<compile_context>
chip_gen: v7x
topology: tpu7x:2x2x1
jax: 0.10.0
libtpu: 0.0.40
codegen_flags: <defaults>
</compile_context>

<pallas_src>
import functools

import jax
import jax.numpy as jnp
from jax import lax
from jax.experimental import pallas as pl
from jax.experimental.pallas import tpu as pltpu


# ----------------------------- Pallas kernel --------------------------------

def _mm_bias_act_kernel(act, x_ref, w_ref, b_ref, o_ref):
    acc = jnp.dot(x_ref[...], w_ref[...], preferred_element_type=jnp.float32)
    acc = acc + b_ref[...]
    if act == "relu":
        acc = jnp.maximum(acc, 0.0)
    elif act == "tanh":
        acc = jnp.tanh(acc)
    o_ref[...] = acc.astype(o_ref.dtype)


def _round_up(x, m):
    return ((x + m - 1) // m) * m


def _pick_tile(m, cap=2048):
    """Largest tile <= cap that divides m (falls back to m itself)."""
    if m <= cap:
        return m
    for t in (2048, 1024, 512, 256, 128, 64, 32, 16, 8):
        if m % t == 0:
            return t
    return m


def batched_matmul_bias_act(lhs, rhs, bias, act):
    """(P, M, K) @ (P, K, Nc) + bias(1, Nc), fused ReLU/Tanh, one pallas_call.

    Grid = (P, M // tm); both axes independent ("parallel").  Nc is expected to
    be a multiple of 128 (lane-dense stores); callers zero-pad & slice.
    """
    P, M, K = lhs.shape
    Nc = rhs.shape[-1]
    tm = _pick_tile(M)
    grid = (P, M // tm)
    return pl.pallas_call(
        functools.partial(_mm_bias_act_kernel, act),
        out_shape=jax.ShapeDtypeStruct((P, M, Nc), jnp.float32),
        grid=grid,
        in_specs=[
            pl.BlockSpec((None, tm, K), lambda p, i: (p, i, 0)),   # lhs, phase-squeezed
            pl.BlockSpec((None, K, Nc), lambda p, i: (p, 0, 0)),   # rhs, phase-squeezed
            pl.BlockSpec((1, Nc), lambda p, i: (0, 0)),            # bias
        ],
        out_specs=pl.BlockSpec((None, tm, Nc), lambda p, i: (p, i, 0)),
        compiler_params=pltpu.CompilerParams(
            dimension_semantics=("parallel", "parallel")),
    )(lhs, rhs, bias)


# ------------------ weight prep (done once, not per forward) -----------------

def _prep_dense_rhs(w, ci_pad, co_pad):
    """Layer-1 ConvTranspose (1x1 input, stride 1, pad 0) as a dense GEMM rhs.

    w: (Ci, Co, 4, 4) -> (ci_pad, 16 * co_pad), columns ordered (kh, kw, co).
    """
    Ci, Co, K, _ = w.shape
    r = jnp.transpose(w, (0, 2, 3, 1))                               # (Ci, kh, kw, Co)
    r = jnp.pad(r, ((0, ci_pad - Ci), (0, 0), (0, 0), (0, co_pad - Co)))
    return r.reshape(ci_pad, K * K * co_pad)


def _prep_phase_rhs(w, co_pad):
    """Stride-2 / pad-1 / K=4 ConvTranspose weights as 4 per-phase 2x2 GEMM rhs.

    Output phase (rh, rw), tap (d, e) uses kernel element (3-rh-2d, 3-rw-2e).
    Returns (4, 4*Ci, co_pad); rows ordered (d, e, ci) with ci fastest.
    """
    Ci, Co, K, _ = w.shape
    assert K == 4
    phases = []
    for rh in range(2):
        for rw in range(2):
            taps = [w[:, :, 3 - rh - 2 * d, 3 - rw - 2 * e]
                    for d in range(2) for e in range(2)]             # 4 x (Ci, Co)
            phases.append(jnp.stack(taps, axis=0))                   # (4, Ci, Co)
    r = jnp.stack(phases, axis=0)                                    # (4, 4, Ci, Co)
    r = jnp.pad(r, ((0, 0), (0, 0), (0, 0), (0, co_pad - Co)))
    return r.reshape(4, 4 * Ci, co_pad)


# ----------------------- layer forward helpers (glue) ------------------------

def _phase_im2col(x):
    """NHWC (N,H,W,C) -> (4, N*H*W, 4*C) polyphase patches (rows: d,e,c order)."""
    N, H, W, C = x.shape
    xp = jnp.pad(x, ((0, 0), (1, 1), (1, 1), (0, 0)))
    phases = []
    for rh in range(2):
        for rw in range(2):
            taps = [xp[:, rh + d:rh + d + H, rw + e:rw + e + W, :]
                    for d in range(2) for e in range(2)]
            t = jnp.stack(taps, axis=3)                              # (N, H, W, 4, C)
            phases.append(t.reshape(N * H * W, 4 * C))
    return jnp.stack(phases, axis=0)


def conv_t_1x1_to_4x4(x_flat, rhs, bias, co):
    """Layer 1: (N, Cin) -> (N, 4, 4, co) via a single dense GEMM."""
    N, Cin = x_flat.shape
    ci_pad = rhs.shape[0]
    co_pad = rhs.shape[1] // 16
    m_pad = _round_up(N, 8)
    x_flat = jnp.pad(x_flat, ((0, m_pad - N), (0, ci_pad - Cin)))
    out = batched_matmul_bias_act(x_flat[None], rhs[None], bias, "relu")
    return out[0, :N].reshape(N, 4, 4, co_pad)[..., :co]


def conv_t_stride2(x, rhs, bias, co, act):
    """Stride-2 ConvTranspose (K=4, pad=1) as 4 phase GEMMs + depth-to-space."""
    N, H, W, _ = x.shape
    lhs = _phase_im2col(x)                                           # (4, N*H*W, 4*Ci)
    out = batched_matmul_bias_act(lhs, rhs, bias, act)               # (4, N*H*W, co_pad)
    # drop channel padding + interleave the 4 phases into (N, 2H, 2W, co)
    out = out[..., :co].reshape(2, 2, N, H, W, co)
    out = jnp.transpose(out, (2, 3, 0, 4, 1, 5))
    return out.reshape(N, 2 * H, 2 * W, co)


# --------------------------- Generator forward -------------------------------

def init_params(key, channels_noise, channels_img, features_g,
                num_classes, embed_size):
    ks = jax.random.split(key, 7)

    def w(k, shape):
        return (0.02 * jax.random.normal(k, shape)).astype(jnp.float32)

    fg = features_g
    return dict(
        embed=w(ks[0], (num_classes, embed_size)),
        w1=w(ks[1], (channels_noise + embed_size, fg * 16, 4, 4)),   # bias=False
        w2=w(ks[2], (fg * 16, fg * 8, 4, 4)),                         # bias=False
        w3=w(ks[3], (fg * 8, fg * 4, 4, 4)),                          # bias=False
        w4=w(ks[4], (fg * 4, fg * 2, 4, 4)),                          # bias=False
        w5=w(ks[5], (fg * 2, channels_img, 4, 4)),                    # bias=True
        b5=w(ks[6], (channels_img,)),
    )


def build_generator(params):
    """Pre-reshape weights into GEMM-ready layout once; return a jitted forward."""
    cin = params["w1"].shape[0]
    co1 = params["w1"].shape[1]
    co1_pad = _round_up(co1, 8)                 # 16*co1_pad is a multiple of 128
    ci1_pad = _round_up(cin, 128)
    l1_rhs = _prep_dense_rhs(params["w1"], ci1_pad, co1_pad)
    l1_bias = jnp.zeros((1, 16 * co1_pad), jnp.float32)

    s2_layers = []
    for name, bias_name, act in (("w2", None, "relu"), ("w3", None, "relu"),
                                 ("w4", None, "relu"), ("w5", "b5", "tanh")):
        w_ = params[name]
        co = w_.shape[1]
        co_pad = _round_up(co, 128)
        rhs = _prep_phase_rhs(w_, co_pad)
        if bias_name is None:
            b = jnp.zeros((1, co_pad), jnp.float32)
        else:
            b = jnp.pad(params[bias_name], (0, co_pad - co)).reshape(1, co_pad)
        s2_layers.append((rhs, b, co, act))

    embed = params["embed"]

    def forward(noise, labels):
        N = noise.shape[0]
        label_embed = embed[labels]                                   # gather (glue)
        x = jnp.concatenate([noise.reshape(N, -1), label_embed], axis=1)
        x = conv_t_1x1_to_4x4(x, l1_rhs, l1_bias, co1)                # (N, 4, 4, fg*16)
        for rhs, b, co, act in s2_layers:                             # 4x4 -> 64x64
            x = conv_t_stride2(x, rhs, b, co, act)
        return jnp.transpose(x, (0, 3, 1, 2))                         # NCHW (PyTorch)

    return jax.jit(forward)


# ----------------------- pure-JAX reference (check) ---------------------------

def _ref_conv_transpose(x, w, bias, stride, padding):
    K = w.shape[2]
    w_conv = jnp.transpose(w[:, :, ::-1, ::-1], (1, 0, 2, 3))         # (Co, Ci, K, K)
    out = lax.conv_general_dilated(
        x, w_conv, window_strides=(1, 1),
        padding=[(K - 1 - padding, K - 1 - padding)] * 2,
        lhs_dilation=(stride, stride),
        dimension_numbers=("NCHW", "OIHW", "NCHW"))
    if bias is not None:
        out = out + bias[None, :, None, None]
    return out


def ref_forward(params, noise, labels):
    N = noise.shape[0]
    x = jnp.concatenate([noise.reshape(N, -1), params["embed"][labels]], axis=1)
    x = x[:, :, None, None]
    x = jax.nn.relu(_ref_conv_transpose(x, params["w1"], None, 1, 0))
    x = jax.nn.relu(_ref_conv_transpose(x, params["w2"], None, 2, 1))
    x = jax.nn.relu(_ref_conv_transpose(x, params["w3"], None, 2, 1))
    x = jax.nn.relu(_ref_conv_transpose(x, params["w4"], None, 2, 1))
    x = jnp.tanh(_ref_conv_transpose(x, params["w5"], params["b5"], 2, 1))
    return x


# --------------------------------- main --------------------------------------

if __name__ == "__main__":
    channels_noise, channels_img, features_g = 8, 3, 8
    num_classes, embed_size = 10, 8
    N = 2

    key = jax.random.PRNGKey(0)
    kp, kn, kl = jax.random.split(key, 3)
    params = init_params(kp, channels_noise, channels_img, features_g,
                         num_classes, embed_size)
    noise = jax.random.normal(kn, (N, channels_noise, 1, 1), jnp.float32)
    labels = jax.random.randint(kl, (N,), 0, num_classes)

    gen = build_generator(params)
    out = jax.block_until_ready(gen(noise, labels))
    assert out.shape == (N, channels_img, 64, 64), out.shape

    ref = jax.block_until_ready(ref_forward(params, noise, labels))
    assert jnp.allclose(out, ref, atol=2e-4, rtol=2e-4), (
        float(jnp.max(jnp.abs(out - ref))))

    print("KERNEL_OK")
</pallas_src>

<mosaic_0001>
module attributes {stable_mosaic.version = 11 : i64} {
  func.func @_mm_bias_act_kernel(%arg0: i32, %arg1: i32, %arg2: memref<1x8x128xf32, #tpu.memory_space<vmem>>, %arg3: memref<1x128x2048xf32, #tpu.memory_space<vmem>>, %arg4: memref<1x2048xf32, #tpu.memory_space<vmem>>, %arg5: memref<1x8x2048xf32, #tpu.memory_space<vmem>>) attributes {dimension_semantics = [#tpu.dimension_semantics<parallel>, #tpu.dimension_semantics<parallel>], iteration_bounds = array<i64: 1, 1>, scalar_prefetch = 0 : i64, scratch_operands = 0 : i64, tpu.core_type = #tpu.core_type<tc>, window_params = [{transform_indices = @transform_0, window_bounds = array<i64: 1, 8, 128>}, {transform_indices = @transform_1, window_bounds = array<i64: 1, 128, 2048>}, {pipeline_mode = #tpu.pipeline_mode<synchronous>, transform_indices = @transform_2, window_bounds = array<i64: 1, 2048>}, {transform_indices = @transform_3, window_bounds = array<i64: 1, 8, 2048>}]} {
    %c0 = arith.constant 0 : index
    %c0_0 = arith.constant 0 : index
    %c0_1 = arith.constant 0 : index
    %0 = vector.load %arg2[%c0, %c0_0, %c0_1] : memref<1x8x128xf32, #tpu.memory_space<vmem>>, vector<1x8x128xf32>
    %1 = vector.shape_cast %0 : vector<1x8x128xf32> to vector<8x128xf32>
    %c0_2 = arith.constant 0 : index
    %c0_3 = arith.constant 0 : index
    %c0_4 = arith.constant 0 : index
    %2 = vector.load %arg3[%c0_2, %c0_3, %c0_4] : memref<1x128x2048xf32, #tpu.memory_space<vmem>>, vector<1x128x2048xf32>
    %3 = vector.shape_cast %2 : vector<1x128x2048xf32> to vector<128x2048xf32>
    %cst = arith.constant dense<0.000000e+00> : vector<8x2048xf32>
    %4 = tpu.matmul %1, %3, %cst {dimension_numbers = #tpu.dot_dimension_numbers<[1], [0], [0], [1], [0, 0, 1, 1], [], []>} : vector<8x128xf32>, vector<128x2048xf32>, vector<8x2048xf32> -> vector<8x2048xf32>
    %c0_5 = arith.constant 0 : index
    %c0_6 = arith.constant 0 : index
    %5 = vector.load %arg4[%c0_5, %c0_6] : memref<1x2048xf32, #tpu.memory_space<vmem>>, vector<1x2048xf32>
    %6 = vector.broadcast %5 : vector<1x2048xf32> to vector<8x2048xf32>
    %7 = arith.addf %4, %6 : vector<8x2048xf32>
    %cst_7 = arith.constant 0.000000e+00 : f32
    %8 = vector.broadcast %cst_7 : f32 to vector<8x2048xf32>
    %9 = arith.maximumf %7, %8 : vector<8x2048xf32>
    %c0_8 = arith.constant 0 : index
    %c0_9 = arith.constant 0 : index
    %c0_10 = arith.constant 0 : index
    %10 = vector.load %arg5[%c0_8, %c0_9, %c0_10] : memref<1x8x2048xf32, #tpu.memory_space<vmem>>, vector<1x8x2048xf32>
    %11 = vector.shape_cast %10 : vector<1x8x2048xf32> to vector<8x2048xf32>
    %12 = vector.shape_cast %9 : vector<8x2048xf32> to vector<1x8x2048xf32>
    tpu.vector_store %arg5[%c0_8, %c0_9, %c0_10], %12 {strides = array<i32>} : memref<1x8x2048xf32, #tpu.memory_space<vmem>>, vector<1x8x2048xf32>,
    return
  }
  func.func @transform_0(%arg0: i32, %arg1: i32) -> (i32, i32, i32) {
    %c0_i32 = arith.constant 0 : i32
    %c0_i32_0 = arith.constant 0 : i32
    return %arg0, %arg1, %c0_i32 : i32, i32, i32
  }
  func.func @transform_1(%arg0: i32, %arg1: i32) -> (i32, i32, i32) {
    %c0_i32 = arith.constant 0 : i32
    %c0_i32_0 = arith.constant 0 : i32
    %c0_i32_1 = arith.constant 0 : i32
    return %arg0, %c0_i32, %c0_i32_0 : i32, i32, i32
  }
  func.func @transform_2(%arg0: i32, %arg1: i32) -> (i32, i32) {
    %c0_i32 = arith.constant 0 : i32
    %c0_i32_0 = arith.constant 0 : i32
    %c0_i32_1 = arith.constant 0 : i32
    return %c0_i32, %c0_i32_0 : i32, i32
  }
  func.func @transform_3(%arg0: i32, %arg1: i32) -> (i32, i32, i32) {
    %c0_i32 = arith.constant 0 : i32
    %c0_i32_0 = arith.constant 0 : i32
    return %arg0, %arg1, %c0_i32 : i32, i32, i32
  }
}

module attributes {stable_mosaic.version = 11 : i64} {
  func.func @_mm_bias_act_kernel(%arg0: i32, %arg1: i32, %arg2: memref<1x32x512xf32, #tpu.memory_space<vmem>>, %arg3: memref<1x512x128xf32, #tpu.memory_space<vmem>>, %arg4: memref<1x128xf32, #tpu.memory_space<vmem>>, %arg5: memref<1x32x128xf32, #tpu.memory_space<vmem>>) attributes {dimension_semantics = [#tpu.dimension_semantics<parallel>, #tpu.dimension_semantics<parallel>], iteration_bounds = array<i64: 4, 1>, scalar_prefetch = 0 : i64, scratch_operands = 0 : i64, tpu.core_type = #tpu.core_type<tc>, window_params = [{transform_indices = @transform_0, window_bounds = array<i64: 1, 32, 512>}, {transform_indices = @transform_1, window_bounds = array<i64: 1, 512, 128>}, {pipeline_mode = #tpu.pipeline_mode<synchronous>, transform_indices = @transform_2, window_bounds = array<i64: 1, 128>}, {transform_indices = @transform_3, window_bounds = array<i64: 1, 32, 128>}]} {
    %c0 = arith.constant 0 : index
    %c0_0 = arith.constant 0 : index
    %c0_1 = arith.constant 0 : index
    %0 = vector.load %arg2[%c0, %c0_0, %c0_1] : memref<1x32x512xf32, #tpu.memory_space<vmem>>, vector<1x32x512xf32>
    %1 = vector.shape_cast %0 : vector<1x32x512xf32> to vector<32x512xf32>
    %c0_2 = arith.constant 0 : index
    %c0_3 = arith.constant 0 : index
    %c0_4 = arith.constant 0 : index
    %2 = vector.load %arg3[%c0_2, %c0_3, %c0_4] : memref<1x512x128xf32, #tpu.memory_space<vmem>>, vector<1x512x128xf32>
    %3 = vector.shape_cast %2 : vector<1x512x128xf32> to vector<512x128xf32>
    %cst = arith.constant dense<0.000000e+00> : vector<32x128xf32>
    %4 = tpu.matmul %1, %3, %cst {dimension_numbers = #tpu.dot_dimension_numbers<[1], [0], [0], [1], [0, 0, 1, 1], [], []>} : vector<32x512xf32>, vector<512x128xf32>, vector<32x128xf32> -> vector<32x128xf32>
    %c0_5 = arith.constant 0 : index
    %c0_6 = arith.constant 0 : index
    %5 = vector.load %arg4[%c0_5, %c0_6] : memref<1x128xf32, #tpu.memory_space<vmem>>, vector<1x128xf32>
    %6 = vector.broadcast %5 : vector<1x128xf32> to vector<32x128xf32>
    %7 = arith.addf %4, %6 : vector<32x128xf32>
    %cst_7 = arith.constant 0.000000e+00 : f32
    %8 = vector.broadcast %cst_7 : f32 to vector<32x128xf32>
    %9 = arith.maximumf %7, %8 : vector<32x128xf32>
    %c0_8 = arith.constant 0 : index
    %c0_9 = arith.constant 0 : index
    %c0_10 = arith.constant 0 : index
    %10 = vector.load %arg5[%c0_8, %c0_9, %c0_10] : memref<1x32x128xf32, #tpu.memory_space<vmem>>, vector<1x32x128xf32>
    %11 = vector.shape_cast %10 : vector<1x32x128xf32> to vector<32x128xf32>
    %12 = vector.shape_cast %9 : vector<32x128xf32> to vector<1x32x128xf32>
    tpu.vector_store %arg5[%c0_8, %c0_9, %c0_10], %12 {strides = array<i32>} : memref<1x32x128xf32, #tpu.memory_space<vmem>>, vector<1x32x128xf32>,
    return
  }
  func.func @transform_0(%arg0: i32, %arg1: i32) -> (i32, i32, i32) {
    %c0_i32 = arith.constant 0 : i32
    %c0_i32_0 = arith.constant 0 : i32
    return %arg0, %arg1, %c0_i32 : i32, i32, i32
  }
  func.func @transform_1(%arg0: i32, %arg1: i32) -> (i32, i32, i32) {
    %c0_i32 = arith.constant 0 : i32
    %c0_i32_0 = arith.constant 0 : i32
    %c0_i32_1 = arith.constant 0 : i32
    return %arg0, %c0_i32, %c0_i32_0 : i32, i32, i32
  }
  func.func @transform_2(%arg0: i32, %arg1: i32) -> (i32, i32) {
    %c0_i32 = arith.constant 0 : i32
    %c0_i32_0 = arith.constant 0 : i32
    %c0_i32_1 = arith.constant 0 : i32
    return %c0_i32, %c0_i32_0 : i32, i32
  }
  func.func @transform_3(%arg0: i32, %arg1: i32) -> (i32, i32, i32) {
    %c0_i32 = arith.constant 0 : i32
    %c0_i32_0 = arith.constant 0 : i32
    return %arg0, %arg1, %c0_i32 : i32, i32, i32
  }
}

module attributes {stable_mosaic.version = 11 : i64} {
  func.func @_mm_bias_act_kernel(%arg0: i32, %arg1: i32, %arg2: memref<1x128x256xf32, #tpu.memory_space<vmem>>, %arg3: memref<1x256x128xf32, #tpu.memory_space<vmem>>, %arg4: memref<1x128xf32, #tpu.memory_space<vmem>>, %arg5: memref<1x128x128xf32, #tpu.memory_space<vmem>>) attributes {dimension_semantics = [#tpu.dimension_semantics<parallel>, #tpu.dimension_semantics<parallel>], iteration_bounds = array<i64: 4, 1>, scalar_prefetch = 0 : i64, scratch_operands = 0 : i64, tpu.core_type = #tpu.core_type<tc>, window_params = [{transform_indices = @transform_0, window_bounds = array<i64: 1, 128, 256>}, {transform_indices = @transform_1, window_bounds = array<i64: 1, 256, 128>}, {pipeline_mode = #tpu.pipeline_mode<synchronous>, transform_indices = @transform_2, window_bounds = array<i64: 1, 128>}, {transform_indices = @transform_3, window_bounds = array<i64: 1, 128, 128>}]} {
    %c0 = arith.constant 0 : index
    %c0_0 = arith.constant 0 : index
    %c0_1 = arith.constant 0 : index
    %0 = vector.load %arg2[%c0, %c0_0, %c0_1] : memref<1x128x256xf32, #tpu.memory_space<vmem>>, vector<1x128x256xf32>
    %1 = vector.shape_cast %0 : vector<1x128x256xf32> to vector<128x256xf32>
    %c0_2 = arith.constant 0 : index
    %c0_3 = arith.constant 0 : index
    %c0_4 = arith.constant 0 : index
    %2 = vector.load %arg3[%c0_2, %c0_3, %c0_4] : memref<1x256x128xf32, #tpu.memory_space<vmem>>, vector<1x256x128xf32>
    %3 = vector.shape_cast %2 : vector<1x256x128xf32> to vector<256x128xf32>
    %cst = arith.constant dense<0.000000e+00> : vector<128x128xf32>
    %4 = tpu.matmul %1, %3, %cst {dimension_numbers = #tpu.dot_dimension_numbers<[1], [0], [0], [1], [0, 0, 1, 1], [], []>} : vector<128x256xf32>, vector<256x128xf32>, vector<128x128xf32> -> vector<128x128xf32>
    %c0_5 = arith.constant 0 : index
    %c0_6 = arith.constant 0 : index
    %5 = vector.load %arg4[%c0_5, %c0_6] : memref<1x128xf32, #tpu.memory_space<vmem>>, vector<1x128xf32>
    %6 = vector.broadcast %5 : vector<1x128xf32> to vector<128x128xf32>
    %7 = arith.addf %4, %6 : vector<128x128xf32>
    %cst_7 = arith.constant 0.000000e+00 : f32
    %8 = vector.broadcast %cst_7 : f32 to vector<128x128xf32>
    %9 = arith.maximumf %7, %8 : vector<128x128xf32>
    %c0_8 = arith.constant 0 : index
    %c0_9 = arith.constant 0 : index
    %c0_10 = arith.constant 0 : index
    %10 = vector.load %arg5[%c0_8, %c0_9, %c0_10] : memref<1x128x128xf32, #tpu.memory_space<vmem>>, vector<1x128x128xf32>
    %11 = vector.shape_cast %10 : vector<1x128x128xf32> to vector<128x128xf32>
    %12 = vector.shape_cast %9 : vector<128x128xf32> to vector<1x128x128xf32>
    tpu.vector_store %arg5[%c0_8, %c0_9, %c0_10], %12 {strides = array<i32>} : memref<1x128x128xf32, #tpu.memory_space<vmem>>, vector<1x128x128xf32>,
    return
  }
  func.func @transform_0(%arg0: i32, %arg1: i32) -> (i32, i32, i32) {
    %c0_i32 = arith.constant 0 : i32
    %c0_i32_0 = arith.constant 0 : i32
    return %arg0, %arg1, %c0_i32 : i32, i32, i32
  }
  func.func @transform_1(%arg0: i32, %arg1: i32) -> (i32, i32, i32) {
    %c0_i32 = arith.constant 0 : i32
    %c0_i32_0 = arith.constant 0 : i32
    %c0_i32_1 = arith.constant 0 : i32
    return %arg0, %c0_i32, %c0_i32_0 : i32, i32, i32
  }
  func.func @transform_2(%arg0: i32, %arg1: i32) -> (i32, i32) {
    %c0_i32 = arith.constant 0 : i32
    %c0_i32_0 = arith.constant 0 : i32
    %c0_i32_1 = arith.constant 0 : i32
    return %c0_i32, %c0_i32_0 : i32, i32
  }
  func.func @transform_3(%arg0: i32, %arg1: i32) -> (i32, i32, i32) {
    %c0_i32 = arith.constant 0 : i32
    %c0_i32_0 = arith.constant 0 : i32
    return %arg0, %arg1, %c0_i32 : i32, i32, i32
  }
}

module attributes {stable_mosaic.version = 11 : i64} {
  func.func @_mm_bias_act_kernel(%arg0: i32, %arg1: i32, %arg2: memref<1x512x128xf32, #tpu.memory_space<vmem>>, %arg3: memref<1x128x128xf32, #tpu.memory_space<vmem>>, %arg4: memref<1x128xf32, #tpu.memory_space<vmem>>, %arg5: memref<1x512x128xf32, #tpu.memory_space<vmem>>) attributes {dimension_semantics = [#tpu.dimension_semantics<parallel>, #tpu.dimension_semantics<parallel>], iteration_bounds = array<i64: 4, 1>, scalar_prefetch = 0 : i64, scratch_operands = 0 : i64, tpu.core_type = #tpu.core_type<tc>, window_params = [{transform_indices = @transform_0, window_bounds = array<i64: 1, 512, 128>}, {transform_indices = @transform_1, window_bounds = array<i64: 1, 128, 128>}, {pipeline_mode = #tpu.pipeline_mode<synchronous>, transform_indices = @transform_2, window_bounds = array<i64: 1, 128>}, {transform_indices = @transform_3, window_bounds = array<i64: 1, 512, 128>}]} {
    %c0 = arith.constant 0 : index
    %c0_0 = arith.constant 0 : index
    %c0_1 = arith.constant 0 : index
    %0 = vector.load %arg2[%c0, %c0_0, %c0_1] : memref<1x512x128xf32, #tpu.memory_space<vmem>>, vector<1x512x128xf32>
    %1 = vector.shape_cast %0 : vector<1x512x128xf32> to vector<512x128xf32>
    %c0_2 = arith.constant 0 : index
    %c0_3 = arith.constant 0 : index
    %c0_4 = arith.constant 0 : index
    %2 = vector.load %arg3[%c0_2, %c0_3, %c0_4] : memref<1x128x128xf32, #tpu.memory_space<vmem>>, vector<1x128x128xf32>
    %3 = vector.shape_cast %2 : vector<1x128x128xf32> to vector<128x128xf32>
    %cst = arith.constant dense<0.000000e+00> : vector<512x128xf32>
    %4 = tpu.matmul %1, %3, %cst {dimension_numbers = #tpu.dot_dimension_numbers<[1], [0], [0], [1], [0, 0, 1, 1], [], []>} : vector<512x128xf32>, vector<128x128xf32>, vector<512x128xf32> -> vector<512x128xf32>
    %c0_5 = arith.constant 0 : index
    %c0_6 = arith.constant 0 : index
    %5 = vector.load %arg4[%c0_5, %c0_6] : memref<1x128xf32, #tpu.memory_space<vmem>>, vector<1x128xf32>
    %6 = vector.broadcast %5 : vector<1x128xf32> to vector<512x128xf32>
    %7 = arith.addf %4, %6 : vector<512x128xf32>
    %cst_7 = arith.constant 0.000000e+00 : f32
    %8 = vector.broadcast %cst_7 : f32 to vector<512x128xf32>
    %9 = arith.maximumf %7, %8 : vector<512x128xf32>
    %c0_8 = arith.constant 0 : index
    %c0_9 = arith.constant 0 : index
    %c0_10 = arith.constant 0 : index
    %10 = vector.load %arg5[%c0_8, %c0_9, %c0_10] : memref<1x512x128xf32, #tpu.memory_space<vmem>>, vector<1x512x128xf32>
    %11 = vector.shape_cast %10 : vector<1x512x128xf32> to vector<512x128xf32>
    %12 = vector.shape_cast %9 : vector<512x128xf32> to vector<1x512x128xf32>
    tpu.vector_store %arg5[%c0_8, %c0_9, %c0_10], %12 {strides = array<i32>} : memref<1x512x128xf32, #tpu.memory_space<vmem>>, vector<1x512x128xf32>,
    return
  }
  func.func @transform_0(%arg0: i32, %arg1: i32) -> (i32, i32, i32) {
    %c0_i32 = arith.constant 0 : i32
    %c0_i32_0 = arith.constant 0 : i32
    return %arg0, %arg1, %c0_i32 : i32, i32, i32
  }
  func.func @transform_1(%arg0: i32, %arg1: i32) -> (i32, i32, i32) {
    %c0_i32 = arith.constant 0 : i32
    %c0_i32_0 = arith.constant 0 : i32
    %c0_i32_1 = arith.constant 0 : i32
    return %arg0, %c0_i32, %c0_i32_0 : i32, i32, i32
  }
  func.func @transform_2(%arg0: i32, %arg1: i32) -> (i32, i32) {
    %c0_i32 = arith.constant 0 : i32
    %c0_i32_0 = arith.constant 0 : i32
    %c0_i32_1 = arith.constant 0 : i32
    return %c0_i32, %c0_i32_0 : i32, i32
  }
  func.func @transform_3(%arg0: i32, %arg1: i32) -> (i32, i32, i32) {
    %c0_i32 = arith.constant 0 : i32
    %c0_i32_0 = arith.constant 0 : i32
    return %arg0, %arg1, %c0_i32 : i32, i32, i32
  }
}

module attributes {stable_mosaic.version = 11 : i64} {
  func.func @_mm_bias_act_kernel(%arg0: i32, %arg1: i32, %arg2: memref<1x2048x64xf32, #tpu.memory_space<vmem>>, %arg3: memref<1x64x128xf32, #tpu.memory_space<vmem>>, %arg4: memref<1x128xf32, #tpu.memory_space<vmem>>, %arg5: memref<1x2048x128xf32, #tpu.memory_space<vmem>>) attributes {dimension_semantics = [#tpu.dimension_semantics<parallel>, #tpu.dimension_semantics<parallel>], iteration_bounds = array<i64: 4, 1>, scalar_prefetch = 0 : i64, scratch_operands = 0 : i64, tpu.core_type = #tpu.core_type<tc>, window_params = [{transform_indices = @transform_0, window_bounds = array<i64: 1, 2048, 64>}, {transform_indices = @transform_1, window_bounds = array<i64: 1, 64, 128>}, {pipeline_mode = #tpu.pipeline_mode<synchronous>, transform_indices = @transform_2, window_bounds = array<i64: 1, 128>}, {transform_indices = @transform_3, window_bounds = array<i64: 1, 2048, 128>}]} {
    %c0 = arith.constant 0 : index
    %c0_0 = arith.constant 0 : index
    %c0_1 = arith.constant 0 : index
    %0 = vector.load %arg2[%c0, %c0_0, %c0_1] : memref<1x2048x64xf32, #tpu.memory_space<vmem>>, vector<1x2048x64xf32>
    %1 = vector.shape_cast %0 : vector<1x2048x64xf32> to vector<2048x64xf32>
    %c0_2 = arith.constant 0 : index
    %c0_3 = arith.constant 0 : index
    %c0_4 = arith.constant 0 : index
    %2 = vector.load %arg3[%c0_2, %c0_3, %c0_4] : memref<1x64x128xf32, #tpu.memory_space<vmem>>, vector<1x64x128xf32>
    %3 = vector.shape_cast %2 : vector<1x64x128xf32> to vector<64x128xf32>
    %cst = arith.constant dense<0.000000e+00> : vector<2048x128xf32>
    %4 = tpu.matmul %1, %3, %cst {dimension_numbers = #tpu.dot_dimension_numbers<[1], [0], [0], [1], [0, 0, 1, 1], [], []>} : vector<2048x64xf32>, vector<64x128xf32>, vector<2048x128xf32> -> vector<2048x128xf32>
    %c0_5 = arith.constant 0 : index
    %c0_6 = arith.constant 0 : index
    %5 = vector.load %arg4[%c0_5, %c0_6] : memref<1x128xf32, #tpu.memory_space<vmem>>, vector<1x128xf32>
    %6 = vector.broadcast %5 : vector<1x128xf32> to vector<2048x128xf32>
    %7 = arith.addf %4, %6 : vector<2048x128xf32>
    %8 = math.tanh %7 : vector<2048x128xf32>
    %c0_7 = arith.constant 0 : index
    %c0_8 = arith.constant 0 : index
    %c0_9 = arith.constant 0 : index
    %9 = vector.load %arg5[%c0_7, %c0_8, %c0_9] : memref<1x2048x128xf32, #tpu.memory_space<vmem>>, vector<1x2048x128xf32>
    %10 = vector.shape_cast %9 : vector<1x2048x128xf32> to vector<2048x128xf32>
    %11 = vector.shape_cast %8 : vector<2048x128xf32> to vector<1x2048x128xf32>
    tpu.vector_store %arg5[%c0_7, %c0_8, %c0_9], %11 {strides = array<i32>} : memref<1x2048x128xf32, #tpu.memory_space<vmem>>, vector<1x2048x128xf32>,
    return
  }
  func.func @transform_0(%arg0: i32, %arg1: i32) -> (i32, i32, i32) {
    %c0_i32 = arith.constant 0 : i32
    %c0_i32_0 = arith.constant 0 : i32
    return %arg0, %arg1, %c0_i32 : i32, i32, i32
  }
  func.func @transform_1(%arg0: i32, %arg1: i32) -> (i32, i32, i32) {
    %c0_i32 = arith.constant 0 : i32
    %c0_i32_0 = arith.constant 0 : i32
    %c0_i32_1 = arith.constant 0 : i32
    return %arg0, %c0_i32, %c0_i32_0 : i32, i32, i32
  }
  func.func @transform_2(%arg0: i32, %arg1: i32) -> (i32, i32) {
    %c0_i32 = arith.constant 0 : i32
    %c0_i32_0 = arith.constant 0 : i32
    %c0_i32_1 = arith.constant 0 : i32
    return %c0_i32, %c0_i32_0 : i32, i32
  }
  func.func @transform_3(%arg0: i32, %arg1: i32) -> (i32, i32, i32) {
    %c0_i32 = arith.constant 0 : i32
    %c0_i32_0 = arith.constant 0 : i32
    return %arg0, %arg1, %c0_i32 : i32, i32, i32
  }
}

</mosaic_0001>

<llo_original>
// kernel: squeeze.1
$region0: #{squeeze.1}
  %s0 = inlined_call_operand.vmem [shape: f32[1,2,2048], index: 0, kind: input, shape index: {}]
  %s1 = inlined_call_operand.vmem [shape: f32[2,4,4,128], index: 1, kind: output, shape index: {}]
  $region1: #{squeeze.1} parent=0
    #allocation0 [shape = 'u8[32768]{0}', space=vmem, size = 0x8000, scoped, tag = 'scoped mem for output reshape']
    #allocation1 [shape = 'u8[65536]{0}', space=vmem, size = 0x10000, scoped, tag = 'scoped mem for input reshape']
    %s3 = sshllo.u32 0, 2
    %s4 = smul.addr 2, 15
    %s5 = scalar_lea.vmem %s0, %s4
    %v6 = vld [vmem:[%s5] sm:%s3]
    %s7 = scalar_lea.vmem [#allocation1], 120
    %8 = vst [vmem:[%s7] sm:%s3] %v6
    %s9 = smul.addr 2, 14
    %s10 = scalar_lea.vmem %s0, %s9
    %v11 = vld [vmem:[%s10] sm:%s3]
    %s12 = scalar_lea.vmem [#allocation1], 112
    %13 = vst [vmem:[%s12] sm:%s3] %v11
    %s14 = smul.addr 2, 13
    %s15 = scalar_lea.vmem %s0, %s14
    %v16 = vld [vmem:[%s15] sm:%s3]
    %s17 = scalar_lea.vmem [#allocation1], 104
    %18 = vst [vmem:[%s17] sm:%s3] %v16
    %s19 = smul.addr 2, 12
    %s20 = scalar_lea.vmem %s0, %s19
    %v21 = vld [vmem:[%s20] sm:%s3]
    %s22 = scalar_lea.vmem [#allocation1], 96
    %23 = vst [vmem:[%s22] sm:%s3] %v21
    %s24 = smul.addr 2, 11
    %s25 = scalar_lea.vmem %s0, %s24
    %v26 = vld [vmem:[%s25] sm:%s3]
    %s27 = scalar_lea.vmem [#allocation1], 88
    %28 = vst [vmem:[%s27] sm:%s3] %v26
    %s29 = smul.addr 2, 10
    %s30 = scalar_lea.vmem %s0, %s29
    %v31 = vld [vmem:[%s30] sm:%s3]
    %s32 = scalar_lea.vmem [#allocation1], 80
    %33 = vst [vmem:[%s32] sm:%s3] %v31
    %s34 = smul.addr 2, 9
    %s35 = scalar_lea.vmem %s0, %s34
    %v36 = vld [vmem:[%s35] sm:%s3]
    %s37 = scalar_lea.vmem [#allocation1], 72
    %38 = vst [vmem:[%s37] sm:%s3] %v36
    %s39 = smul.addr 2, 8
    %s40 = scalar_lea.vmem %s0, %s39
    %v41 = vld [vmem:[%s40] sm:%s3]
    %s42 = scalar_lea.vmem [#allocation1], 64
    %43 = vst [vmem:[%s42] sm:%s3] %v41
    %s44 = smul.addr 2, 7
    %s45 = scalar_lea.vmem %s0, %s44
    %v46 = vld [vmem:[%s45] sm:%s3]
    %s47 = scalar_lea.vmem [#allocation1], 56
    %48 = vst [vmem:[%s47] sm:%s3] %v46
    %s49 = smul.addr 2, 6
    %s50 = scalar_lea.vmem %s0, %s49
    %v51 = vld [vmem:[%s50] sm:%s3]
    %s52 = scalar_lea.vmem [#allocation1], 48
    %53 = vst [vmem:[%s52] sm:%s3] %v51
    %s54 = smul.addr 2, 5
    %s55 = scalar_lea.vmem %s0, %s54
    %v56 = vld [vmem:[%s55] sm:%s3]
    %s57 = scalar_lea.vmem [#allocation1], 40
    %58 = vst [vmem:[%s57] sm:%s3] %v56
    %s59 = smul.addr 2, 4
    %s60 = scalar_lea.vmem %s0, %s59
    %v61 = vld [vmem:[%s60] sm:%s3]
    %s62 = scalar_lea.vmem [#allocation1], 32
    %63 = vst [vmem:[%s62] sm:%s3] %v61
    %s64 = smul.addr 2, 3
    %s65 = scalar_lea.vmem %s0, %s64
    %v66 = vld [vmem:[%s65] sm:%s3]
    %s67 = scalar_lea.vmem [#allocation1], 24
    %68 = vst [vmem:[%s67] sm:%s3] %v66
    %s69 = smul.addr 2, 2
    %s70 = scalar_lea.vmem %s0, %s69
    %v71 = vld [vmem:[%s70] sm:%s3]
    %s72 = scalar_lea.vmem [#allocation1], 16
    %73 = vst [vmem:[%s72] sm:%s3] %v71
    %s74 = scalar_lea.vmem %s0, 2
    %v75 = vld [vmem:[%s74] sm:%s3]
    %s76 = scalar_lea.vmem [#allocation1], 8
    %77 = vst [vmem:[%s76] sm:%s3] %v75
    %v78 = vld [vmem:[%s0] sm:%s3]
    %79 = vst [vmem:[#allocation1] sm:%s3] %v78
    %v80 = vld [vmem:[#allocation1] sm:$0x3]
    %81 = vst [vmem:[#allocation0] sm:$0x1] %v80
    %s82 = scalar_lea.vmem [#allocation0], 31
    %83 = vst [vmem:[%s82] sm:$0x2] %v80
    %s84 = scalar_lea.vmem [#allocation1], 8
    %v85 = vld [vmem:[%s84] sm:$0x3]
    %s86 = scalar_lea.vmem [#allocation0], 1
    %87 = vst [vmem:[%s86] sm:$0x1] %v85
    %s88 = scalar_lea.vmem [#allocation0], 32
    %89 = vst [vmem:[%s88] sm:$0x2] %v85
    %s90 = scalar_lea.vmem [#allocation1], 16
    %v91 = vld [vmem:[%s90] sm:$0x3]
    %s92 = scalar_lea.vmem [#allocation0], 2
    %93 = vst [vmem:[%s92] sm:$0x1] %v91
    %s94 = scalar_lea.vmem [#allocation0], 33
    %95 = vst [vmem:[%s94] sm:$0x2] %v91
    %s96 = scalar_lea.vmem [#allocation1], 24
    %v97 = vld [vmem:[%s96] sm:$0x3]
    %s98 = scalar_lea.vmem [#allocation0], 3
    %99 = vst [vmem:[%s98] sm:$0x1] %v97
    %s100 = scalar_lea.vmem [#allocation0], 34
    %101 = vst [vmem:[%s100] sm:$0x2] %v97
    %s102 = scalar_lea.vmem [#allocation1], 32
    %v103 = vld [vmem:[%s102] sm:$0x3]
    %s104 = scalar_lea.vmem [#allocation0], 8
    %105 = vst [vmem:[%s104] sm:$0x1] %v103
    %s106 = scalar_lea.vmem [#allocation0], 39
    %107 = vst [vmem:[%s106] sm:$0x2] %v103
    %s108 = scalar_lea.vmem [#allocation1], 40
    %v109 = vld [vmem:[%s108] sm:$0x3]
    %s110 = scalar_lea.vmem [#allocation0], 9
    %111 = vst [vmem:[%s110] sm:$0x1] %v109
    %s112 = scalar_lea.vmem [#allocation0], 40
    %113 = vst [vmem:[%s112] sm:$0x2] %v109
    %s114 = scalar_lea.vmem [#allocation1], 48
    %v115 = vld [vmem:[%s114] sm:$0x3]
    %s116 = scalar_lea.vmem [#allocation0], 10
    %117 = vst [vmem:[%s116] sm:$0x1] %v115
    %s118 = scalar_lea.vmem [#allocation0], 41
    %119 = vst [vmem:[%s118] sm:$0x2] %v115
    %s120 = scalar_lea.vmem [#allocation1], 56
    %v121 = vld [vmem:[%s120] sm:$0x3]
    %s122 = scalar_lea.vmem [#allocation0], 11
    %123 = vst [vmem:[%s122] sm:$0x1] %v121
    %s124 = scalar_lea.vmem [#allocation0], 42
    %125 = vst [vmem:[%s124] sm:$0x2] %v121
    %s126 = scalar_lea.vmem [#allocation1], 64
    %v127 = vld [vmem:[%s126] sm:$0x3]
    %s128 = scalar_lea.vmem [#allocation0], 16
    %129 = vst [vmem:[%s128] sm:$0x1] %v127
    %s130 = scalar_lea.vmem [#allocation0], 47
    %131 = vst [vmem:[%s130] sm:$0x2] %v127
    %s132 = scalar_lea.vmem [#allocation1], 72
    %v133 = vld [vmem:[%s132] sm:$0x3]
    %s134 = scalar_lea.vmem [#allocation0], 17
    %135 = vst [vmem:[%s134] sm:$0x1] %v133
    %s136 = scalar_lea.vmem [#allocation0], 48
    %137 = vst [vmem:[%s136] sm:$0x2] %v133
    %s138 = scalar_lea.vmem [#allocation1], 80
    %v139 = vld [vmem:[%s138] sm:$0x3]
    %s140 = scalar_lea.vmem [#allocation0], 18
    %141 = vst [vmem:[%s140] sm:$0x1] %v139
    %s142 = scalar_lea.vmem [#allocation0], 49
    %143 = vst [vmem:[%s142] sm:$0x2] %v139
    %s144 = scalar_lea.vmem [#allocation1], 88
    %v145 = vld [vmem:[%s144] sm:$0x3]
    %s146 = scalar_lea.vmem [#allocation0], 19
    %147 = vst [vmem:[%s146] sm:$0x1] %v145
    %s148 = scalar_lea.vmem [#allocation0], 50
    %149 = vst [vmem:[%s148] sm:$0x2] %v145
    %s150 = scalar_lea.vmem [#allocation1], 96
    %v151 = vld [vmem:[%s150] sm:$0x3]
    %s152 = scalar_lea.vmem [#allocation0], 24
    %153 = vst [vmem:[%s152] sm:$0x1] %v151
    %s154 = scalar_lea.vmem [#allocation0], 55
    %155 = vst [vmem:[%s154] sm:$0x2] %v151
    %s156 = scalar_lea.vmem [#allocation1], 104
    %v157 = vld [vmem:[%s156] sm:$0x3]
    %s158 = scalar_lea.vmem [#allocation0], 25
    %159 = vst [vmem:[%s158] sm:$0x1] %v157
    %s160 = scalar_lea.vmem [#allocation0], 56
    %161 = vst [vmem:[%s160] sm:$0x2] %v157
    %s162 = scalar_lea.vmem [#allocation1], 112
    %v163 = vld [vmem:[%s162] sm:$0x3]
    %s164 = scalar_lea.vmem [#allocation0], 26
    %165 = vst [vmem:[%s164] sm:$0x1] %v163
    %s166 = scalar_lea.vmem [#allocation0], 57
    %167 = vst [vmem:[%s166] sm:$0x2] %v163
    %s168 = scalar_lea.vmem [#allocation1], 120
    %v169 = vld [vmem:[%s168] sm:$0x3]
    %s170 = scalar_lea.vmem [#allocation0], 27
    %171 = vst [vmem:[%s170] sm:$0x1] %v169
    %s172 = scalar_lea.vmem [#allocation0], 58
    %173 = vst [vmem:[%s172] sm:$0x2] %v169
    %s175 = sshllo.u32 0, 4
    %v177 = vld [vmem:[#allocation0] sm:%s175]
    %s178 = sshllo.u32 0, 4
    %179 = vst [vmem:[%s1] sm:%s178] %v177
    %s180 = scalar_lea.vmem [#allocation0], 8
    %v181 = vld [vmem:[%s180] sm:%s175]
    %s182 = sshllo.u32 0, 4
    %s183 = scalar_lea.vmem %s1, 4
    %184 = vst [vmem:[%s183] sm:%s182] %v181
    %s185 = scalar_lea.vmem [#allocation0], 16
    %v186 = vld [vmem:[%s185] sm:%s175]
    %s187 = sshllo.u32 0, 4
    %s188 = smul.addr 4, 2
    %s189 = scalar_lea.vmem %s1, %s188
    %190 = vst [vmem:[%s189] sm:%s187] %v186
    %s191 = scalar_lea.vmem [#allocation0], 24
    %v192 = vld [vmem:[%s191] sm:%s175]
    %s193 = sshllo.u32 0, 4
    %s194 = smul.addr 4, 3
    %s195 = scalar_lea.vmem %s1, %s194
    %196 = vst [vmem:[%s195] sm:%s193] %v192
    %s197 = scalar_lea.vmem [#allocation0], 32
    %v198 = vld [vmem:[%s197] sm:%s175]
    %s199 = sshllo.u32 0, 4
    %s200 = smul.addr 4, 4
    %s201 = scalar_lea.vmem %s1, %s200
    %202 = vst [vmem:[%s201] sm:%s199] %v198
    %s203 = scalar_lea.vmem [#allocation0], 40
    %v204 = vld [vmem:[%s203] sm:%s175]
    %s205 = sshllo.u32 0, 4
    %s206 = smul.addr 4, 5
    %s207 = scalar_lea.vmem %s1, %s206
    %208 = vst [vmem:[%s207] sm:%s205] %v204
    %s209 = scalar_lea.vmem [#allocation0], 48
    %v210 = vld [vmem:[%s209] sm:%s175]
    %s211 = sshllo.u32 0, 4
    %s212 = smul.addr 4, 6
    %s213 = scalar_lea.vmem %s1, %s212
    %214 = vst [vmem:[%s213] sm:%s211] %v210
    %s215 = scalar_lea.vmem [#allocation0], 56
    %v216 = vld [vmem:[%s215] sm:%s175]
    %s217 = sshllo.u32 0, 4
    %s218 = smul.addr 4, 7
    %s219 = scalar_lea.vmem %s1, %s218
    %220 = vst [vmem:[%s219] sm:%s217] %v216

// kernel: forward.6
$region0: #{forward.6}
  #allocation0 [shape = 'u32[]', space=smem, size = 0x4, offset = 0x4, fixed_abs, tag = 'smem constant byte address 0x4 - core index']
  #allocation1 [shape = 'u32[144,128]{1,0:T(1,128)}', space=vmem, size = 0x12000, scoped, tag = 'internal scratch']
  %s0 = inlined_call_operand.vmem [shape: f32[4,32,512], index: 0, kind: input, shape index: {}]
  %s1 = inlined_call_operand.hbm [shape: f32[4,512,128], index: 1, kind: input, shape index: {}]
  %s2 = inlined_call_operand.vmem [shape: f32[1,128], index: 2, kind: input, shape index: {}]
  %s3 = inlined_call_operand.vmem [shape: f32[4,32,128], index: 3, kind: output, shape index: {}]
  %s4 = sld [smem:[#allocation0]]
  $region49: #{forward.6} parent=0
    _
  %s6 = ssub.s32 1, %s4
  %s7 = scalar_select 0, %s6, %s4
  $region1: #{forward.6} parent=0
    #allocation2 [shape = 'u8[524288]{0}', space=vmem, size = 0x80000, scoped, tag = 'input window, operand 1']
    #allocation3 [shape = 's32[2]{0}', space=sflag, size = 0x8, scoped, tag = 'scoped memory for forward.6']
    %8 = vsyncpa [#allocation3], 0
    %s9 = scalar_lea.sflag [#allocation3], 1
    %10 = vsyncpa %s9, 0
    loop: start=0, step=1, limit=6
    $region2: #{forward.6} parent=1 // loop_pre_header
      _
    $region3: #{forward.6} parent=1 // loop_header
      %s12 = sphi 0, %s16
      %p13 = scmp.ge.s32.totalorder %s12, 6
      %s19 = sphi 0, %s31
      %s20 = sphi 0, %s27
      %s21 = sphi 0, %s19
      %s22 = sphi 0, %s20
      %s23 = sphi 0, %s21
      %s24 = sphi 0, %s22
      %s36 = sphi 0, %s38
      %s39 = sphi 0, %s36
      %s40 = sphi 0, %s39
      %s56 = sphi 0, %s40
      %s62 = sphi 0, %s64
      %s65 = sphi 0, %s62
      %s66 = sphi 0, %s65
      %s82 = sphi 0, %s66
      %s86 = sphi 0, %s86
      %s88 = sphi 0, %s86
      %s89 = sphi 0, %s88
      %s103 = sphi 0, %s89
      %s111 = sphi 0, %s113
      %s114 = sphi 0, %s111
      %s115 = sphi 0, %s114
      %s131 = sphi 0, %s115
    $region4: #{forward.6} parent=1 // loop_header_branch
      %15 = sbr.rel (%p13) target = $region8
    $region5: #{forward.6} parent=1 // loop_body
      %s17 = ssub.s32 %s12, 1
      %s18 = ssub.s32 %s12, 2
      %s25 = sadd.s32 1, %s20
      %p26 = scmp.ge.s32.totalorder %s25, 1
      %s27 = scalar_select %p26, 0, %s25
      %s28 = sadd.s32 1, %s19
      %s29 = scalar_select %p26, %s28, %s19
      %p30 = scmp.ge.s32.totalorder %s29, 4
      %s31 = scalar_select %p30, 0, %s29
      %s32 = ssub.s32 %s19, %s31
      %s33 = ssub.s32 %s20, %s27
      %s34 = sor.u32 %s32, %s33
      %p35 = scmp.eq.s32.totalorder %s34, 0
      %s37 = sadd.s32 %s36, 1
      %s38 = scalar_select %p35, %s36, %s37
      %p41 = pneg %p35
      %p42 = scmp.eq.s32.totalorder %s12, 3
      %p43 = por %p41, %p42
      %p44 = scmp.ne.s32.totalorder %s36, %s39
      %p45 = scmp.eq.s32.totalorder %s12, 0
      %p46 = por %p44, %p45
      %p47 = scmp.ne.s32.totalorder %s36, %s39
      %p48 = scmp.eq.s32.totalorder %s17, 3
      %p49 = por %p47, %p48
      %p50 = scmp.ne.s32.totalorder %s39, %s40
      %p51 = scmp.eq.s32.totalorder %s17, 0
      %p52 = por %p50, %p51
      %p53 = scmp.ne.s32.totalorder %s39, %s40
      %p54 = scmp.eq.s32.totalorder %s18, 3
      %p55 = por %p53, %p54
      %p57 = scmp.ne.s32.totalorder %s40, %s56
      %p58 = scmp.eq.s32.totalorder %s18, 0
      %p59 = por %p57, %p58
      %s60 = ssub.s32 %s19, %s31
      %p61 = scmp.eq.s32.totalorder %s60, 0
      %s63 = sadd.s32 %s62, 1
      %s64 = scalar_select %p61, %s62, %s63
      %p67 = pneg %p61
      %p68 = scmp.eq.s32.totalorder %s12, 3
      %p69 = por %p67, %p68
      %p70 = scmp.ne.s32.totalorder %s62, %s65
      %p71 = scmp.eq.s32.totalorder %s12, 0
      %p72 = por %p70, %p71
      %p73 = scmp.ne.s32.totalorder %s62, %s65
      %p74 = scmp.eq.s32.totalorder %s17, 3
      %p75 = por %p73, %p74
      %p76 = scmp.ne.s32.totalorder %s65, %s66
      %p77 = scmp.eq.s32.totalorder %s17, 0
      %p78 = por %p76, %p77
      %p79 = scmp.ne.s32.totalorder %s65, %s66
      %p80 = scmp.eq.s32.totalorder %s18, 3
      %p81 = por %p79, %p80
      %p83 = scmp.ne.s32.totalorder %s66, %s82
      %p84 = scmp.eq.s32.totalorder %s18, 0
      %p85 = por %p83, %p84
      %s87 = sadd.s32 %s86, 1
      %p90 = scmp.eq.s32.totalorder %s12, 3
      %p91 = scmp.ne.s32.totalorder %s86, %s88
      %p92 = scmp.eq.s32.totalorder %s12, 0
      %p93 = por %p91, %p92
      %p94 = scmp.ne.s32.totalorder %s86, %s88
      %p95 = scmp.eq.s32.totalorder %s17, 3
      %p96 = por %p94, %p95
      %p97 = scmp.ne.s32.totalorder %s88, %s89
      %p98 = scmp.eq.s32.totalorder %s17, 0
      %p99 = por %p97, %p98
      %p100 = scmp.ne.s32.totalorder %s88, %s89
      %p101 = scmp.eq.s32.totalorder %s18, 3
      %p102 = por %p100, %p101
      %p104 = scmp.ne.s32.totalorder %s89, %s103
      %p105 = scmp.eq.s32.totalorder %s18, 0
      %p106 = por %p104, %p105
      %s107 = ssub.s32 %s19, %s31
      %s108 = ssub.s32 %s20, %s27
      %s109 = sor.u32 %s107, %s108
      %p110 = scmp.eq.s32.totalorder %s109, 0
      %s112 = sadd.s32 %s111, 1
      %s113 = scalar_select %p110, %s111, %s112
      %p116 = pneg %p110
      %p117 = scmp.eq.s32.totalorder %s12, 3
      %p118 = por %p116, %p117
      %p119 = scmp.ne.s32.totalorder %s111, %s114
      %p120 = scmp.eq.s32.totalorder %s12, 0
      %p121 = por %p119, %p120
      %p122 = scmp.ne.s32.totalorder %s111, %s114
      %p123 = scmp.eq.s32.totalorder %s17, 3
      %p124 = por %p122, %p123
      %p125 = scmp.ne.s32.totalorder %s114, %s115
      %p126 = scmp.eq.s32.totalorder %s17, 0
      %p127 = por %p125, %p126
      %p128 = scmp.ne.s32.totalorder %s114, %s115
      %p129 = scmp.eq.s32.totalorder %s18, 3
      %p130 = por %p128, %p129
      %p132 = scmp.ne.s32.totalorder %s115, %s131
      %p133 = scmp.eq.s32.totalorder %s18, 0
      %p134 = por %p132, %p133
      %p135 = scmp.le.s32.totalorder 1, %s12
      %p136 = scmp.lt.s32.totalorder %s12, 5
      %p137 = pnand %p135, %p136
      %p138 = pneg %p137
      // Predicated region
      $region9: #{forward.6} parent=5 // pred_check
        _
      $region10: #{forward.6} parent=5 // pred_check_branch
        %140 = sbr.rel (%p137) target = $region12
      $region11: #{forward.6} parent=5 // pred_region
        %s141 = ssub.s32 %s12, 1
        // Predicated region
        $region13: #{forward.6} parent=11 // pred_check
          %p142 = pneg %p99
        $region14: #{forward.6} parent=11 // pred_check_branch
          %144 = sbr.rel (%p142) target = $region16
        $region15: #{forward.6} parent=11 // pred_region
          _
        $region16: #{forward.6} parent=11 // pred_fallthru
          _
      $region12: #{forward.6} parent=5 // pred_fallthru
        _
      %p145 = scmp.lt.s32.totalorder %s12, 4
      // Predicated region
      $region17: #{forward.6} parent=5 // pred_check
        %p146 = pneg %p145
      $region18: #{forward.6} parent=5 // pred_check_branch
        %148 = sbr.rel (%p146) target = $region20
      $region19: #{forward.6} parent=5 // pred_region
        // Predicated region
        $region21: #{forward.6} parent=19 // pred_check
          %p149 = pneg %p46
        $region22: #{forward.6} parent=19 // pred_check_branch
          %151 = sbr.rel (%p149) target = $region24
        $region23: #{forward.6} parent=19 // pred_region
          %s152 = smul.u32 4, %s20
          %p153 = scmp.lt.s32.totalorder %s19, 3
          %s154 = scalar_select %p153, %s19, 3
          %p155 = scmp.lt.s32.totalorder %s152, 3
          %s156 = scalar_select %p155, %s152, 3
          %s157 = smul.addr %s156, 4
          %s158 = smul.addr %s154, 16
          %s159 = sadd.s32 %s157, %s158
          %s160 = smul.addr %s159, 8
          %s161 = scalar_lea.vmem %s0, %s160
          %s162 = smul.u32 4, %s20
        $region24: #{forward.6} parent=19 // pred_fallthru
          _
        // Predicated region
        $region25: #{forward.6} parent=19 // pred_check
          %p163 = pneg %p72
        $region26: #{forward.6} parent=19 // pred_check_branch
          %165 = sbr.rel (%p163) target = $region28
        $region27: #{forward.6} parent=19 // pred_region
          %s166 = sand.u32 %s62, 1
          %s167 = scalar_lea.sflag [#allocation3], %s166
          %s168 = sand.u32 %s62, 1
          %s169 = smul.addr %s168, 512
          %s170 = scalar_lea.vmem [#allocation2], %s169
          %s172 = ssub.s32 8192, 8192
          %173 = vsyncadd %s167, %s172
          %s174 = smul.addr %s19, 64
          %s175 = smul.addr %s174, 128
          %s176 = scalar_lea.hbm %s1, %s175
          %s177 = sshll.u32 %s170, 4
          %s178 = int_to_ptr.vmem [resolvable:$true] %s177
          %183 = dma.hbm_to_vmem [thread:$0]  %s176, 8192, %s178, %s167, 128, 128, 8
        $region28: #{forward.6} parent=19 // pred_fallthru
          _
      $region20: #{forward.6} parent=5 // pred_fallthru
        _
      %p184 = scmp.le.s32.totalorder 1, %s12
      %p185 = scmp.lt.s32.totalorder %s12, 5
      %p186 = pnand %p184, %p185
      %p187 = pneg %p186
      // Predicated region
      $region29: #{forward.6} parent=5 // pred_check
        _
      $region30: #{forward.6} parent=5 // pred_check_branch
        %189 = sbr.rel (%p186) target = $region32
      $region31: #{forward.6} parent=5 // pred_region
        %s190 = ssub.s32 %s12, 1
        %s191 = sand.u32 %s65, 1
        %s192 = scalar_lea.sflag [#allocation3], %s191
        %s193 = sand.u32 %s65, 1
        %s194 = smul.addr %s193, 512
        %s195 = scalar_lea.vmem [#allocation2], %s194
        // Predicated region
        $region33: #{forward.6} parent=31 // pred_check
          %p196 = pneg %p78
        $region34: #{forward.6} parent=31 // pred_check_branch
          %198 = sbr.rel (%p196) target = $region36
        $region35: #{forward.6} parent=31 // pred_region
          %199 = dma.done %s192, 8192
        $region36: #{forward.6} parent=31 // pred_fallthru
          _
        %s200 = smul.u32 4, %s22
        %p201 = scmp.lt.s32.totalorder %s21, 3
        %s202 = scalar_select %p201, %s21, 3
        %p203 = scmp.lt.s32.totalorder %s200, 3
        %s204 = scalar_select %p203, %s200, 3
        %s205 = smul.addr %s204, 4
        %s206 = smul.addr %s202, 16
        %s207 = sadd.s32 %s205, %s206
        %s208 = smul.addr %s207, 8
        %s209 = scalar_lea.vmem %s0, %s208
        %p210 = pneg %p52
        %p211 = pneg %p49
        %s212 = sand.u32 %s65, 1
        %s213 = scalar_lea.sflag [#allocation3], %s212
        %s214 = sand.u32 %s65, 1
        %s215 = smul.addr %s214, 512
        %s216 = scalar_lea.vmem [#allocation2], %s215
        %p217 = pneg %p78
        %p218 = pneg %p75
        %p219 = pneg %p99
        %p220 = pneg %p96
        %p221 = pneg %p127
        %p222 = pneg %p124
        %s223 = smul.u32 4, %s22
        %p224 = scmp.lt.s32.totalorder %s21, 3
        %s225 = scalar_select %p224, %s21, 3
        %p226 = scmp.lt.s32.totalorder %s223, 3
        %s227 = scalar_select %p226, %s223, 3
        %s228 = smul.addr %s225, 4
        %s229 = sadd.s32 %s227, %s228
        %s230 = smul.addr %s229, 8
        %s231 = scalar_lea.vmem %s3, %s230
        %s232 = smul.u32 4, %s22
        %p233 = scmp.lt.s32.totalorder %s21, 3
        %s234 = scalar_select %p233, %s21, 3
        %p235 = scmp.lt.s32.totalorder %s232, 3
        %s236 = scalar_select %p235, %s232, 3
        %s237 = smul.addr %s236, 4
        %s238 = smul.addr %s234, 16
        %s239 = sadd.s32 %s237, %s238
        %s240 = smul.addr %s239, 8
        %s241 = scalar_lea.vmem %s0, %s240
        %s242 = smul.u32 4, %s22
        %s243 = smul.u32 4, %s22
        %p244 = scmp.lt.s32.totalorder %s21, 3
        %s245 = scalar_select %p244, %s21, 3
        %p246 = scmp.lt.s32.totalorder %s243, 3
        %s247 = scalar_select %p246, %s243, 3
        %s248 = smul.addr %s245, 4
        %s249 = sadd.s32 %s247, %s248
        %s250 = smul.addr %s249, 8
        %s251 = scalar_lea.vmem %s3, %s250
        %s252 = smul.u32 4, %s22
        %v253 = vld [vmem:[%s241] sm:$0xff]
        %v254 = vld [vmem:[%s241 + $0x8] sm:$0xff]
        %v255 = vld [vmem:[%s241 + $0x10] sm:$0xff]
        %v256 = vld [vmem:[%s241 + $0x18] sm:$0xff]
        %v257 = vld [vmem:[%s241 + $0x20] sm:$0xff]
        %v258 = vld [vmem:[%s241 + $0x28] sm:$0xff]
        %v259 = vld [vmem:[%s241 + $0x30] sm:$0xff]
        %v260 = vld [vmem:[%s241 + $0x38] sm:$0xff]
        %v261 = vld [vmem:[%s241 + $0x40] sm:$0xff]
        %v262 = vld [vmem:[%s241 + $0x48] sm:$0xff]
        %v263 = vld [vmem:[%s241 + $0x50] sm:$0xff]
        %v264 = vld [vmem:[%s241 + $0x58] sm:$0xff]
        %v265 = vld [vmem:[%s241 + $0x60] sm:$0xff]
        %v266 = vld [vmem:[%s241 + $0x68] sm:$0xff]
        %v267 = vld [vmem:[%s241 + $0x70] sm:$0xff]
        %v268 = vld [vmem:[%s241 + $0x78] sm:$0xff]
        %v269 = vld [vmem:[%s195] sm:$0xff]
        %v270 = vld [vmem:[%s195 + $0x8] sm:$0xff]
        %v271 = vld [vmem:[%s195 + $0x10] sm:$0xff]
        %v272 = vld [vmem:[%s195 + $0x18] sm:$0xff]
        %v273 = vld [vmem:[%s195 + $0x20] sm:$0xff]
        %v274 = vld [vmem:[%s195 + $0x28] sm:$0xff]
        %v275 = vld [vmem:[%s195 + $0x30] sm:$0xff]
        %v276 = vld [vmem:[%s195 + $0x38] sm:$0xff]
        %v277 = vld [vmem:[%s195 + $0x40] sm:$0xff]
        %v278 = vld [vmem:[%s195 + $0x48] sm:$0xff]
        %v279 = vld [vmem:[%s195 + $0x50] sm:$0xff]
        %v280 = vld [vmem:[%s195 + $0x58] sm:$0xff]
        %v281 = vld [vmem:[%s195 + $0x60] sm:$0xff]
        %v282 = vld [vmem:[%s195 + $0x68] sm:$0xff]
        %v283 = vld [vmem:[%s195 + $0x70] sm:$0xff]
        %v284 = vld [vmem:[%s195 + $0x78] sm:$0xff]
        %v285 = vld [vmem:[%s195 + $0x80] sm:$0xff]
        %v286 = vld [vmem:[%s195 + $0x88] sm:$0xff]
        %v287 = vld [vmem:[%s195 + $0x90] sm:$0xff]
        %v288 = vld [vmem:[%s195 + $0x98] sm:$0xff]
        %v289 = vld [vmem:[%s195 + $0xa0] sm:$0xff]
        %v290 = vld [vmem:[%s195 + $0xa8] sm:$0xff]
        %v291 = vld [vmem:[%s195 + $0xb0] sm:$0xff]
        %v292 = vld [vmem:[%s195 + $0xb8] sm:$0xff]
        %v293 = vld [vmem:[%s195 + $0xc0] sm:$0xff]
        %v294 = vld [vmem:[%s195 + $0xc8] sm:$0xff]
        %v295 = vld [vmem:[%s195 + $0xd0] sm:$0xff]
        %v296 = vld [vmem:[%s195 + $0xd8] sm:$0xff]
        %v297 = vld [vmem:[%s195 + $0xe0] sm:$0xff]
        %v298 = vld [vmem:[%s195 + $0xe8] sm:$0xff]
        %v299 = vld [vmem:[%s195 + $0xf0] sm:$0xff]
        %v300 = vld [vmem:[%s195 + $0xf8] sm:$0xff]
        %v301 = vld [vmem:[%s195 + $0x100] sm:$0xff]
        %v302 = vld [vmem:[%s195 + $0x108] sm:$0xff]
        %v303 = vld [vmem:[%s195 + $0x110] sm:$0xff]
        %v304 = vld [vmem:[%s195 + $0x118] sm:$0xff]
        %v305 = vld [vmem:[%s195 + $0x120] sm:$0xff]
        %v306 = vld [vmem:[%s195 + $0x128] sm:$0xff]
        %v307 = vld [vmem:[%s195 + $0x130] sm:$0xff]
        %v308 = vld [vmem:[%s195 + $0x138] sm:$0xff]
        %v309 = vld [vmem:[%s195 + $0x140] sm:$0xff]
        %v310 = vld [vmem:[%s195 + $0x148] sm:$0xff]
        %v311 = vld [vmem:[%s195 + $0x150] sm:$0xff]
        %v312 = vld [vmem:[%s195 + $0x158] sm:$0xff]
        %v313 = vld [vmem:[%s195 + $0x160] sm:$0xff]
        %v314 = vld [vmem:[%s195 + $0x168] sm:$0xff]
        %v315 = vld [vmem:[%s195 + $0x170] sm:$0xff]
        %v316 = vld [vmem:[%s195 + $0x178] sm:$0xff]
        %v317 = vld [vmem:[%s195 + $0x180] sm:$0xff]
        %v318 = vld [vmem:[%s195 + $0x188] sm:$0xff]
        %v319 = vld [vmem:[%s195 + $0x190] sm:$0xff]
        %v320 = vld [vmem:[%s195 + $0x198] sm:$0xff]
        %v321 = vld [vmem:[%s195 + $0x1a0] sm:$0xff]
        %v322 = vld [vmem:[%s195 + $0x1a8] sm:$0xff]
        %v323 = vld [vmem:[%s195 + $0x1b0] sm:$0xff]
        %v324 = vld [vmem:[%s195 + $0x1b8] sm:$0xff]
        %v325 = vld [vmem:[%s195 + $0x1c0] sm:$0xff]
        %v326 = vld [vmem:[%s195 + $0x1c8] sm:$0xff]
        %v327 = vld [vmem:[%s195 + $0x1d0] sm:$0xff]
        %v328 = vld [vmem:[%s195 + $0x1d8] sm:$0xff]
        %v329 = vld [vmem:[%s195 + $0x1e0] sm:$0xff]
        %v330 = vld [vmem:[%s195 + $0x1e8] sm:$0xff]
        %v331 = vld [vmem:[%s195 + $0x1f0] sm:$0xff]
        %v332 = vld [vmem:[%s195 + $0x1f8] sm:$0xff]
        %v333 = vld [vmem:[%s2] sm:$0x1]
        %v335 = vlaneseq
        %v336 = vshrl.u32 %v335, 7
        %v337 = vsub.s32 0, %v336
        %v338 = vrot.slane %v333, %v337
        %340 = vmatprep.subr.mxu0 0.0
        %341 = vmatpush1.msra.mxu0 %v269
        %342 = vmatprep.subr.mxu0 0.0
        %343 = vmatpush1.msra.mxu0 %v270
        %344 = vmatprep.subr.mxu0 0.0
        %345 = vmatpush1.msra.mxu0 %v271
        %346 = vmatprep.subr.mxu0 0.0
        %347 = vmatpush1.msra.mxu0 %v272
        %348 = vmatprep.subr.mxu0 0.0
        %349 = vmatpush1.msra.mxu0 %v273
        %350 = vmatprep.subr.mxu0 0.0
        %351 = vmatpush1.msra.mxu0 %v274
        %352 = vmatprep.subr.mxu0 0.0
        %353 = vmatpush1.msra.mxu0 %v275
        %354 = vmatprep.subr.mxu0 0.0
        %355 = vmatpush1.msra.mxu0 %v276
        %356 = vmatprep.subr.mxu0 0.0
        %357 = vmatpush1.msra.mxu0 %v277
        %358 = vmatprep.subr.mxu0 0.0
        %359 = vmatpush1.msra.mxu0 %v278
        %360 = vmatprep.subr.mxu0 0.0
        %361 = vmatpush1.msra.mxu0 %v279
        %362 = vmatprep.subr.mxu0 0.0
        %363 = vmatpush1.msra.mxu0 %v280
        %364 = vmatprep.subr.mxu0 0.0
        %365 = vmatpush1.msra.mxu0 %v281
        %366 = vmatprep.subr.mxu0 0.0
        %367 = vmatpush1.msra.mxu0 %v282
        %368 = vmatprep.subr.mxu0 0.0
        %369 = vmatpush1.msra.mxu0 %v283
        %370 = vmatprep.subr.mxu0 0.0
        %371 = vmatpush1.msra.mxu0 %v284
        %372 = vmatprep.subr.mxu0 0.0
        %373 = vmatpush1.msra.mxu0 %v285
        %374 = vmatprep.subr.mxu0 0.0
        %375 = vmatpush1.msra.mxu0 %v286
        %376 = vmatprep.subr.mxu0 0.0
        %377 = vmatpush1.msra.mxu0 %v287
        %378 = vmatprep.subr.mxu0 0.0
        %379 = vmatpush1.msra.mxu0 %v288
        %380 = vmatprep.subr.mxu0 0.0
        %381 = vmatpush1.msra.mxu0 %v289
        %382 = vmatprep.subr.mxu0 0.0
        %383 = vmatpush1.msra.mxu0 %v290
        %384 = vmatprep.subr.mxu0 0.0
        %385 = vmatpush1.msra.mxu0 %v291
        %386 = vmatprep.subr.mxu0 0.0
        %387 = vmatpush1.msra.mxu0 %v292
        %388 = vmatprep.subr.mxu0 0.0
        %389 = vmatpush1.msra.mxu0 %v293
        %390 = vmatprep.subr.mxu0 0.0
        %391 = vmatpush1.msra.mxu0 %v294
        %392 = vmatprep.subr.mxu0 0.0
        %393 = vmatpush1.msra.mxu0 %v295
        %394 = vmatprep.subr.mxu0 0.0
        %395 = vmatpush1.msra.mxu0 %v296
        %396 = vmatprep.subr.mxu0 0.0
        %397 = vmatpush1.msra.mxu0 %v297
        %398 = vmatprep.subr.mxu0 0.0
        %399 = vmatpush1.msra.mxu0 %v298
        %400 = vmatprep.subr.mxu0 0.0
        %401 = vmatpush1.msra.mxu0 %v299
        %402 = vmatprep.subr.mxu0 0.0
        %403 = vmatpush1.msra.mxu0 %v300
        %404 = vmatprep.mubr.f32.mxu0 %v254
        %405 = vmatmul.mubr.f32.gmra.mrb[0].mxu0 %v253
        %v406 = vpop.f32.mrb[0].mxu0
        %v407 = vadd.f32 %v338, %v406
        %v408 = vpop.f32.mrb[0].mxu0
        %409 = vmatprep.mubr.f32.mxu0 %v258
        %410 = vmatmul.mubr.f32.gmra.mrb[0].mxu0 %v257
        %v411 = vpop.f32.mrb[0].mxu0
        %v412 = vadd.f32 %v338, %v411
        %v413 = vpop.f32.mrb[0].mxu0
        %414 = vmatprep.mubr.f32.mxu0 %v262
        %415 = vmatmul.mubr.f32.gmra.mrb[0].mxu0 %v261
        %v416 = vpop.f32.mrb[0].mxu0
        %v417 = vadd.f32 %v338, %v416
        %v418 = vpop.f32.mrb[0].mxu0
        %419 = vmatprep.mubr.f32.mxu0 %v266
        %420 = vmatmul.mubr.f32.gmra.mrb[0].mxu0 %v265
        %v421 = vpop.f32.mrb[0].mxu0
        %v422 = vadd.f32 %v338, %v421
        %v423 = vpop.f32.mrb[0].mxu0
        %424 = vdwg.mxu0
        %425 = vmatprep.subr.mxu0 0.0
        %426 = vmatpush1.msra.mxu0 %v301
        %427 = vmatprep.subr.mxu0 0.0
        %428 = vmatpush1.msra.mxu0 %v302
        %429 = vmatprep.subr.mxu0 0.0
        %430 = vmatpush1.msra.mxu0 %v303
        %431 = vmatprep.subr.mxu0 0.0
        %432 = vmatpush1.msra.mxu0 %v304
        %433 = vmatprep.subr.mxu0 0.0
        %434 = vmatpush1.msra.mxu0 %v305
        %435 = vmatprep.subr.mxu0 0.0
        %436 = vmatpush1.msra.mxu0 %v306
        %437 = vmatprep.subr.mxu0 0.0
        %438 = vmatpush1.msra.mxu0 %v307
        %439 = vmatprep.subr.mxu0 0.0
        %440 = vmatpush1.msra.mxu0 %v308
        %441 = vmatprep.subr.mxu0 0.0
        %442 = vmatpush1.msra.mxu0 %v309
        %443 = vmatprep.subr.mxu0 0.0
        %444 = vmatpush1.msra.mxu0 %v310
        %445 = vmatprep.subr.mxu0 0.0
        %446 = vmatpush1.msra.mxu0 %v311
        %447 = vmatprep.subr.mxu0 0.0
        %448 = vmatpush1.msra.mxu0 %v312
        %449 = vmatprep.subr.mxu0 0.0
        %450 = vmatpush1.msra.mxu0 %v313
        %451 = vmatprep.subr.mxu0 0.0
        %452 = vmatpush1.msra.mxu0 %v314
        %453 = vmatprep.subr.mxu0 0.0
        %454 = vmatpush1.msra.mxu0 %v315
        %455 = vmatprep.subr.mxu0 0.0
        %456 = vmatpush1.msra.mxu0 %v316
        %457 = vmatprep.subr.mxu0 0.0
        %458 = vmatpush1.msra.mxu0 %v317
        %459 = vmatprep.subr.mxu0 0.0
        %460 = vmatpush1.msra.mxu0 %v318
        %461 = vmatprep.subr.mxu0 0.0
        %462 = vmatpush1.msra.mxu0 %v319
        %463 = vmatprep.subr.mxu0 0.0
        %464 = vmatpush1.msra.mxu0 %v320
        %465 = vmatprep.subr.mxu0 0.0
        %466 = vmatpush1.msra.mxu0 %v321
        %467 = vmatprep.subr.mxu0 0.0
        %468 = vmatpush1.msra.mxu0 %v322
        %469 = vmatprep.subr.mxu0 0.0
        %470 = vmatpush1.msra.mxu0 %v323
        %471 = vmatprep.subr.mxu0 0.0
        %472 = vmatpush1.msra.mxu0 %v324
        %473 = vmatprep.subr.mxu0 0.0
        %474 = vmatpush1.msra.mxu0 %v325
        %475 = vmatprep.subr.mxu0 0.0
        %476 = vmatpush1.msra.mxu0 %v326
        %477 = vmatprep.subr.mxu0 0.0
        %478 = vmatpush1.msra.mxu0 %v327
        %479 = vmatprep.subr.mxu0 0.0
        %480 = vmatpush1.msra.mxu0 %v328
        %481 = vmatprep.subr.mxu0 0.0
        %482 = vmatpush1.msra.mxu0 %v329
        %483 = vmatprep.subr.mxu0 0.0
        %484 = vmatpush1.msra.mxu0 %v330
        %485 = vmatprep.subr.mxu0 0.0
        %486 = vmatpush1.msra.mxu0 %v331
        %487 = vmatprep.subr.mxu0 0.0
        %488 = vmatpush1.msra.mxu0 %v332
        %489 = vmatprep.mubr.f32.mxu0 %v256
        %490 = vmatmul.mubr.f32.gmra.mrb[0].mxu0 %v255
        %v491 = vpop.f32.mrb[0].mxu0
        %v492 = vadd.f32 %v407, %v491
        %v493 = vpop.f32.mrb[0].mxu0
        %494 = vmatprep.mubr.f32.mxu0 %v260
        %495 = vmatmul.mubr.f32.gmra.mrb[0].mxu0 %v259
        %v496 = vpop.f32.mrb[0].mxu0
        %v497 = vadd.f32 %v412, %v496
        %v498 = vpop.f32.mrb[0].mxu0
        %499 = vmatprep.mubr.f32.mxu0 %v264
        %500 = vmatmul.mubr.f32.gmra.mrb[0].mxu0 %v263
        %v501 = vpop.f32.mrb[0].mxu0
        %v502 = vadd.f32 %v417, %v501
        %v503 = vpop.f32.mrb[0].mxu0
        %504 = vmatprep.mubr.f32.mxu0 %v268
        %505 = vmatmul.mubr.f32.gmra.mrb[0].mxu0 %v267
        %v506 = vpop.f32.mrb[0].mxu0
        %v507 = vadd.f32 %v422, %v506
        %v508 = vpop.f32.mrb[0].mxu0
        %509 = vdwg.mxu0
        %v510 = vmax.f32 %v492, 0.0
        %v511 = vmax.f32 %v497, 0.0
        %v512 = vmax.f32 %v502, 0.0
        %v513 = vmax.f32 %v507, 0.0
        %514 = vst [vmem:[%s251] sm:$0xff] %v510
        %515 = vst [vmem:[%s251 + $0x8] sm:$0xff] %v511
        %516 = vst [vmem:[%s251 + $0x10] sm:$0xff] %v512
        %517 = vst [vmem:[%s251 + $0x18] sm:$0xff] %v513
        %s518 = smul.u32 4, %s22
        %p519 = scmp.lt.s32.totalorder %s21, 3
        %s520 = scalar_select %p519, %s21, 3
        %p521 = scmp.lt.s32.totalorder %s518, 3
        %s522 = scalar_select %p521, %s518, 3
        %s523 = smul.addr %s520, 4
        %s524 = sadd.s32 %s522, %s523
        %s525 = smul.addr %s524, 8
        %s526 = scalar_lea.vmem %s3, %s525
        // Predicated region
        $region37: #{forward.6} parent=31 // pred_check
          %p527 = pneg %p124
        $region38: #{forward.6} parent=31 // pred_check_branch
          %529 = sbr.rel (%p527) target = $region40
        $region39: #{forward.6} parent=31 // pred_region
          %s530 = smul.u32 4, %s22
        $region40: #{forward.6} parent=31 // pred_fallthru
          _
      $region32: #{forward.6} parent=5 // pred_fallthru
        _
      %p531 = scmp.le.s32.totalorder 2, %s12
      // Predicated region
      $region41: #{forward.6} parent=5 // pred_check
        %p532 = pneg %p531
      $region42: #{forward.6} parent=5 // pred_check_branch
        %534 = sbr.rel (%p532) target = $region44
      $region43: #{forward.6} parent=5 // pred_region
        %s535 = ssub.s32 %s12, 2
        // Predicated region
        $region45: #{forward.6} parent=43 // pred_check
          %p536 = pneg %p130
        $region46: #{forward.6} parent=43 // pred_check_branch
          %538 = sbr.rel (%p536) target = $region48
        $region47: #{forward.6} parent=43 // pred_region
          %s539 = smul.u32 4, %s24
          %p540 = scmp.lt.s32.totalorder %s23, 3
          %s541 = scalar_select %p540, %s23, 3
          %p542 = scmp.lt.s32.totalorder %s539, 3
          %s543 = scalar_select %p542, %s539, 3
          %s544 = smul.addr %s541, 4
          %s545 = sadd.s32 %s543, %s544
          %s546 = smul.addr %s545, 8
          %s547 = scalar_lea.vmem %s3, %s546
        $region48: #{forward.6} parent=43 // pred_fallthru
          _
      $region44: #{forward.6} parent=5 // pred_fallthru
        _
    $region6: #{forward.6} parent=1 // loop_footer
      %s16 = sadd.s32 1, %s12
    $region7: #{forward.6} parent=1 // loop_footer_branch
      %11 = sbr.rel target = $region3
    $region8: #{forward.6} parent=1 // loop_exit
      _
    %548 = vsyncpa [#allocation3], 1
    %s549 = scalar_lea.sflag [#allocation3], 1
    %550 = vsyncpa %s549, 1

// kernel: forward.5
$region0: #{forward.5}
  #allocation0 [shape = 'u32[]', space=smem, size = 0x4, offset = 0x4, fixed_abs, tag = 'smem constant byte address 0x4 - core index']
  #allocation1 [shape = 'u32[144,128]{1,0:T(1,128)}', space=vmem, size = 0x12000, scoped, tag = 'internal scratch']
  %s0 = inlined_call_operand.vmem [shape: f32[1,8,128], index: 0, kind: input, shape index: {}]
  %s1 = inlined_call_operand.hbm [shape: f32[1,128,2048], index: 1, kind: input, shape index: {}]
  %s2 = inlined_call_operand.vmem [shape: f32[1,2048], index: 2, kind: input, shape index: {}]
  %s3 = inlined_call_operand.vmem [shape: f32[1,8,2048], index: 3, kind: output, shape index: {}]
  %s4 = sld [smem:[#allocation0]]
  $region26: #{forward.5} parent=0
    _
  %s6 = ssub.s32 1, %s4
  %s7 = scalar_select 0, %s6, %s4
  $region1: #{forward.5} parent=0
    #allocation2 [shape = 'u8[1048576]{0}', space=vmem, size = 0x100000, scoped, tag = 'input window, operand 1, single buffered']
    #allocation3 [shape = 's32[1]{0}', space=sflag, size = 0x4, scoped, tag = 'scoped memory for forward.5']
    %8 = vsyncpa [#allocation3], 0
    // Predicated region
    $region2: #{forward.5} parent=1 // pred_check
      _
    $region3: #{forward.5} parent=1 // pred_check_branch
      %10 = sbr.rel (0) target = $region5
    $region4: #{forward.5} parent=1 // pred_region
      _
    $region5: #{forward.5} parent=1 // pred_fallthru
      _
    // Predicated region
    $region6: #{forward.5} parent=1 // pred_check
      _
    $region7: #{forward.5} parent=1 // pred_check_branch
      %12 = sbr.rel (0) target = $region9
    $region8: #{forward.5} parent=1 // pred_region
      %s14 = ssub.s32 32768, 32768
      %15 = vsyncadd [#allocation3], %s14
      %s16 = sshll.u32 [#allocation2], 4
      %s17 = int_to_ptr.vmem [resolvable:$true] %s16
      %22 = dma.hbm_to_vmem [thread:$0]  %s1, 32768, %s17, [#allocation3], 2048, 2048, 128
    $region9: #{forward.5} parent=1 // pred_fallthru
      _
    // Predicated region
    $region10: #{forward.5} parent=1 // pred_check
      _
    $region11: #{forward.5} parent=1 // pred_check_branch
      %24 = sbr.rel (0) target = $region13
    $region12: #{forward.5} parent=1 // pred_region
      _
    $region13: #{forward.5} parent=1 // pred_fallthru
      _
    // Predicated region
    $region14: #{forward.5} parent=1 // pred_check
      _
    $region15: #{forward.5} parent=1 // pred_check_branch
      %26 = sbr.rel (0) target = $region17
    $region16: #{forward.5} parent=1 // pred_region
      %27 = dma.done [#allocation3], 32768
    $region17: #{forward.5} parent=1 // pred_fallthru
      _
    %v28 = vld [vmem:[%s0] sm:$0xff]
    %v29 = vld [vmem:[#allocation2] sm:$0xff]
    %v30 = vld [vmem:[#allocation2 + $0x8] sm:$0xff]
    %v31 = vld [vmem:[#allocation2 + $0x10] sm:$0xff]
    %v32 = vld [vmem:[#allocation2 + $0x18] sm:$0xff]
    %v33 = vld [vmem:[#allocation2 + $0x20] sm:$0xff]
    %v34 = vld [vmem:[#allocation2 + $0x28] sm:$0xff]
    %v35 = vld [vmem:[#allocation2 + $0x30] sm:$0xff]
    %v36 = vld [vmem:[#allocation2 + $0x38] sm:$0xff]
    %v37 = vld [vmem:[#allocation2 + $0x40] sm:$0xff]
    %v38 = vld [vmem:[#allocation2 + $0x48] sm:$0xff]
    %v39 = vld [vmem:[#allocation2 + $0x50] sm:$0xff]
    %v40 = vld [vmem:[#allocation2 + $0x58] sm:$0xff]
    %v41 = vld [vmem:[#allocation2 + $0x60] sm:$0xff]
    %v42 = vld [vmem:[#allocation2 + $0x68] sm:$0xff]
    %v43 = vld [vmem:[#allocation2 + $0x70] sm:$0xff]
    %v44 = vld [vmem:[#allocation2 + $0x78] sm:$0xff]
    %v45 = vld [vmem:[#allocation2 + $0x80] sm:$0xff]
    %v46 = vld [vmem:[#allocation2 + $0x88] sm:$0xff]
    %v47 = vld [vmem:[#allocation2 + $0x90] sm:$0xff]
    %v48 = vld [vmem:[#allocation2 + $0x98] sm:$0xff]
    %v49 = vld [vmem:[#allocation2 + $0xa0] sm:$0xff]
    %v50 = vld [vmem:[#allocation2 + $0xa8] sm:$0xff]
    %v51 = vld [vmem:[#allocation2 + $0xb0] sm:$0xff]
    %v52 = vld [vmem:[#allocation2 + $0xb8] sm:$0xff]
    %v53 = vld [vmem:[#allocation2 + $0xc0] sm:$0xff]
    %v54 = vld [vmem:[#allocation2 + $0xc8] sm:$0xff]
    %v55 = vld [vmem:[#allocation2 + $0xd0] sm:$0xff]
    %v56 = vld [vmem:[#allocation2 + $0xd8] sm:$0xff]
    %v57 = vld [vmem:[#allocation2 + $0xe0] sm:$0xff]
    %v58 = vld [vmem:[#allocation2 + $0xe8] sm:$0xff]
    %v59 = vld [vmem:[#allocation2 + $0xf0] sm:$0xff]
    %v60 = vld [vmem:[#allocation2 + $0xf8] sm:$0xff]
    %v61 = vld [vmem:[#allocation2 + $0x100] sm:$0xff]
    %v62 = vld [vmem:[#allocation2 + $0x108] sm:$0xff]
    %v63 = vld [vmem:[#allocation2 + $0x110] sm:$0xff]
    %v64 = vld [vmem:[#allocation2 + $0x118] sm:$0xff]
    %v65 = vld [vmem:[#allocation2 + $0x120] sm:$0xff]
    %v66 = vld [vmem:[#allocation2 + $0x128] sm:$0xff]
    %v67 = vld [vmem:[#allocation2 + $0x130] sm:$0xff]
    %v68 = vld [vmem:[#allocation2 + $0x138] sm:$0xff]
    %v69 = vld [vmem:[#allocation2 + $0x140] sm:$0xff]
    %v70 = vld [vmem:[#allocation2 + $0x148] sm:$0xff]
    %v71 = vld [vmem:[#allocation2 + $0x150] sm:$0xff]
    %v72 = vld [vmem:[#allocation2 + $0x158] sm:$0xff]
    %v73 = vld [vmem:[#allocation2 + $0x160] sm:$0xff]
    %v74 = vld [vmem:[#allocation2 + $0x168] sm:$0xff]
    %v75 = vld [vmem:[#allocation2 + $0x170] sm:$0xff]
    %v76 = vld [vmem:[#allocation2 + $0x178] sm:$0xff]
    %v77 = vld [vmem:[#allocation2 + $0x180] sm:$0xff]
    %v78 = vld [vmem:[#allocation2 + $0x188] sm:$0xff]
    %v79 = vld [vmem:[#allocation2 + $0x190] sm:$0xff]
    %v80 = vld [vmem:[#allocation2 + $0x198] sm:$0xff]
    %v81 = vld [vmem:[#allocation2 + $0x1a0] sm:$0xff]
    %v82 = vld [vmem:[#allocation2 + $0x1a8] sm:$0xff]
    %v83 = vld [vmem:[#allocation2 + $0x1b0] sm:$0xff]
    %v84 = vld [vmem:[#allocation2 + $0x1b8] sm:$0xff]
    %v85 = vld [vmem:[#allocation2 + $0x1c0] sm:$0xff]
    %v86 = vld [vmem:[#allocation2 + $0x1c8] sm:$0xff]
    %v87 = vld [vmem:[#allocation2 + $0x1d0] sm:$0xff]
    %v88 = vld [vmem:[#allocation2 + $0x1d8] sm:$0xff]
    %v89 = vld [vmem:[#allocation2 + $0x1e0] sm:$0xff]
    %v90 = vld [vmem:[#allocation2 + $0x1e8] sm:$0xff]
    %v91 = vld [vmem:[#allocation2 + $0x1f0] sm:$0xff]
    %v92 = vld [vmem:[#allocation2 + $0x1f8] sm:$0xff]
    %v93 = vld [vmem:[#allocation2 + $0x200] sm:$0xff]
    %v94 = vld [vmem:[#allocation2 + $0x208] sm:$0xff]
    %v95 = vld [vmem:[#allocation2 + $0x210] sm:$0xff]
    %v96 = vld [vmem:[#allocation2 + $0x218] sm:$0xff]
    %v97 = vld [vmem:[#allocation2 + $0x220] sm:$0xff]
    %v98 = vld [vmem:[#allocation2 + $0x228] sm:$0xff]
    %v99 = vld [vmem:[#allocation2 + $0x230] sm:$0xff]
    %v100 = vld [vmem:[#allocation2 + $0x238] sm:$0xff]
    %v101 = vld [vmem:[#allocation2 + $0x240] sm:$0xff]
    %v102 = vld [vmem:[#allocation2 + $0x248] sm:$0xff]
    %v103 = vld [vmem:[#allocation2 + $0x250] sm:$0xff]
    %v104 = vld [vmem:[#allocation2 + $0x258] sm:$0xff]
    %v105 = vld [vmem:[#allocation2 + $0x260] sm:$0xff]
    %v106 = vld [vmem:[#allocation2 + $0x268] sm:$0xff]
    %v107 = vld [vmem:[#allocation2 + $0x270] sm:$0xff]
    %v108 = vld [vmem:[#allocation2 + $0x278] sm:$0xff]
    %v109 = vld [vmem:[#allocation2 + $0x280] sm:$0xff]
    %v110 = vld [vmem:[#allocation2 + $0x288] sm:$0xff]
    %v111 = vld [vmem:[#allocation2 + $0x290] sm:$0xff]
    %v112 = vld [vmem:[#allocation2 + $0x298] sm:$0xff]
    %v113 = vld [vmem:[#allocation2 + $0x2a0] sm:$0xff]
    %v114 = vld [vmem:[#allocation2 + $0x2a8] sm:$0xff]
    %v115 = vld [vmem:[#allocation2 + $0x2b0] sm:$0xff]
    %v116 = vld [vmem:[#allocation2 + $0x2b8] sm:$0xff]
    %v117 = vld [vmem:[#allocation2 + $0x2c0] sm:$0xff]
    %v118 = vld [vmem:[#allocation2 + $0x2c8] sm:$0xff]
    %v119 = vld [vmem:[#allocation2 + $0x2d0] sm:$0xff]
    %v120 = vld [vmem:[#allocation2 + $0x2d8] sm:$0xff]
    %v121 = vld [vmem:[#allocation2 + $0x2e0] sm:$0xff]
    %v122 = vld [vmem:[#allocation2 + $0x2e8] sm:$0xff]
    %v123 = vld [vmem:[#allocation2 + $0x2f0] sm:$0xff]
    %v124 = vld [vmem:[#allocation2 + $0x2f8] sm:$0xff]
    %v125 = vld [vmem:[#allocation2 + $0x300] sm:$0xff]
    %v126 = vld [vmem:[#allocation2 + $0x308] sm:$0xff]
    %v127 = vld [vmem:[#allocation2 + $0x310] sm:$0xff]
    %v128 = vld [vmem:[#allocation2 + $0x318] sm:$0xff]
    %v129 = vld [vmem:[#allocation2 + $0x320] sm:$0xff]
    %v130 = vld [vmem:[#allocation2 + $0x328] sm:$0xff]
    %v131 = vld [vmem:[#allocation2 + $0x330] sm:$0xff]
    %v132 = vld [vmem:[#allocation2 + $0x338] sm:$0xff]
    %v133 = vld [vmem:[#allocation2 + $0x340] sm:$0xff]
    %v134 = vld [vmem:[#allocation2 + $0x348] sm:$0xff]
    %v135 = vld [vmem:[#allocation2 + $0x350] sm:$0xff]
    %v136 = vld [vmem:[#allocation2 + $0x358] sm:$0xff]
    %v137 = vld [vmem:[#allocation2 + $0x360] sm:$0xff]
    %v138 = vld [vmem:[#allocation2 + $0x368] sm:$0xff]
    %v139 = vld [vmem:[#allocation2 + $0x370] sm:$0xff]
    %v140 = vld [vmem:[#allocation2 + $0x378] sm:$0xff]
    %v141 = vld [vmem:[#allocation2 + $0x380] sm:$0xff]
    %v142 = vld [vmem:[#allocation2 + $0x388] sm:$0xff]
    %v143 = vld [vmem:[#allocation2 + $0x390] sm:$0xff]
    %v144 = vld [vmem:[#allocation2 + $0x398] sm:$0xff]
    %v145 = vld [vmem:[#allocation2 + $0x3a0] sm:$0xff]
    %v146 = vld [vmem:[#allocation2 + $0x3a8] sm:$0xff]
    %v147 = vld [vmem:[#allocation2 + $0x3b0] sm:$0xff]
    %v148 = vld [vmem:[#allocation2 + $0x3b8] sm:$0xff]
    %v149 = vld [vmem:[#allocation2 + $0x3c0] sm:$0xff]
    %v150 = vld [vmem:[#allocation2 + $0x3c8] sm:$0xff]
    %v151 = vld [vmem:[#allocation2 + $0x3d0] sm:$0xff]
    %v152 = vld [vmem:[#allocation2 + $0x3d8] sm:$0xff]
    %v153 = vld [vmem:[#allocation2 + $0x3e0] sm:$0xff]
    %v154 = vld [vmem:[#allocation2 + $0x3e8] sm:$0xff]
    %v155 = vld [vmem:[#allocation2 + $0x3f0] sm:$0xff]
    %v156 = vld [vmem:[#allocation2 + $0x3f8] sm:$0xff]
    %v157 = vld [vmem:[#allocation2 + $0x400] sm:$0xff]
    %v158 = vld [vmem:[#allocation2 + $0x408] sm:$0xff]
    %v159 = vld [vmem:[#allocation2 + $0x410] sm:$0xff]
    %v160 = vld [vmem:[#allocation2 + $0x418] sm:$0xff]
    %v161 = vld [vmem:[#allocation2 + $0x420] sm:$0xff]
    %v162 = vld [vmem:[#allocation2 + $0x428] sm:$0xff]
    %v163 = vld [vmem:[#allocation2 + $0x430] sm:$0xff]
    %v164 = vld [vmem:[#allocation2 + $0x438] sm:$0xff]
    %v165 = vld [vmem:[#allocation2 + $0x440] sm:$0xff]
    %v166 = vld [vmem:[#allocation2 + $0x448] sm:$0xff]
    %v167 = vld [vmem:[#allocation2 + $0x450] sm:$0xff]
    %v168 = vld [vmem:[#allocation2 + $0x458] sm:$0xff]
    %v169 = vld [vmem:[#allocation2 + $0x460] sm:$0xff]
    %v170 = vld [vmem:[#allocation2 + $0x468] sm:$0xff]
    %v171 = vld [vmem:[#allocation2 + $0x470] sm:$0xff]
    %v172 = vld [vmem:[#allocation2 + $0x478] sm:$0xff]
    %v173 = vld [vmem:[#allocation2 + $0x480] sm:$0xff]
    %v174 = vld [vmem:[#allocation2 + $0x488] sm:$0xff]
    %v175 = vld [vmem:[#allocation2 + $0x490] sm:$0xff]
    %v176 = vld [vmem:[#allocation2 + $0x498] sm:$0xff]
    %v177 = vld [vmem:[#allocation2 + $0x4a0] sm:$0xff]
    %v178 = vld [vmem:[#allocation2 + $0x4a8] sm:$0xff]
    %v179 = vld [vmem:[#allocation2 + $0x4b0] sm:$0xff]
    %v180 = vld [vmem:[#allocation2 + $0x4b8] sm:$0xff]
    %v181 = vld [vmem:[#allocation2 + $0x4c0] sm:$0xff]
    %v182 = vld [vmem:[#allocation2 + $0x4c8] sm:$0xff]
    %v183 = vld [vmem:[#allocation2 + $0x4d0] sm:$0xff]
    %v184 = vld [vmem:[#allocation2 + $0x4d8] sm:$0xff]
    %v185 = vld [vmem:[#allocation2 + $0x4e0] sm:$0xff]
    %v186 = vld [vmem:[#allocation2 + $0x4e8] sm:$0xff]
    %v187 = vld [vmem:[#allocation2 + $0x4f0] sm:$0xff]
    %v188 = vld [vmem:[#allocation2 + $0x4f8] sm:$0xff]
    %v189 = vld [vmem:[#allocation2 + $0x500] sm:$0xff]
    %v190 = vld [vmem:[#allocation2 + $0x508] sm:$0xff]
    %v191 = vld [vmem:[#allocation2 + $0x510] sm:$0xff]
    %v192 = vld [vmem:[#allocation2 + $0x518] sm:$0xff]
    %v193 = vld [vmem:[#allocation2 + $0x520] sm:$0xff]
    %v194 = vld [vmem:[#allocation2 + $0x528] sm:$0xff]
    %v195 = vld [vmem:[#allocation2 + $0x530] sm:$0xff]
    %v196 = vld [vmem:[#allocation2 + $0x538] sm:$0xff]
    %v197 = vld [vmem:[#allocation2 + $0x540] sm:$0xff]
    %v198 = vld [vmem:[#allocation2 + $0x548] sm:$0xff]
    %v199 = vld [vmem:[#allocation2 + $0x550] sm:$0xff]
    %v200 = vld [vmem:[#allocation2 + $0x558] sm:$0xff]
    %v201 = vld [vmem:[#allocation2 + $0x560] sm:$0xff]
    %v202 = vld [vmem:[#allocation2 + $0x568] sm:$0xff]
    %v203 = vld [vmem:[#allocation2 + $0x570] sm:$0xff]
    %v204 = vld [vmem:[#allocation2 + $0x578] sm:$0xff]
    %v205 = vld [vmem:[#allocation2 + $0x580] sm:$0xff]
    %v206 = vld [vmem:[#allocation2 + $0x588] sm:$0xff]
    %v207 = vld [vmem:[#allocation2 + $0x590] sm:$0xff]
    %v208 = vld [vmem:[#allocation2 + $0x598] sm:$0xff]
    %v209 = vld [vmem:[#allocation2 + $0x5a0] sm:$0xff]
    %v210 = vld [vmem:[#allocation2 + $0x5a8] sm:$0xff]
    %v211 = vld [vmem:[#allocation2 + $0x5b0] sm:$0xff]
    %v212 = vld [vmem:[#allocation2 + $0x5b8] sm:$0xff]
    %v213 = vld [vmem:[#allocation2 + $0x5c0] sm:$0xff]
    %v214 = vld [vmem:[#allocation2 + $0x5c8] sm:$0xff]
    %v215 = vld [vmem:[#allocation2 + $0x5d0] sm:$0xff]
    %v216 = vld [vmem:[#allocation2 + $0x5d8] sm:$0xff]
    %v217 = vld [vmem:[#allocation2 + $0x5e0] sm:$0xff]
    %v218 = vld [vmem:[#allocation2 + $0x5e8] sm:$0xff]
    %v219 = vld [vmem:[#allocation2 + $0x5f0] sm:$0xff]
    %v220 = vld [vmem:[#allocation2 + $0x5f8] sm:$0xff]
    %v221 = vld [vmem:[#allocation2 + $0x600] sm:$0xff]
    %v222 = vld [vmem:[#allocation2 + $0x608] sm:$0xff]
    %v223 = vld [vmem:[#allocation2 + $0x610] sm:$0xff]
    %v224 = vld [vmem:[#allocation2 + $0x618] sm:$0xff]
    %v225 = vld [vmem:[#allocation2 + $0x620] sm:$0xff]
    %v226 = vld [vmem:[#allocation2 + $0x628] sm:$0xff]
    %v227 = vld [vmem:[#allocation2 + $0x630] sm:$0xff]
    %v228 = vld [vmem:[#allocation2 + $0x638] sm:$0xff]
    %v229 = vld [vmem:[#allocation2 + $0x640] sm:$0xff]
    %v230 = vld [vmem:[#allocation2 + $0x648] sm:$0xff]
    %v231 = vld [vmem:[#allocation2 + $0x650] sm:$0xff]
    %v232 = vld [vmem:[#allocation2 + $0x658] sm:$0xff]
    %v233 = vld [vmem:[#allocation2 + $0x660] sm:$0xff]
    %v234 = vld [vmem:[#allocation2 + $0x668] sm:$0xff]
    %v235 = vld [vmem:[#allocation2 + $0x670] sm:$0xff]
    %v236 = vld [vmem:[#allocation2 + $0x678] sm:$0xff]
    %v237 = vld [vmem:[#allocation2 + $0x680] sm:$0xff]
    %v238 = vld [vmem:[#allocation2 + $0x688] sm:$0xff]
    %v239 = vld [vmem:[#allocation2 + $0x690] sm:$0xff]
    %v240 = vld [vmem:[#allocation2 + $0x698] sm:$0xff]
    %v241 = vld [vmem:[#allocation2 + $0x6a0] sm:$0xff]
    %v242 = vld [vmem:[#allocation2 + $0x6a8] sm:$0xff]
    %v243 = vld [vmem:[#allocation2 + $0x6b0] sm:$0xff]
    %v244 = vld [vmem:[#allocation2 + $0x6b8] sm:$0xff]
    %v245 = vld [vmem:[#allocation2 + $0x6c0] sm:$0xff]
    %v246 = vld [vmem:[#allocation2 + $0x6c8] sm:$0xff]
    %v247 = vld [vmem:[#allocation2 + $0x6d0] sm:$0xff]
    %v248 = vld [vmem:[#allocation2 + $0x6d8] sm:$0xff]
    %v249 = vld [vmem:[#allocation2 + $0x6e0] sm:$0xff]
    %v250 = vld [vmem:[#allocation2 + $0x6e8] sm:$0xff]
    %v251 = vld [vmem:[#allocation2 + $0x6f0] sm:$0xff]
    %v252 = vld [vmem:[#allocation2 + $0x6f8] sm:$0xff]
    %v253 = vld [vmem:[#allocation2 + $0x700] sm:$0xff]
    %v254 = vld [vmem:[#allocation2 + $0x708] sm:$0xff]
    %v255 = vld [vmem:[#allocation2 + $0x710] sm:$0xff]
    %v256 = vld [vmem:[#allocation2 + $0x718] sm:$0xff]
    %v257 = vld [vmem:[#allocation2 + $0x720] sm:$0xff]
    %v258 = vld [vmem:[#allocation2 + $0x728] sm:$0xff]
    %v259 = vld [vmem:[#allocation2 + $0x730] sm:$0xff]
    %v260 = vld [vmem:[#allocation2 + $0x738] sm:$0xff]
    %v261 = vld [vmem:[#allocation2 + $0x740] sm:$0xff]
    %v262 = vld [vmem:[#allocation2 + $0x748] sm:$0xff]
    %v263 = vld [vmem:[#allocation2 + $0x750] sm:$0xff]
    %v264 = vld [vmem:[#allocation2 + $0x758] sm:$0xff]
    %v265 = vld [vmem:[#allocation2 + $0x760] sm:$0xff]
    %v266 = vld [vmem:[#allocation2 + $0x768] sm:$0xff]
    %v267 = vld [vmem:[#allocation2 + $0x770] sm:$0xff]
    %v268 = vld [vmem:[#allocation2 + $0x778] sm:$0xff]
    %v269 = vld [vmem:[#allocation2 + $0x780] sm:$0xff]
    %v270 = vld [vmem:[#allocation2 + $0x788] sm:$0xff]
    %v271 = vld [vmem:[#allocation2 + $0x790] sm:$0xff]
    %v272 = vld [vmem:[#allocation2 + $0x798] sm:$0xff]
    %v273 = vld [vmem:[#allocation2 + $0x7a0] sm:$0xff]
    %v274 = vld [vmem:[#allocation2 + $0x7a8] sm:$0xff]
    %v275 = vld [vmem:[#allocation2 + $0x7b0] sm:$0xff]
    %v276 = vld [vmem:[#allocation2 + $0x7b8] sm:$0xff]
    %v277 = vld [vmem:[#allocation2 + $0x7c0] sm:$0xff]
    %v278 = vld [vmem:[#allocation2 + $0x7c8] sm:$0xff]
    %v279 = vld [vmem:[#allocation2 + $0x7d0] sm:$0xff]
    %v280 = vld [vmem:[#allocation2 + $0x7d8] sm:$0xff]
    %v281 = vld [vmem:[#allocation2 + $0x7e0] sm:$0xff]
    %v282 = vld [vmem:[#allocation2 + $0x7e8] sm:$0xff]
    %v283 = vld [vmem:[#allocation2 + $0x7f0] sm:$0xff]
    %v284 = vld [vmem:[#allocation2 + $0x7f8] sm:$0xff]
    %v285 = vld [vmem:[%s2] sm:$0xff]
    %v286 = vld [vmem:[%s2 + $0x8] sm:$0xff]
    %v289 = vlaneseq
    %v290 = vshrl.u32 %v289, 7
    %v291 = vsub.s32 0, %v290
    %v292 = vrot.slane %v285, %v291
    %v293 = vlaneseq
    %v294 = vshrl.u32 %v293, 7
    %v295 = vsub.s32 1, %v294
    %v296 = vrot.slane %v285, %v295
    %v297 = vlaneseq
    %v298 = vshrl.u32 %v297, 7
    %v299 = vsub.s32 2, %v298
    %v300 = vrot.slane %v285, %v299
    %v301 = vlaneseq
    %v302 = vshrl.u32 %v301, 7
    %v303 = vsub.s32 3, %v302
    %v304 = vrot.slane %v285, %v303
    %v305 = vlaneseq
    %v306 = vshrl.u32 %v305, 7
    %v307 = vsub.s32 4, %v306
    %v308 = vrot.slane %v285, %v307
    %v309 = vlaneseq
    %v310 = vshrl.u32 %v309, 7
    %v311 = vsub.s32 5, %v310
    %v312 = vrot.slane %v285, %v311
    %v313 = vlaneseq
    %v314 = vshrl.u32 %v313, 7
    %v315 = vsub.s32 6, %v314
    %v316 = vrot.slane %v285, %v315
    %v317 = vlaneseq
    %v318 = vshrl.u32 %v317, 7
    %v319 = vsub.s32 7, %v318
    %v320 = vrot.slane %v285, %v319
    %v321 = vlaneseq
    %v322 = vshrl.u32 %v321, 7
    %v323 = vsub.s32 0, %v322
    %v324 = vrot.slane %v286, %v323
    %v325 = vlaneseq
    %v326 = vshrl.u32 %v325, 7
    %v327 = vsub.s32 1, %v326
    %v328 = vrot.slane %v286, %v327
    %v329 = vlaneseq
    %v330 = vshrl.u32 %v329, 7
    %v331 = vsub.s32 2, %v330
    %v332 = vrot.slane %v286, %v331
    %v333 = vlaneseq
    %v334 = vshrl.u32 %v333, 7
    %v335 = vsub.s32 3, %v334
    %v336 = vrot.slane %v286, %v335
    %v337 = vlaneseq
    %v338 = vshrl.u32 %v337, 7
    %v339 = vsub.s32 4, %v338
    %v340 = vrot.slane %v286, %v339
    %v341 = vlaneseq
    %v342 = vshrl.u32 %v341, 7
    %v343 = vsub.s32 5, %v342
    %v344 = vrot.slane %v286, %v343
    %v345 = vlaneseq
    %v346 = vshrl.u32 %v345, 7
    %v347 = vsub.s32 6, %v346
    %v348 = vrot.slane %v286, %v347
    %v349 = vlaneseq
    %v350 = vshrl.u32 %v349, 7
    %v351 = vsub.s32 7, %v350
    %v352 = vrot.slane %v286, %v351
    %369 = vmatprep.subr.mxu0 %v30
    %370 = vmatpush1.msra.mxu0 %v29
    %371 = vmatprep.subr.mxu0 %v46
    %372 = vmatpush1.msra.mxu0 %v45
    %373 = vmatprep.subr.mxu0 %v62
    %374 = vmatpush1.msra.mxu0 %v61
    %375 = vmatprep.subr.mxu0 %v78
    %376 = vmatpush1.msra.mxu0 %v77
    %377 = vmatprep.subr.mxu0 %v94
    %378 = vmatpush1.msra.mxu0 %v93
    %379 = vmatprep.subr.mxu0 %v110
    %380 = vmatpush1.msra.mxu0 %v109
    %381 = vmatprep.subr.mxu0 %v126
    %382 = vmatpush1.msra.mxu0 %v125
    %383 = vmatprep.subr.mxu0 %v142
    %384 = vmatpush1.msra.mxu0 %v141
    %385 = vmatprep.subr.mxu0 %v158
    %386 = vmatpush1.msra.mxu0 %v157
    %387 = vmatprep.subr.mxu0 %v174
    %388 = vmatpush1.msra.mxu0 %v173
    %389 = vmatprep.subr.mxu0 %v190
    %390 = vmatpush1.msra.mxu0 %v189
    %391 = vmatprep.subr.mxu0 %v206
    %392 = vmatpush1.msra.mxu0 %v205
    %393 = vmatprep.subr.mxu0 %v222
    %394 = vmatpush1.msra.mxu0 %v221
    %395 = vmatprep.subr.mxu0 %v238
    %396 = vmatpush1.msra.mxu0 %v237
    %397 = vmatprep.subr.mxu0 %v254
    %398 = vmatpush1.msra.mxu0 %v253
    %399 = vmatprep.subr.mxu0 %v270
    %400 = vmatpush1.msra.mxu0 %v269
    %401 = vmatprep.subr.mxu0 0.0
    %402 = vmatpush1.msra.mxu0 0.0
    %403 = vmatprep.subr.mxu0 0.0
    %404 = vmatpush1.msra.mxu0 0.0
    %405 = vmatprep.subr.mxu0 0.0
    %406 = vmatpush1.msra.mxu0 0.0
    %407 = vmatprep.subr.mxu0 0.0
    %408 = vmatpush1.msra.mxu0 0.0
    %409 = vmatprep.subr.mxu0 0.0
    %410 = vmatpush1.msra.mxu0 0.0
    %411 = vmatprep.subr.mxu0 0.0
    %412 = vmatpush1.msra.mxu0 0.0
    %413 = vmatprep.subr.mxu0 0.0
    %414 = vmatpush1.msra.mxu0 0.0
    %415 = vmatprep.subr.mxu0 0.0
    %416 = vmatpush1.msra.mxu0 0.0
    %417 = vmatprep.subr.mxu0 0.0
    %418 = vmatpush1.msra.mxu0 0.0
    %419 = vmatprep.subr.mxu0 0.0
    %420 = vmatpush1.msra.mxu0 0.0
    %421 = vmatprep.subr.mxu0 0.0
    %422 = vmatpush1.msra.mxu0 0.0
    %423 = vmatprep.subr.mxu0 0.0
    %424 = vmatpush1.msra.mxu0 0.0
    %425 = vmatprep.subr.mxu0 0.0
    %426 = vmatpush1.msra.mxu0 0.0
    %427 = vmatprep.subr.mxu0 0.0
    %428 = vmatpush1.msra.mxu0 0.0
    %429 = vmatprep.subr.mxu0 0.0
    %430 = vmatpush1.msra.mxu0 0.0
    %431 = vmatprep.subr.mxu0 0.0
    %432 = vmatpush1.msra.mxu0 0.0
    %433 = vmatprep.mubr.f32.mxu0 0.0
    %434 = vmatmul.mubr.f32.gmra.mrb[0].mxu0 %v28
    %v435 = vpop.f32.mrb[0].mxu0
    %v436 = vadd.f32 %v292, %v435
    %v437 = vpop.f32.mrb[0].mxu0
    %v438 = vadd.f32 %v296, %v437
    %439 = vdwg.mxu0
    %440 = vmatprep.subr.mxu0 %v32
    %441 = vmatpush1.msra.mxu0 %v31
    %442 = vmatprep.subr.mxu0 %v48
    %443 = vmatpush1.msra.mxu0 %v47
    %444 = vmatprep.subr.mxu0 %v64
    %445 = vmatpush1.msra.mxu0 %v63
    %446 = vmatprep.subr.mxu0 %v80
    %447 = vmatpush1.msra.mxu0 %v79
    %448 = vmatprep.subr.mxu0 %v96
    %449 = vmatpush1.msra.mxu0 %v95
    %450 = vmatprep.subr.mxu0 %v112
    %451 = vmatpush1.msra.mxu0 %v111
    %452 = vmatprep.subr.mxu0 %v128
    %453 = vmatpush1.msra.mxu0 %v127
    %454 = vmatprep.subr.mxu0 %v144
    %455 = vmatpush1.msra.mxu0 %v143
    %456 = vmatprep.subr.mxu0 %v160
    %457 = vmatpush1.msra.mxu0 %v159
    %458 = vmatprep.subr.mxu0 %v176
    %459 = vmatpush1.msra.mxu0 %v175
    %460 = vmatprep.subr.mxu0 %v192
    %461 = vmatpush1.msra.mxu0 %v191
    %462 = vmatprep.subr.mxu0 %v208
    %463 = vmatpush1.msra.mxu0 %v207
    %464 = vmatprep.subr.mxu0 %v224
    %465 = vmatpush1.msra.mxu0 %v223
    %466 = vmatprep.subr.mxu0 %v240
    %467 = vmatpush1.msra.mxu0 %v239
    %468 = vmatprep.subr.mxu0 %v256
    %469 = vmatpush1.msra.mxu0 %v255
    %470 = vmatprep.subr.mxu0 %v272
    %471 = vmatpush1.msra.mxu0 %v271
    %472 = vmatprep.subr.mxu0 0.0
    %473 = vmatpush1.msra.mxu0 0.0
    %474 = vmatprep.subr.mxu0 0.0
    %475 = vmatpush1.msra.mxu0 0.0
    %476 = vmatprep.subr.mxu0 0.0
    %477 = vmatpush1.msra.mxu0 0.0
    %478 = vmatprep.subr.mxu0 0.0
    %479 = vmatpush1.msra.mxu0 0.0
    %480 = vmatprep.subr.mxu0 0.0
    %481 = vmatpush1.msra.mxu0 0.0
    %482 = vmatprep.subr.mxu0 0.0
    %483 = vmatpush1.msra.mxu0 0.0
    %484 = vmatprep.subr.mxu0 0.0
    %485 = vmatpush1.msra.mxu0 0.0
    %486 = vmatprep.subr.mxu0 0.0
    %487 = vmatpush1.msra.mxu0 0.0
    %488 = vmatprep.subr.mxu0 0.0
    %489 = vmatpush1.msra.mxu0 0.0
    %490 = vmatprep.subr.mxu0 0.0
    %491 = vmatpush1.msra.mxu0 0.0
    %492 = vmatprep.subr.mxu0 0.0
    %493 = vmatpush1.msra.mxu0 0.0
    %494 = vmatprep.subr.mxu0 0.0
    %495 = vmatpush1.msra.mxu0 0.0
    %496 = vmatprep.subr.mxu0 0.0
    %497 = vmatpush1.msra.mxu0 0.0
    %498 = vmatprep.subr.mxu0 0.0
    %499 = vmatpush1.msra.mxu0 0.0
    %500 = vmatprep.subr.mxu0 0.0
    %501 = vmatpush1.msra.mxu0 0.0
    %502 = vmatprep.subr.mxu0 0.0
    %503 = vmatpush1.msra.mxu0 0.0
    %504 = vmatprep.mubr.f32.mxu0 0.0
    %505 = vmatmul.mubr.f32.gmra.mrb[0].mxu0 %v28
    %v506 = vpop.f32.mrb[0].mxu0
    %v507 = vadd.f32 %v300, %v506
    %v508 = vpop.f32.mrb[0].mxu0
    %v509 = vadd.f32 %v304, %v508
    %510 = vdwg.mxu0
    %511 = vmatprep.subr.mxu0 %v34
    %512 = vmatpush1.msra.mxu0 %v33
    %513 = vmatprep.subr.mxu0 %v50
    %514 = vmatpush1.msra.mxu0 %v49
    %515 = vmatprep.subr.mxu0 %v66
    %516 = vmatpush1.msra.mxu0 %v65
    %517 = vmatprep.subr.mxu0 %v82
    %518 = vmatpush1.msra.mxu0 %v81
    %519 = vmatprep.subr.mxu0 %v98
    %520 = vmatpush1.msra.mxu0 %v97
    %521 = vmatprep.subr.mxu0 %v114
    %522 = vmatpush1.msra.mxu0 %v113
    %523 = vmatprep.subr.mxu0 %v130
    %524 = vmatpush1.msra.mxu0 %v129
    %525 = vmatprep.subr.mxu0 %v146
    %526 = vmatpush1.msra.mxu0 %v145
    %527 = vmatprep.subr.mxu0 %v162
    %528 = vmatpush1.msra.mxu0 %v161
    %529 = vmatprep.subr.mxu0 %v178
    %530 = vmatpush1.msra.mxu0 %v177
    %531 = vmatprep.subr.mxu0 %v194
    %532 = vmatpush1.msra.mxu0 %v193
    %533 = vmatprep.subr.mxu0 %v210
    %534 = vmatpush1.msra.mxu0 %v209
    %535 = vmatprep.subr.mxu0 %v226
    %536 = vmatpush1.msra.mxu0 %v225
    %537 = vmatprep.subr.mxu0 %v242
    %538 = vmatpush1.msra.mxu0 %v241
    %539 = vmatprep.subr.mxu0 %v258
    %540 = vmatpush1.msra.mxu0 %v257
    %541 = vmatprep.subr.mxu0 %v274
    %542 = vmatpush1.msra.mxu0 %v273
    %543 = vmatprep.subr.mxu0 0.0
    %544 = vmatpush1.msra.mxu0 0.0
    %545 = vmatprep.subr.mxu0 0.0
    %546 = vmatpush1.msra.mxu0 0.0
    %547 = vmatprep.subr.mxu0 0.0
    %548 = vmatpush1.msra.mxu0 0.0
    %549 = vmatprep.subr.mxu0 0.0
    %550 = vmatpush1.msra.mxu0 0.0
    %551 = vmatprep.subr.mxu0 0.0
    %552 = vmatpush1.msra.mxu0 0.0
    %553 = vmatprep.subr.mxu0 0.0
    %554 = vmatpush1.msra.mxu0 0.0
    %555 = vmatprep.subr.mxu0 0.0
    %556 = vmatpush1.msra.mxu0 0.0
    %557 = vmatprep.subr.mxu0 0.0
    %558 = vmatpush1.msra.mxu0 0.0
    %559 = vmatprep.subr.mxu0 0.0
    %560 = vmatpush1.msra.mxu0 0.0
    %561 = vmatprep.subr.mxu0 0.0
    %562 = vmatpush1.msra.mxu0 0.0
    %563 = vmatprep.subr.mxu0 0.0
    %564 = vmatpush1.msra.mxu0 0.0
    %565 = vmatprep.subr.mxu0 0.0
    %566 = vmatpush1.msra.mxu0 0.0
    %567 = vmatprep.subr.mxu0 0.0
    %568 = vmatpush1.msra.mxu0 0.0
    %569 = vmatprep.subr.mxu0 0.0
    %570 = vmatpush1.msra.mxu0 0.0
    %571 = vmatprep.subr.mxu0 0.0
    %572 = vmatpush1.msra.mxu0 0.0
    %573 = vmatprep.subr.mxu0 0.0
    %574 = vmatpush1.msra.mxu0 0.0
    %575 = vmatprep.mubr.f32.mxu0 0.0
    %576 = vmatmul.mubr.f32.gmra.mrb[0].mxu0 %v28
    %v577 = vpop.f32.mrb[0].mxu0
    %v578 = vadd.f32 %v308, %v577
    %v579 = vpop.f32.mrb[0].mxu0
    %v580 = vadd.f32 %v312, %v579
    %581 = vdwg.mxu0
    %582 = vmatprep.subr.mxu0 %v36
    %583 = vmatpush1.msra.mxu0 %v35
    %584 = vmatprep.subr.mxu0 %v52
    %585 = vmatpush1.msra.mxu0 %v51
    %586 = vmatprep.subr.mxu0 %v68
    %587 = vmatpush1.msra.mxu0 %v67
    %588 = vmatprep.subr.mxu0 %v84
    %589 = vmatpush1.msra.mxu0 %v83
    %590 = vmatprep.subr.mxu0 %v100
    %591 = vmatpush1.msra.mxu0 %v99
    %592 = vmatprep.subr.mxu0 %v116
    %593 = vmatpush1.msra.mxu0 %v115
    %594 = vmatprep.subr.mxu0 %v132
    %595 = vmatpush1.msra.mxu0 %v131
    %596 = vmatprep.subr.mxu0 %v148
    %597 = vmatpush1.msra.mxu0 %v147
    %598 = vmatprep.subr.mxu0 %v164
    %599 = vmatpush1.msra.mxu0 %v163
    %600 = vmatprep.subr.mxu0 %v180
    %601 = vmatpush1.msra.mxu0 %v179
    %602 = vmatprep.subr.mxu0 %v196
    %603 = vmatpush1.msra.mxu0 %v195
    %604 = vmatprep.subr.mxu0 %v212
    %605 = vmatpush1.msra.mxu0 %v211
    %606 = vmatprep.subr.mxu0 %v228
    %607 = vmatpush1.msra.mxu0 %v227
    %608 = vmatprep.subr.mxu0 %v244
    %609 = vmatpush1.msra.mxu0 %v243
    %610 = vmatprep.subr.mxu0 %v260
    %611 = vmatpush1.msra.mxu0 %v259
    %612 = vmatprep.subr.mxu0 %v276
    %613 = vmatpush1.msra.mxu0 %v275
    %614 = vmatprep.subr.mxu0 0.0
    %615 = vmatpush1.msra.mxu0 0.0
    %616 = vmatprep.subr.mxu0 0.0
    %617 = vmatpush1.msra.mxu0 0.0
    %618 = vmatprep.subr.mxu0 0.0
    %619 = vmatpush1.msra.mxu0 0.0
    %620 = vmatprep.subr.mxu0 0.0
    %621 = vmatpush1.msra.mxu0 0.0
    %622 = vmatprep.subr.mxu0 0.0
    %623 = vmatpush1.msra.mxu0 0.0
    %624 = vmatprep.subr.mxu0 0.0
    %625 = vmatpush1.msra.mxu0 0.0
    %626 = vmatprep.subr.mxu0 0.0
    %627 = vmatpush1.msra.mxu0 0.0
    %628 = vmatprep.subr.mxu0 0.0
    %629 = vmatpush1.msra.mxu0 0.0
    %630 = vmatprep.subr.mxu0 0.0
    %631 = vmatpush1.msra.mxu0 0.0
    %632 = vmatprep.subr.mxu0 0.0
    %633 = vmatpush1.msra.mxu0 0.0
    %634 = vmatprep.subr.mxu0 0.0
    %635 = vmatpush1.msra.mxu0 0.0
    %636 = vmatprep.subr.mxu0 0.0
    %637 = vmatpush1.msra.mxu0 0.0
    %638 = vmatprep.subr.mxu0 0.0
    %639 = vmatpush1.msra.mxu0 0.0
    %640 = vmatprep.subr.mxu0 0.0
    %641 = vmatpush1.msra.mxu0 0.0
    %642 = vmatprep.subr.mxu0 0.0
    %643 = vmatpush1.msra.mxu0 0.0
    %644 = vmatprep.subr.mxu0 0.0
    %645 = vmatpush1.msra.mxu0 0.0
    %646 = vmatprep.mubr.f32.mxu0 0.0
    %647 = vmatmul.mubr.f32.gmra.mrb[0].mxu0 %v28
    %v648 = vpop.f32.mrb[0].mxu0
    %v649 = vadd.f32 %v316, %v648
    %v650 = vpop.f32.mrb[0].mxu0
    %v651 = vadd.f32 %v320, %v650
    %652 = vdwg.mxu0
    %653 = vmatprep.subr.mxu0 %v38
    %654 = vmatpush1.msra.mxu0 %v37
    %655 = vmatprep.subr.mxu0 %v54
    %656 = vmatpush1.msra.mxu0 %v53
    %657 = vmatprep.subr.mxu0 %v70
    %658 = vmatpush1.msra.mxu0 %v69
    %659 = vmatprep.subr.mxu0 %v86
    %660 = vmatpush1.msra.mxu0 %v85
    %661 = vmatprep.subr.mxu0 %v102
    %662 = vmatpush1.msra.mxu0 %v101
    %663 = vmatprep.subr.mxu0 %v118
    %664 = vmatpush1.msra.mxu0 %v117
    %665 = vmatprep.subr.mxu0 %v134
    %666 = vmatpush1.msra.mxu0 %v133
    %667 = vmatprep.subr.mxu0 %v150
    %668 = vmatpush1.msra.mxu0 %v149
    %669 = vmatprep.subr.mxu0 %v166
    %670 = vmatpush1.msra.mxu0 %v165
    %671 = vmatprep.subr.mxu0 %v182
    %672 = vmatpush1.msra.mxu0 %v181
    %673 = vmatprep.subr.mxu0 %v198
    %674 = vmatpush1.msra.mxu0 %v197
    %675 = vmatprep.subr.mxu0 %v214
    %676 = vmatpush1.msra.mxu0 %v213
    %677 = vmatprep.subr.mxu0 %v230
    %678 = vmatpush1.msra.mxu0 %v229
    %679 = vmatprep.subr.mxu0 %v246
    %680 = vmatpush1.msra.mxu0 %v245
    %681 = vmatprep.subr.mxu0 %v262
    %682 = vmatpush1.msra.mxu0 %v261
    %683 = vmatprep.subr.mxu0 %v278
    %684 = vmatpush1.msra.mxu0 %v277
    %685 = vmatprep.subr.mxu0 0.0
    %686 = vmatpush1.msra.mxu0 0.0
    %687 = vmatprep.subr.mxu0 0.0
    %688 = vmatpush1.msra.mxu0 0.0
    %689 = vmatprep.subr.mxu0 0.0
    %690 = vmatpush1.msra.mxu0 0.0
    %691 = vmatprep.subr.mxu0 0.0
    %692 = vmatpush1.msra.mxu0 0.0
    %693 = vmatprep.subr.mxu0 0.0
    %694 = vmatpush1.msra.mxu0 0.0
    %695 = vmatprep.subr.mxu0 0.0
    %696 = vmatpush1.msra.mxu0 0.0
    %697 = vmatprep.subr.mxu0 0.0
    %698 = vmatpush1.msra.mxu0 0.0
    %699 = vmatprep.subr.mxu0 0.0
    %700 = vmatpush1.msra.mxu0 0.0
    %701 = vmatprep.subr.mxu0 0.0
    %702 = vmatpush1.msra.mxu0 0.0
    %703 = vmatprep.subr.mxu0 0.0
    %704 = vmatpush1.msra.mxu0 0.0
    %705 = vmatprep.subr.mxu0 0.0
    %706 = vmatpush1.msra.mxu0 0.0
    %707 = vmatprep.subr.mxu0 0.0
    %708 = vmatpush1.msra.mxu0 0.0
    %709 = vmatprep.subr.mxu0 0.0
    %710 = vmatpush1.msra.mxu0 0.0
    %711 = vmatprep.subr.mxu0 0.0
    %712 = vmatpush1.msra.mxu0 0.0
    %713 = vmatprep.subr.mxu0 0.0
    %714 = vmatpush1.msra.mxu0 0.0
    %715 = vmatprep.subr.mxu0 0.0
    %716 = vmatpush1.msra.mxu0 0.0
    %717 = vmatprep.mubr.f32.mxu0 0.0
    %718 = vmatmul.mubr.f32.gmra.mrb[0].mxu0 %v28
    %v719 = vpop.f32.mrb[0].mxu0
    %v720 = vadd.f32 %v324, %v719
    %v721 = vpop.f32.mrb[0].mxu0
    %v722 = vadd.f32 %v328, %v721
    %723 = vdwg.mxu0
    %724 = vmatprep.subr.mxu0 %v40
    %725 = vmatpush1.msra.mxu0 %v39
    %726 = vmatprep.subr.mxu0 %v56
    %727 = vmatpush1.msra.mxu0 %v55
    %728 = vmatprep.subr.mxu0 %v72
    %729 = vmatpush1.msra.mxu0 %v71
    %730 = vmatprep.subr.mxu0 %v88
    %731 = vmatpush1.msra.mxu0 %v87
    %732 = vmatprep.subr.mxu0 %v104
    %733 = vmatpush1.msra.mxu0 %v103
    %734 = vmatprep.subr.mxu0 %v120
    %735 = vmatpush1.msra.mxu0 %v119
    %736 = vmatprep.subr.mxu0 %v136
    %737 = vmatpush1.msra.mxu0 %v135
    %738 = vmatprep.subr.mxu0 %v152
    %739 = vmatpush1.msra.mxu0 %v151
    %740 = vmatprep.subr.mxu0 %v168
    %741 = vmatpush1.msra.mxu0 %v167
    %742 = vmatprep.subr.mxu0 %v184
    %743 = vmatpush1.msra.mxu0 %v183
    %744 = vmatprep.subr.mxu0 %v200
    %745 = vmatpush1.msra.mxu0 %v199
    %746 = vmatprep.subr.mxu0 %v216
    %747 = vmatpush1.msra.mxu0 %v215
    %748 = vmatprep.subr.mxu0 %v232
    %749 = vmatpush1.msra.mxu0 %v231
    %750 = vmatprep.subr.mxu0 %v248
    %751 = vmatpush1.msra.mxu0 %v247
    %752 = vmatprep.subr.mxu0 %v264
    %753 = vmatpush1.msra.mxu0 %v263
    %754 = vmatprep.subr.mxu0 %v280
    %755 = vmatpush1.msra.mxu0 %v279
    %756 = vmatprep.subr.mxu0 0.0
    %757 = vmatpush1.msra.mxu0 0.0
    %758 = vmatprep.subr.mxu0 0.0
    %759 = vmatpush1.msra.mxu0 0.0
    %760 = vmatprep.subr.mxu0 0.0
    %761 = vmatpush1.msra.mxu0 0.0
    %762 = vmatprep.subr.mxu0 0.0
    %763 = vmatpush1.msra.mxu0 0.0
    %764 = vmatprep.subr.mxu0 0.0
    %765 = vmatpush1.msra.mxu0 0.0
    %766 = vmatprep.subr.mxu0 0.0
    %767 = vmatpush1.msra.mxu0 0.0
    %768 = vmatprep.subr.mxu0 0.0
    %769 = vmatpush1.msra.mxu0 0.0
    %770 = vmatprep.subr.mxu0 0.0
    %771 = vmatpush1.msra.mxu0 0.0
    %772 = vmatprep.subr.mxu0 0.0
    %773 = vmatpush1.msra.mxu0 0.0
    %774 = vmatprep.subr.mxu0 0.0
    %775 = vmatpush1.msra.mxu0 0.0
    %776 = vmatprep.subr.mxu0 0.0
    %777 = vmatpush1.msra.mxu0 0.0
    %778 = vmatprep.subr.mxu0 0.0
    %779 = vmatpush1.msra.mxu0 0.0
    %780 = vmatprep.subr.mxu0 0.0
    %781 = vmatpush1.msra.mxu0 0.0
    %782 = vmatprep.subr.mxu0 0.0
    %783 = vmatpush1.msra.mxu0 0.0
    %784 = vmatprep.subr.mxu0 0.0
    %785 = vmatpush1.msra.mxu0 0.0
    %786 = vmatprep.subr.mxu0 0.0
    %787 = vmatpush1.msra.mxu0 0.0
    %788 = vmatprep.mubr.f32.mxu0 0.0
    %789 = vmatmul.mubr.f32.gmra.mrb[0].mxu0 %v28
    %v790 = vpop.f32.mrb[0].mxu0
    %v791 = vadd.f32 %v332, %v790
    %v792 = vpop.f32.mrb[0].mxu0
    %v793 = vadd.f32 %v336, %v792
    %794 = vdwg.mxu0
    %795 = vmatprep.subr.mxu0 %v42
    %796 = vmatpush1.msra.mxu0 %v41
    %797 = vmatprep.subr.mxu0 %v58
    %798 = vmatpush1.msra.mxu0 %v57
    %799 = vmatprep.subr.mxu0 %v74
    %800 = vmatpush1.msra.mxu0 %v73
    %801 = vmatprep.subr.mxu0 %v90
    %802 = vmatpush1.msra.mxu0 %v89
    %803 = vmatprep.subr.mxu0 %v106
    %804 = vmatpush1.msra.mxu0 %v105
    %805 = vmatprep.subr.mxu0 %v122
    %806 = vmatpush1.msra.mxu0 %v121
    %807 = vmatprep.subr.mxu0 %v138
    %808 = vmatpush1.msra.mxu0 %v137
    %809 = vmatprep.subr.mxu0 %v154
    %810 = vmatpush1.msra.mxu0 %v153
    %811 = vmatprep.subr.mxu0 %v170
    %812 = vmatpush1.msra.mxu0 %v169
    %813 = vmatprep.subr.mxu0 %v186
    %814 = vmatpush1.msra.mxu0 %v185
    %815 = vmatprep.subr.mxu0 %v202
    %816 = vmatpush1.msra.mxu0 %v201
    %817 = vmatprep.subr.mxu0 %v218
    %818 = vmatpush1.msra.mxu0 %v217
    %819 = vmatprep.subr.mxu0 %v234
    %820 = vmatpush1.msra.mxu0 %v233
    %821 = vmatprep.subr.mxu0 %v250
    %822 = vmatpush1.msra.mxu0 %v249
    %823 = vmatprep.subr.mxu0 %v266
    %824 = vmatpush1.msra.mxu0 %v265
    %825 = vmatprep.subr.mxu0 %v282
    %826 = vmatpush1.msra.mxu0 %v281
    %827 = vmatprep.subr.mxu0 0.0
    %828 = vmatpush1.msra.mxu0 0.0
    %829 = vmatprep.subr.mxu0 0.0
    %830 = vmatpush1.msra.mxu0 0.0
    %831 = vmatprep.subr.mxu0 0.0
    %832 = vmatpush1.msra.mxu0 0.0
    %833 = vmatprep.subr.mxu0 0.0
    %834 = vmatpush1.msra.mxu0 0.0
    %835 = vmatprep.subr.mxu0 0.0
    %836 = vmatpush1.msra.mxu0 0.0
    %837 = vmatprep.subr.mxu0 0.0
    %838 = vmatpush1.msra.mxu0 0.0
    %839 = vmatprep.subr.mxu0 0.0
    %840 = vmatpush1.msra.mxu0 0.0
    %841 = vmatprep.subr.mxu0 0.0
    %842 = vmatpush1.msra.mxu0 0.0
    %843 = vmatprep.subr.mxu0 0.0
    %844 = vmatpush1.msra.mxu0 0.0
    %845 = vmatprep.subr.mxu0 0.0
    %846 = vmatpush1.msra.mxu0 0.0
    %847 = vmatprep.subr.mxu0 0.0
    %848 = vmatpush1.msra.mxu0 0.0
    %849 = vmatprep.subr.mxu0 0.0
    %850 = vmatpush1.msra.mxu0 0.0
    %851 = vmatprep.subr.mxu0 0.0
    %852 = vmatpush1.msra.mxu0 0.0
    %853 = vmatprep.subr.mxu0 0.0
    %854 = vmatpush1.msra.mxu0 0.0
    %855 = vmatprep.subr.mxu0 0.0
    %856 = vmatpush1.msra.mxu0 0.0
    %857 = vmatprep.subr.mxu0 0.0
    %858 = vmatpush1.msra.mxu0 0.0
    %859 = vmatprep.mubr.f32.mxu0 0.0
    %860 = vmatmul.mubr.f32.gmra.mrb[0].mxu0 %v28
    %v861 = vpop.f32.mrb[0].mxu0
    %v862 = vadd.f32 %v340, %v861
    %v863 = vpop.f32.mrb[0].mxu0
    %v864 = vadd.f32 %v344, %v863
    %865 = vdwg.mxu0
    %866 = vmatprep.subr.mxu0 %v44
    %867 = vmatpush1.msra.mxu0 %v43
    %868 = vmatprep.subr.mxu0 %v60
    %869 = vmatpush1.msra.mxu0 %v59
    %870 = vmatprep.subr.mxu0 %v76
    %871 = vmatpush1.msra.mxu0 %v75
    %872 = vmatprep.subr.mxu0 %v92
    %873 = vmatpush1.msra.mxu0 %v91
    %874 = vmatprep.subr.mxu0 %v108
    %875 = vmatpush1.msra.mxu0 %v107
    %876 = vmatprep.subr.mxu0 %v124
    %877 = vmatpush1.msra.mxu0 %v123
    %878 = vmatprep.subr.mxu0 %v140
    %879 = vmatpush1.msra.mxu0 %v139
    %880 = vmatprep.subr.mxu0 %v156
    %881 = vmatpush1.msra.mxu0 %v155
    %882 = vmatprep.subr.mxu0 %v172
    %883 = vmatpush1.msra.mxu0 %v171
    %884 = vmatprep.subr.mxu0 %v188
    %885 = vmatpush1.msra.mxu0 %v187
    %886 = vmatprep.subr.mxu0 %v204
    %887 = vmatpush1.msra.mxu0 %v203
    %888 = vmatprep.subr.mxu0 %v220
    %889 = vmatpush1.msra.mxu0 %v219
    %890 = vmatprep.subr.mxu0 %v236
    %891 = vmatpush1.msra.mxu0 %v235
    %892 = vmatprep.subr.mxu0 %v252
    %893 = vmatpush1.msra.mxu0 %v251
    %894 = vmatprep.subr.mxu0 %v268
    %895 = vmatpush1.msra.mxu0 %v267
    %896 = vmatprep.subr.mxu0 %v284
    %897 = vmatpush1.msra.mxu0 %v283
    %898 = vmatprep.subr.mxu0 0.0
    %899 = vmatpush1.msra.mxu0 0.0
    %900 = vmatprep.subr.mxu0 0.0
    %901 = vmatpush1.msra.mxu0 0.0
    %902 = vmatprep.subr.mxu0 0.0
    %903 = vmatpush1.msra.mxu0 0.0
    %904 = vmatprep.subr.mxu0 0.0
    %905 = vmatpush1.msra.mxu0 0.0
    %906 = vmatprep.subr.mxu0 0.0
    %907 = vmatpush1.msra.mxu0 0.0
    %908 = vmatprep.subr.mxu0 0.0
    %909 = vmatpush1.msra.mxu0 0.0
    %910 = vmatprep.subr.mxu0 0.0
    %911 = vmatpush1.msra.mxu0 0.0
    %912 = vmatprep.subr.mxu0 0.0
    %913 = vmatpush1.msra.mxu0 0.0
    %914 = vmatprep.subr.mxu0 0.0
    %915 = vmatpush1.msra.mxu0 0.0
    %916 = vmatprep.subr.mxu0 0.0
    %917 = vmatpush1.msra.mxu0 0.0
    %918 = vmatprep.subr.mxu0 0.0
    %919 = vmatpush1.msra.mxu0 0.0
    %920 = vmatprep.subr.mxu0 0.0
    %921 = vmatpush1.msra.mxu0 0.0
    %922 = vmatprep.subr.mxu0 0.0
    %923 = vmatpush1.msra.mxu0 0.0
    %924 = vmatprep.subr.mxu0 0.0
    %925 = vmatpush1.msra.mxu0 0.0
    %926 = vmatprep.subr.mxu0 0.0
    %927 = vmatpush1.msra.mxu0 0.0
    %928 = vmatprep.subr.mxu0 0.0
    %929 = vmatpush1.msra.mxu0 0.0
    %930 = vmatprep.mubr.f32.mxu0 0.0
    %931 = vmatmul.mubr.f32.gmra.mrb[0].mxu0 %v28
    %v932 = vpop.f32.mrb[0].mxu0
    %v933 = vadd.f32 %v348, %v932
    %v934 = vpop.f32.mrb[0].mxu0
    %v935 = vadd.f32 %v352, %v934
    %936 = vdwg.mxu0
    %v937 = vmax.f32 %v436, 0.0
    %v938 = vmax.f32 %v438, 0.0
    %v939 = vmax.f32 %v507, 0.0
    %v940 = vmax.f32 %v509, 0.0
    %v941 = vmax.f32 %v578, 0.0
    %v942 = vmax.f32 %v580, 0.0
    %v943 = vmax.f32 %v649, 0.0
    %v944 = vmax.f32 %v651, 0.0
    %v945 = vmax.f32 %v720, 0.0
    %v946 = vmax.f32 %v722, 0.0
    %v947 = vmax.f32 %v791, 0.0
    %v948 = vmax.f32 %v793, 0.0
    %v949 = vmax.f32 %v862, 0.0
    %v950 = vmax.f32 %v864, 0.0
    %v951 = vmax.f32 %v933, 0.0
    %v952 = vmax.f32 %v935, 0.0
    %953 = vst [vmem:[%s3] sm:$0xff] %v937
    %954 = vst [vmem:[%s3 + $0x8] sm:$0xff] %v938
    %955 = vst [vmem:[%s3 + $0x10] sm:$0xff] %v939
    %956 = vst [vmem:[%s3 + $0x18] sm:$0xff] %v940
    %957 = vst [vmem:[%s3 + $0x20] sm:$0xff] %v941
    %958 = vst [vmem:[%s3 + $0x28] sm:$0xff] %v942
    %959 = vst [vmem:[%s3 + $0x30] sm:$0xff] %v943
    %960 = vst [vmem:[%s3 + $0x38] sm:$0xff] %v944
    %961 = vst [vmem:[%s3 + $0x40] sm:$0xff] %v945
    %962 = vst [vmem:[%s3 + $0x48] sm:$0xff] %v946
    %963 = vst [vmem:[%s3 + $0x50] sm:$0xff] %v947
    %964 = vst [vmem:[%s3 + $0x58] sm:$0xff] %v948
    %965 = vst [vmem:[%s3 + $0x60] sm:$0xff] %v949
    %966 = vst [vmem:[%s3 + $0x68] sm:$0xff] %v950
    %967 = vst [vmem:[%s3 + $0x70] sm:$0xff] %v951
    %968 = vst [vmem:[%s3 + $0x78] sm:$0xff] %v952
    // Predicated region
    $region18: #{forward.5} parent=1 // pred_check
      _
    $region19: #{forward.5} parent=1 // pred_check_branch
      %970 = sbr.rel (0) target = $region21
    $region20: #{forward.5} parent=1 // pred_region
      _
    $region21: #{forward.5} parent=1 // pred_fallthru
      _
    // Predicated region
    $region22: #{forward.5} parent=1 // pred_check
      _
    $region23: #{forward.5} parent=1 // pred_check_branch
      %972 = sbr.rel (0) target = $region25
    $region24: #{forward.5} parent=1 // pred_region
      _
    $region25: #{forward.5} parent=1 // pred_fallthru
      _
    %973 = vsyncpa [#allocation3], 1

// kernel: forward.7
$region0: #{forward.7}
  #allocation0 [shape = 'u32[]', space=smem, size = 0x4, offset = 0x4, fixed_abs, tag = 'smem constant byte address 0x4 - core index']
  #allocation1 [shape = 'u32[144,128]{1,0:T(1,128)}', space=vmem, size = 0x12000, scoped, tag = 'internal scratch']
  %s0 = inlined_call_operand.vmem [shape: f32[4,128,256], index: 0, kind: input, shape index: {}]
  %s1 = inlined_call_operand.vmem [shape: f32[4,256,128], index: 1, kind: input, shape index: {}]
  %s2 = inlined_call_operand.vmem [shape: f32[1,128], index: 2, kind: input, shape index: {}]
  %s3 = inlined_call_operand.vmem [shape: f32[4,128,128], index: 3, kind: output, shape index: {}]
  %s4 = sld [smem:[#allocation0]]
  $region45: #{forward.7} parent=0
    _
  %s6 = ssub.s32 1, %s4
  %s7 = scalar_select 0, %s6, %s4
  loop: start=0, step=1, limit=6
  $region2: #{forward.7} parent=0 // loop_pre_header
    _
  $region3: #{forward.7} parent=0 // loop_header
    %s9 = sphi 0, %s13
    %p10 = scmp.ge.s32.totalorder %s9, 6
    %s16 = sphi 0, %s28
    %s17 = sphi 0, %s24
    %s18 = sphi 0, %s16
    %s19 = sphi 0, %s17
    %s20 = sphi 0, %s18
    %s21 = sphi 0, %s19
    %s33 = sphi 0, %s35
    %s36 = sphi 0, %s33
    %s37 = sphi 0, %s36
    %s53 = sphi 0, %s37
    %s59 = sphi 0, %s61
    %s62 = sphi 0, %s59
    %s63 = sphi 0, %s62
    %s79 = sphi 0, %s63
    %s83 = sphi 0, %s83
    %s85 = sphi 0, %s83
    %s86 = sphi 0, %s85
    %s100 = sphi 0, %s86
    %s108 = sphi 0, %s110
    %s111 = sphi 0, %s108
    %s112 = sphi 0, %s111
    %s128 = sphi 0, %s112
  $region4: #{forward.7} parent=0 // loop_header_branch
    %12 = sbr.rel (%p10) target = $region8
  $region5: #{forward.7} parent=0 // loop_body
    %s14 = ssub.s32 %s9, 1
    %s15 = ssub.s32 %s9, 2
    %s22 = sadd.s32 1, %s17
    %p23 = scmp.ge.s32.totalorder %s22, 1
    %s24 = scalar_select %p23, 0, %s22
    %s25 = sadd.s32 1, %s16
    %s26 = scalar_select %p23, %s25, %s16
    %p27 = scmp.ge.s32.totalorder %s26, 4
    %s28 = scalar_select %p27, 0, %s26
    %s29 = ssub.s32 %s16, %s28
    %s30 = ssub.s32 %s17, %s24
    %s31 = sor.u32 %s29, %s30
    %p32 = scmp.eq.s32.totalorder %s31, 0
    %s34 = sadd.s32 %s33, 1
    %s35 = scalar_select %p32, %s33, %s34
    %p38 = pneg %p32
    %p39 = scmp.eq.s32.totalorder %s9, 3
    %p40 = por %p38, %p39
    %p41 = scmp.ne.s32.totalorder %s33, %s36
    %p42 = scmp.eq.s32.totalorder %s9, 0
    %p43 = por %p41, %p42
    %p44 = scmp.ne.s32.totalorder %s33, %s36
    %p45 = scmp.eq.s32.totalorder %s14, 3
    %p46 = por %p44, %p45
    %p47 = scmp.ne.s32.totalorder %s36, %s37
    %p48 = scmp.eq.s32.totalorder %s14, 0
    %p49 = por %p47, %p48
    %p50 = scmp.ne.s32.totalorder %s36, %s37
    %p51 = scmp.eq.s32.totalorder %s15, 3
    %p52 = por %p50, %p51
    %p54 = scmp.ne.s32.totalorder %s37, %s53
    %p55 = scmp.eq.s32.totalorder %s15, 0
    %p56 = por %p54, %p55
    %s57 = ssub.s32 %s16, %s28
    %p58 = scmp.eq.s32.totalorder %s57, 0
    %s60 = sadd.s32 %s59, 1
    %s61 = scalar_select %p58, %s59, %s60
    %p64 = pneg %p58
    %p65 = scmp.eq.s32.totalorder %s9, 3
    %p66 = por %p64, %p65
    %p67 = scmp.ne.s32.totalorder %s59, %s62
    %p68 = scmp.eq.s32.totalorder %s9, 0
    %p69 = por %p67, %p68
    %p70 = scmp.ne.s32.totalorder %s59, %s62
    %p71 = scmp.eq.s32.totalorder %s14, 3
    %p72 = por %p70, %p71
    %p73 = scmp.ne.s32.totalorder %s62, %s63
    %p74 = scmp.eq.s32.totalorder %s14, 0
    %p75 = por %p73, %p74
    %p76 = scmp.ne.s32.totalorder %s62, %s63
    %p77 = scmp.eq.s32.totalorder %s15, 3
    %p78 = por %p76, %p77
    %p80 = scmp.ne.s32.totalorder %s63, %s79
    %p81 = scmp.eq.s32.totalorder %s15, 0
    %p82 = por %p80, %p81
    %s84 = sadd.s32 %s83, 1
    %p87 = scmp.eq.s32.totalorder %s9, 3
    %p88 = scmp.ne.s32.totalorder %s83, %s85
    %p89 = scmp.eq.s32.totalorder %s9, 0
    %p90 = por %p88, %p89
    %p91 = scmp.ne.s32.totalorder %s83, %s85
    %p92 = scmp.eq.s32.totalorder %s14, 3
    %p93 = por %p91, %p92
    %p94 = scmp.ne.s32.totalorder %s85, %s86
    %p95 = scmp.eq.s32.totalorder %s14, 0
    %p96 = por %p94, %p95
    %p97 = scmp.ne.s32.totalorder %s85, %s86
    %p98 = scmp.eq.s32.totalorder %s15, 3
    %p99 = por %p97, %p98
    %p101 = scmp.ne.s32.totalorder %s86, %s100
    %p102 = scmp.eq.s32.totalorder %s15, 0
    %p103 = por %p101, %p102
    %s104 = ssub.s32 %s16, %s28
    %s105 = ssub.s32 %s17, %s24
    %s106 = sor.u32 %s104, %s105
    %p107 = scmp.eq.s32.totalorder %s106, 0
    %s109 = sadd.s32 %s108, 1
    %s110 = scalar_select %p107, %s108, %s109
    %p113 = pneg %p107
    %p114 = scmp.eq.s32.totalorder %s9, 3
    %p115 = por %p113, %p114
    %p116 = scmp.ne.s32.totalorder %s108, %s111
    %p117 = scmp.eq.s32.totalorder %s9, 0
    %p118 = por %p116, %p117
    %p119 = scmp.ne.s32.totalorder %s108, %s111
    %p120 = scmp.eq.s32.totalorder %s14, 3
    %p121 = por %p119, %p120
    %p122 = scmp.ne.s32.totalorder %s111, %s112
    %p123 = scmp.eq.s32.totalorder %s14, 0
    %p124 = por %p122, %p123
    %p125 = scmp.ne.s32.totalorder %s111, %s112
    %p126 = scmp.eq.s32.totalorder %s15, 3
    %p127 = por %p125, %p126
    %p129 = scmp.ne.s32.totalorder %s112, %s128
    %p130 = scmp.eq.s32.totalorder %s15, 0
    %p131 = por %p129, %p130
    %p132 = scmp.le.s32.totalorder 1, %s9
    %p133 = scmp.lt.s32.totalorder %s9, 5
    %p134 = pnand %p132, %p133
    %p135 = pneg %p134
    // Predicated region
    $region9: #{forward.7} parent=5 // pred_check
      _
    $region10: #{forward.7} parent=5 // pred_check_branch
      %137 = sbr.rel (%p134) target = $region12
    $region11: #{forward.7} parent=5 // pred_region
      %s138 = ssub.s32 %s9, 1
      // Predicated region
      $region13: #{forward.7} parent=11 // pred_check
        %p139 = pneg %p96
      $region14: #{forward.7} parent=11 // pred_check_branch
        %141 = sbr.rel (%p139) target = $region16
      $region15: #{forward.7} parent=11 // pred_region
        _
      $region16: #{forward.7} parent=11 // pred_fallthru
        _
    $region12: #{forward.7} parent=5 // pred_fallthru
      _
    %p142 = scmp.lt.s32.totalorder %s9, 4
    // Predicated region
    $region17: #{forward.7} parent=5 // pred_check
      %p143 = pneg %p142
    $region18: #{forward.7} parent=5 // pred_check_branch
      %145 = sbr.rel (%p143) target = $region20
    $region19: #{forward.7} parent=5 // pred_region
      // Predicated region
      $region21: #{forward.7} parent=19 // pred_check
        %p146 = pneg %p43
      $region22: #{forward.7} parent=19 // pred_check_branch
        %148 = sbr.rel (%p146) target = $region24
      $region23: #{forward.7} parent=19 // pred_region
        %s149 = smul.u32 16, %s17
        %p150 = scmp.lt.s32.totalorder %s16, 3
        %s151 = scalar_select %p150, %s16, 3
        %p152 = scmp.lt.s32.totalorder %s149, 15
        %s153 = scalar_select %p152, %s149, 15
        %s154 = smul.addr %s153, 2
        %s155 = smul.addr %s151, 32
        %s156 = sadd.s32 %s154, %s155
        %s157 = smul.addr %s156, 8
        %s158 = scalar_lea.vmem %s0, %s157
        %s159 = smul.u32 16, %s17
      $region24: #{forward.7} parent=19 // pred_fallthru
        _
      // Predicated region
      $region25: #{forward.7} parent=19 // pred_check
        %p160 = pneg %p69
      $region26: #{forward.7} parent=19 // pred_check_branch
        %162 = sbr.rel (%p160) target = $region28
      $region27: #{forward.7} parent=19 // pred_region
        %p163 = scmp.lt.s32.totalorder %s16, 3
        %s164 = scalar_select %p163, %s16, 3
        %s165 = smul.addr %s164, 32
        %s166 = smul.addr %s165, 8
        %s167 = scalar_lea.vmem %s1, %s166
      $region28: #{forward.7} parent=19 // pred_fallthru
        _
    $region20: #{forward.7} parent=5 // pred_fallthru
      _
    %p168 = scmp.le.s32.totalorder 1, %s9
    %p169 = scmp.lt.s32.totalorder %s9, 5
    %p170 = pnand %p168, %p169
    %p171 = pneg %p170
    // Predicated region
    $region29: #{forward.7} parent=5 // pred_check
      _
    $region30: #{forward.7} parent=5 // pred_check_branch
      %173 = sbr.rel (%p170) target = $region32
    $region31: #{forward.7} parent=5 // pred_region
      %s174 = ssub.s32 %s9, 1
      %s175 = smul.u32 16, %s19
      %p176 = scmp.lt.s32.totalorder %s18, 3
      %s177 = scalar_select %p176, %s18, 3
      %p178 = scmp.lt.s32.totalorder %s175, 15
      %s179 = scalar_select %p178, %s175, 15
      %s180 = smul.addr %s179, 2
      %s181 = smul.addr %s177, 32
      %s182 = sadd.s32 %s180, %s181
      %s183 = smul.addr %s182, 8
      %s184 = scalar_lea.vmem %s0, %s183
      %p185 = pneg %p49
      %p186 = pneg %p46
      %p187 = scmp.lt.s32.totalorder %s18, 3
      %s188 = scalar_select %p187, %s18, 3
      %s189 = smul.addr %s188, 32
      %s190 = smul.addr %s189, 8
      %s191 = scalar_lea.vmem %s1, %s190
      %p192 = pneg %p75
      %p193 = pneg %p72
      %p194 = pneg %p96
      %p195 = pneg %p93
      %p196 = pneg %p124
      %p197 = pneg %p121
      %s198 = smul.u32 16, %s19
      %p199 = scmp.lt.s32.totalorder %s18, 3
      %s200 = scalar_select %p199, %s18, 3
      %p201 = scmp.lt.s32.totalorder %s198, 15
      %s202 = scalar_select %p201, %s198, 15
      %s203 = smul.addr %s200, 16
      %s204 = sadd.s32 %s202, %s203
      %s205 = smul.addr %s204, 8
      %s206 = scalar_lea.vmem %s3, %s205
      %s207 = smul.u32 16, %s19
      %p208 = scmp.lt.s32.totalorder %s18, 3
      %s209 = scalar_select %p208, %s18, 3
      %p210 = scmp.lt.s32.totalorder %s207, 15
      %s211 = scalar_select %p210, %s207, 15
      %s212 = smul.addr %s211, 2
      %s213 = smul.addr %s209, 32
      %s214 = sadd.s32 %s212, %s213
      %s215 = smul.addr %s214, 8
      %s216 = scalar_lea.vmem %s0, %s215
      %s217 = smul.u32 16, %s19
      %p218 = scmp.lt.s32.totalorder %s18, 3
      %s219 = scalar_select %p218, %s18, 3
      %s220 = smul.addr %s219, 32
      %s221 = smul.addr %s220, 8
      %s222 = scalar_lea.vmem %s1, %s221
      %s223 = smul.u32 16, %s19
      %p224 = scmp.lt.s32.totalorder %s18, 3
      %s225 = scalar_select %p224, %s18, 3
      %p226 = scmp.lt.s32.totalorder %s223, 15
      %s227 = scalar_select %p226, %s223, 15
      %s228 = smul.addr %s225, 16
      %s229 = sadd.s32 %s227, %s228
      %s230 = smul.addr %s229, 8
      %s231 = scalar_lea.vmem %s3, %s230
      %s232 = smul.u32 16, %s19
      %v233 = vld [vmem:[%s216] sm:$0xff]
      %v234 = vld [vmem:[%s216 + $0x8] sm:$0xff]
      %v235 = vld [vmem:[%s216 + $0x10] sm:$0xff]
      %v236 = vld [vmem:[%s216 + $0x18] sm:$0xff]
      %v237 = vld [vmem:[%s216 + $0x20] sm:$0xff]
      %v238 = vld [vmem:[%s216 + $0x28] sm:$0xff]
      %v239 = vld [vmem:[%s216 + $0x30] sm:$0xff]
      %v240 = vld [vmem:[%s216 + $0x38] sm:$0xff]
      %v241 = vld [vmem:[%s216 + $0x40] sm:$0xff]
      %v242 = vld [vmem:[%s216 + $0x48] sm:$0xff]
      %v243 = vld [vmem:[%s216 + $0x50] sm:$0xff]
      %v244 = vld [vmem:[%s216 + $0x58] sm:$0xff]
      %v245 = vld [vmem:[%s216 + $0x60] sm:$0xff]
      %v246 = vld [vmem:[%s216 + $0x68] sm:$0xff]
      %v247 = vld [vmem:[%s216 + $0x70] sm:$0xff]
      %v248 = vld [vmem:[%s216 + $0x78] sm:$0xff]
      %v249 = vld [vmem:[%s216 + $0x80] sm:$0xff]
      %v250 = vld [vmem:[%s216 + $0x88] sm:$0xff]
      %v251 = vld [vmem:[%s216 + $0x90] sm:$0xff]
      %v252 = vld [vmem:[%s216 + $0x98] sm:$0xff]
      %v253 = vld [vmem:[%s216 + $0xa0] sm:$0xff]
      %v254 = vld [vmem:[%s216 + $0xa8] sm:$0xff]
      %v255 = vld [vmem:[%s216 + $0xb0] sm:$0xff]
      %v256 = vld [vmem:[%s216 + $0xb8] sm:$0xff]
      %v257 = vld [vmem:[%s216 + $0xc0] sm:$0xff]
      %v258 = vld [vmem:[%s216 + $0xc8] sm:$0xff]
      %v259 = vld [vmem:[%s216 + $0xd0] sm:$0xff]
      %v260 = vld [vmem:[%s216 + $0xd8] sm:$0xff]
      %v261 = vld [vmem:[%s216 + $0xe0] sm:$0xff]
      %v262 = vld [vmem:[%s216 + $0xe8] sm:$0xff]
      %v263 = vld [vmem:[%s216 + $0xf0] sm:$0xff]
      %v264 = vld [vmem:[%s216 + $0xf8] sm:$0xff]
      %v265 = vld [vmem:[%s222] sm:$0xff]
      %v266 = vld [vmem:[%s222 + $0x8] sm:$0xff]
      %v267 = vld [vmem:[%s222 + $0x10] sm:$0xff]
      %v268 = vld [vmem:[%s222 + $0x18] sm:$0xff]
      %v269 = vld [vmem:[%s222 + $0x20] sm:$0xff]
      %v270 = vld [vmem:[%s222 + $0x28] sm:$0xff]
      %v271 = vld [vmem:[%s222 + $0x30] sm:$0xff]
      %v272 = vld [vmem:[%s222 + $0x38] sm:$0xff]
      %v273 = vld [vmem:[%s222 + $0x40] sm:$0xff]
      %v274 = vld [vmem:[%s222 + $0x48] sm:$0xff]
      %v275 = vld [vmem:[%s222 + $0x50] sm:$0xff]
      %v276 = vld [vmem:[%s222 + $0x58] sm:$0xff]
      %v277 = vld [vmem:[%s222 + $0x60] sm:$0xff]
      %v278 = vld [vmem:[%s222 + $0x68] sm:$0xff]
      %v279 = vld [vmem:[%s222 + $0x70] sm:$0xff]
      %v280 = vld [vmem:[%s222 + $0x78] sm:$0xff]
      %v281 = vld [vmem:[%s222 + $0x80] sm:$0xff]
      %v282 = vld [vmem:[%s222 + $0x88] sm:$0xff]
      %v283 = vld [vmem:[%s222 + $0x90] sm:$0xff]
      %v284 = vld [vmem:[%s222 + $0x98] sm:$0xff]
      %v285 = vld [vmem:[%s222 + $0xa0] sm:$0xff]
      %v286 = vld [vmem:[%s222 + $0xa8] sm:$0xff]
      %v287 = vld [vmem:[%s222 + $0xb0] sm:$0xff]
      %v288 = vld [vmem:[%s222 + $0xb8] sm:$0xff]
      %v289 = vld [vmem:[%s222 + $0xc0] sm:$0xff]
      %v290 = vld [vmem:[%s222 + $0xc8] sm:$0xff]
      %v291 = vld [vmem:[%s222 + $0xd0] sm:$0xff]
      %v292 = vld [vmem:[%s222 + $0xd8] sm:$0xff]
      %v293 = vld [vmem:[%s222 + $0xe0] sm:$0xff]
      %v294 = vld [vmem:[%s222 + $0xe8] sm:$0xff]
      %v295 = vld [vmem:[%s222 + $0xf0] sm:$0xff]
      %v296 = vld [vmem:[%s222 + $0xf8] sm:$0xff]
      %v297 = vld [vmem:[%s2] sm:$0x1]
      %v299 = vlaneseq
      %v300 = vshrl.u32 %v299, 7
      %v301 = vsub.s32 0, %v300
      %v302 = vrot.slane %v297, %v301
      %304 = vmatprep.subr.mxu0 0.0
      %305 = vmatpush1.msra.mxu0 %v265
      %306 = vmatprep.subr.mxu0 0.0
      %307 = vmatpush1.msra.mxu0 %v266
      %308 = vmatprep.subr.mxu0 0.0
      %309 = vmatpush1.msra.mxu0 %v267
      %310 = vmatprep.subr.mxu0 0.0
      %311 = vmatpush1.msra.mxu0 %v268
      %312 = vmatprep.subr.mxu0 0.0
      %313 = vmatpush1.msra.mxu0 %v269
      %314 = vmatprep.subr.mxu0 0.0
      %315 = vmatpush1.msra.mxu0 %v270
      %316 = vmatprep.subr.mxu0 0.0
      %317 = vmatpush1.msra.mxu0 %v271
      %318 = vmatprep.subr.mxu0 0.0
      %319 = vmatpush1.msra.mxu0 %v272
      %320 = vmatprep.subr.mxu0 0.0
      %321 = vmatpush1.msra.mxu0 %v273
      %322 = vmatprep.subr.mxu0 0.0
      %323 = vmatpush1.msra.mxu0 %v274
      %324 = vmatprep.subr.mxu0 0.0
      %325 = vmatpush1.msra.mxu0 %v275
      %326 = vmatprep.subr.mxu0 0.0
      %327 = vmatpush1.msra.mxu0 %v276
      %328 = vmatprep.subr.mxu0 0.0
      %329 = vmatpush1.msra.mxu0 %v277
      %330 = vmatprep.subr.mxu0 0.0
      %331 = vmatpush1.msra.mxu0 %v278
      %332 = vmatprep.subr.mxu0 0.0
      %333 = vmatpush1.msra.mxu0 %v279
      %334 = vmatprep.subr.mxu0 0.0
      %335 = vmatpush1.msra.mxu0 %v280
      %336 = vmatprep.subr.mxu0 0.0
      %337 = vmatpush1.msra.mxu0 %v281
      %338 = vmatprep.subr.mxu0 0.0
      %339 = vmatpush1.msra.mxu0 %v282
      %340 = vmatprep.subr.mxu0 0.0
      %341 = vmatpush1.msra.mxu0 %v283
      %342 = vmatprep.subr.mxu0 0.0
      %343 = vmatpush1.msra.mxu0 %v284
      %344 = vmatprep.subr.mxu0 0.0
      %345 = vmatpush1.msra.mxu0 %v285
      %346 = vmatprep.subr.mxu0 0.0
      %347 = vmatpush1.msra.mxu0 %v286
      %348 = vmatprep.subr.mxu0 0.0
      %349 = vmatpush1.msra.mxu0 %v287
      %350 = vmatprep.subr.mxu0 0.0
      %351 = vmatpush1.msra.mxu0 %v288
      %352 = vmatprep.subr.mxu0 0.0
      %353 = vmatpush1.msra.mxu0 %v289
      %354 = vmatprep.subr.mxu0 0.0
      %355 = vmatpush1.msra.mxu0 %v290
      %356 = vmatprep.subr.mxu0 0.0
      %357 = vmatpush1.msra.mxu0 %v291
      %358 = vmatprep.subr.mxu0 0.0
      %359 = vmatpush1.msra.mxu0 %v292
      %360 = vmatprep.subr.mxu0 0.0
      %361 = vmatpush1.msra.mxu0 %v293
      %362 = vmatprep.subr.mxu0 0.0
      %363 = vmatpush1.msra.mxu0 %v294
      %364 = vmatprep.subr.mxu0 0.0
      %365 = vmatpush1.msra.mxu0 %v295
      %366 = vmatprep.subr.mxu0 0.0
      %367 = vmatpush1.msra.mxu0 %v296
      %368 = vmatprep.mubr.f32.mxu0 %v234
      %369 = vmatmul.mubr.f32.gmra.mrb[0].mxu0 %v233
      %v370 = vpop.f32.mrb[0].mxu0
      %v371 = vadd.f32 %v302, %v370
      %v372 = vpop.f32.mrb[0].mxu0
      %373 = vmatprep.mubr.f32.mxu0 %v236
      %374 = vmatmul.mubr.f32.gmra.mrb[0].mxu0 %v235
      %v375 = vpop.f32.mrb[0].mxu0
      %v376 = vadd.f32 %v302, %v375
      %v377 = vpop.f32.mrb[0].mxu0
      %378 = vmatprep.mubr.f32.mxu0 %v238
      %379 = vmatmul.mubr.f32.gmra.mrb[0].mxu0 %v237
      %v380 = vpop.f32.mrb[0].mxu0
      %v381 = vadd.f32 %v302, %v380
      %v382 = vpop.f32.mrb[0].mxu0
      %383 = vmatprep.mubr.f32.mxu0 %v240
      %384 = vmatmul.mubr.f32.gmra.mrb[0].mxu0 %v239
      %v385 = vpop.f32.mrb[0].mxu0
      %v386 = vadd.f32 %v302, %v385
      %v387 = vpop.f32.mrb[0].mxu0
      %388 = vmatprep.mubr.f32.mxu0 %v242
      %389 = vmatmul.mubr.f32.gmra.mrb[0].mxu0 %v241
      %v390 = vpop.f32.mrb[0].mxu0
      %v391 = vadd.f32 %v302, %v390
      %v392 = vpop.f32.mrb[0].mxu0
      %393 = vmatprep.mubr.f32.mxu0 %v244
      %394 = vmatmul.mubr.f32.gmra.mrb[0].mxu0 %v243
      %v395 = vpop.f32.mrb[0].mxu0
      %v396 = vadd.f32 %v302, %v395
      %v397 = vpop.f32.mrb[0].mxu0
      %398 = vmatprep.mubr.f32.mxu0 %v246
      %399 = vmatmul.mubr.f32.gmra.mrb[0].mxu0 %v245
      %v400 = vpop.f32.mrb[0].mxu0
      %v401 = vadd.f32 %v302, %v400
      %v402 = vpop.f32.mrb[0].mxu0
      %403 = vmatprep.mubr.f32.mxu0 %v248
      %404 = vmatmul.mubr.f32.gmra.mrb[0].mxu0 %v247
      %v405 = vpop.f32.mrb[0].mxu0
      %v406 = vadd.f32 %v302, %v405
      %v407 = vpop.f32.mrb[0].mxu0
      %408 = vmatprep.mubr.f32.mxu0 %v250
      %409 = vmatmul.mubr.f32.gmra.mrb[0].mxu0 %v249
      %v410 = vpop.f32.mrb[0].mxu0
      %v411 = vadd.f32 %v302, %v410
      %v412 = vpop.f32.mrb[0].mxu0
      %413 = vmatprep.mubr.f32.mxu0 %v252
      %414 = vmatmul.mubr.f32.gmra.mrb[0].mxu0 %v251
      %v415 = vpop.f32.mrb[0].mxu0
      %v416 = vadd.f32 %v302, %v415
      %v417 = vpop.f32.mrb[0].mxu0
      %418 = vmatprep.mubr.f32.mxu0 %v254
      %419 = vmatmul.mubr.f32.gmra.mrb[0].mxu0 %v253
      %v420 = vpop.f32.mrb[0].mxu0
      %v421 = vadd.f32 %v302, %v420
      %v422 = vpop.f32.mrb[0].mxu0
      %423 = vmatprep.mubr.f32.mxu0 %v256
      %424 = vmatmul.mubr.f32.gmra.mrb[0].mxu0 %v255
      %v425 = vpop.f32.mrb[0].mxu0
      %v426 = vadd.f32 %v302, %v425
      %v427 = vpop.f32.mrb[0].mxu0
      %428 = vmatprep.mubr.f32.mxu0 %v258
      %429 = vmatmul.mubr.f32.gmra.mrb[0].mxu0 %v257
      %v430 = vpop.f32.mrb[0].mxu0
      %v431 = vadd.f32 %v302, %v430
      %v432 = vpop.f32.mrb[0].mxu0
      %433 = vmatprep.mubr.f32.mxu0 %v260
      %434 = vmatmul.mubr.f32.gmra.mrb[0].mxu0 %v259
      %v435 = vpop.f32.mrb[0].mxu0
      %v436 = vadd.f32 %v302, %v435
      %v437 = vpop.f32.mrb[0].mxu0
      %438 = vmatprep.mubr.f32.mxu0 %v262
      %439 = vmatmul.mubr.f32.gmra.mrb[0].mxu0 %v261
      %v440 = vpop.f32.mrb[0].mxu0
      %v441 = vadd.f32 %v302, %v440
      %v442 = vpop.f32.mrb[0].mxu0
      %443 = vmatprep.mubr.f32.mxu0 %v264
      %444 = vmatmul.mubr.f32.gmra.mrb[0].mxu0 %v263
      %v445 = vpop.f32.mrb[0].mxu0
      %v446 = vadd.f32 %v302, %v445
      %v447 = vpop.f32.mrb[0].mxu0
      %448 = vdwg.mxu0
      %v449 = vmax.f32 %v371, 0.0
      %v450 = vmax.f32 %v376, 0.0
      %v451 = vmax.f32 %v381, 0.0
      %v452 = vmax.f32 %v386, 0.0
      %v453 = vmax.f32 %v391, 0.0
      %v454 = vmax.f32 %v396, 0.0
      %v455 = vmax.f32 %v401, 0.0
      %v456 = vmax.f32 %v406, 0.0
      %v457 = vmax.f32 %v411, 0.0
      %v458 = vmax.f32 %v416, 0.0
      %v459 = vmax.f32 %v421, 0.0
      %v460 = vmax.f32 %v426, 0.0
      %v461 = vmax.f32 %v431, 0.0
      %v462 = vmax.f32 %v436, 0.0
      %v463 = vmax.f32 %v441, 0.0
      %v464 = vmax.f32 %v446, 0.0
      %465 = vst [vmem:[%s231] sm:$0xff] %v449
      %466 = vst [vmem:[%s231 + $0x8] sm:$0xff] %v450
      %467 = vst [vmem:[%s231 + $0x10] sm:$0xff] %v451
      %468 = vst [vmem:[%s231 + $0x18] sm:$0xff] %v452
      %469 = vst [vmem:[%s231 + $0x20] sm:$0xff] %v453
      %470 = vst [vmem:[%s231 + $0x28] sm:$0xff] %v454
      %471 = vst [vmem:[%s231 + $0x30] sm:$0xff] %v455
      %472 = vst [vmem:[%s231 + $0x38] sm:$0xff] %v456
      %473 = vst [vmem:[%s231 + $0x40] sm:$0xff] %v457
      %474 = vst [vmem:[%s231 + $0x48] sm:$0xff] %v458
      %475 = vst [vmem:[%s231 + $0x50] sm:$0xff] %v459
      %476 = vst [vmem:[%s231 + $0x58] sm:$0xff] %v460
      %477 = vst [vmem:[%s231 + $0x60] sm:$0xff] %v461
      %478 = vst [vmem:[%s231 + $0x68] sm:$0xff] %v462
      %479 = vst [vmem:[%s231 + $0x70] sm:$0xff] %v463
      %480 = vst [vmem:[%s231 + $0x78] sm:$0xff] %v464
      %s481 = smul.u32 16, %s19
      %p482 = scmp.lt.s32.totalorder %s18, 3
      %s483 = scalar_select %p482, %s18, 3
      %p484 = scmp.lt.s32.totalorder %s481, 15
      %s485 = scalar_select %p484, %s481, 15
      %s486 = smul.addr %s483, 16
      %s487 = sadd.s32 %s485, %s486
      %s488 = smul.addr %s487, 8
      %s489 = scalar_lea.vmem %s3, %s488
      // Predicated region
      $region33: #{forward.7} parent=31 // pred_check
        %p490 = pneg %p121
      $region34: #{forward.7} parent=31 // pred_check_branch
        %492 = sbr.rel (%p490) target = $region36
      $region35: #{forward.7} parent=31 // pred_region
        %s493 = smul.u32 16, %s19
      $region36: #{forward.7} parent=31 // pred_fallthru
        _
    $region32: #{forward.7} parent=5 // pred_fallthru
      _
    %p494 = scmp.le.s32.totalorder 2, %s9
    // Predicated region
    $region37: #{forward.7} parent=5 // pred_check
      %p495 = pneg %p494
    $region38: #{forward.7} parent=5 // pred_check_branch
      %497 = sbr.rel (%p495) target = $region40
    $region39: #{forward.7} parent=5 // pred_region
      %s498 = ssub.s32 %s9, 2
      // Predicated region
      $region41: #{forward.7} parent=39 // pred_check
        %p499 = pneg %p127
      $region42: #{forward.7} parent=39 // pred_check_branch
        %501 = sbr.rel (%p499) target = $region44
      $region43: #{forward.7} parent=39 // pred_region
        %s502 = smul.u32 16, %s21
        %p503 = scmp.lt.s32.totalorder %s20, 3
        %s504 = scalar_select %p503, %s20, 3
        %p505 = scmp.lt.s32.totalorder %s502, 15
        %s506 = scalar_select %p505, %s502, 15
        %s507 = smul.addr %s504, 16
        %s508 = sadd.s32 %s506, %s507
        %s509 = smul.addr %s508, 8
        %s510 = scalar_lea.vmem %s3, %s509
      $region44: #{forward.7} parent=39 // pred_fallthru
        _
    $region40: #{forward.7} parent=5 // pred_fallthru
      _
  $region6: #{forward.7} parent=0 // loop_footer
    %s13 = sadd.s32 1, %s9
  $region7: #{forward.7} parent=0 // loop_footer_branch
    %8 = sbr.rel target = $region3
  $region8: #{forward.7} parent=0 // loop_exit
    _

// kernel: forward.8
$region0: #{forward.8}
  #allocation0 [shape = 'u32[]', space=smem, size = 0x4, offset = 0x4, fixed_abs, tag = 'smem constant byte address 0x4 - core index']
  #allocation1 [shape = 'u32[144,128]{1,0:T(1,128)}', space=vmem, size = 0x12000, scoped, tag = 'internal scratch']
  %s0 = inlined_call_operand.vmem [shape: f32[4,512,128], index: 0, kind: input, shape index: {}]
  %s1 = inlined_call_operand.vmem [shape: f32[4,128,128], index: 1, kind: input, shape index: {}]
  %s2 = inlined_call_operand.vmem [shape: f32[1,128], index: 2, kind: input, shape index: {}]
  %s3 = inlined_call_operand.vmem [shape: f32[4,512,128], index: 3, kind: output, shape index: {}]
  %s4 = sld [smem:[#allocation0]]
  $region45: #{forward.8} parent=0
    _
  %s6 = ssub.s32 1, %s4
  %s7 = scalar_select 0, %s6, %s4
  loop: start=0, step=1, limit=6
  $region2: #{forward.8} parent=0 // loop_pre_header
    _
  $region3: #{forward.8} parent=0 // loop_header
    %s9 = sphi 0, %s13
    %p10 = scmp.ge.s32.totalorder %s9, 6
    %s16 = sphi 0, %s28
    %s17 = sphi 0, %s24
    %s18 = sphi 0, %s16
    %s19 = sphi 0, %s17
    %s20 = sphi 0, %s18
    %s21 = sphi 0, %s19
    %s33 = sphi 0, %s35
    %s36 = sphi 0, %s33
    %s37 = sphi 0, %s36
    %s53 = sphi 0, %s37
    %s59 = sphi 0, %s61
    %s62 = sphi 0, %s59
    %s63 = sphi 0, %s62
    %s79 = sphi 0, %s63
    %s83 = sphi 0, %s83
    %s85 = sphi 0, %s83
    %s86 = sphi 0, %s85
    %s100 = sphi 0, %s86
    %s108 = sphi 0, %s110
    %s111 = sphi 0, %s108
    %s112 = sphi 0, %s111
    %s128 = sphi 0, %s112
  $region4: #{forward.8} parent=0 // loop_header_branch
    %12 = sbr.rel (%p10) target = $region8
  $region5: #{forward.8} parent=0 // loop_body
    %s14 = ssub.s32 %s9, 1
    %s15 = ssub.s32 %s9, 2
    %s22 = sadd.s32 1, %s17
    %p23 = scmp.ge.s32.totalorder %s22, 1
    %s24 = scalar_select %p23, 0, %s22
    %s25 = sadd.s32 1, %s16
    %s26 = scalar_select %p23, %s25, %s16
    %p27 = scmp.ge.s32.totalorder %s26, 4
    %s28 = scalar_select %p27, 0, %s26
    %s29 = ssub.s32 %s16, %s28
    %s30 = ssub.s32 %s17, %s24
    %s31 = sor.u32 %s29, %s30
    %p32 = scmp.eq.s32.totalorder %s31, 0
    %s34 = sadd.s32 %s33, 1
    %s35 = scalar_select %p32, %s33, %s34
    %p38 = pneg %p32
    %p39 = scmp.eq.s32.totalorder %s9, 3
    %p40 = por %p38, %p39
    %p41 = scmp.ne.s32.totalorder %s33, %s36
    %p42 = scmp.eq.s32.totalorder %s9, 0
    %p43 = por %p41, %p42
    %p44 = scmp.ne.s32.totalorder %s33, %s36
    %p45 = scmp.eq.s32.totalorder %s14, 3
    %p46 = por %p44, %p45
    %p47 = scmp.ne.s32.totalorder %s36, %s37
    %p48 = scmp.eq.s32.totalorder %s14, 0
    %p49 = por %p47, %p48
    %p50 = scmp.ne.s32.totalorder %s36, %s37
    %p51 = scmp.eq.s32.totalorder %s15, 3
    %p52 = por %p50, %p51
    %p54 = scmp.ne.s32.totalorder %s37, %s53
    %p55 = scmp.eq.s32.totalorder %s15, 0
    %p56 = por %p54, %p55
    %s57 = ssub.s32 %s16, %s28
    %p58 = scmp.eq.s32.totalorder %s57, 0
    %s60 = sadd.s32 %s59, 1
    %s61 = scalar_select %p58, %s59, %s60
    %p64 = pneg %p58
    %p65 = scmp.eq.s32.totalorder %s9, 3
    %p66 = por %p64, %p65
    %p67 = scmp.ne.s32.totalorder %s59, %s62
    %p68 = scmp.eq.s32.totalorder %s9, 0
    %p69 = por %p67, %p68
    %p70 = scmp.ne.s32.totalorder %s59, %s62
    %p71 = scmp.eq.s32.totalorder %s14, 3
    %p72 = por %p70, %p71
    %p73 = scmp.ne.s32.totalorder %s62, %s63
    %p74 = scmp.eq.s32.totalorder %s14, 0
    %p75 = por %p73, %p74
    %p76 = scmp.ne.s32.totalorder %s62, %s63
    %p77 = scmp.eq.s32.totalorder %s15, 3
    %p78 = por %p76, %p77
    %p80 = scmp.ne.s32.totalorder %s63, %s79
    %p81 = scmp.eq.s32.totalorder %s15, 0
    %p82 = por %p80, %p81
    %s84 = sadd.s32 %s83, 1
    %p87 = scmp.eq.s32.totalorder %s9, 3
    %p88 = scmp.ne.s32.totalorder %s83, %s85
    %p89 = scmp.eq.s32.totalorder %s9, 0
    %p90 = por %p88, %p89
    %p91 = scmp.ne.s32.totalorder %s83, %s85
    %p92 = scmp.eq.s32.totalorder %s14, 3
    %p93 = por %p91, %p92
    %p94 = scmp.ne.s32.totalorder %s85, %s86
    %p95 = scmp.eq.s32.totalorder %s14, 0
    %p96 = por %p94, %p95
    %p97 = scmp.ne.s32.totalorder %s85, %s86
    %p98 = scmp.eq.s32.totalorder %s15, 3
    %p99 = por %p97, %p98
    %p101 = scmp.ne.s32.totalorder %s86, %s100
    %p102 = scmp.eq.s32.totalorder %s15, 0
    %p103 = por %p101, %p102
    %s104 = ssub.s32 %s16, %s28
    %s105 = ssub.s32 %s17, %s24
    %s106 = sor.u32 %s104, %s105
    %p107 = scmp.eq.s32.totalorder %s106, 0
    %s109 = sadd.s32 %s108, 1
    %s110 = scalar_select %p107, %s108, %s109
    %p113 = pneg %p107
    %p114 = scmp.eq.s32.totalorder %s9, 3
    %p115 = por %p113, %p114
    %p116 = scmp.ne.s32.totalorder %s108, %s111
    %p117 = scmp.eq.s32.totalorder %s9, 0
    %p118 = por %p116, %p117
    %p119 = scmp.ne.s32.totalorder %s108, %s111
    %p120 = scmp.eq.s32.totalorder %s14, 3
    %p121 = por %p119, %p120
    %p122 = scmp.ne.s32.totalorder %s111, %s112
    %p123 = scmp.eq.s32.totalorder %s14, 0
    %p124 = por %p122, %p123
    %p125 = scmp.ne.s32.totalorder %s111, %s112
    %p126 = scmp.eq.s32.totalorder %s15, 3
    %p127 = por %p125, %p126
    %p129 = scmp.ne.s32.totalorder %s112, %s128
    %p130 = scmp.eq.s32.totalorder %s15, 0
    %p131 = por %p129, %p130
    %p132 = scmp.le.s32.totalorder 1, %s9
    %p133 = scmp.lt.s32.totalorder %s9, 5
    %p134 = pnand %p132, %p133
    %p135 = pneg %p134
    // Predicated region
    $region9: #{forward.8} parent=5 // pred_check
      _
    $region10: #{forward.8} parent=5 // pred_check_branch
      %137 = sbr.rel (%p134) target = $region12
    $region11: #{forward.8} parent=5 // pred_region
      %s138 = ssub.s32 %s9, 1
      // Predicated region
      $region13: #{forward.8} parent=11 // pred_check
        %p139 = pneg %p96
      $region14: #{forward.8} parent=11 // pred_check_branch
        %141 = sbr.rel (%p139) target = $region16
      $region15: #{forward.8} parent=11 // pred_region
        _
      $region16: #{forward.8} parent=11 // pred_fallthru
        _
    $region12: #{forward.8} parent=5 // pred_fallthru
      _
    %p142 = scmp.lt.s32.totalorder %s9, 4
    // Predicated region
    $region17: #{forward.8} parent=5 // pred_check
      %p143 = pneg %p142
    $region18: #{forward.8} parent=5 // pred_check_branch
      %145 = sbr.rel (%p143) target = $region20
    $region19: #{forward.8} parent=5 // pred_region
      // Predicated region
      $region21: #{forward.8} parent=19 // pred_check
        %p146 = pneg %p43
      $region22: #{forward.8} parent=19 // pred_check_branch
        %148 = sbr.rel (%p146) target = $region24
      $region23: #{forward.8} parent=19 // pred_region
        %s149 = smul.u32 64, %s17
        %p150 = scmp.lt.s32.totalorder %s16, 3
        %s151 = scalar_select %p150, %s16, 3
        %p152 = scmp.lt.s32.totalorder %s149, 63
        %s153 = scalar_select %p152, %s149, 63
        %s154 = smul.addr %s151, 64
        %s155 = sadd.s32 %s153, %s154
        %s156 = smul.addr %s155, 8
        %s157 = scalar_lea.vmem %s0, %s156
        %s158 = smul.u32 64, %s17
      $region24: #{forward.8} parent=19 // pred_fallthru
        _
      // Predicated region
      $region25: #{forward.8} parent=19 // pred_check
        %p159 = pneg %p69
      $region26: #{forward.8} parent=19 // pred_check_branch
        %161 = sbr.rel (%p159) target = $region28
      $region27: #{forward.8} parent=19 // pred_region
        %p162 = scmp.lt.s32.totalorder %s16, 3
        %s163 = scalar_select %p162, %s16, 3
        %s164 = smul.addr %s163, 16
        %s165 = smul.addr %s164, 8
        %s166 = scalar_lea.vmem %s1, %s165
      $region28: #{forward.8} parent=19 // pred_fallthru
        _
    $region20: #{forward.8} parent=5 // pred_fallthru
      _
    %p167 = scmp.le.s32.totalorder 1, %s9
    %p168 = scmp.lt.s32.totalorder %s9, 5
    %p169 = pnand %p167, %p168
    %p170 = pneg %p169
    // Predicated region
    $region29: #{forward.8} parent=5 // pred_check
      _
    $region30: #{forward.8} parent=5 // pred_check_branch
      %172 = sbr.rel (%p169) target = $region32
    $region31: #{forward.8} parent=5 // pred_region
      %s173 = ssub.s32 %s9, 1
      %s174 = smul.u32 64, %s19
      %p175 = scmp.lt.s32.totalorder %s18, 3
      %s176 = scalar_select %p175, %s18, 3
      %p177 = scmp.lt.s32.totalorder %s174, 63
      %s178 = scalar_select %p177, %s174, 63
      %s179 = smul.addr %s176, 64
      %s180 = sadd.s32 %s178, %s179
      %s181 = smul.addr %s180, 8
      %s182 = scalar_lea.vmem %s0, %s181
      %p183 = pneg %p49
      %p184 = pneg %p46
      %p185 = scmp.lt.s32.totalorder %s18, 3
      %s186 = scalar_select %p185, %s18, 3
      %s187 = smul.addr %s186, 16
      %s188 = smul.addr %s187, 8
      %s189 = scalar_lea.vmem %s1, %s188
      %p190 = pneg %p75
      %p191 = pneg %p72
      %p192 = pneg %p96
      %p193 = pneg %p93
      %p194 = pneg %p124
      %p195 = pneg %p121
      %s196 = smul.u32 64, %s19
      %p197 = scmp.lt.s32.totalorder %s18, 3
      %s198 = scalar_select %p197, %s18, 3
      %p199 = scmp.lt.s32.totalorder %s196, 63
      %s200 = scalar_select %p199, %s196, 63
      %s201 = smul.addr %s198, 64
      %s202 = sadd.s32 %s200, %s201
      %s203 = smul.addr %s202, 8
      %s204 = scalar_lea.vmem %s3, %s203
      %s205 = smul.u32 64, %s19
      %p206 = scmp.lt.s32.totalorder %s18, 3
      %s207 = scalar_select %p206, %s18, 3
      %p208 = scmp.lt.s32.totalorder %s205, 63
      %s209 = scalar_select %p208, %s205, 63
      %s210 = smul.addr %s207, 64
      %s211 = sadd.s32 %s209, %s210
      %s212 = smul.addr %s211, 8
      %s213 = scalar_lea.vmem %s0, %s212
      %s214 = smul.u32 64, %s19
      %p215 = scmp.lt.s32.totalorder %s18, 3
      %s216 = scalar_select %p215, %s18, 3
      %s217 = smul.addr %s216, 16
      %s218 = smul.addr %s217, 8
      %s219 = scalar_lea.vmem %s1, %s218
      %s220 = smul.u32 64, %s19
      %p221 = scmp.lt.s32.totalorder %s18, 3
      %s222 = scalar_select %p221, %s18, 3
      %p223 = scmp.lt.s32.totalorder %s220, 63
      %s224 = scalar_select %p223, %s220, 63
      %s225 = smul.addr %s222, 64
      %s226 = sadd.s32 %s224, %s225
      %s227 = smul.addr %s226, 8
      %s228 = scalar_lea.vmem %s3, %s227
      %s229 = smul.u32 64, %s19
      %v230 = vld [vmem:[%s213] sm:$0xff]
      %v231 = vld [vmem:[%s213 + $0x8] sm:$0xff]
      %v232 = vld [vmem:[%s213 + $0x10] sm:$0xff]
      %v233 = vld [vmem:[%s213 + $0x18] sm:$0xff]
      %v234 = vld [vmem:[%s213 + $0x20] sm:$0xff]
      %v235 = vld [vmem:[%s213 + $0x28] sm:$0xff]
      %v236 = vld [vmem:[%s213 + $0x30] sm:$0xff]
      %v237 = vld [vmem:[%s213 + $0x38] sm:$0xff]
      %v238 = vld [vmem:[%s213 + $0x40] sm:$0xff]
      %v239 = vld [vmem:[%s213 + $0x48] sm:$0xff]
      %v240 = vld [vmem:[%s213 + $0x50] sm:$0xff]
      %v241 = vld [vmem:[%s213 + $0x58] sm:$0xff]
      %v242 = vld [vmem:[%s213 + $0x60] sm:$0xff]
      %v243 = vld [vmem:[%s213 + $0x68] sm:$0xff]
      %v244 = vld [vmem:[%s213 + $0x70] sm:$0xff]
      %v245 = vld [vmem:[%s213 + $0x78] sm:$0xff]
      %v246 = vld [vmem:[%s213 + $0x80] sm:$0xff]
      %v247 = vld [vmem:[%s213 + $0x88] sm:$0xff]
      %v248 = vld [vmem:[%s213 + $0x90] sm:$0xff]
      %v249 = vld [vmem:[%s213 + $0x98] sm:$0xff]
      %v250 = vld [vmem:[%s213 + $0xa0] sm:$0xff]
      %v251 = vld [vmem:[%s213 + $0xa8] sm:$0xff]
      %v252 = vld [vmem:[%s213 + $0xb0] sm:$0xff]
      %v253 = vld [vmem:[%s213 + $0xb8] sm:$0xff]
      %v254 = vld [vmem:[%s213 + $0xc0] sm:$0xff]
      %v255 = vld [vmem:[%s213 + $0xc8] sm:$0xff]
      %v256 = vld [vmem:[%s213 + $0xd0] sm:$0xff]
      %v257 = vld [vmem:[%s213 + $0xd8] sm:$0xff]
      %v258 = vld [vmem:[%s213 + $0xe0] sm:$0xff]
      %v259 = vld [vmem:[%s213 + $0xe8] sm:$0xff]
      %v260 = vld [vmem:[%s213 + $0xf0] sm:$0xff]
      %v261 = vld [vmem:[%s213 + $0xf8] sm:$0xff]
      %v262 = vld [vmem:[%s213 + $0x100] sm:$0xff]
      %v263 = vld [vmem:[%s213 + $0x108] sm:$0xff]
      %v264 = vld [vmem:[%s213 + $0x110] sm:$0xff]
      %v265 = vld [vmem:[%s213 + $0x118] sm:$0xff]
      %v266 = vld [vmem:[%s213 + $0x120] sm:$0xff]
      %v267 = vld [vmem:[%s213 + $0x128] sm:$0xff]
      %v268 = vld [vmem:[%s213 + $0x130] sm:$0xff]
      %v269 = vld [vmem:[%s213 + $0x138] sm:$0xff]
      %v270 = vld [vmem:[%s213 + $0x140] sm:$0xff]
      %v271 = vld [vmem:[%s213 + $0x148] sm:$0xff]
      %v272 = vld [vmem:[%s213 + $0x150] sm:$0xff]
      %v273 = vld [vmem:[%s213 + $0x158] sm:$0xff]
      %v274 = vld [vmem:[%s213 + $0x160] sm:$0xff]
      %v275 = vld [vmem:[%s213 + $0x168] sm:$0xff]
      %v276 = vld [vmem:[%s213 + $0x170] sm:$0xff]
      %v277 = vld [vmem:[%s213 + $0x178] sm:$0xff]
      %v278 = vld [vmem:[%s213 + $0x180] sm:$0xff]
      %v279 = vld [vmem:[%s213 + $0x188] sm:$0xff]
      %v280 = vld [vmem:[%s213 + $0x190] sm:$0xff]
      %v281 = vld [vmem:[%s213 + $0x198] sm:$0xff]
      %v282 = vld [vmem:[%s213 + $0x1a0] sm:$0xff]
      %v283 = vld [vmem:[%s213 + $0x1a8] sm:$0xff]
      %v284 = vld [vmem:[%s213 + $0x1b0] sm:$0xff]
      %v285 = vld [vmem:[%s213 + $0x1b8] sm:$0xff]
      %v286 = vld [vmem:[%s213 + $0x1c0] sm:$0xff]
      %v287 = vld [vmem:[%s213 + $0x1c8] sm:$0xff]
      %v288 = vld [vmem:[%s213 + $0x1d0] sm:$0xff]
      %v289 = vld [vmem:[%s213 + $0x1d8] sm:$0xff]
      %v290 = vld [vmem:[%s213 + $0x1e0] sm:$0xff]
      %v291 = vld [vmem:[%s213 + $0x1e8] sm:$0xff]
      %v292 = vld [vmem:[%s213 + $0x1f0] sm:$0xff]
      %v293 = vld [vmem:[%s213 + $0x1f8] sm:$0xff]
      %v294 = vld [vmem:[%s219] sm:$0xff]
      %v295 = vld [vmem:[%s219 + $0x8] sm:$0xff]
      %v296 = vld [vmem:[%s219 + $0x10] sm:$0xff]
      %v297 = vld [vmem:[%s219 + $0x18] sm:$0xff]
      %v298 = vld [vmem:[%s219 + $0x20] sm:$0xff]
      %v299 = vld [vmem:[%s219 + $0x28] sm:$0xff]
      %v300 = vld [vmem:[%s219 + $0x30] sm:$0xff]
      %v301 = vld [vmem:[%s219 + $0x38] sm:$0xff]
      %v302 = vld [vmem:[%s219 + $0x40] sm:$0xff]
      %v303 = vld [vmem:[%s219 + $0x48] sm:$0xff]
      %v304 = vld [vmem:[%s219 + $0x50] sm:$0xff]
      %v305 = vld [vmem:[%s219 + $0x58] sm:$0xff]
      %v306 = vld [vmem:[%s219 + $0x60] sm:$0xff]
      %v307 = vld [vmem:[%s219 + $0x68] sm:$0xff]
      %v308 = vld [vmem:[%s219 + $0x70] sm:$0xff]
      %v309 = vld [vmem:[%s219 + $0x78] sm:$0xff]
      %v310 = vld [vmem:[%s2] sm:$0x1]
      %v312 = vlaneseq
      %v313 = vshrl.u32 %v312, 7
      %v314 = vsub.s32 0, %v313
      %v315 = vrot.slane %v310, %v314
      %317 = vmatprep.subr.mxu0 0.0
      %318 = vmatpush1.msra.mxu0 %v294
      %319 = vmatprep.subr.mxu0 0.0
      %320 = vmatpush1.msra.mxu0 %v295
      %321 = vmatprep.subr.mxu0 0.0
      %322 = vmatpush1.msra.mxu0 %v296
      %323 = vmatprep.subr.mxu0 0.0
      %324 = vmatpush1.msra.mxu0 %v297
      %325 = vmatprep.subr.mxu0 0.0
      %326 = vmatpush1.msra.mxu0 %v298
      %327 = vmatprep.subr.mxu0 0.0
      %328 = vmatpush1.msra.mxu0 %v299
      %329 = vmatprep.subr.mxu0 0.0
      %330 = vmatpush1.msra.mxu0 %v300
      %331 = vmatprep.subr.mxu0 0.0
      %332 = vmatpush1.msra.mxu0 %v301
      %333 = vmatprep.subr.mxu0 0.0
      %334 = vmatpush1.msra.mxu0 %v302
      %335 = vmatprep.subr.mxu0 0.0
      %336 = vmatpush1.msra.mxu0 %v303
      %337 = vmatprep.subr.mxu0 0.0
      %338 = vmatpush1.msra.mxu0 %v304
      %339 = vmatprep.subr.mxu0 0.0
      %340 = vmatpush1.msra.mxu0 %v305
      %341 = vmatprep.subr.mxu0 0.0
      %342 = vmatpush1.msra.mxu0 %v306
      %343 = vmatprep.subr.mxu0 0.0
      %344 = vmatpush1.msra.mxu0 %v307
      %345 = vmatprep.subr.mxu0 0.0
      %346 = vmatpush1.msra.mxu0 %v308
      %347 = vmatprep.subr.mxu0 0.0
      %348 = vmatpush1.msra.mxu0 %v309
      %349 = vmatprep.subr.mxu0 0.0
      %350 = vmatpush1.msra.mxu0 0.0
      %351 = vmatprep.subr.mxu0 0.0
      %352 = vmatpush1.msra.mxu0 0.0
      %353 = vmatprep.subr.mxu0 0.0
      %354 = vmatpush1.msra.mxu0 0.0
      %355 = vmatprep.subr.mxu0 0.0
      %356 = vmatpush1.msra.mxu0 0.0
      %357 = vmatprep.subr.mxu0 0.0
      %358 = vmatpush1.msra.mxu0 0.0
      %359 = vmatprep.subr.mxu0 0.0
      %360 = vmatpush1.msra.mxu0 0.0
      %361 = vmatprep.subr.mxu0 0.0
      %362 = vmatpush1.msra.mxu0 0.0
      %363 = vmatprep.subr.mxu0 0.0
      %364 = vmatpush1.msra.mxu0 0.0
      %365 = vmatprep.subr.mxu0 0.0
      %366 = vmatpush1.msra.mxu0 0.0
      %367 = vmatprep.subr.mxu0 0.0
      %368 = vmatpush1.msra.mxu0 0.0
      %369 = vmatprep.subr.mxu0 0.0
      %370 = vmatpush1.msra.mxu0 0.0
      %371 = vmatprep.subr.mxu0 0.0
      %372 = vmatpush1.msra.mxu0 0.0
      %373 = vmatprep.subr.mxu0 0.0
      %374 = vmatpush1.msra.mxu0 0.0
      %375 = vmatprep.subr.mxu0 0.0
      %376 = vmatpush1.msra.mxu0 0.0
      %377 = vmatprep.subr.mxu0 0.0
      %378 = vmatpush1.msra.mxu0 0.0
      %379 = vmatprep.subr.mxu0 0.0
      %380 = vmatpush1.msra.mxu0 0.0
      %381 = vmatprep.mubr.f32.mxu0 0.0
      %382 = vmatmul.mubr.f32.gmra.mrb[0].mxu0 %v230
      %v383 = vpop.f32.mrb[0].mxu0
      %v384 = vadd.f32 %v315, %v383
      %v385 = vpop.f32.mrb[0].mxu0
      %386 = vmatprep.mubr.f32.mxu0 0.0
      %387 = vmatmul.mubr.f32.gmra.mrb[0].mxu0 %v231
      %v388 = vpop.f32.mrb[0].mxu0
      %v389 = vadd.f32 %v315, %v388
      %v390 = vpop.f32.mrb[0].mxu0
      %391 = vmatprep.mubr.f32.mxu0 0.0
      %392 = vmatmul.mubr.f32.gmra.mrb[0].mxu0 %v232
      %v393 = vpop.f32.mrb[0].mxu0
      %v394 = vadd.f32 %v315, %v393
      %v395 = vpop.f32.mrb[0].mxu0
      %396 = vmatprep.mubr.f32.mxu0 0.0
      %397 = vmatmul.mubr.f32.gmra.mrb[0].mxu0 %v233
      %v398 = vpop.f32.mrb[0].mxu0
      %v399 = vadd.f32 %v315, %v398
      %v400 = vpop.f32.mrb[0].mxu0
      %401 = vmatprep.mubr.f32.mxu0 0.0
      %402 = vmatmul.mubr.f32.gmra.mrb[0].mxu0 %v234
      %v403 = vpop.f32.mrb[0].mxu0
      %v404 = vadd.f32 %v315, %v403
      %v405 = vpop.f32.mrb[0].mxu0
      %406 = vmatprep.mubr.f32.mxu0 0.0
      %407 = vmatmul.mubr.f32.gmra.mrb[0].mxu0 %v235
      %v408 = vpop.f32.mrb[0].mxu0
      %v409 = vadd.f32 %v315, %v408
      %v410 = vpop.f32.mrb[0].mxu0
      %411 = vmatprep.mubr.f32.mxu0 0.0
      %412 = vmatmul.mubr.f32.gmra.mrb[0].mxu0 %v236
      %v413 = vpop.f32.mrb[0].mxu0
      %v414 = vadd.f32 %v315, %v413
      %v415 = vpop.f32.mrb[0].mxu0
      %416 = vmatprep.mubr.f32.mxu0 0.0
      %417 = vmatmul.mubr.f32.gmra.mrb[0].mxu0 %v237
      %v418 = vpop.f32.mrb[0].mxu0
      %v419 = vadd.f32 %v315, %v418
      %v420 = vpop.f32.mrb[0].mxu0
      %421 = vmatprep.mubr.f32.mxu0 0.0
      %422 = vmatmul.mubr.f32.gmra.mrb[0].mxu0 %v238
      %v423 = vpop.f32.mrb[0].mxu0
      %v424 = vadd.f32 %v315, %v423
      %v425 = vpop.f32.mrb[0].mxu0
      %426 = vmatprep.mubr.f32.mxu0 0.0
      %427 = vmatmul.mubr.f32.gmra.mrb[0].mxu0 %v239
      %v428 = vpop.f32.mrb[0].mxu0
      %v429 = vadd.f32 %v315, %v428
      %v430 = vpop.f32.mrb[0].mxu0
      %431 = vmatprep.mubr.f32.mxu0 0.0
      %432 = vmatmul.mubr.f32.gmra.mrb[0].mxu0 %v240
      %v433 = vpop.f32.mrb[0].mxu0
      %v434 = vadd.f32 %v315, %v433
      %v435 = vpop.f32.mrb[0].mxu0
      %436 = vmatprep.mubr.f32.mxu0 0.0
      %437 = vmatmul.mubr.f32.gmra.mrb[0].mxu0 %v241
      %v438 = vpop.f32.mrb[0].mxu0
      %v439 = vadd.f32 %v315, %v438
      %v440 = vpop.f32.mrb[0].mxu0
      %441 = vmatprep.mubr.f32.mxu0 0.0
      %442 = vmatmul.mubr.f32.gmra.mrb[0].mxu0 %v242
      %v443 = vpop.f32.mrb[0].mxu0
      %v444 = vadd.f32 %v315, %v443
      %v445 = vpop.f32.mrb[0].mxu0
      %446 = vmatprep.mubr.f32.mxu0 0.0
      %447 = vmatmul.mubr.f32.gmra.mrb[0].mxu0 %v243
      %v448 = vpop.f32.mrb[0].mxu0
      %v449 = vadd.f32 %v315, %v448
      %v450 = vpop.f32.mrb[0].mxu0
      %451 = vmatprep.mubr.f32.mxu0 0.0
      %452 = vmatmul.mubr.f32.gmra.mrb[0].mxu0 %v244
      %v453 = vpop.f32.mrb[0].mxu0
      %v454 = vadd.f32 %v315, %v453
      %v455 = vpop.f32.mrb[0].mxu0
      %456 = vmatprep.mubr.f32.mxu0 0.0
      %457 = vmatmul.mubr.f32.gmra.mrb[0].mxu0 %v245
      %v458 = vpop.f32.mrb[0].mxu0
      %v459 = vadd.f32 %v315, %v458
      %v460 = vpop.f32.mrb[0].mxu0
      %461 = vmatprep.mubr.f32.mxu0 0.0
      %462 = vmatmul.mubr.f32.gmra.mrb[0].mxu0 %v246
      %v463 = vpop.f32.mrb[0].mxu0
      %v464 = vadd.f32 %v315, %v463
      %v465 = vpop.f32.mrb[0].mxu0
      %466 = vmatprep.mubr.f32.mxu0 0.0
      %467 = vmatmul.mubr.f32.gmra.mrb[0].mxu0 %v247
      %v468 = vpop.f32.mrb[0].mxu0
      %v469 = vadd.f32 %v315, %v468
      %v470 = vpop.f32.mrb[0].mxu0
      %471 = vmatprep.mubr.f32.mxu0 0.0
      %472 = vmatmul.mubr.f32.gmra.mrb[0].mxu0 %v248
      %v473 = vpop.f32.mrb[0].mxu0
      %v474 = vadd.f32 %v315, %v473
      %v475 = vpop.f32.mrb[0].mxu0
      %476 = vmatprep.mubr.f32.mxu0 0.0
      %477 = vmatmul.mubr.f32.gmra.mrb[0].mxu0 %v249
      %v478 = vpop.f32.mrb[0].mxu0
      %v479 = vadd.f32 %v315, %v478
      %v480 = vpop.f32.mrb[0].mxu0
      %481 = vmatprep.mubr.f32.mxu0 0.0
      %482 = vmatmul.mubr.f32.gmra.mrb[0].mxu0 %v250
      %v483 = vpop.f32.mrb[0].mxu0
      %v484 = vadd.f32 %v315, %v483
      %v485 = vpop.f32.mrb[0].mxu0
      %486 = vmatprep.mubr.f32.mxu0 0.0
      %487 = vmatmul.mubr.f32.gmra.mrb[0].mxu0 %v251
      %v488 = vpop.f32.mrb[0].mxu0
      %v489 = vadd.f32 %v315, %v488
      %v490 = vpop.f32.mrb[0].mxu0
      %491 = vmatprep.mubr.f32.mxu0 0.0
      %492 = vmatmul.mubr.f32.gmra.mrb[0].mxu0 %v252
      %v493 = vpop.f32.mrb[0].mxu0
      %v494 = vadd.f32 %v315, %v493
      %v495 = vpop.f32.mrb[0].mxu0
      %496 = vmatprep.mubr.f32.mxu0 0.0
      %497 = vmatmul.mubr.f32.gmra.mrb[0].mxu0 %v253
      %v498 = vpop.f32.mrb[0].mxu0
      %v499 = vadd.f32 %v315, %v498
      %v500 = vpop.f32.mrb[0].mxu0
      %501 = vmatprep.mubr.f32.mxu0 0.0
      %502 = vmatmul.mubr.f32.gmra.mrb[0].mxu0 %v254
      %v503 = vpop.f32.mrb[0].mxu0
      %v504 = vadd.f32 %v315, %v503
      %v505 = vpop.f32.mrb[0].mxu0
      %506 = vmatprep.mubr.f32.mxu0 0.0
      %507 = vmatmul.mubr.f32.gmra.mrb[0].mxu0 %v255
      %v508 = vpop.f32.mrb[0].mxu0
      %v509 = vadd.f32 %v315, %v508
      %v510 = vpop.f32.mrb[0].mxu0
      %511 = vmatprep.mubr.f32.mxu0 0.0
      %512 = vmatmul.mubr.f32.gmra.mrb[0].mxu0 %v256
      %v513 = vpop.f32.mrb[0].mxu0
      %v514 = vadd.f32 %v315, %v513
      %v515 = vpop.f32.mrb[0].mxu0
      %516 = vmatprep.mubr.f32.mxu0 0.0
      %517 = vmatmul.mubr.f32.gmra.mrb[0].mxu0 %v257
      %v518 = vpop.f32.mrb[0].mxu0
      %v519 = vadd.f32 %v315, %v518
      %v520 = vpop.f32.mrb[0].mxu0
      %521 = vmatprep.mubr.f32.mxu0 0.0
      %522 = vmatmul.mubr.f32.gmra.mrb[0].mxu0 %v258
      %v523 = vpop.f32.mrb[0].mxu0
      %v524 = vadd.f32 %v315, %v523
      %v525 = vpop.f32.mrb[0].mxu0
      %526 = vmatprep.mubr.f32.mxu0 0.0
      %527 = vmatmul.mubr.f32.gmra.mrb[0].mxu0 %v259
      %v528 = vpop.f32.mrb[0].mxu0
      %v529 = vadd.f32 %v315, %v528
      %v530 = vpop.f32.mrb[0].mxu0
      %531 = vmatprep.mubr.f32.mxu0 0.0
      %532 = vmatmul.mubr.f32.gmra.mrb[0].mxu0 %v260
      %v533 = vpop.f32.mrb[0].mxu0
      %v534 = vadd.f32 %v315, %v533
      %v535 = vpop.f32.mrb[0].mxu0
      %536 = vmatprep.mubr.f32.mxu0 0.0
      %537 = vmatmul.mubr.f32.gmra.mrb[0].mxu0 %v261
      %v538 = vpop.f32.mrb[0].mxu0
      %v539 = vadd.f32 %v315, %v538
      %v540 = vpop.f32.mrb[0].mxu0
      %541 = vmatprep.mubr.f32.mxu0 0.0
      %542 = vmatmul.mubr.f32.gmra.mrb[0].mxu0 %v262
      %v543 = vpop.f32.mrb[0].mxu0
      %v544 = vadd.f32 %v315, %v543
      %v545 = vpop.f32.mrb[0].mxu0
      %546 = vmatprep.mubr.f32.mxu0 0.0
      %547 = vmatmul.mubr.f32.gmra.mrb[0].mxu0 %v263
      %v548 = vpop.f32.mrb[0].mxu0
      %v549 = vadd.f32 %v315, %v548
      %v550 = vpop.f32.mrb[0].mxu0
      %551 = vmatprep.mubr.f32.mxu0 0.0
      %552 = vmatmul.mubr.f32.gmra.mrb[0].mxu0 %v264
      %v553 = vpop.f32.mrb[0].mxu0
      %v554 = vadd.f32 %v315, %v553
      %v555 = vpop.f32.mrb[0].mxu0
      %556 = vmatprep.mubr.f32.mxu0 0.0
      %557 = vmatmul.mubr.f32.gmra.mrb[0].mxu0 %v265
      %v558 = vpop.f32.mrb[0].mxu0
      %v559 = vadd.f32 %v315, %v558
      %v560 = vpop.f32.mrb[0].mxu0
      %561 = vmatprep.mubr.f32.mxu0 0.0
      %562 = vmatmul.mubr.f32.gmra.mrb[0].mxu0 %v266
      %v563 = vpop.f32.mrb[0].mxu0
      %v564 = vadd.f32 %v315, %v563
      %v565 = vpop.f32.mrb[0].mxu0
      %566 = vmatprep.mubr.f32.mxu0 0.0
      %567 = vmatmul.mubr.f32.gmra.mrb[0].mxu0 %v267
      %v568 = vpop.f32.mrb[0].mxu0
      %v569 = vadd.f32 %v315, %v568
      %v570 = vpop.f32.mrb[0].mxu0
      %571 = vmatprep.mubr.f32.mxu0 0.0
      %572 = vmatmul.mubr.f32.gmra.mrb[0].mxu0 %v268
      %v573 = vpop.f32.mrb[0].mxu0
      %v574 = vadd.f32 %v315, %v573
      %v575 = vpop.f32.mrb[0].mxu0
      %576 = vmatprep.mubr.f32.mxu0 0.0
      %577 = vmatmul.mubr.f32.gmra.mrb[0].mxu0 %v269
      %v578 = vpop.f32.mrb[0].mxu0
      %v579 = vadd.f32 %v315, %v578
      %v580 = vpop.f32.mrb[0].mxu0
      %581 = vmatprep.mubr.f32.mxu0 0.0
      %582 = vmatmul.mubr.f32.gmra.mrb[0].mxu0 %v270
      %v583 = vpop.f32.mrb[0].mxu0
      %v584 = vadd.f32 %v315, %v583
      %v585 = vpop.f32.mrb[0].mxu0
      %586 = vmatprep.mubr.f32.mxu0 0.0
      %587 = vmatmul.mubr.f32.gmra.mrb[0].mxu0 %v271
      %v588 = vpop.f32.mrb[0].mxu0
      %v589 = vadd.f32 %v315, %v588
      %v590 = vpop.f32.mrb[0].mxu0
      %591 = vmatprep.mubr.f32.mxu0 0.0
      %592 = vmatmul.mubr.f32.gmra.mrb[0].mxu0 %v272
      %v593 = vpop.f32.mrb[0].mxu0
      %v594 = vadd.f32 %v315, %v593
      %v595 = vpop.f32.mrb[0].mxu0
      %596 = vmatprep.mubr.f32.mxu0 0.0
      %597 = vmatmul.mubr.f32.gmra.mrb[0].mxu0 %v273
      %v598 = vpop.f32.mrb[0].mxu0
      %v599 = vadd.f32 %v315, %v598
      %v600 = vpop.f32.mrb[0].mxu0
      %601 = vmatprep.mubr.f32.mxu0 0.0
      %602 = vmatmul.mubr.f32.gmra.mrb[0].mxu0 %v274
      %v603 = vpop.f32.mrb[0].mxu0
      %v604 = vadd.f32 %v315, %v603
      %v605 = vpop.f32.mrb[0].mxu0
      %606 = vmatprep.mubr.f32.mxu0 0.0
      %607 = vmatmul.mubr.f32.gmra.mrb[0].mxu0 %v275
      %v608 = vpop.f32.mrb[0].mxu0
      %v609 = vadd.f32 %v315, %v608
      %v610 = vpop.f32.mrb[0].mxu0
      %611 = vmatprep.mubr.f32.mxu0 0.0
      %612 = vmatmul.mubr.f32.gmra.mrb[0].mxu0 %v276
      %v613 = vpop.f32.mrb[0].mxu0
      %v614 = vadd.f32 %v315, %v613
      %v615 = vpop.f32.mrb[0].mxu0
      %616 = vmatprep.mubr.f32.mxu0 0.0
      %617 = vmatmul.mubr.f32.gmra.mrb[0].mxu0 %v277
      %v618 = vpop.f32.mrb[0].mxu0
      %v619 = vadd.f32 %v315, %v618
      %v620 = vpop.f32.mrb[0].mxu0
      %621 = vmatprep.mubr.f32.mxu0 0.0
      %622 = vmatmul.mubr.f32.gmra.mrb[0].mxu0 %v278
      %v623 = vpop.f32.mrb[0].mxu0
      %v624 = vadd.f32 %v315, %v623
      %v625 = vpop.f32.mrb[0].mxu0
      %626 = vmatprep.mubr.f32.mxu0 0.0
      %627 = vmatmul.mubr.f32.gmra.mrb[0].mxu0 %v279
      %v628 = vpop.f32.mrb[0].mxu0
      %v629 = vadd.f32 %v315, %v628
      %v630 = vpop.f32.mrb[0].mxu0
      %631 = vmatprep.mubr.f32.mxu0 0.0
      %632 = vmatmul.mubr.f32.gmra.mrb[0].mxu0 %v280
      %v633 = vpop.f32.mrb[0].mxu0
      %v634 = vadd.f32 %v315, %v633
      %v635 = vpop.f32.mrb[0].mxu0
      %636 = vmatprep.mubr.f32.mxu0 0.0
      %637 = vmatmul.mubr.f32.gmra.mrb[0].mxu0 %v281
      %v638 = vpop.f32.mrb[0].mxu0
      %v639 = vadd.f32 %v315, %v638
      %v640 = vpop.f32.mrb[0].mxu0
      %641 = vmatprep.mubr.f32.mxu0 0.0
      %642 = vmatmul.mubr.f32.gmra.mrb[0].mxu0 %v282
      %v643 = vpop.f32.mrb[0].mxu0
      %v644 = vadd.f32 %v315, %v643
      %v645 = vpop.f32.mrb[0].mxu0
      %646 = vmatprep.mubr.f32.mxu0 0.0
      %647 = vmatmul.mubr.f32.gmra.mrb[0].mxu0 %v283
      %v648 = vpop.f32.mrb[0].mxu0
      %v649 = vadd.f32 %v315, %v648
      %v650 = vpop.f32.mrb[0].mxu0
      %651 = vmatprep.mubr.f32.mxu0 0.0
      %652 = vmatmul.mubr.f32.gmra.mrb[0].mxu0 %v284
      %v653 = vpop.f32.mrb[0].mxu0
      %v654 = vadd.f32 %v315, %v653
      %v655 = vpop.f32.mrb[0].mxu0
      %656 = vmatprep.mubr.f32.mxu0 0.0
      %657 = vmatmul.mubr.f32.gmra.mrb[0].mxu0 %v285
      %v658 = vpop.f32.mrb[0].mxu0
      %v659 = vadd.f32 %v315, %v658
      %v660 = vpop.f32.mrb[0].mxu0
      %661 = vmatprep.mubr.f32.mxu0 0.0
      %662 = vmatmul.mubr.f32.gmra.mrb[0].mxu0 %v286
      %v663 = vpop.f32.mrb[0].mxu0
      %v664 = vadd.f32 %v315, %v663
      %v665 = vpop.f32.mrb[0].mxu0
      %666 = vmatprep.mubr.f32.mxu0 0.0
      %667 = vmatmul.mubr.f32.gmra.mrb[0].mxu0 %v287
      %v668 = vpop.f32.mrb[0].mxu0
      %v669 = vadd.f32 %v315, %v668
      %v670 = vpop.f32.mrb[0].mxu0
      %671 = vmatprep.mubr.f32.mxu0 0.0
      %672 = vmatmul.mubr.f32.gmra.mrb[0].mxu0 %v288
      %v673 = vpop.f32.mrb[0].mxu0
      %v674 = vadd.f32 %v315, %v673
      %v675 = vpop.f32.mrb[0].mxu0
      %676 = vmatprep.mubr.f32.mxu0 0.0
      %677 = vmatmul.mubr.f32.gmra.mrb[0].mxu0 %v289
      %v678 = vpop.f32.mrb[0].mxu0
      %v679 = vadd.f32 %v315, %v678
      %v680 = vpop.f32.mrb[0].mxu0
      %681 = vmatprep.mubr.f32.mxu0 0.0
      %682 = vmatmul.mubr.f32.gmra.mrb[0].mxu0 %v290
      %v683 = vpop.f32.mrb[0].mxu0
      %v684 = vadd.f32 %v315, %v683
      %v685 = vpop.f32.mrb[0].mxu0
      %686 = vmatprep.mubr.f32.mxu0 0.0
      %687 = vmatmul.mubr.f32.gmra.mrb[0].mxu0 %v291
      %v688 = vpop.f32.mrb[0].mxu0
      %v689 = vadd.f32 %v315, %v688
      %v690 = vpop.f32.mrb[0].mxu0
      %691 = vmatprep.mubr.f32.mxu0 0.0
      %692 = vmatmul.mubr.f32.gmra.mrb[0].mxu0 %v292
      %v693 = vpop.f32.mrb[0].mxu0
      %v694 = vadd.f32 %v315, %v693
      %v695 = vpop.f32.mrb[0].mxu0
      %696 = vmatprep.mubr.f32.mxu0 0.0
      %697 = vmatmul.mubr.f32.gmra.mrb[0].mxu0 %v293
      %v698 = vpop.f32.mrb[0].mxu0
      %v699 = vadd.f32 %v315, %v698
      %v700 = vpop.f32.mrb[0].mxu0
      %701 = vdwg.mxu0
      %v702 = vmax.f32 %v384, 0.0
      %v703 = vmax.f32 %v389, 0.0
      %v704 = vmax.f32 %v394, 0.0
      %v705 = vmax.f32 %v399, 0.0
      %v706 = vmax.f32 %v404, 0.0
      %v707 = vmax.f32 %v409, 0.0
      %v708 = vmax.f32 %v414, 0.0
      %v709 = vmax.f32 %v419, 0.0
      %v710 = vmax.f32 %v424, 0.0
      %v711 = vmax.f32 %v429, 0.0
      %v712 = vmax.f32 %v434, 0.0
      %v713 = vmax.f32 %v439, 0.0
      %v714 = vmax.f32 %v444, 0.0
      %v715 = vmax.f32 %v449, 0.0
      %v716 = vmax.f32 %v454, 0.0
      %v717 = vmax.f32 %v459, 0.0
      %v718 = vmax.f32 %v464, 0.0
      %v719 = vmax.f32 %v469, 0.0
      %v720 = vmax.f32 %v474, 0.0
      %v721 = vmax.f32 %v479, 0.0
      %v722 = vmax.f32 %v484, 0.0
      %v723 = vmax.f32 %v489, 0.0
      %v724 = vmax.f32 %v494, 0.0
      %v725 = vmax.f32 %v499, 0.0
      %v726 = vmax.f32 %v504, 0.0
      %v727 = vmax.f32 %v509, 0.0
      %v728 = vmax.f32 %v514, 0.0
      %v729 = vmax.f32 %v519, 0.0
      %v730 = vmax.f32 %v524, 0.0
      %v731 = vmax.f32 %v529, 0.0
      %v732 = vmax.f32 %v534, 0.0
      %v733 = vmax.f32 %v539, 0.0
      %v734 = vmax.f32 %v544, 0.0
      %v735 = vmax.f32 %v549, 0.0
      %v736 = vmax.f32 %v554, 0.0
      %v737 = vmax.f32 %v559, 0.0
      %v738 = vmax.f32 %v564, 0.0
      %v739 = vmax.f32 %v569, 0.0
      %v740 = vmax.f32 %v574, 0.0
      %v741 = vmax.f32 %v579, 0.0
      %v742 = vmax.f32 %v584, 0.0
      %v743 = vmax.f32 %v589, 0.0
      %v744 = vmax.f32 %v594, 0.0
      %v745 = vmax.f32 %v599, 0.0
      %v746 = vmax.f32 %v604, 0.0
      %v747 = vmax.f32 %v609, 0.0
      %v748 = vmax.f32 %v614, 0.0
      %v749 = vmax.f32 %v619, 0.0
      %v750 = vmax.f32 %v624, 0.0
      %v751 = vmax.f32 %v629, 0.0
      %v752 = vmax.f32 %v634, 0.0
      %v753 = vmax.f32 %v639, 0.0
      %v754 = vmax.f32 %v644, 0.0
      %v755 = vmax.f32 %v649, 0.0
      %v756 = vmax.f32 %v654, 0.0
      %v757 = vmax.f32 %v659, 0.0
      %v758 = vmax.f32 %v664, 0.0
      %v759 = vmax.f32 %v669, 0.0
      %v760 = vmax.f32 %v674, 0.0
      %v761 = vmax.f32 %v679, 0.0
      %v762 = vmax.f32 %v684, 0.0
      %v763 = vmax.f32 %v689, 0.0
      %v764 = vmax.f32 %v694, 0.0
      %v765 = vmax.f32 %v699, 0.0
      %766 = vst [vmem:[%s228] sm:$0xff] %v702
      %767 = vst [vmem:[%s228 + $0x8] sm:$0xff] %v703
      %768 = vst [vmem:[%s228 + $0x10] sm:$0xff] %v704
      %769 = vst [vmem:[%s228 + $0x18] sm:$0xff] %v705
      %770 = vst [vmem:[%s228 + $0x20] sm:$0xff] %v706
      %771 = vst [vmem:[%s228 + $0x28] sm:$0xff] %v707
      %772 = vst [vmem:[%s228 + $0x30] sm:$0xff] %v708
      %773 = vst [vmem:[%s228 + $0x38] sm:$0xff] %v709
      %774 = vst [vmem:[%s228 + $0x40] sm:$0xff] %v710
      %775 = vst [vmem:[%s228 + $0x48] sm:$0xff] %v711
      %776 = vst [vmem:[%s228 + $0x50] sm:$0xff] %v712
      %777 = vst [vmem:[%s228 + $0x58] sm:$0xff] %v713
      %778 = vst [vmem:[%s228 + $0x60] sm:$0xff] %v714
      %779 = vst [vmem:[%s228 + $0x68] sm:$0xff] %v715
      %780 = vst [vmem:[%s228 + $0x70] sm:$0xff] %v716
      %781 = vst [vmem:[%s228 + $0x78] sm:$0xff] %v717
      %782 = vst [vmem:[%s228 + $0x80] sm:$0xff] %v718
      %783 = vst [vmem:[%s228 + $0x88] sm:$0xff] %v719
      %784 = vst [vmem:[%s228 + $0x90] sm:$0xff] %v720
      %785 = vst [vmem:[%s228 + $0x98] sm:$0xff] %v721
      %786 = vst [vmem:[%s228 + $0xa0] sm:$0xff] %v722
      %787 = vst [vmem:[%s228 + $0xa8] sm:$0xff] %v723
      %788 = vst [vmem:[%s228 + $0xb0] sm:$0xff] %v724
      %789 = vst [vmem:[%s228 + $0xb8] sm:$0xff] %v725
      %790 = vst [vmem:[%s228 + $0xc0] sm:$0xff] %v726
      %791 = vst [vmem:[%s228 + $0xc8] sm:$0xff] %v727
      %792 = vst [vmem:[%s228 + $0xd0] sm:$0xff] %v728
      %793 = vst [vmem:[%s228 + $0xd8] sm:$0xff] %v729
      %794 = vst [vmem:[%s228 + $0xe0] sm:$0xff] %v730
      %795 = vst [vmem:[%s228 + $0xe8] sm:$0xff] %v731
      %796 = vst [vmem:[%s228 + $0xf0] sm:$0xff] %v732
      %797 = vst [vmem:[%s228 + $0xf8] sm:$0xff] %v733
      %798 = vst [vmem:[%s228 + $0x100] sm:$0xff] %v734
      %799 = vst [vmem:[%s228 + $0x108] sm:$0xff] %v735
      %800 = vst [vmem:[%s228 + $0x110] sm:$0xff] %v736
      %801 = vst [vmem:[%s228 + $0x118] sm:$0xff] %v737
      %802 = vst [vmem:[%s228 + $0x120] sm:$0xff] %v738
      %803 = vst [vmem:[%s228 + $0x128] sm:$0xff] %v739
      %804 = vst [vmem:[%s228 + $0x130] sm:$0xff] %v740
      %805 = vst [vmem:[%s228 + $0x138] sm:$0xff] %v741
      %806 = vst [vmem:[%s228 + $0x140] sm:$0xff] %v742
      %807 = vst [vmem:[%s228 + $0x148] sm:$0xff] %v743
      %808 = vst [vmem:[%s228 + $0x150] sm:$0xff] %v744
      %809 = vst [vmem:[%s228 + $0x158] sm:$0xff] %v745
      %810 = vst [vmem:[%s228 + $0x160] sm:$0xff] %v746
      %811 = vst [vmem:[%s228 + $0x168] sm:$0xff] %v747
      %812 = vst [vmem:[%s228 + $0x170] sm:$0xff] %v748
      %813 = vst [vmem:[%s228 + $0x178] sm:$0xff] %v749
      %814 = vst [vmem:[%s228 + $0x180] sm:$0xff] %v750
      %815 = vst [vmem:[%s228 + $0x188] sm:$0xff] %v751
      %816 = vst [vmem:[%s228 + $0x190] sm:$0xff] %v752
      %817 = vst [vmem:[%s228 + $0x198] sm:$0xff] %v753
      %818 = vst [vmem:[%s228 + $0x1a0] sm:$0xff] %v754
      %819 = vst [vmem:[%s228 + $0x1a8] sm:$0xff] %v755
      %820 = vst [vmem:[%s228 + $0x1b0] sm:$0xff] %v756
      %821 = vst [vmem:[%s228 + $0x1b8] sm:$0xff] %v757
      %822 = vst [vmem:[%s228 + $0x1c0] sm:$0xff] %v758
      %823 = vst [vmem:[%s228 + $0x1c8] sm:$0xff] %v759
      %824 = vst [vmem:[%s228 + $0x1d0] sm:$0xff] %v760
      %825 = vst [vmem:[%s228 + $0x1d8] sm:$0xff] %v761
      %826 = vst [vmem:[%s228 + $0x1e0] sm:$0xff] %v762
      %827 = vst [vmem:[%s228 + $0x1e8] sm:$0xff] %v763
      %828 = vst [vmem:[%s228 + $0x1f0] sm:$0xff] %v764
      %829 = vst [vmem:[%s228 + $0x1f8] sm:$0xff] %v765
      %s830 = smul.u32 64, %s19
      %p831 = scmp.lt.s32.totalorder %s18, 3
      %s832 = scalar_select %p831, %s18, 3
      %p833 = scmp.lt.s32.totalorder %s830, 63
      %s834 = scalar_select %p833, %s830, 63
      %s835 = smul.addr %s832, 64
      %s836 = sadd.s32 %s834, %s835
      %s837 = smul.addr %s836, 8
      %s838 = scalar_lea.vmem %s3, %s837
      // Predicated region
      $region33: #{forward.8} parent=31 // pred_check
        %p839 = pneg %p121
      $region34: #{forward.8} parent=31 // pred_check_branch
        %841 = sbr.rel (%p839) target = $region36
      $region35: #{forward.8} parent=31 // pred_region
        %s842 = smul.u32 64, %s19
      $region36: #{forward.8} parent=31 // pred_fallthru
        _
    $region32: #{forward.8} parent=5 // pred_fallthru
      _
    %p843 = scmp.le.s32.totalorder 2, %s9
    // Predicated region
    $region37: #{forward.8} parent=5 // pred_check
      %p844 = pneg %p843
    $region38: #{forward.8} parent=5 // pred_check_branch
      %846 = sbr.rel (%p844) target = $region40
    $region39: #{forward.8} parent=5 // pred_region
      %s847 = ssub.s32 %s9, 2
      // Predicated region
      $region41: #{forward.8} parent=39 // pred_check
        %p848 = pneg %p127
      $region42: #{forward.8} parent=39 // pred_check_branch
        %850 = sbr.rel (%p848) target = $region44
      $region43: #{forward.8} parent=39 // pred_region
        %s851 = smul.u32 64, %s21
        %p852 = scmp.lt.s32.totalorder %s20, 3
        %s853 = scalar_select %p852, %s20, 3
        %p854 = scmp.lt.s32.totalorder %s851, 63
        %s855 = scalar_select %p854, %s851, 63
        %s856 = smul.addr %s853, 64
        %s857 = sadd.s32 %s855, %s856
        %s858 = smul.addr %s857, 8
        %s859 = scalar_lea.vmem %s3, %s858
      $region44: #{forward.8} parent=39 // pred_fallthru
        _
    $region40: #{forward.8} parent=5 // pred_fallthru
      _
  $region6: #{forward.8} parent=0 // loop_footer
    %s13 = sadd.s32 1, %s9
  $region7: #{forward.8} parent=0 // loop_footer_branch
    %8 = sbr.rel target = $region3
  $region8: #{forward.8} parent=0 // loop_exit
    _

// kernel: forward.9
$region0: #{forward.9}
  #allocation0 [shape = 'u32[]', space=smem, size = 0x4, offset = 0x4, fixed_abs, tag = 'smem constant byte address 0x4 - core index']
  #allocation1 [shape = 'u32[144,128]{1,0:T(1,128)}', space=vmem, size = 0x12000, scoped, tag = 'internal scratch']
  %s0 = inlined_call_operand.vmem [shape: f32[4,2048,64], index: 0, kind: input, shape index: {}]
  %s1 = inlined_call_operand.vmem [shape: f32[4,64,128], index: 1, kind: input, shape index: {}]
  %s2 = inlined_call_operand.vmem [shape: f32[1,128], index: 2, kind: input, shape index: {}]
  %s3 = inlined_call_operand.vmem [shape: f32[4,2048,128], index: 3, kind: output, shape index: {}]
  %s4 = sld [smem:[#allocation0]]
  $region45: #{forward.9} parent=0
    _
  %s6 = ssub.s32 1, %s4
  %s7 = scalar_select 0, %s6, %s4
  loop: start=0, step=1, limit=6
  $region2: #{forward.9} parent=0 // loop_pre_header
    _
  $region3: #{forward.9} parent=0 // loop_header
    %s9 = sphi 0, %s13
    %p10 = scmp.ge.s32.totalorder %s9, 6
    %s16 = sphi 0, %s28
    %s17 = sphi 0, %s24
    %s18 = sphi 0, %s16
    %s19 = sphi 0, %s17
    %s20 = sphi 0, %s18
    %s21 = sphi 0, %s19
    %s33 = sphi 0, %s35
    %s36 = sphi 0, %s33
    %s37 = sphi 0, %s36
    %s53 = sphi 0, %s37
    %s59 = sphi 0, %s61
    %s62 = sphi 0, %s59
    %s63 = sphi 0, %s62
    %s79 = sphi 0, %s63
    %s83 = sphi 0, %s83
    %s85 = sphi 0, %s83
    %s86 = sphi 0, %s85
    %s100 = sphi 0, %s86
    %s108 = sphi 0, %s110
    %s111 = sphi 0, %s108
    %s112 = sphi 0, %s111
    %s128 = sphi 0, %s112
  $region4: #{forward.9} parent=0 // loop_header_branch
    %12 = sbr.rel (%p10) target = $region8
  $region5: #{forward.9} parent=0 // loop_body
    %s14 = ssub.s32 %s9, 1
    %s15 = ssub.s32 %s9, 2
    %s22 = sadd.s32 1, %s17
    %p23 = scmp.ge.s32.totalorder %s22, 1
    %s24 = scalar_select %p23, 0, %s22
    %s25 = sadd.s32 1, %s16
    %s26 = scalar_select %p23, %s25, %s16
    %p27 = scmp.ge.s32.totalorder %s26, 4
    %s28 = scalar_select %p27, 0, %s26
    %s29 = ssub.s32 %s16, %s28
    %s30 = ssub.s32 %s17, %s24
    %s31 = sor.u32 %s29, %s30
    %p32 = scmp.eq.s32.totalorder %s31, 0
    %s34 = sadd.s32 %s33, 1
    %s35 = scalar_select %p32, %s33, %s34
    %p38 = pneg %p32
    %p39 = scmp.eq.s32.totalorder %s9, 3
    %p40 = por %p38, %p39
    %p41 = scmp.ne.s32.totalorder %s33, %s36
    %p42 = scmp.eq.s32.totalorder %s9, 0
    %p43 = por %p41, %p42
    %p44 = scmp.ne.s32.totalorder %s33, %s36
    %p45 = scmp.eq.s32.totalorder %s14, 3
    %p46 = por %p44, %p45
    %p47 = scmp.ne.s32.totalorder %s36, %s37
    %p48 = scmp.eq.s32.totalorder %s14, 0
    %p49 = por %p47, %p48
    %p50 = scmp.ne.s32.totalorder %s36, %s37
    %p51 = scmp.eq.s32.totalorder %s15, 3
    %p52 = por %p50, %p51
    %p54 = scmp.ne.s32.totalorder %s37, %s53
    %p55 = scmp.eq.s32.totalorder %s15, 0
    %p56 = por %p54, %p55
    %s57 = ssub.s32 %s16, %s28
    %p58 = scmp.eq.s32.totalorder %s57, 0
    %s60 = sadd.s32 %s59, 1
    %s61 = scalar_select %p58, %s59, %s60
    %p64 = pneg %p58
    %p65 = scmp.eq.s32.totalorder %s9, 3
    %p66 = por %p64, %p65
    %p67 = scmp.ne.s32.totalorder %s59, %s62
    %p68 = scmp.eq.s32.totalorder %s9, 0
    %p69 = por %p67, %p68
    %p70 = scmp.ne.s32.totalorder %s59, %s62
    %p71 = scmp.eq.s32.totalorder %s14, 3
    %p72 = por %p70, %p71
    %p73 = scmp.ne.s32.totalorder %s62, %s63
    %p74 = scmp.eq.s32.totalorder %s14, 0
    %p75 = por %p73, %p74
    %p76 = scmp.ne.s32.totalorder %s62, %s63
    %p77 = scmp.eq.s32.totalorder %s15, 3
    %p78 = por %p76, %p77
    %p80 = scmp.ne.s32.totalorder %s63, %s79
    %p81 = scmp.eq.s32.totalorder %s15, 0
    %p82 = por %p80, %p81
    %s84 = sadd.s32 %s83, 1
    %p87 = scmp.eq.s32.totalorder %s9, 3
    %p88 = scmp.ne.s32.totalorder %s83, %s85
    %p89 = scmp.eq.s32.totalorder %s9, 0
    %p90 = por %p88, %p89
    %p91 = scmp.ne.s32.totalorder %s83, %s85
    %p92 = scmp.eq.s32.totalorder %s14, 3
    %p93 = por %p91, %p92
    %p94 = scmp.ne.s32.totalorder %s85, %s86
    %p95 = scmp.eq.s32.totalorder %s14, 0
    %p96 = por %p94, %p95
    %p97 = scmp.ne.s32.totalorder %s85, %s86
    %p98 = scmp.eq.s32.totalorder %s15, 3
    %p99 = por %p97, %p98
    %p101 = scmp.ne.s32.totalorder %s86, %s100
    %p102 = scmp.eq.s32.totalorder %s15, 0
    %p103 = por %p101, %p102
    %s104 = ssub.s32 %s16, %s28
    %s105 = ssub.s32 %s17, %s24
    %s106 = sor.u32 %s104, %s105
    %p107 = scmp.eq.s32.totalorder %s106, 0
    %s109 = sadd.s32 %s108, 1
    %s110 = scalar_select %p107, %s108, %s109
    %p113 = pneg %p107
    %p114 = scmp.eq.s32.totalorder %s9, 3
    %p115 = por %p113, %p114
    %p116 = scmp.ne.s32.totalorder %s108, %s111
    %p117 = scmp.eq.s32.totalorder %s9, 0
    %p118 = por %p116, %p117
    %p119 = scmp.ne.s32.totalorder %s108, %s111
    %p120 = scmp.eq.s32.totalorder %s14, 3
    %p121 = por %p119, %p120
    %p122 = scmp.ne.s32.totalorder %s111, %s112
    %p123 = scmp.eq.s32.totalorder %s14, 0
    %p124 = por %p122, %p123
    %p125 = scmp.ne.s32.totalorder %s111, %s112
    %p126 = scmp.eq.s32.totalorder %s15, 3
    %p127 = por %p125, %p126
    %p129 = scmp.ne.s32.totalorder %s112, %s128
    %p130 = scmp.eq.s32.totalorder %s15, 0
    %p131 = por %p129, %p130
    %p132 = scmp.le.s32.totalorder 1, %s9
    %p133 = scmp.lt.s32.totalorder %s9, 5
    %p134 = pnand %p132, %p133
    %p135 = pneg %p134
    // Predicated region
    $region9: #{forward.9} parent=5 // pred_check
      _
    $region10: #{forward.9} parent=5 // pred_check_branch
      %137 = sbr.rel (%p134) target = $region12
    $region11: #{forward.9} parent=5 // pred_region
      %s138 = ssub.s32 %s9, 1
      // Predicated region
      $region13: #{forward.9} parent=11 // pred_check
        %p139 = pneg %p96
      $region14: #{forward.9} parent=11 // pred_check_branch
        %141 = sbr.rel (%p139) target = $region16
      $region15: #{forward.9} parent=11 // pred_region
        _
      $region16: #{forward.9} parent=11 // pred_fallthru
        _
    $region12: #{forward.9} parent=5 // pred_fallthru
      _
    %p142 = scmp.lt.s32.totalorder %s9, 4
    // Predicated region
    $region17: #{forward.9} parent=5 // pred_check
      %p143 = pneg %p142
    $region18: #{forward.9} parent=5 // pred_check_branch
      %145 = sbr.rel (%p143) target = $region20
    $region19: #{forward.9} parent=5 // pred_region
      // Predicated region
      $region21: #{forward.9} parent=19 // pred_check
        %p146 = pneg %p43
      $region22: #{forward.9} parent=19 // pred_check_branch
        %148 = sbr.rel (%p146) target = $region24
      $region23: #{forward.9} parent=19 // pred_region
        %s149 = smul.u32 256, %s17
        %p150 = scmp.lt.s32.totalorder %s16, 3
        %s151 = scalar_select %p150, %s16, 3
        %p152 = scmp.lt.s32.totalorder %s149, 255
        %s153 = scalar_select %p152, %s149, 255
        %s154 = smul.addr %s151, 256
        %s155 = sadd.s32 %s153, %s154
        %s156 = smul.addr %s155, 8
        %s157 = scalar_lea.vmem %s0, %s156
        %s158 = smul.u32 256, %s17
      $region24: #{forward.9} parent=19 // pred_fallthru
        _
      // Predicated region
      $region25: #{forward.9} parent=19 // pred_check
        %p159 = pneg %p69
      $region26: #{forward.9} parent=19 // pred_check_branch
        %161 = sbr.rel (%p159) target = $region28
      $region27: #{forward.9} parent=19 // pred_region
        %p162 = scmp.lt.s32.totalorder %s16, 3
        %s163 = scalar_select %p162, %s16, 3
        %s164 = smul.addr %s163, 8
        %s165 = smul.addr %s164, 8
        %s166 = scalar_lea.vmem %s1, %s165
      $region28: #{forward.9} parent=19 // pred_fallthru
        _
    $region20: #{forward.9} parent=5 // pred_fallthru
      _
    %p167 = scmp.le.s32.totalorder 1, %s9
    %p168 = scmp.lt.s32.totalorder %s9, 5
    %p169 = pnand %p167, %p168
    %p170 = pneg %p169
    // Predicated region
    $region29: #{forward.9} parent=5 // pred_check
      _
    $region30: #{forward.9} parent=5 // pred_check_branch
      %172 = sbr.rel (%p169) target = $region32
    $region31: #{forward.9} parent=5 // pred_region
      %s173 = ssub.s32 %s9, 1
      %s174 = smul.u32 256, %s19
      %p175 = scmp.lt.s32.totalorder %s18, 3
      %s176 = scalar_select %p175, %s18, 3
      %p177 = scmp.lt.s32.totalorder %s174, 255
      %s178 = scalar_select %p177, %s174, 255
      %s179 = smul.addr %s176, 256
      %s180 = sadd.s32 %s178, %s179
      %s181 = smul.addr %s180, 8
      %s182 = scalar_lea.vmem %s0, %s181
      %p183 = pneg %p49
      %p184 = pneg %p46
      %p185 = scmp.lt.s32.totalorder %s18, 3
      %s186 = scalar_select %p185, %s18, 3
      %s187 = smul.addr %s186, 8
      %s188 = smul.addr %s187, 8
      %s189 = scalar_lea.vmem %s1, %s188
      %p190 = pneg %p75
      %p191 = pneg %p72
      %p192 = pneg %p96
      %p193 = pneg %p93
      %p194 = pneg %p124
      %p195 = pneg %p121
      %s196 = smul.u32 256, %s19
      %p197 = scmp.lt.s32.totalorder %s18, 3
      %s198 = scalar_select %p197, %s18, 3
      %p199 = scmp.lt.s32.totalorder %s196, 255
      %s200 = scalar_select %p199, %s196, 255
      %s201 = smul.addr %s198, 256
      %s202 = sadd.s32 %s200, %s201
      %s203 = smul.addr %s202, 8
      %s204 = scalar_lea.vmem %s3, %s203
      %s205 = smul.u32 256, %s19
      %p206 = scmp.lt.s32.totalorder %s18, 3
      %s207 = scalar_select %p206, %s18, 3
      %p208 = scmp.lt.s32.totalorder %s205, 255
      %s209 = scalar_select %p208, %s205, 255
      %s210 = smul.addr %s207, 256
      %s211 = sadd.s32 %s209, %s210
      %s212 = smul.addr %s211, 8
      %s213 = scalar_lea.vmem %s0, %s212
      %s214 = smul.u32 256, %s19
      %p215 = scmp.lt.s32.totalorder %s18, 3
      %s216 = scalar_select %p215, %s18, 3
      %s217 = smul.addr %s216, 8
      %s218 = smul.addr %s217, 8
      %s219 = scalar_lea.vmem %s1, %s218
      %s220 = smul.u32 256, %s19
      %p221 = scmp.lt.s32.totalorder %s18, 3
      %s222 = scalar_select %p221, %s18, 3
      %p223 = scmp.lt.s32.totalorder %s220, 255
      %s224 = scalar_select %p223, %s220, 255
      %s225 = smul.addr %s222, 256
      %s226 = sadd.s32 %s224, %s225
      %s227 = smul.addr %s226, 8
      %s228 = scalar_lea.vmem %s3, %s227
      %s229 = smul.u32 256, %s19
      %v230 = vld [vmem:[%s213] sm:$0xff]
      %v231 = vld [vmem:[%s213 + $0x8] sm:$0xff]
      %v232 = vld [vmem:[%s213 + $0x10] sm:$0xff]
      %v233 = vld [vmem:[%s213 + $0x18] sm:$0xff]
      %v234 = vld [vmem:[%s213 + $0x20] sm:$0xff]
      %v235 = vld [vmem:[%s213 + $0x28] sm:$0xff]
      %v236 = vld [vmem:[%s213 + $0x30] sm:$0xff]
      %v237 = vld [vmem:[%s213 + $0x38] sm:$0xff]
      %v238 = vld [vmem:[%s213 + $0x40] sm:$0xff]
      %v239 = vld [vmem:[%s213 + $0x48] sm:$0xff]
      %v240 = vld [vmem:[%s213 + $0x50] sm:$0xff]
      %v241 = vld [vmem:[%s213 + $0x58] sm:$0xff]
      %v242 = vld [vmem:[%s213 + $0x60] sm:$0xff]
      %v243 = vld [vmem:[%s213 + $0x68] sm:$0xff]
      %v244 = vld [vmem:[%s213 + $0x70] sm:$0xff]
      %v245 = vld [vmem:[%s213 + $0x78] sm:$0xff]
      %v246 = vld [vmem:[%s213 + $0x80] sm:$0xff]
      %v247 = vld [vmem:[%s213 + $0x88] sm:$0xff]
      %v248 = vld [vmem:[%s213 + $0x90] sm:$0xff]
      %v249 = vld [vmem:[%s213 + $0x98] sm:$0xff]
      %v250 = vld [vmem:[%s213 + $0xa0] sm:$0xff]
      %v251 = vld [vmem:[%s213 + $0xa8] sm:$0xff]
      %v252 = vld [vmem:[%s213 + $0xb0] sm:$0xff]
      %v253 = vld [vmem:[%s213 + $0xb8] sm:$0xff]
      %v254 = vld [vmem:[%s213 + $0xc0] sm:$0xff]
      %v255 = vld [vmem:[%s213 + $0xc8] sm:$0xff]
      %v256 = vld [vmem:[%s213 + $0xd0] sm:$0xff]
      %v257 = vld [vmem:[%s213 + $0xd8] sm:$0xff]
      %v258 = vld [vmem:[%s213 + $0xe0] sm:$0xff]
      %v259 = vld [vmem:[%s213 + $0xe8] sm:$0xff]
      %v260 = vld [vmem:[%s213 + $0xf0] sm:$0xff]
      %v261 = vld [vmem:[%s213 + $0xf8] sm:$0xff]
      %v262 = vld [vmem:[%s213 + $0x100] sm:$0xff]
      %v263 = vld [vmem:[%s213 + $0x108] sm:$0xff]
      %v264 = vld [vmem:[%s213 + $0x110] sm:$0xff]
      %v265 = vld [vmem:[%s213 + $0x118] sm:$0xff]
      %v266 = vld [vmem:[%s213 + $0x120] sm:$0xff]
      %v267 = vld [vmem:[%s213 + $0x128] sm:$0xff]
      %v268 = vld [vmem:[%s213 + $0x130] sm:$0xff]
      %v269 = vld [vmem:[%s213 + $0x138] sm:$0xff]
      %v270 = vld [vmem:[%s213 + $0x140] sm:$0xff]
      %v271 = vld [vmem:[%s213 + $0x148] sm:$0xff]
      %v272 = vld [vmem:[%s213 + $0x150] sm:$0xff]
      %v273 = vld [vmem:[%s213 + $0x158] sm:$0xff]
      %v274 = vld [vmem:[%s213 + $0x160] sm:$0xff]
      %v275 = vld [vmem:[%s213 + $0x168] sm:$0xff]
      %v276 = vld [vmem:[%s213 + $0x170] sm:$0xff]
      %v277 = vld [vmem:[%s213 + $0x178] sm:$0xff]
      %v278 = vld [vmem:[%s213 + $0x180] sm:$0xff]
      %v279 = vld [vmem:[%s213 + $0x188] sm:$0xff]
      %v280 = vld [vmem:[%s213 + $0x190] sm:$0xff]
      %v281 = vld [vmem:[%s213 + $0x198] sm:$0xff]
      %v282 = vld [vmem:[%s213 + $0x1a0] sm:$0xff]
      %v283 = vld [vmem:[%s213 + $0x1a8] sm:$0xff]
      %v284 = vld [vmem:[%s213 + $0x1b0] sm:$0xff]
      %v285 = vld [vmem:[%s213 + $0x1b8] sm:$0xff]
      %v286 = vld [vmem:[%s213 + $0x1c0] sm:$0xff]
      %v287 = vld [vmem:[%s213 + $0x1c8] sm:$0xff]
      %v288 = vld [vmem:[%s213 + $0x1d0] sm:$0xff]
      %v289 = vld [vmem:[%s213 + $0x1d8] sm:$0xff]
      %v290 = vld [vmem:[%s213 + $0x1e0] sm:$0xff]
      %v291 = vld [vmem:[%s213 + $0x1e8] sm:$0xff]
      %v292 = vld [vmem:[%s213 + $0x1f0] sm:$0xff]
      %v293 = vld [vmem:[%s213 + $0x1f8] sm:$0xff]
      %v294 = vld [vmem:[%s213 + $0x200] sm:$0xff]
      %v295 = vld [vmem:[%s213 + $0x208] sm:$0xff]
      %v296 = vld [vmem:[%s213 + $0x210] sm:$0xff]
      %v297 = vld [vmem:[%s213 + $0x218] sm:$0xff]
      %v298 = vld [vmem:[%s213 + $0x220] sm:$0xff]
      %v299 = vld [vmem:[%s213 + $0x228] sm:$0xff]
      %v300 = vld [vmem:[%s213 + $0x230] sm:$0xff]
      %v301 = vld [vmem:[%s213 + $0x238] sm:$0xff]
      %v302 = vld [vmem:[%s213 + $0x240] sm:$0xff]
      %v303 = vld [vmem:[%s213 + $0x248] sm:$0xff]
      %v304 = vld [vmem:[%s213 + $0x250] sm:$0xff]
      %v305 = vld [vmem:[%s213 + $0x258] sm:$0xff]
      %v306 = vld [vmem:[%s213 + $0x260] sm:$0xff]
      %v307 = vld [vmem:[%s213 + $0x268] sm:$0xff]
      %v308 = vld [vmem:[%s213 + $0x270] sm:$0xff]
      %v309 = vld [vmem:[%s213 + $0x278] sm:$0xff]
      %v310 = vld [vmem:[%s213 + $0x280] sm:$0xff]
      %v311 = vld [vmem:[%s213 + $0x288] sm:$0xff]
      %v312 = vld [vmem:[%s213 + $0x290] sm:$0xff]
      %v313 = vld [vmem:[%s213 + $0x298] sm:$0xff]
      %v314 = vld [vmem:[%s213 + $0x2a0] sm:$0xff]
      %v315 = vld [vmem:[%s213 + $0x2a8] sm:$0xff]
      %v316 = vld [vmem:[%s213 + $0x2b0] sm:$0xff]
      %v317 = vld [vmem:[%s213 + $0x2b8] sm:$0xff]
      %v318 = vld [vmem:[%s213 + $0x2c0] sm:$0xff]
      %v319 = vld [vmem:[%s213 + $0x2c8] sm:$0xff]
      %v320 = vld [vmem:[%s213 + $0x2d0] sm:$0xff]
      %v321 = vld [vmem:[%s213 + $0x2d8] sm:$0xff]
      %v322 = vld [vmem:[%s213 + $0x2e0] sm:$0xff]
      %v323 = vld [vmem:[%s213 + $0x2e8] sm:$0xff]
      %v324 = vld [vmem:[%s213 + $0x2f0] sm:$0xff]
      %v325 = vld [vmem:[%s213 + $0x2f8] sm:$0xff]
      %v326 = vld [vmem:[%s213 + $0x300] sm:$0xff]
      %v327 = vld [vmem:[%s213 + $0x308] sm:$0xff]
      %v328 = vld [vmem:[%s213 + $0x310] sm:$0xff]
      %v329 = vld [vmem:[%s213 + $0x318] sm:$0xff]
      %v330 = vld [vmem:[%s213 + $0x320] sm:$0xff]
      %v331 = vld [vmem:[%s213 + $0x328] sm:$0xff]
      %v332 = vld [vmem:[%s213 + $0x330] sm:$0xff]
      %v333 = vld [vmem:[%s213 + $0x338] sm:$0xff]
      %v334 = vld [vmem:[%s213 + $0x340] sm:$0xff]
      %v335 = vld [vmem:[%s213 + $0x348] sm:$0xff]
      %v336 = vld [vmem:[%s213 + $0x350] sm:$0xff]
      %v337 = vld [vmem:[%s213 + $0x358] sm:$0xff]
      %v338 = vld [vmem:[%s213 + $0x360] sm:$0xff]
      %v339 = vld [vmem:[%s213 + $0x368] sm:$0xff]
      %v340 = vld [vmem:[%s213 + $0x370] sm:$0xff]
      %v341 = vld [vmem:[%s213 + $0x378] sm:$0xff]
      %v342 = vld [vmem:[%s213 + $0x380] sm:$0xff]
      %v343 = vld [vmem:[%s213 + $0x388] sm:$0xff]
      %v344 = vld [vmem:[%s213 + $0x390] sm:$0xff]
      %v345 = vld [vmem:[%s213 + $0x398] sm:$0xff]
      %v346 = vld [vmem:[%s213 + $0x3a0] sm:$0xff]
      %v347 = vld [vmem:[%s213 + $0x3a8] sm:$0xff]
      %v348 = vld [vmem:[%s213 + $0x3b0] sm:$0xff]
      %v349 = vld [vmem:[%s213 + $0x3b8] sm:$0xff]
      %v350 = vld [vmem:[%s213 + $0x3c0] sm:$0xff]
      %v351 = vld [vmem:[%s213 + $0x3c8] sm:$0xff]
      %v352 = vld [vmem:[%s213 + $0x3d0] sm:$0xff]
      %v353 = vld [vmem:[%s213 + $0x3d8] sm:$0xff]
      %v354 = vld [vmem:[%s213 + $0x3e0] sm:$0xff]
      %v355 = vld [vmem:[%s213 + $0x3e8] sm:$0xff]
      %v356 = vld [vmem:[%s213 + $0x3f0] sm:$0xff]
      %v357 = vld [vmem:[%s213 + $0x3f8] sm:$0xff]
      %v358 = vld [vmem:[%s213 + $0x400] sm:$0xff]
      %v359 = vld [vmem:[%s213 + $0x408] sm:$0xff]
      %v360 = vld [vmem:[%s213 + $0x410] sm:$0xff]
      %v361 = vld [vmem:[%s213 + $0x418] sm:$0xff]
      %v362 = vld [vmem:[%s213 + $0x420] sm:$0xff]
      %v363 = vld [vmem:[%s213 + $0x428] sm:$0xff]
      %v364 = vld [vmem:[%s213 + $0x430] sm:$0xff]
      %v365 = vld [vmem:[%s213 + $0x438] sm:$0xff]
      %v366 = vld [vmem:[%s213 + $0x440] sm:$0xff]
      %v367 = vld [vmem:[%s213 + $0x448] sm:$0xff]
      %v368 = vld [vmem:[%s213 + $0x450] sm:$0xff]
      %v369 = vld [vmem:[%s213 + $0x458] sm:$0xff]
      %v370 = vld [vmem:[%s213 + $0x460] sm:$0xff]
      %v371 = vld [vmem:[%s213 + $0x468] sm:$0xff]
      %v372 = vld [vmem:[%s213 + $0x470] sm:$0xff]
      %v373 = vld [vmem:[%s213 + $0x478] sm:$0xff]
      %v374 = vld [vmem:[%s213 + $0x480] sm:$0xff]
      %v375 = vld [vmem:[%s213 + $0x488] sm:$0xff]
      %v376 = vld [vmem:[%s213 + $0x490] sm:$0xff]
      %v377 = vld [vmem:[%s213 + $0x498] sm:$0xff]
      %v378 = vld [vmem:[%s213 + $0x4a0] sm:$0xff]
      %v379 = vld [vmem:[%s213 + $0x4a8] sm:$0xff]
      %v380 = vld [vmem:[%s213 + $0x4b0] sm:$0xff]
      %v381 = vld [vmem:[%s213 + $0x4b8] sm:$0xff]
      %v382 = vld [vmem:[%s213 + $0x4c0] sm:$0xff]
      %v383 = vld [vmem:[%s213 + $0x4c8] sm:$0xff]
      %v384 = vld [vmem:[%s213 + $0x4d0] sm:$0xff]
      %v385 = vld [vmem:[%s213 + $0x4d8] sm:$0xff]
      %v386 = vld [vmem:[%s213 + $0x4e0] sm:$0xff]
      %v387 = vld [vmem:[%s213 + $0x4e8] sm:$0xff]
      %v388 = vld [vmem:[%s213 + $0x4f0] sm:$0xff]
      %v389 = vld [vmem:[%s213 + $0x4f8] sm:$0xff]
      %v390 = vld [vmem:[%s213 + $0x500] sm:$0xff]
      %v391 = vld [vmem:[%s213 + $0x508] sm:$0xff]
      %v392 = vld [vmem:[%s213 + $0x510] sm:$0xff]
      %v393 = vld [vmem:[%s213 + $0x518] sm:$0xff]
      %v394 = vld [vmem:[%s213 + $0x520] sm:$0xff]
      %v395 = vld [vmem:[%s213 + $0x528] sm:$0xff]
      %v396 = vld [vmem:[%s213 + $0x530] sm:$0xff]
      %v397 = vld [vmem:[%s213 + $0x538] sm:$0xff]
      %v398 = vld [vmem:[%s213 + $0x540] sm:$0xff]
      %v399 = vld [vmem:[%s213 + $0x548] sm:$0xff]
      %v400 = vld [vmem:[%s213 + $0x550] sm:$0xff]
      %v401 = vld [vmem:[%s213 + $0x558] sm:$0xff]
      %v402 = vld [vmem:[%s213 + $0x560] sm:$0xff]
      %v403 = vld [vmem:[%s213 + $0x568] sm:$0xff]
      %v404 = vld [vmem:[%s213 + $0x570] sm:$0xff]
      %v405 = vld [vmem:[%s213 + $0x578] sm:$0xff]
      %v406 = vld [vmem:[%s213 + $0x580] sm:$0xff]
      %v407 = vld [vmem:[%s213 + $0x588] sm:$0xff]
      %v408 = vld [vmem:[%s213 + $0x590] sm:$0xff]
      %v409 = vld [vmem:[%s213 + $0x598] sm:$0xff]
      %v410 = vld [vmem:[%s213 + $0x5a0] sm:$0xff]
      %v411 = vld [vmem:[%s213 + $0x5a8] sm:$0xff]
      %v412 = vld [vmem:[%s213 + $0x5b0] sm:$0xff]
      %v413 = vld [vmem:[%s213 + $0x5b8] sm:$0xff]
      %v414 = vld [vmem:[%s213 + $0x5c0] sm:$0xff]
      %v415 = vld [vmem:[%s213 + $0x5c8] sm:$0xff]
      %v416 = vld [vmem:[%s213 + $0x5d0] sm:$0xff]
      %v417 = vld [vmem:[%s213 + $0x5d8] sm:$0xff]
      %v418 = vld [vmem:[%s213 + $0x5e0] sm:$0xff]
      %v419 = vld [vmem:[%s213 + $0x5e8] sm:$0xff]
      %v420 = vld [vmem:[%s213 + $0x5f0] sm:$0xff]
      %v421 = vld [vmem:[%s213 + $0x5f8] sm:$0xff]
      %v422 = vld [vmem:[%s213 + $0x600] sm:$0xff]
      %v423 = vld [vmem:[%s213 + $0x608] sm:$0xff]
      %v424 = vld [vmem:[%s213 + $0x610] sm:$0xff]
      %v425 = vld [vmem:[%s213 + $0x618] sm:$0xff]
      %v426 = vld [vmem:[%s213 + $0x620] sm:$0xff]
      %v427 = vld [vmem:[%s213 + $0x628] sm:$0xff]
      %v428 = vld [vmem:[%s213 + $0x630] sm:$0xff]
      %v429 = vld [vmem:[%s213 + $0x638] sm:$0xff]
      %v430 = vld [vmem:[%s213 + $0x640] sm:$0xff]
      %v431 = vld [vmem:[%s213 + $0x648] sm:$0xff]
      %v432 = vld [vmem:[%s213 + $0x650] sm:$0xff]
      %v433 = vld [vmem:[%s213 + $0x658] sm:$0xff]
      %v434 = vld [vmem:[%s213 + $0x660] sm:$0xff]
      %v435 = vld [vmem:[%s213 + $0x668] sm:$0xff]
      %v436 = vld [vmem:[%s213 + $0x670] sm:$0xff]
      %v437 = vld [vmem:[%s213 + $0x678] sm:$0xff]
      %v438 = vld [vmem:[%s213 + $0x680] sm:$0xff]
      %v439 = vld [vmem:[%s213 + $0x688] sm:$0xff]
      %v440 = vld [vmem:[%s213 + $0x690] sm:$0xff]
      %v441 = vld [vmem:[%s213 + $0x698] sm:$0xff]
      %v442 = vld [vmem:[%s213 + $0x6a0] sm:$0xff]
      %v443 = vld [vmem:[%s213 + $0x6a8] sm:$0xff]
      %v444 = vld [vmem:[%s213 + $0x6b0] sm:$0xff]
      %v445 = vld [vmem:[%s213 + $0x6b8] sm:$0xff]
      %v446 = vld [vmem:[%s213 + $0x6c0] sm:$0xff]
      %v447 = vld [vmem:[%s213 + $0x6c8] sm:$0xff]
      %v448 = vld [vmem:[%s213 + $0x6d0] sm:$0xff]
      %v449 = vld [vmem:[%s213 + $0x6d8] sm:$0xff]
      %v450 = vld [vmem:[%s213 + $0x6e0] sm:$0xff]
      %v451 = vld [vmem:[%s213 + $0x6e8] sm:$0xff]
      %v452 = vld [vmem:[%s213 + $0x6f0] sm:$0xff]
      %v453 = vld [vmem:[%s213 + $0x6f8] sm:$0xff]
      %v454 = vld [vmem:[%s213 + $0x700] sm:$0xff]
      %v455 = vld [vmem:[%s213 + $0x708] sm:$0xff]
      %v456 = vld [vmem:[%s213 + $0x710] sm:$0xff]
      %v457 = vld [vmem:[%s213 + $0x718] sm:$0xff]
      %v458 = vld [vmem:[%s213 + $0x720] sm:$0xff]
      %v459 = vld [vmem:[%s213 + $0x728] sm:$0xff]
      %v460 = vld [vmem:[%s213 + $0x730] sm:$0xff]
      %v461 = vld [vmem:[%s213 + $0x738] sm:$0xff]
      %v462 = vld [vmem:[%s213 + $0x740] sm:$0xff]
      %v463 = vld [vmem:[%s213 + $0x748] sm:$0xff]
      %v464 = vld [vmem:[%s213 + $0x750] sm:$0xff]
      %v465 = vld [vmem:[%s213 + $0x758] sm:$0xff]
      %v466 = vld [vmem:[%s213 + $0x760] sm:$0xff]
      %v467 = vld [vmem:[%s213 + $0x768] sm:$0xff]
      %v468 = vld [vmem:[%s213 + $0x770] sm:$0xff]
      %v469 = vld [vmem:[%s213 + $0x778] sm:$0xff]
      %v470 = vld [vmem:[%s213 + $0x780] sm:$0xff]
      %v471 = vld [vmem:[%s213 + $0x788] sm:$0xff]
      %v472 = vld [vmem:[%s213 + $0x790] sm:$0xff]
      %v473 = vld [vmem:[%s213 + $0x798] sm:$0xff]
      %v474 = vld [vmem:[%s213 + $0x7a0] sm:$0xff]
      %v475 = vld [vmem:[%s213 + $0x7a8] sm:$0xff]
      %v476 = vld [vmem:[%s213 + $0x7b0] sm:$0xff]
      %v477 = vld [vmem:[%s213 + $0x7b8] sm:$0xff]
      %v478 = vld [vmem:[%s213 + $0x7c0] sm:$0xff]
      %v479 = vld [vmem:[%s213 + $0x7c8] sm:$0xff]
      %v480 = vld [vmem:[%s213 + $0x7d0] sm:$0xff]
      %v481 = vld [vmem:[%s213 + $0x7d8] sm:$0xff]
      %v482 = vld [vmem:[%s213 + $0x7e0] sm:$0xff]
      %v483 = vld [vmem:[%s213 + $0x7e8] sm:$0xff]
      %v484 = vld [vmem:[%s213 + $0x7f0] sm:$0xff]
      %v485 = vld [vmem:[%s213 + $0x7f8] sm:$0xff]
      %v486 = vld [vmem:[%s219] sm:$0xff]
      %v487 = vld [vmem:[%s219 + $0x8] sm:$0xff]
      %v488 = vld [vmem:[%s219 + $0x10] sm:$0xff]
      %v489 = vld [vmem:[%s219 + $0x18] sm:$0xff]
      %v490 = vld [vmem:[%s219 + $0x20] sm:$0xff]
      %v491 = vld [vmem:[%s219 + $0x28] sm:$0xff]
      %v492 = vld [vmem:[%s219 + $0x30] sm:$0xff]
      %v493 = vld [vmem:[%s219 + $0x38] sm:$0xff]
      %v494 = vld [vmem:[%s2] sm:$0x1]
      %v496 = vlaneseq
      %v497 = vshrl.u32 %v496, 7
      %v498 = vsub.s32 0, %v497
      %v499 = vrot.slane %v494, %v498
      %vm501 = vcmask 523264
      %v503 = vsel %vm501, %v230, 0
      %v506 = vsel %vm501, %v231, 0
      %v509 = vsel %vm501, %v232, 0
      %v512 = vsel %vm501, %v233, 0
      %v515 = vsel %vm501, %v234, 0
      %v518 = vsel %vm501, %v235, 0
      %v521 = vsel %vm501, %v236, 0
      %v524 = vsel %vm501, %v237, 0
      %v527 = vsel %vm501, %v238, 0
      %v530 = vsel %vm501, %v239, 0
      %v533 = vsel %vm501, %v240, 0
      %v536 = vsel %vm501, %v241, 0
      %v539 = vsel %vm501, %v242, 0
      %v542 = vsel %vm501, %v243, 0
      %v545 = vsel %vm501, %v244, 0
      %v548 = vsel %vm501, %v245, 0
      %v551 = vsel %vm501, %v246, 0
      %v554 = vsel %vm501, %v247, 0
      %v557 = vsel %vm501, %v248, 0
      %v560 = vsel %vm501, %v249, 0
      %v563 = vsel %vm501, %v250, 0
      %v566 = vsel %vm501, %v251, 0
      %v569 = vsel %vm501, %v252, 0
      %v572 = vsel %vm501, %v253, 0
      %v575 = vsel %vm501, %v254, 0
      %v578 = vsel %vm501, %v255, 0
      %v581 = vsel %vm501, %v256, 0
      %v584 = vsel %vm501, %v257, 0
      %v587 = vsel %vm501, %v258, 0
      %v590 = vsel %vm501, %v259, 0
      %v593 = vsel %vm501, %v260, 0
      %v596 = vsel %vm501, %v261, 0
      %v599 = vsel %vm501, %v262, 0
      %v602 = vsel %vm501, %v263, 0
      %v605 = vsel %vm501, %v264, 0
      %v608 = vsel %vm501, %v265, 0
      %v611 = vsel %vm501, %v266, 0
      %v614 = vsel %vm501, %v267, 0
      %v617 = vsel %vm501, %v268, 0
      %v620 = vsel %vm501, %v269, 0
      %v623 = vsel %vm501, %v270, 0
      %v626 = vsel %vm501, %v271, 0
      %v629 = vsel %vm501, %v272, 0
      %v632 = vsel %vm501, %v273, 0
      %v635 = vsel %vm501, %v274, 0
      %v638 = vsel %vm501, %v275, 0
      %v641 = vsel %vm501, %v276, 0
      %v644 = vsel %vm501, %v277, 0
      %v647 = vsel %vm501, %v278, 0
      %v650 = vsel %vm501, %v279, 0
      %v653 = vsel %vm501, %v280, 0
      %v656 = vsel %vm501, %v281, 0
      %v659 = vsel %vm501, %v282, 0
      %v662 = vsel %vm501, %v283, 0
      %v665 = vsel %vm501, %v284, 0
      %v668 = vsel %vm501, %v285, 0
      %v671 = vsel %vm501, %v286, 0
      %v674 = vsel %vm501, %v287, 0
      %v677 = vsel %vm501, %v288, 0
      %v680 = vsel %vm501, %v289, 0
      %v683 = vsel %vm501, %v290, 0
      %v686 = vsel %vm501, %v291, 0
      %v689 = vsel %vm501, %v292, 0
      %v692 = vsel %vm501, %v293, 0
      %v695 = vsel %vm501, %v294, 0
      %v698 = vsel %vm501, %v295, 0
      %v701 = vsel %vm501, %v296, 0
      %v704 = vsel %vm501, %v297, 0
      %v707 = vsel %vm501, %v298, 0
      %v710 = vsel %vm501, %v299, 0
      %v713 = vsel %vm501, %v300, 0
      %v716 = vsel %vm501, %v301, 0
      %v719 = vsel %vm501, %v302, 0
      %v722 = vsel %vm501, %v303, 0
      %v725 = vsel %vm501, %v304, 0
      %v728 = vsel %vm501, %v305, 0
      %v731 = vsel %vm501, %v306, 0
      %v734 = vsel %vm501, %v307, 0
      %v737 = vsel %vm501, %v308, 0
      %v740 = vsel %vm501, %v309, 0
      %v743 = vsel %vm501, %v310, 0
      %v746 = vsel %vm501, %v311, 0
      %v749 = vsel %vm501, %v312, 0
      %v752 = vsel %vm501, %v313, 0
      %v755 = vsel %vm501, %v314, 0
      %v758 = vsel %vm501, %v315, 0
      %v761 = vsel %vm501, %v316, 0
      %v764 = vsel %vm501, %v317, 0
      %v767 = vsel %vm501, %v318, 0
      %v770 = vsel %vm501, %v319, 0
      %v773 = vsel %vm501, %v320, 0
      %v776 = vsel %vm501, %v321, 0
      %v779 = vsel %vm501, %v322, 0
      %v782 = vsel %vm501, %v323, 0
      %v785 = vsel %vm501, %v324, 0
      %v788 = vsel %vm501, %v325, 0
      %v791 = vsel %vm501, %v326, 0
      %v794 = vsel %vm501, %v327, 0
      %v797 = vsel %vm501, %v328, 0
      %v800 = vsel %vm501, %v329, 0
      %v803 = vsel %vm501, %v330, 0
      %v806 = vsel %vm501, %v331, 0
      %v809 = vsel %vm501, %v332, 0
      %v812 = vsel %vm501, %v333, 0
      %v815 = vsel %vm501, %v334, 0
      %v818 = vsel %vm501, %v335, 0
      %v821 = vsel %vm501, %v336, 0
      %v824 = vsel %vm501, %v337, 0
      %v827 = vsel %vm501, %v338, 0
      %v830 = vsel %vm501, %v339, 0
      %v833 = vsel %vm501, %v340, 0
      %v836 = vsel %vm501, %v341, 0
      %v839 = vsel %vm501, %v342, 0
      %v842 = vsel %vm501, %v343, 0
      %v845 = vsel %vm501, %v344, 0
      %v848 = vsel %vm501, %v345, 0
      %v851 = vsel %vm501, %v346, 0
      %v854 = vsel %vm501, %v347, 0
      %v857 = vsel %vm501, %v348, 0
      %v860 = vsel %vm501, %v349, 0
      %v863 = vsel %vm501, %v350, 0
      %v866 = vsel %vm501, %v351, 0
      %v869 = vsel %vm501, %v352, 0
      %v872 = vsel %vm501, %v353, 0
      %v875 = vsel %vm501, %v354, 0
      %v878 = vsel %vm501, %v355, 0
      %v881 = vsel %vm501, %v356, 0
      %v884 = vsel %vm501, %v357, 0
      %v887 = vsel %vm501, %v358, 0
      %v890 = vsel %vm501, %v359, 0
      %v893 = vsel %vm501, %v360, 0
      %v896 = vsel %vm501, %v361, 0
      %v899 = vsel %vm501, %v362, 0
      %v902 = vsel %vm501, %v363, 0
      %v905 = vsel %vm501, %v364, 0
      %v908 = vsel %vm501, %v365, 0
      %v911 = vsel %vm501, %v366, 0
      %v914 = vsel %vm501, %v367, 0
      %v917 = vsel %vm501, %v368, 0
      %v920 = vsel %vm501, %v369, 0
      %v923 = vsel %vm501, %v370, 0
      %v926 = vsel %vm501, %v371, 0
      %v929 = vsel %vm501, %v372, 0
      %v932 = vsel %vm501, %v373, 0
      %v935 = vsel %vm501, %v374, 0
      %v938 = vsel %vm501, %v375, 0
      %v941 = vsel %vm501, %v376, 0
      %v944 = vsel %vm501, %v377, 0
      %v947 = vsel %vm501, %v378, 0
      %v950 = vsel %vm501, %v379, 0
      %v953 = vsel %vm501, %v380, 0
      %v956 = vsel %vm501, %v381, 0
      %v959 = vsel %vm501, %v382, 0
      %v962 = vsel %vm501, %v383, 0
      %v965 = vsel %vm501, %v384, 0
      %v968 = vsel %vm501, %v385, 0
      %v971 = vsel %vm501, %v386, 0
      %v974 = vsel %vm501, %v387, 0
      %v977 = vsel %vm501, %v388, 0
      %v980 = vsel %vm501, %v389, 0
      %v983 = vsel %vm501, %v390, 0
      %v986 = vsel %vm501, %v391, 0
      %v989 = vsel %vm501, %v392, 0
      %v992 = vsel %vm501, %v393, 0
      %v995 = vsel %vm501, %v394, 0
      %v998 = vsel %vm501, %v395, 0
      %v1001 = vsel %vm501, %v396, 0
      %v1004 = vsel %vm501, %v397, 0
      %v1007 = vsel %vm501, %v398, 0
      %v1010 = vsel %vm501, %v399, 0
      %v1013 = vsel %vm501, %v400, 0
      %v1016 = vsel %vm501, %v401, 0
      %v1019 = vsel %vm501, %v402, 0
      %v1022 = vsel %vm501, %v403, 0
      %v1025 = vsel %vm501, %v404, 0
      %v1028 = vsel %vm501, %v405, 0
      %v1031 = vsel %vm501, %v406, 0
      %v1034 = vsel %vm501, %v407, 0
      %v1037 = vsel %vm501, %v408, 0
      %v1040 = vsel %vm501, %v409, 0
      %v1043 = vsel %vm501, %v410, 0
      %v1046 = vsel %vm501, %v411, 0
      %v1049 = vsel %vm501, %v412, 0
      %v1052 = vsel %vm501, %v413, 0
      %v1055 = vsel %vm501, %v414, 0
      %v1058 = vsel %vm501, %v415, 0
      %v1061 = vsel %vm501, %v416, 0
      %v1064 = vsel %vm501, %v417, 0
      %v1067 = vsel %vm501, %v418, 0
      %v1070 = vsel %vm501, %v419, 0
      %v1073 = vsel %vm501, %v420, 0
      %v1076 = vsel %vm501, %v421, 0
      %v1079 = vsel %vm501, %v422, 0
      %v1082 = vsel %vm501, %v423, 0
      %v1085 = vsel %vm501, %v424, 0
      %v1088 = vsel %vm501, %v425, 0
      %v1091 = vsel %vm501, %v426, 0
      %v1094 = vsel %vm501, %v427, 0
      %v1097 = vsel %vm501, %v428, 0
      %v1100 = vsel %vm501, %v429, 0
      %v1103 = vsel %vm501, %v430, 0
      %v1106 = vsel %vm501, %v431, 0
      %v1109 = vsel %vm501, %v432, 0
      %v1112 = vsel %vm501, %v433, 0
      %v1115 = vsel %vm501, %v434, 0
      %v1118 = vsel %vm501, %v435, 0
      %v1121 = vsel %vm501, %v436, 0
      %v1124 = vsel %vm501, %v437, 0
      %v1127 = vsel %vm501, %v438, 0
      %v1130 = vsel %vm501, %v439, 0
      %v1133 = vsel %vm501, %v440, 0
      %v1136 = vsel %vm501, %v441, 0
      %v1139 = vsel %vm501, %v442, 0
      %v1142 = vsel %vm501, %v443, 0
      %v1145 = vsel %vm501, %v444, 0
      %v1148 = vsel %vm501, %v445, 0
      %v1151 = vsel %vm501, %v446, 0
      %v1154 = vsel %vm501, %v447, 0
      %v1157 = vsel %vm501, %v448, 0
      %v1160 = vsel %vm501, %v449, 0
      %v1163 = vsel %vm501, %v450, 0
      %v1166 = vsel %vm501, %v451, 0
      %v1169 = vsel %vm501, %v452, 0
      %v1172 = vsel %vm501, %v453, 0
      %v1175 = vsel %vm501, %v454, 0
      %v1178 = vsel %vm501, %v455, 0
      %v1181 = vsel %vm501, %v456, 0
      %v1184 = vsel %vm501, %v457, 0
      %v1187 = vsel %vm501, %v458, 0
      %v1190 = vsel %vm501, %v459, 0
      %v1193 = vsel %vm501, %v460, 0
      %v1196 = vsel %vm501, %v461, 0
      %v1199 = vsel %vm501, %v462, 0
      %v1202 = vsel %vm501, %v463, 0
      %v1205 = vsel %vm501, %v464, 0
      %v1208 = vsel %vm501, %v465, 0
      %v1211 = vsel %vm501, %v466, 0
      %v1214 = vsel %vm501, %v467, 0
      %v1217 = vsel %vm501, %v468, 0
      %v1220 = vsel %vm501, %v469, 0
      %v1223 = vsel %vm501, %v470, 0
      %v1226 = vsel %vm501, %v471, 0
      %v1229 = vsel %vm501, %v472, 0
      %v1232 = vsel %vm501, %v473, 0
      %v1235 = vsel %vm501, %v474, 0
      %v1238 = vsel %vm501, %v475, 0
      %v1241 = vsel %vm501, %v476, 0
      %v1244 = vsel %vm501, %v477, 0
      %v1247 = vsel %vm501, %v478, 0
      %v1250 = vsel %vm501, %v479, 0
      %v1253 = vsel %vm501, %v480, 0
      %v1256 = vsel %vm501, %v481, 0
      %v1259 = vsel %vm501, %v482, 0
      %v1262 = vsel %vm501, %v483, 0
      %v1265 = vsel %vm501, %v484, 0
      %v1268 = vsel %vm501, %v485, 0
      %1270 = vmatprep.subr.mxu0 0.0
      %1271 = vmatpush1.msra.mxu0 %v486
      %1272 = vmatprep.subr.mxu0 0.0
      %1273 = vmatpush1.msra.mxu0 %v487
      %1274 = vmatprep.subr.mxu0 0.0
      %1275 = vmatpush1.msra.mxu0 %v488
      %1276 = vmatprep.subr.mxu0 0.0
      %1277 = vmatpush1.msra.mxu0 %v489
      %1278 = vmatprep.subr.mxu0 0.0
      %1279 = vmatpush1.msra.mxu0 %v490
      %1280 = vmatprep.subr.mxu0 0.0
      %1281 = vmatpush1.msra.mxu0 %v491
      %1282 = vmatprep.subr.mxu0 0.0
      %1283 = vmatpush1.msra.mxu0 %v492
      %1284 = vmatprep.subr.mxu0 0.0
      %1285 = vmatpush1.msra.mxu0 %v493
      %1286 = vmatprep.subr.mxu0 0.0
      %1287 = vmatpush1.msra.mxu0 0.0
      %1288 = vmatprep.subr.mxu0 0.0
      %1289 = vmatpush1.msra.mxu0 0.0
      %1290 = vmatprep.subr.mxu0 0.0
      %1291 = vmatpush1.msra.mxu0 0.0
      %1292 = vmatprep.subr.mxu0 0.0
      %1293 = vmatpush1.msra.mxu0 0.0
      %1294 = vmatprep.subr.mxu0 0.0
      %1295 = vmatpush1.msra.mxu0 0.0
      %1296 = vmatprep.subr.mxu0 0.0
      %1297 = vmatpush1.msra.mxu0 0.0
      %1298 = vmatprep.subr.mxu0 0.0
      %1299 = vmatpush1.msra.mxu0 0.0
      %1300 = vmatprep.subr.mxu0 0.0
      %1301 = vmatpush1.msra.mxu0 0.0
      %1302 = vmatprep.subr.mxu0 0.0
      %1303 = vmatpush1.msra.mxu0 0.0
      %1304 = vmatprep.subr.mxu0 0.0
      %1305 = vmatpush1.msra.mxu0 0.0
      %1306 = vmatprep.subr.mxu0 0.0
      %1307 = vmatpush1.msra.mxu0 0.0
      %1308 = vmatprep.subr.mxu0 0.0
      %1309 = vmatpush1.msra.mxu0 0.0
      %1310 = vmatprep.subr.mxu0 0.0
      %1311 = vmatpush1.msra.mxu0 0.0
      %1312 = vmatprep.subr.mxu0 0.0
      %1313 = vmatpush1.msra.mxu0 0.0
      %1314 = vmatprep.subr.mxu0 0.0
      %1315 = vmatpush1.msra.mxu0 0.0
      %1316 = vmatprep.subr.mxu0 0.0
      %1317 = vmatpush1.msra.mxu0 0.0
      %1318 = vmatprep.subr.mxu0 0.0
      %1319 = vmatpush1.msra.mxu0 0.0
      %1320 = vmatprep.subr.mxu0 0.0
      %1321 = vmatpush1.msra.mxu0 0.0
      %1322 = vmatprep.subr.mxu0 0.0
      %1323 = vmatpush1.msra.mxu0 0.0
      %1324 = vmatprep.subr.mxu0 0.0
      %1325 = vmatpush1.msra.mxu0 0.0
      %1326 = vmatprep.subr.mxu0 0.0
      %1327 = vmatpush1.msra.mxu0 0.0
      %1328 = vmatprep.subr.mxu0 0.0
      %1329 = vmatpush1.msra.mxu0 0.0
      %1330 = vmatprep.subr.mxu0 0.0
      %1331 = vmatpush1.msra.mxu0 0.0
      %1332 = vmatprep.subr.mxu0 0.0
      %1333 = vmatpush1.msra.mxu0 0.0
      %1334 = vmatprep.mubr.f32.mxu0 0.0
      %1335 = vmatmul.mubr.f32.gmra.mrb[0].mxu0 %v503
      %v1336 = vpop.f32.mrb[0].mxu0
      %v1337 = vadd.f32 %v499, %v1336
      %v1338 = vpop.f32.mrb[0].mxu0
      %1339 = vmatprep.mubr.f32.mxu0 0.0
      %1340 = vmatmul.mubr.f32.gmra.mrb[0].mxu0 %v506
      %v1341 = vpop.f32.mrb[0].mxu0
      %v1342 = vadd.f32 %v499, %v1341
      %v1343 = vpop.f32.mrb[0].mxu0
      %1344 = vmatprep.mubr.f32.mxu0 0.0
      %1345 = vmatmul.mubr.f32.gmra.mrb[0].mxu0 %v509
      %v1346 = vpop.f32.mrb[0].mxu0
      %v1347 = vadd.f32 %v499, %v1346
      %v1348 = vpop.f32.mrb[0].mxu0
      %1349 = vmatprep.mubr.f32.mxu0 0.0
      %1350 = vmatmul.mubr.f32.gmra.mrb[0].mxu0 %v512
      %v1351 = vpop.f32.mrb[0].mxu0
      %v1352 = vadd.f32 %v499, %v1351
      %v1353 = vpop.f32.mrb[0].mxu0
      %1354 = vmatprep.mubr.f32.mxu0 0.0
      %1355 = vmatmul.mubr.f32.gmra.mrb[0].mxu0 %v515
      %v1356 = vpop.f32.mrb[0].mxu0
      %v1357 = vadd.f32 %v499, %v1356
      %v1358 = vpop.f32.mrb[0].mxu0
      %1359 = vmatprep.mubr.f32.mxu0 0.0
      %1360 = vmatmul.mubr.f32.gmra.mrb[0].mxu0 %v518
      %v1361 = vpop.f32.mrb[0].mxu0
      %v1362 = vadd.f32 %v499, %v1361
      %v1363 = vpop.f32.mrb[0].mxu0
      %1364 = vmatprep.mubr.f32.mxu0 0.0
      %1365 = vmatmul.mubr.f32.gmra.mrb[0].mxu0 %v521
      %v1366 = vpop.f32.mrb[0].mxu0
      %v1367 = vadd.f32 %v499, %v1366
      %v1368 = vpop.f32.mrb[0].mxu0
      %1369 = vmatprep.mubr.f32.mxu0 0.0
      %1370 = vmatmul.mubr.f32.gmra.mrb[0].mxu0 %v524
      %v1371 = vpop.f32.mrb[0].mxu0
      %v1372 = vadd.f32 %v499, %v1371
      %v1373 = vpop.f32.mrb[0].mxu0
      %1374 = vmatprep.mubr.f32.mxu0 0.0
      %1375 = vmatmul.mubr.f32.gmra.mrb[0].mxu0 %v527
      %v1376 = vpop.f32.mrb[0].mxu0
      %v1377 = vadd.f32 %v499, %v1376
      %v1378 = vpop.f32.mrb[0].mxu0
      %1379 = vmatprep.mubr.f32.mxu0 0.0
      %1380 = vmatmul.mubr.f32.gmra.mrb[0].mxu0 %v530
      %v1381 = vpop.f32.mrb[0].mxu0
      %v1382 = vadd.f32 %v499, %v1381
      %v1383 = vpop.f32.mrb[0].mxu0
      %1384 = vmatprep.mubr.f32.mxu0 0.0
      %1385 = vmatmul.mubr.f32.gmra.mrb[0].mxu0 %v533
      %v1386 = vpop.f32.mrb[0].mxu0
      %v1387 = vadd.f32 %v499, %v1386
      %v1388 = vpop.f32.mrb[0].mxu0
      %1389 = vmatprep.mubr.f32.mxu0 0.0
      %1390 = vmatmul.mubr.f32.gmra.mrb[0].mxu0 %v536
      %v1391 = vpop.f32.mrb[0].mxu0
      %v1392 = vadd.f32 %v499, %v1391
      %v1393 = vpop.f32.mrb[0].mxu0
      %1394 = vmatprep.mubr.f32.mxu0 0.0
      %1395 = vmatmul.mubr.f32.gmra.mrb[0].mxu0 %v539
      %v1396 = vpop.f32.mrb[0].mxu0
      %v1397 = vadd.f32 %v499, %v1396
      %v1398 = vpop.f32.mrb[0].mxu0
      %1399 = vmatprep.mubr.f32.mxu0 0.0
      %1400 = vmatmul.mubr.f32.gmra.mrb[0].mxu0 %v542
      %v1401 = vpop.f32.mrb[0].mxu0
      %v1402 = vadd.f32 %v499, %v1401
      %v1403 = vpop.f32.mrb[0].mxu0
      %1404 = vmatprep.mubr.f32.mxu0 0.0
      %1405 = vmatmul.mubr.f32.gmra.mrb[0].mxu0 %v545
      %v1406 = vpop.f32.mrb[0].mxu0
      %v1407 = vadd.f32 %v499, %v1406
      %v1408 = vpop.f32.mrb[0].mxu0
      %1409 = vmatprep.mubr.f32.mxu0 0.0
      %1410 = vmatmul.mubr.f32.gmra.mrb[0].mxu0 %v548
      %v1411 = vpop.f32.mrb[0].mxu0
      %v1412 = vadd.f32 %v499, %v1411
      %v1413 = vpop.f32.mrb[0].mxu0
      %1414 = vmatprep.mubr.f32.mxu0 0.0
      %1415 = vmatmul.mubr.f32.gmra.mrb[0].mxu0 %v551
      %v1416 = vpop.f32.mrb[0].mxu0
      %v1417 = vadd.f32 %v499, %v1416
      %v1418 = vpop.f32.mrb[0].mxu0
      %1419 = vmatprep.mubr.f32.mxu0 0.0
      %1420 = vmatmul.mubr.f32.gmra.mrb[0].mxu0 %v554
      %v1421 = vpop.f32.mrb[0].mxu0
      %v1422 = vadd.f32 %v499, %v1421
      %v1423 = vpop.f32.mrb[0].mxu0
      %1424 = vmatprep.mubr.f32.mxu0 0.0
      %1425 = vmatmul.mubr.f32.gmra.mrb[0].mxu0 %v557
      %v1426 = vpop.f32.mrb[0].mxu0
      %v1427 = vadd.f32 %v499, %v1426
      %v1428 = vpop.f32.mrb[0].mxu0
      %1429 = vmatprep.mubr.f32.mxu0 0.0
      %1430 = vmatmul.mubr.f32.gmra.mrb[0].mxu0 %v560
      %v1431 = vpop.f32.mrb[0].mxu0
      %v1432 = vadd.f32 %v499, %v1431
      %v1433 = vpop.f32.mrb[0].mxu0
      %1434 = vmatprep.mubr.f32.mxu0 0.0
      %1435 = vmatmul.mubr.f32.gmra.mrb[0].mxu0 %v563
      %v1436 = vpop.f32.mrb[0].mxu0
      %v1437 = vadd.f32 %v499, %v1436
      %v1438 = vpop.f32.mrb[0].mxu0
      %1439 = vmatprep.mubr.f32.mxu0 0.0
      %1440 = vmatmul.mubr.f32.gmra.mrb[0].mxu0 %v566
      %v1441 = vpop.f32.mrb[0].mxu0
      %v1442 = vadd.f32 %v499, %v1441
      %v1443 = vpop.f32.mrb[0].mxu0
      %1444 = vmatprep.mubr.f32.mxu0 0.0
      %1445 = vmatmul.mubr.f32.gmra.mrb[0].mxu0 %v569
      %v1446 = vpop.f32.mrb[0].mxu0
      %v1447 = vadd.f32 %v499, %v1446
      %v1448 = vpop.f32.mrb[0].mxu0
      %1449 = vmatprep.mubr.f32.mxu0 0.0
      %1450 = vmatmul.mubr.f32.gmra.mrb[0].mxu0 %v572
      %v1451 = vpop.f32.mrb[0].mxu0
      %v1452 = vadd.f32 %v499, %v1451
      %v1453 = vpop.f32.mrb[0].mxu0
      %1454 = vmatprep.mubr.f32.mxu0 0.0
      %1455 = vmatmul.mubr.f32.gmra.mrb[0].mxu0 %v575
      %v1456 = vpop.f32.mrb[0].mxu0
      %v1457 = vadd.f32 %v499, %v1456
      %v1458 = vpop.f32.mrb[0].mxu0
      %1459 = vmatprep.mubr.f32.mxu0 0.0
      %1460 = vmatmul.mubr.f32.gmra.mrb[0].mxu0 %v578
      %v1461 = vpop.f32.mrb[0].mxu0
      %v1462 = vadd.f32 %v499, %v1461
      %v1463 = vpop.f32.mrb[0].mxu0
      %1464 = vmatprep.mubr.f32.mxu0 0.0
      %1465 = vmatmul.mubr.f32.gmra.mrb[0].mxu0 %v581
      %v1466 = vpop.f32.mrb[0].mxu0
      %v1467 = vadd.f32 %v499, %v1466
      %v1468 = vpop.f32.mrb[0].mxu0
      %1469 = vmatprep.mubr.f32.mxu0 0.0
      %1470 = vmatmul.mubr.f32.gmra.mrb[0].mxu0 %v584
      %v1471 = vpop.f32.mrb[0].mxu0
      %v1472 = vadd.f32 %v499, %v1471
      %v1473 = vpop.f32.mrb[0].mxu0
      %1474 = vmatprep.mubr.f32.mxu0 0.0
      %1475 = vmatmul.mubr.f32.gmra.mrb[0].mxu0 %v587
      %v1476 = vpop.f32.mrb[0].mxu0
      %v1477 = vadd.f32 %v499, %v1476
      %v1478 = vpop.f32.mrb[0].mxu0
      %1479 = vmatprep.mubr.f32.mxu0 0.0
      %1480 = vmatmul.mubr.f32.gmra.mrb[0].mxu0 %v590
      %v1481 = vpop.f32.mrb[0].mxu0
      %v1482 = vadd.f32 %v499, %v1481
      %v1483 = vpop.f32.mrb[0].mxu0
      %1484 = vmatprep.mubr.f32.mxu0 0.0
      %1485 = vmatmul.mubr.f32.gmra.mrb[0].mxu0 %v593
      %v1486 = vpop.f32.mrb[0].mxu0
      %v1487 = vadd.f32 %v499, %v1486
      %v1488 = vpop.f32.mrb[0].mxu0
      %1489 = vmatprep.mubr.f32.mxu0 0.0
      %1490 = vmatmul.mubr.f32.gmra.mrb[0].mxu0 %v596
      %v1491 = vpop.f32.mrb[0].mxu0
      %v1492 = vadd.f32 %v499, %v1491
      %v1493 = vpop.f32.mrb[0].mxu0
      %1494 = vmatprep.mubr.f32.mxu0 0.0
      %1495 = vmatmul.mubr.f32.gmra.mrb[0].mxu0 %v599
      %v1496 = vpop.f32.mrb[0].mxu0
      %v1497 = vadd.f32 %v499, %v1496
      %v1498 = vpop.f32.mrb[0].mxu0
      %1499 = vmatprep.mubr.f32.mxu0 0.0
      %1500 = vmatmul.mubr.f32.gmra.mrb[0].mxu0 %v602
      %v1501 = vpop.f32.mrb[0].mxu0
      %v1502 = vadd.f32 %v499, %v1501
      %v1503 = vpop.f32.mrb[0].mxu0
      %1504 = vmatprep.mubr.f32.mxu0 0.0
      %1505 = vmatmul.mubr.f32.gmra.mrb[0].mxu0 %v605
      %v1506 = vpop.f32.mrb[0].mxu0
      %v1507 = vadd.f32 %v499, %v1506
      %v1508 = vpop.f32.mrb[0].mxu0
      %1509 = vmatprep.mubr.f32.mxu0 0.0
      %1510 = vmatmul.mubr.f32.gmra.mrb[0].mxu0 %v608
      %v1511 = vpop.f32.mrb[0].mxu0
      %v1512 = vadd.f32 %v499, %v1511
      %v1513 = vpop.f32.mrb[0].mxu0
      %1514 = vmatprep.mubr.f32.mxu0 0.0
      %1515 = vmatmul.mubr.f32.gmra.mrb[0].mxu0 %v611
      %v1516 = vpop.f32.mrb[0].mxu0
      %v1517 = vadd.f32 %v499, %v1516
      %v1518 = vpop.f32.mrb[0].mxu0
      %1519 = vmatprep.mubr.f32.mxu0 0.0
      %1520 = vmatmul.mubr.f32.gmra.mrb[0].mxu0 %v614
      %v1521 = vpop.f32.mrb[0].mxu0
      %v1522 = vadd.f32 %v499, %v1521
      %v1523 = vpop.f32.mrb[0].mxu0
      %1524 = vmatprep.mubr.f32.mxu0 0.0
      %1525 = vmatmul.mubr.f32.gmra.mrb[0].mxu0 %v617
      %v1526 = vpop.f32.mrb[0].mxu0
      %v1527 = vadd.f32 %v499, %v1526
      %v1528 = vpop.f32.mrb[0].mxu0
      %1529 = vmatprep.mubr.f32.mxu0 0.0
      %1530 = vmatmul.mubr.f32.gmra.mrb[0].mxu0 %v620
      %v1531 = vpop.f32.mrb[0].mxu0
      %v1532 = vadd.f32 %v499, %v1531
      %v1533 = vpop.f32.mrb[0].mxu0
      %1534 = vmatprep.mubr.f32.mxu0 0.0
      %1535 = vmatmul.mubr.f32.gmra.mrb[0].mxu0 %v623
      %v1536 = vpop.f32.mrb[0].mxu0
      %v1537 = vadd.f32 %v499, %v1536
      %v1538 = vpop.f32.mrb[0].mxu0
      %1539 = vmatprep.mubr.f32.mxu0 0.0
      %1540 = vmatmul.mubr.f32.gmra.mrb[0].mxu0 %v626
      %v1541 = vpop.f32.mrb[0].mxu0
      %v1542 = vadd.f32 %v499, %v1541
      %v1543 = vpop.f32.mrb[0].mxu0
      %1544 = vmatprep.mubr.f32.mxu0 0.0
      %1545 = vmatmul.mubr.f32.gmra.mrb[0].mxu0 %v629
      %v1546 = vpop.f32.mrb[0].mxu0
      %v1547 = vadd.f32 %v499, %v1546
      %v1548 = vpop.f32.mrb[0].mxu0
      %1549 = vmatprep.mubr.f32.mxu0 0.0
      %1550 = vmatmul.mubr.f32.gmra.mrb[0].mxu0 %v632
      %v1551 = vpop.f32.mrb[0].mxu0
      %v1552 = vadd.f32 %v499, %v1551
      %v1553 = vpop.f32.mrb[0].mxu0
      %1554 = vmatprep.mubr.f32.mxu0 0.0
      %1555 = vmatmul.mubr.f32.gmra.mrb[0].mxu0 %v635
      %v1556 = vpop.f32.mrb[0].mxu0
      %v1557 = vadd.f32 %v499, %v1556
      %v1558 = vpop.f32.mrb[0].mxu0
      %1559 = vmatprep.mubr.f32.mxu0 0.0
      %1560 = vmatmul.mubr.f32.gmra.mrb[0].mxu0 %v638
      %v1561 = vpop.f32.mrb[0].mxu0
      %v1562 = vadd.f32 %v499, %v1561
      %v1563 = vpop.f32.mrb[0].mxu0
      %1564 = vmatprep.mubr.f32.mxu0 0.0
      %1565 = vmatmul.mubr.f32.gmra.mrb[0].mxu0 %v641
      %v1566 = vpop.f32.mrb[0].mxu0
      %v1567 = vadd.f32 %v499, %v1566
      %v1568 = vpop.f32.mrb[0].mxu0
      %1569 = vmatprep.mubr.f32.mxu0 0.0
      %1570 = vmatmul.mubr.f32.gmra.mrb[0].mxu0 %v644
      %v1571 = vpop.f32.mrb[0].mxu0
      %v1572 = vadd.f32 %v499, %v1571
      %v1573 = vpop.f32.mrb[0].mxu0
      %1574 = vmatprep.mubr.f32.mxu0 0.0
      %1575 = vmatmul.mubr.f32.gmra.mrb[0].mxu0 %v647
      %v1576 = vpop.f32.mrb[0].mxu0
      %v1577 = vadd.f32 %v499, %v1576
      %v1578 = vpop.f32.mrb[0].mxu0
      %1579 = vmatprep.mubr.f32.mxu0 0.0
      %1580 = vmatmul.mubr.f32.gmra.mrb[0].mxu0 %v650
      %v1581 = vpop.f32.mrb[0].mxu0
      %v1582 = vadd.f32 %v499, %v1581
      %v1583 = vpop.f32.mrb[0].mxu0
      %1584 = vmatprep.mubr.f32.mxu0 0.0
      %1585 = vmatmul.mubr.f32.gmra.mrb[0].mxu0 %v653
      %v1586 = vpop.f32.mrb[0].mxu0
      %v1587 = vadd.f32 %v499, %v1586
      %v1588 = vpop.f32.mrb[0].mxu0
      %1589 = vmatprep.mubr.f32.mxu0 0.0
      %1590 = vmatmul.mubr.f32.gmra.mrb[0].mxu0 %v656
      %v1591 = vpop.f32.mrb[0].mxu0
      %v1592 = vadd.f32 %v499, %v1591
      %v1593 = vpop.f32.mrb[0].mxu0
      %1594 = vmatprep.mubr.f32.mxu0 0.0
      %1595 = vmatmul.mubr.f32.gmra.mrb[0].mxu0 %v659
      %v1596 = vpop.f32.mrb[0].mxu0
      %v1597 = vadd.f32 %v499, %v1596
      %v1598 = vpop.f32.mrb[0].mxu0
      %1599 = vmatprep.mubr.f32.mxu0 0.0
      %1600 = vmatmul.mubr.f32.gmra.mrb[0].mxu0 %v662
      %v1601 = vpop.f32.mrb[0].mxu0
      %v1602 = vadd.f32 %v499, %v1601
      %v1603 = vpop.f32.mrb[0].mxu0
      %1604 = vmatprep.mubr.f32.mxu0 0.0
      %1605 = vmatmul.mubr.f32.gmra.mrb[0].mxu0 %v665
      %v1606 = vpop.f32.mrb[0].mxu0
      %v1607 = vadd.f32 %v499, %v1606
      %v1608 = vpop.f32.mrb[0].mxu0
      %1609 = vmatprep.mubr.f32.mxu0 0.0
      %1610 = vmatmul.mubr.f32.gmra.mrb[0].mxu0 %v668
      %v1611 = vpop.f32.mrb[0].mxu0
      %v1612 = vadd.f32 %v499, %v1611
      %v1613 = vpop.f32.mrb[0].mxu0
      %1614 = vmatprep.mubr.f32.mxu0 0.0
      %1615 = vmatmul.mubr.f32.gmra.mrb[0].mxu0 %v671
      %v1616 = vpop.f32.mrb[0].mxu0
      %v1617 = vadd.f32 %v499, %v1616
      %v1618 = vpop.f32.mrb[0].mxu0
      %1619 = vmatprep.mubr.f32.mxu0 0.0
      %1620 = vmatmul.mubr.f32.gmra.mrb[0].mxu0 %v674
      %v1621 = vpop.f32.mrb[0].mxu0
      %v1622 = vadd.f32 %v499, %v1621
      %v1623 = vpop.f32.mrb[0].mxu0
      %1624 = vmatprep.mubr.f32.mxu0 0.0
      %1625 = vmatmul.mubr.f32.gmra.mrb[0].mxu0 %v677
      %v1626 = vpop.f32.mrb[0].mxu0
      %v1627 = vadd.f32 %v499, %v1626
      %v1628 = vpop.f32.mrb[0].mxu0
      %1629 = vmatprep.mubr.f32.mxu0 0.0
      %1630 = vmatmul.mubr.f32.gmra.mrb[0].mxu0 %v680
      %v1631 = vpop.f32.mrb[0].mxu0
      %v1632 = vadd.f32 %v499, %v1631
      %v1633 = vpop.f32.mrb[0].mxu0
      %1634 = vmatprep.mubr.f32.mxu0 0.0
      %1635 = vmatmul.mubr.f32.gmra.mrb[0].mxu0 %v683
      %v1636 = vpop.f32.mrb[0].mxu0
      %v1637 = vadd.f32 %v499, %v1636
      %v1638 = vpop.f32.mrb[0].mxu0
      %1639 = vmatprep.mubr.f32.mxu0 0.0
      %1640 = vmatmul.mubr.f32.gmra.mrb[0].mxu0 %v686
      %v1641 = vpop.f32.mrb[0].mxu0
      %v1642 = vadd.f32 %v499, %v1641
      %v1643 = vpop.f32.mrb[0].mxu0
      %1644 = vmatprep.mubr.f32.mxu0 0.0
      %1645 = vmatmul.mubr.f32.gmra.mrb[0].mxu0 %v689
      %v1646 = vpop.f32.mrb[0].mxu0
      %v1647 = vadd.f32 %v499, %v1646
      %v1648 = vpop.f32.mrb[0].mxu0
      %1649 = vmatprep.mubr.f32.mxu0 0.0
      %1650 = vmatmul.mubr.f32.gmra.mrb[0].mxu0 %v692
      %v1651 = vpop.f32.mrb[0].mxu0
      %v1652 = vadd.f32 %v499, %v1651
      %v1653 = vpop.f32.mrb[0].mxu0
      %1654 = vmatprep.mubr.f32.mxu0 0.0
      %1655 = vmatmul.mubr.f32.gmra.mrb[0].mxu0 %v695
      %v1656 = vpop.f32.mrb[0].mxu0
      %v1657 = vadd.f32 %v499, %v1656
      %v1658 = vpop.f32.mrb[0].mxu0
      %1659 = vmatprep.mubr.f32.mxu0 0.0
      %1660 = vmatmul.mubr.f32.gmra.mrb[0].mxu0 %v698
      %v1661 = vpop.f32.mrb[0].mxu0
      %v1662 = vadd.f32 %v499, %v1661
      %v1663 = vpop.f32.mrb[0].mxu0
      %1664 = vmatprep.mubr.f32.mxu0 0.0
      %1665 = vmatmul.mubr.f32.gmra.mrb[0].mxu0 %v701
      %v1666 = vpop.f32.mrb[0].mxu0
      %v1667 = vadd.f32 %v499, %v1666
      %v1668 = vpop.f32.mrb[0].mxu0
      %1669 = vmatprep.mubr.f32.mxu0 0.0
      %1670 = vmatmul.mubr.f32.gmra.mrb[0].mxu0 %v704
      %v1671 = vpop.f32.mrb[0].mxu0
      %v1672 = vadd.f32 %v499, %v1671
      %v1673 = vpop.f32.mrb[0].mxu0
      %1674 = vmatprep.mubr.f32.mxu0 0.0
      %1675 = vmatmul.mubr.f32.gmra.mrb[0].mxu0 %v707
      %v1676 = vpop.f32.mrb[0].mxu0
      %v1677 = vadd.f32 %v499, %v1676
      %v1678 = vpop.f32.mrb[0].mxu0
      %1679 = vmatprep.mubr.f32.mxu0 0.0
      %1680 = vmatmul.mubr.f32.gmra.mrb[0].mxu0 %v710
      %v1681 = vpop.f32.mrb[0].mxu0
      %v1682 = vadd.f32 %v499, %v1681
      %v1683 = vpop.f32.mrb[0].mxu0
      %1684 = vmatprep.mubr.f32.mxu0 0.0
      %1685 = vmatmul.mubr.f32.gmra.mrb[0].mxu0 %v713
      %v1686 = vpop.f32.mrb[0].mxu0
      %v1687 = vadd.f32 %v499, %v1686
      %v1688 = vpop.f32.mrb[0].mxu0
      %1689 = vmatprep.mubr.f32.mxu0 0.0
      %1690 = vmatmul.mubr.f32.gmra.mrb[0].mxu0 %v716
      %v1691 = vpop.f32.mrb[0].mxu0
      %v1692 = vadd.f32 %v499, %v1691
      %v1693 = vpop.f32.mrb[0].mxu0
      %1694 = vmatprep.mubr.f32.mxu0 0.0
      %1695 = vmatmul.mubr.f32.gmra.mrb[0].mxu0 %v719
      %v1696 = vpop.f32.mrb[0].mxu0
      %v1697 = vadd.f32 %v499, %v1696
      %v1698 = vpop.f32.mrb[0].mxu0
      %1699 = vmatprep.mubr.f32.mxu0 0.0
      %1700 = vmatmul.mubr.f32.gmra.mrb[0].mxu0 %v722
      %v1701 = vpop.f32.mrb[0].mxu0
      %v1702 = vadd.f32 %v499, %v1701
      %v1703 = vpop.f32.mrb[0].mxu0
      %1704 = vmatprep.mubr.f32.mxu0 0.0
      %1705 = vmatmul.mubr.f32.gmra.mrb[0].mxu0 %v725
      %v1706 = vpop.f32.mrb[0].mxu0
      %v1707 = vadd.f32 %v499, %v1706
      %v1708 = vpop.f32.mrb[0].mxu0
      %1709 = vmatprep.mubr.f32.mxu0 0.0
      %1710 = vmatmul.mubr.f32.gmra.mrb[0].mxu0 %v728
      %v1711 = vpop.f32.mrb[0].mxu0
      %v1712 = vadd.f32 %v499, %v1711
      %v1713 = vpop.f32.mrb[0].mxu0
      %1714 = vmatprep.mubr.f32.mxu0 0.0
      %1715 = vmatmul.mubr.f32.gmra.mrb[0].mxu0 %v731
      %v1716 = vpop.f32.mrb[0].mxu0
      %v1717 = vadd.f32 %v499, %v1716
      %v1718 = vpop.f32.mrb[0].mxu0
      %1719 = vmatprep.mubr.f32.mxu0 0.0
      %1720 = vmatmul.mubr.f32.gmra.mrb[0].mxu0 %v734
      %v1721 = vpop.f32.mrb[0].mxu0
      %v1722 = vadd.f32 %v499, %v1721
      %v1723 = vpop.f32.mrb[0].mxu0
      %1724 = vmatprep.mubr.f32.mxu0 0.0
      %1725 = vmatmul.mubr.f32.gmra.mrb[0].mxu0 %v737
      %v1726 = vpop.f32.mrb[0].mxu0
      %v1727 = vadd.f32 %v499, %v1726
      %v1728 = vpop.f32.mrb[0].mxu0
      %1729 = vmatprep.mubr.f32.mxu0 0.0
      %1730 = vmatmul.mubr.f32.gmra.mrb[0].mxu0 %v740
      %v1731 = vpop.f32.mrb[0].mxu0
      %v1732 = vadd.f32 %v499, %v1731
      %v1733 = vpop.f32.mrb[0].mxu0
      %1734 = vmatprep.mubr.f32.mxu0 0.0
      %1735 = vmatmul.mubr.f32.gmra.mrb[0].mxu0 %v743
      %v1736 = vpop.f32.mrb[0].mxu0
      %v1737 = vadd.f32 %v499, %v1736
      %v1738 = vpop.f32.mrb[0].mxu0
      %1739 = vmatprep.mubr.f32.mxu0 0.0
      %1740 = vmatmul.mubr.f32.gmra.mrb[0].mxu0 %v746
      %v1741 = vpop.f32.mrb[0].mxu0
      %v1742 = vadd.f32 %v499, %v1741
      %v1743 = vpop.f32.mrb[0].mxu0
      %1744 = vmatprep.mubr.f32.mxu0 0.0
      %1745 = vmatmul.mubr.f32.gmra.mrb[0].mxu0 %v749
      %v1746 = vpop.f32.mrb[0].mxu0
      %v1747 = vadd.f32 %v499, %v1746
      %v1748 = vpop.f32.mrb[0].mxu0
      %1749 = vmatprep.mubr.f32.mxu0 0.0
      %1750 = vmatmul.mubr.f32.gmra.mrb[0].mxu0 %v752
      %v1751 = vpop.f32.mrb[0].mxu0
      %v1752 = vadd.f32 %v499, %v1751
      %v1753 = vpop.f32.mrb[0].mxu0
      %1754 = vmatprep.mubr.f32.mxu0 0.0
      %1755 = vmatmul.mubr.f32.gmra.mrb[0].mxu0 %v755
      %v1756 = vpop.f32.mrb[0].mxu0
      %v1757 = vadd.f32 %v499, %v1756
      %v1758 = vpop.f32.mrb[0].mxu0
      %1759 = vmatprep.mubr.f32.mxu0 0.0
      %1760 = vmatmul.mubr.f32.gmra.mrb[0].mxu0 %v758
      %v1761 = vpop.f32.mrb[0].mxu0
      %v1762 = vadd.f32 %v499, %v1761
      %v1763 = vpop.f32.mrb[0].mxu0
      %1764 = vmatprep.mubr.f32.mxu0 0.0
      %1765 = vmatmul.mubr.f32.gmra.mrb[0].mxu0 %v761
      %v1766 = vpop.f32.mrb[0].mxu0
      %v1767 = vadd.f32 %v499, %v1766
      %v1768 = vpop.f32.mrb[0].mxu0
      %1769 = vmatprep.mubr.f32.mxu0 0.0
      %1770 = vmatmul.mubr.f32.gmra.mrb[0].mxu0 %v764
      %v1771 = vpop.f32.mrb[0].mxu0
      %v1772 = vadd.f32 %v499, %v1771
      %v1773 = vpop.f32.mrb[0].mxu0
      %1774 = vmatprep.mubr.f32.mxu0 0.0
      %1775 = vmatmul.mubr.f32.gmra.mrb[0].mxu0 %v767
      %v1776 = vpop.f32.mrb[0].mxu0
      %v1777 = vadd.f32 %v499, %v1776
      %v1778 = vpop.f32.mrb[0].mxu0
      %1779 = vmatprep.mubr.f32.mxu0 0.0
      %1780 = vmatmul.mubr.f32.gmra.mrb[0].mxu0 %v770
      %v1781 = vpop.f32.mrb[0].mxu0
      %v1782 = vadd.f32 %v499, %v1781
      %v1783 = vpop.f32.mrb[0].mxu0
      %1784 = vmatprep.mubr.f32.mxu0 0.0
      %1785 = vmatmul.mubr.f32.gmra.mrb[0].mxu0 %v773
      %v1786 = vpop.f32.mrb[0].mxu0
      %v1787 = vadd.f32 %v499, %v1786
      %v1788 = vpop.f32.mrb[0].mxu0
      %1789 = vmatprep.mubr.f32.mxu0 0.0
      %1790 = vmatmul.mubr.f32.gmra.mrb[0].mxu0 %v776
      %v1791 = vpop.f32.mrb[0].mxu0
      %v1792 = vadd.f32 %v499, %v1791
      %v1793 = vpop.f32.mrb[0].mxu0
      %1794 = vmatprep.mubr.f32.mxu0 0.0
      %1795 = vmatmul.mubr.f32.gmra.mrb[0].mxu0 %v779
      %v1796 = vpop.f32.mrb[0].mxu0
      %v1797 = vadd.f32 %v499, %v1796
      %v1798 = vpop.f32.mrb[0].mxu0
      %1799 = vmatprep.mubr.f32.mxu0 0.0
      %1800 = vmatmul.mubr.f32.gmra.mrb[0].mxu0 %v782
      %v1801 = vpop.f32.mrb[0].mxu0
      %v1802 = vadd.f32 %v499, %v1801
      %v1803 = vpop.f32.mrb[0].mxu0
      %1804 = vmatprep.mubr.f32.mxu0 0.0
      %1805 = vmatmul.mubr.f32.gmra.mrb[0].mxu0 %v785
      %v1806 = vpop.f32.mrb[0].mxu0
      %v1807 = vadd.f32 %v499, %v1806
      %v1808 = vpop.f32.mrb[0].mxu0
      %1809 = vmatprep.mubr.f32.mxu0 0.0
      %1810 = vmatmul.mubr.f32.gmra.mrb[0].mxu0 %v788
      %v1811 = vpop.f32.mrb[0].mxu0
      %v1812 = vadd.f32 %v499, %v1811
      %v1813 = vpop.f32.mrb[0].mxu0
      %1814 = vmatprep.mubr.f32.mxu0 0.0
      %1815 = vmatmul.mubr.f32.gmra.mrb[0].mxu0 %v791
      %v1816 = vpop.f32.mrb[0].mxu0
      %v1817 = vadd.f32 %v499, %v1816
      %v1818 = vpop.f32.mrb[0].mxu0
      %1819 = vmatprep.mubr.f32.mxu0 0.0
      %1820 = vmatmul.mubr.f32.gmra.mrb[0].mxu0 %v794
      %v1821 = vpop.f32.mrb[0].mxu0
      %v1822 = vadd.f32 %v499, %v1821
      %v1823 = vpop.f32.mrb[0].mxu0
      %1824 = vmatprep.mubr.f32.mxu0 0.0
      %1825 = vmatmul.mubr.f32.gmra.mrb[0].mxu0 %v797
      %v1826 = vpop.f32.mrb[0].mxu0
      %v1827 = vadd.f32 %v499, %v1826
      %v1828 = vpop.f32.mrb[0].mxu0
      %1829 = vmatprep.mubr.f32.mxu0 0.0
      %1830 = vmatmul.mubr.f32.gmra.mrb[0].mxu0 %v800
      %v1831 = vpop.f32.mrb[0].mxu0
      %v1832 = vadd.f32 %v499, %v1831
      %v1833 = vpop.f32.mrb[0].mxu0
      %1834 = vmatprep.mubr.f32.mxu0 0.0
      %1835 = vmatmul.mubr.f32.gmra.mrb[0].mxu0 %v803
      %v1836 = vpop.f32.mrb[0].mxu0
      %v1837 = vadd.f32 %v499, %v1836
      %v1838 = vpop.f32.mrb[0].mxu0
      %1839 = vmatprep.mubr.f32.mxu0 0.0
      %1840 = vmatmul.mubr.f32.gmra.mrb[0].mxu0 %v806
      %v1841 = vpop.f32.mrb[0].mxu0
      %v1842 = vadd.f32 %v499, %v1841
      %v1843 = vpop.f32.mrb[0].mxu0
      %1844 = vmatprep.mubr.f32.mxu0 0.0
      %1845 = vmatmul.mubr.f32.gmra.mrb[0].mxu0 %v809
      %v1846 = vpop.f32.mrb[0].mxu0
      %v1847 = vadd.f32 %v499, %v1846
      %v1848 = vpop.f32.mrb[0].mxu0
      %1849 = vmatprep.mubr.f32.mxu0 0.0
      %1850 = vmatmul.mubr.f32.gmra.mrb[0].mxu0 %v812
      %v1851 = vpop.f32.mrb[0].mxu0
      %v1852 = vadd.f32 %v499, %v1851
      %v1853 = vpop.f32.mrb[0].mxu0
      %1854 = vmatprep.mubr.f32.mxu0 0.0
      %1855 = vmatmul.mubr.f32.gmra.mrb[0].mxu0 %v815
      %v1856 = vpop.f32.mrb[0].mxu0
      %v1857 = vadd.f32 %v499, %v1856
      %v1858 = vpop.f32.mrb[0].mxu0
      %1859 = vmatprep.mubr.f32.mxu0 0.0
      %1860 = vmatmul.mubr.f32.gmra.mrb[0].mxu0 %v818
      %v1861 = vpop.f32.mrb[0].mxu0
      %v1862 = vadd.f32 %v499, %v1861
      %v1863 = vpop.f32.mrb[0].mxu0
      %1864 = vmatprep.mubr.f32.mxu0 0.0
      %1865 = vmatmul.mubr.f32.gmra.mrb[0].mxu0 %v821
      %v1866 = vpop.f32.mrb[0].mxu0
      %v1867 = vadd.f32 %v499, %v1866
      %v1868 = vpop.f32.mrb[0].mxu0
      %1869 = vmatprep.mubr.f32.mxu0 0.0
      %1870 = vmatmul.mubr.f32.gmra.mrb[0].mxu0 %v824
      %v1871 = vpop.f32.mrb[0].mxu0
      %v1872 = vadd.f32 %v499, %v1871
      %v1873 = vpop.f32.mrb[0].mxu0
      %1874 = vmatprep.mubr.f32.mxu0 0.0
      %1875 = vmatmul.mubr.f32.gmra.mrb[0].mxu0 %v827
      %v1876 = vpop.f32.mrb[0].mxu0
      %v1877 = vadd.f32 %v499, %v1876
      %v1878 = vpop.f32.mrb[0].mxu0
      %1879 = vmatprep.mubr.f32.mxu0 0.0
      %1880 = vmatmul.mubr.f32.gmra.mrb[0].mxu0 %v830
      %v1881 = vpop.f32.mrb[0].mxu0
      %v1882 = vadd.f32 %v499, %v1881
      %v1883 = vpop.f32.mrb[0].mxu0
      %1884 = vmatprep.mubr.f32.mxu0 0.0
      %1885 = vmatmul.mubr.f32.gmra.mrb[0].mxu0 %v833
      %v1886 = vpop.f32.mrb[0].mxu0
      %v1887 = vadd.f32 %v499, %v1886
      %v1888 = vpop.f32.mrb[0].mxu0
      %1889 = vmatprep.mubr.f32.mxu0 0.0
      %1890 = vmatmul.mubr.f32.gmra.mrb[0].mxu0 %v836
      %v1891 = vpop.f32.mrb[0].mxu0
      %v1892 = vadd.f32 %v499, %v1891
      %v1893 = vpop.f32.mrb[0].mxu0
      %1894 = vmatprep.mubr.f32.mxu0 0.0
      %1895 = vmatmul.mubr.f32.gmra.mrb[0].mxu0 %v839
      %v1896 = vpop.f32.mrb[0].mxu0
      %v1897 = vadd.f32 %v499, %v1896
      %v1898 = vpop.f32.mrb[0].mxu0
      %1899 = vmatprep.mubr.f32.mxu0 0.0
      %1900 = vmatmul.mubr.f32.gmra.mrb[0].mxu0 %v842
      %v1901 = vpop.f32.mrb[0].mxu0
      %v1902 = vadd.f32 %v499, %v1901
      %v1903 = vpop.f32.mrb[0].mxu0
      %1904 = vmatprep.mubr.f32.mxu0 0.0
      %1905 = vmatmul.mubr.f32.gmra.mrb[0].mxu0 %v845
      %v1906 = vpop.f32.mrb[0].mxu0
      %v1907 = vadd.f32 %v499, %v1906
      %v1908 = vpop.f32.mrb[0].mxu0
      %1909 = vmatprep.mubr.f32.mxu0 0.0
      %1910 = vmatmul.mubr.f32.gmra.mrb[0].mxu0 %v848
      %v1911 = vpop.f32.mrb[0].mxu0
      %v1912 = vadd.f32 %v499, %v1911
      %v1913 = vpop.f32.mrb[0].mxu0
      %1914 = vmatprep.mubr.f32.mxu0 0.0
      %1915 = vmatmul.mubr.f32.gmra.mrb[0].mxu0 %v851
      %v1916 = vpop.f32.mrb[0].mxu0
      %v1917 = vadd.f32 %v499, %v1916
      %v1918 = vpop.f32.mrb[0].mxu0
      %1919 = vmatprep.mubr.f32.mxu0 0.0
      %1920 = vmatmul.mubr.f32.gmra.mrb[0].mxu0 %v854
      %v1921 = vpop.f32.mrb[0].mxu0
      %v1922 = vadd.f32 %v499, %v1921
      %v1923 = vpop.f32.mrb[0].mxu0
      %1924 = vmatprep.mubr.f32.mxu0 0.0
      %1925 = vmatmul.mubr.f32.gmra.mrb[0].mxu0 %v857
      %v1926 = vpop.f32.mrb[0].mxu0
      %v1927 = vadd.f32 %v499, %v1926
      %v1928 = vpop.f32.mrb[0].mxu0
      %1929 = vmatprep.mubr.f32.mxu0 0.0
      %1930 = vmatmul.mubr.f32.gmra.mrb[0].mxu0 %v860
      %v1931 = vpop.f32.mrb[0].mxu0
      %v1932 = vadd.f32 %v499, %v1931
      %v1933 = vpop.f32.mrb[0].mxu0
      %1934 = vmatprep.mubr.f32.mxu0 0.0
      %1935 = vmatmul.mubr.f32.gmra.mrb[0].mxu0 %v863
      %v1936 = vpop.f32.mrb[0].mxu0
      %v1937 = vadd.f32 %v499, %v1936
      %v1938 = vpop.f32.mrb[0].mxu0
      %1939 = vmatprep.mubr.f32.mxu0 0.0
      %1940 = vmatmul.mubr.f32.gmra.mrb[0].mxu0 %v866
      %v1941 = vpop.f32.mrb[0].mxu0
      %v1942 = vadd.f32 %v499, %v1941
      %v1943 = vpop.f32.mrb[0].mxu0
      %1944 = vmatprep.mubr.f32.mxu0 0.0
      %1945 = vmatmul.mubr.f32.gmra.mrb[0].mxu0 %v869
      %v1946 = vpop.f32.mrb[0].mxu0
      %v1947 = vadd.f32 %v499, %v1946
      %v1948 = vpop.f32.mrb[0].mxu0
      %1949 = vmatprep.mubr.f32.mxu0 0.0
      %1950 = vmatmul.mubr.f32.gmra.mrb[0].mxu0 %v872
      %v1951 = vpop.f32.mrb[0].mxu0
      %v1952 = vadd.f32 %v499, %v1951
      %v1953 = vpop.f32.mrb[0].mxu0
      %1954 = vmatprep.mubr.f32.mxu0 0.0
      %1955 = vmatmul.mubr.f32.gmra.mrb[0].mxu0 %v875
      %v1956 = vpop.f32.mrb[0].mxu0
      %v1957 = vadd.f32 %v499, %v1956
      %v1958 = vpop.f32.mrb[0].mxu0
      %1959 = vmatprep.mubr.f32.mxu0 0.0
      %1960 = vmatmul.mubr.f32.gmra.mrb[0].mxu0 %v878
      %v1961 = vpop.f32.mrb[0].mxu0
      %v1962 = vadd.f32 %v499, %v1961
      %v1963 = vpop.f32.mrb[0].mxu0
      %1964 = vmatprep.mubr.f32.mxu0 0.0
      %1965 = vmatmul.mubr.f32.gmra.mrb[0].mxu0 %v881
      %v1966 = vpop.f32.mrb[0].mxu0
      %v1967 = vadd.f32 %v499, %v1966
      %v1968 = vpop.f32.mrb[0].mxu0
      %1969 = vmatprep.mubr.f32.mxu0 0.0
      %1970 = vmatmul.mubr.f32.gmra.mrb[0].mxu0 %v884
      %v1971 = vpop.f32.mrb[0].mxu0
      %v1972 = vadd.f32 %v499, %v1971
      %v1973 = vpop.f32.mrb[0].mxu0
      %1974 = vmatprep.mubr.f32.mxu0 0.0
      %1975 = vmatmul.mubr.f32.gmra.mrb[0].mxu0 %v887
      %v1976 = vpop.f32.mrb[0].mxu0
      %v1977 = vadd.f32 %v499, %v1976
      %v1978 = vpop.f32.mrb[0].mxu0
      %1979 = vmatprep.mubr.f32.mxu0 0.0
      %1980 = vmatmul.mubr.f32.gmra.mrb[0].mxu0 %v890
      %v1981 = vpop.f32.mrb[0].mxu0
      %v1982 = vadd.f32 %v499, %v1981
      %v1983 = vpop.f32.mrb[0].mxu0
      %1984 = vmatprep.mubr.f32.mxu0 0.0
      %1985 = vmatmul.mubr.f32.gmra.mrb[0].mxu0 %v893
      %v1986 = vpop.f32.mrb[0].mxu0
      %v1987 = vadd.f32 %v499, %v1986
      %v1988 = vpop.f32.mrb[0].mxu0
      %1989 = vmatprep.mubr.f32.mxu0 0.0
      %1990 = vmatmul.mubr.f32.gmra.mrb[0].mxu0 %v896
      %v1991 = vpop.f32.mrb[0].mxu0
      %v1992 = vadd.f32 %v499, %v1991
      %v1993 = vpop.f32.mrb[0].mxu0
      %1994 = vmatprep.mubr.f32.mxu0 0.0
      %1995 = vmatmul.mubr.f32.gmra.mrb[0].mxu0 %v899
      %v1996 = vpop.f32.mrb[0].mxu0
      %v1997 = vadd.f32 %v499, %v1996
      %v1998 = vpop.f32.mrb[0].mxu0
      %1999 = vmatprep.mubr.f32.mxu0 0.0
      %2000 = vmatmul.mubr.f32.gmra.mrb[0].mxu0 %v902
      %v2001 = vpop.f32.mrb[0].mxu0
      %v2002 = vadd.f32 %v499, %v2001
      %v2003 = vpop.f32.mrb[0].mxu0
      %2004 = vmatprep.mubr.f32.mxu0 0.0
      %2005 = vmatmul.mubr.f32.gmra.mrb[0].mxu0 %v905
      %v2006 = vpop.f32.mrb[0].mxu0
      %v2007 = vadd.f32 %v499, %v2006
      %v2008 = vpop.f32.mrb[0].mxu0
      %2009 = vmatprep.mubr.f32.mxu0 0.0
      %2010 = vmatmul.mubr.f32.gmra.mrb[0].mxu0 %v908
      %v2011 = vpop.f32.mrb[0].mxu0
      %v2012 = vadd.f32 %v499, %v2011
      %v2013 = vpop.f32.mrb[0].mxu0
      %2014 = vmatprep.mubr.f32.mxu0 0.0
      %2015 = vmatmul.mubr.f32.gmra.mrb[0].mxu0 %v911
      %v2016 = vpop.f32.mrb[0].mxu0
      %v2017 = vadd.f32 %v499, %v2016
      %v2018 = vpop.f32.mrb[0].mxu0
      %2019 = vmatprep.mubr.f32.mxu0 0.0
      %2020 = vmatmul.mubr.f32.gmra.mrb[0].mxu0 %v914
      %v2021 = vpop.f32.mrb[0].mxu0
      %v2022 = vadd.f32 %v499, %v2021
      %v2023 = vpop.f32.mrb[0].mxu0
      %2024 = vmatprep.mubr.f32.mxu0 0.0
      %2025 = vmatmul.mubr.f32.gmra.mrb[0].mxu0 %v917
      %v2026 = vpop.f32.mrb[0].mxu0
      %v2027 = vadd.f32 %v499, %v2026
      %v2028 = vpop.f32.mrb[0].mxu0
      %2029 = vmatprep.mubr.f32.mxu0 0.0
      %2030 = vmatmul.mubr.f32.gmra.mrb[0].mxu0 %v920
      %v2031 = vpop.f32.mrb[0].mxu0
      %v2032 = vadd.f32 %v499, %v2031
      %v2033 = vpop.f32.mrb[0].mxu0
      %2034 = vmatprep.mubr.f32.mxu0 0.0
      %2035 = vmatmul.mubr.f32.gmra.mrb[0].mxu0 %v923
      %v2036 = vpop.f32.mrb[0].mxu0
      %v2037 = vadd.f32 %v499, %v2036
      %v2038 = vpop.f32.mrb[0].mxu0
      %2039 = vmatprep.mubr.f32.mxu0 0.0
      %2040 = vmatmul.mubr.f32.gmra.mrb[0].mxu0 %v926
      %v2041 = vpop.f32.mrb[0].mxu0
      %v2042 = vadd.f32 %v499, %v2041
      %v2043 = vpop.f32.mrb[0].mxu0
      %2044 = vmatprep.mubr.f32.mxu0 0.0
      %2045 = vmatmul.mubr.f32.gmra.mrb[0].mxu0 %v929
      %v2046 = vpop.f32.mrb[0].mxu0
      %v2047 = vadd.f32 %v499, %v2046
      %v2048 = vpop.f32.mrb[0].mxu0
      %2049 = vmatprep.mubr.f32.mxu0 0.0
      %2050 = vmatmul.mubr.f32.gmra.mrb[0].mxu0 %v932
      %v2051 = vpop.f32.mrb[0].mxu0
      %v2052 = vadd.f32 %v499, %v2051
      %v2053 = vpop.f32.mrb[0].mxu0
      %2054 = vmatprep.mubr.f32.mxu0 0.0
      %2055 = vmatmul.mubr.f32.gmra.mrb[0].mxu0 %v935
      %v2056 = vpop.f32.mrb[0].mxu0
      %v2057 = vadd.f32 %v499, %v2056
      %v2058 = vpop.f32.mrb[0].mxu0
      %2059 = vmatprep.mubr.f32.mxu0 0.0
      %2060 = vmatmul.mubr.f32.gmra.mrb[0].mxu0 %v938
      %v2061 = vpop.f32.mrb[0].mxu0
      %v2062 = vadd.f32 %v499, %v2061
      %v2063 = vpop.f32.mrb[0].mxu0
      %2064 = vmatprep.mubr.f32.mxu0 0.0
      %2065 = vmatmul.mubr.f32.gmra.mrb[0].mxu0 %v941
      %v2066 = vpop.f32.mrb[0].mxu0
      %v2067 = vadd.f32 %v499, %v2066
      %v2068 = vpop.f32.mrb[0].mxu0
      %2069 = vmatprep.mubr.f32.mxu0 0.0
      %2070 = vmatmul.mubr.f32.gmra.mrb[0].mxu0 %v944
      %v2071 = vpop.f32.mrb[0].mxu0
      %v2072 = vadd.f32 %v499, %v2071
      %v2073 = vpop.f32.mrb[0].mxu0
      %2074 = vmatprep.mubr.f32.mxu0 0.0
      %2075 = vmatmul.mubr.f32.gmra.mrb[0].mxu0 %v947
      %v2076 = vpop.f32.mrb[0].mxu0
      %v2077 = vadd.f32 %v499, %v2076
      %v2078 = vpop.f32.mrb[0].mxu0
      %2079 = vmatprep.mubr.f32.mxu0 0.0
      %2080 = vmatmul.mubr.f32.gmra.mrb[0].mxu0 %v950
      %v2081 = vpop.f32.mrb[0].mxu0
      %v2082 = vadd.f32 %v499, %v2081
      %v2083 = vpop.f32.mrb[0].mxu0
      %2084 = vmatprep.mubr.f32.mxu0 0.0
      %2085 = vmatmul.mubr.f32.gmra.mrb[0].mxu0 %v953
      %v2086 = vpop.f32.mrb[0].mxu0
      %v2087 = vadd.f32 %v499, %v2086
      %v2088 = vpop.f32.mrb[0].mxu0
      %2089 = vmatprep.mubr.f32.mxu0 0.0
      %2090 = vmatmul.mubr.f32.gmra.mrb[0].mxu0 %v956
      %v2091 = vpop.f32.mrb[0].mxu0
      %v2092 = vadd.f32 %v499, %v2091
      %v2093 = vpop.f32.mrb[0].mxu0
      %2094 = vmatprep.mubr.f32.mxu0 0.0
      %2095 = vmatmul.mubr.f32.gmra.mrb[0].mxu0 %v959
      %v2096 = vpop.f32.mrb[0].mxu0
      %v2097 = vadd.f32 %v499, %v2096
      %v2098 = vpop.f32.mrb[0].mxu0
      %2099 = vmatprep.mubr.f32.mxu0 0.0
      %2100 = vmatmul.mubr.f32.gmra.mrb[0].mxu0 %v962
      %v2101 = vpop.f32.mrb[0].mxu0
      %v2102 = vadd.f32 %v499, %v2101
      %v2103 = vpop.f32.mrb[0].mxu0
      %2104 = vmatprep.mubr.f32.mxu0 0.0
      %2105 = vmatmul.mubr.f32.gmra.mrb[0].mxu0 %v965
      %v2106 = vpop.f32.mrb[0].mxu0
      %v2107 = vadd.f32 %v499, %v2106
      %v2108 = vpop.f32.mrb[0].mxu0
      %2109 = vmatprep.mubr.f32.mxu0 0.0
      %2110 = vmatmul.mubr.f32.gmra.mrb[0].mxu0 %v968
      %v2111 = vpop.f32.mrb[0].mxu0
      %v2112 = vadd.f32 %v499, %v2111
      %v2113 = vpop.f32.mrb[0].mxu0
      %2114 = vmatprep.mubr.f32.mxu0 0.0
      %2115 = vmatmul.mubr.f32.gmra.mrb[0].mxu0 %v971
      %v2116 = vpop.f32.mrb[0].mxu0
      %v2117 = vadd.f32 %v499, %v2116
      %v2118 = vpop.f32.mrb[0].mxu0
      %2119 = vmatprep.mubr.f32.mxu0 0.0
      %2120 = vmatmul.mubr.f32.gmra.mrb[0].mxu0 %v974
      %v2121 = vpop.f32.mrb[0].mxu0
      %v2122 = vadd.f32 %v499, %v2121
      %v2123 = vpop.f32.mrb[0].mxu0
      %2124 = vmatprep.mubr.f32.mxu0 0.0
      %2125 = vmatmul.mubr.f32.gmra.mrb[0].mxu0 %v977
      %v2126 = vpop.f32.mrb[0].mxu0
      %v2127 = vadd.f32 %v499, %v2126
      %v2128 = vpop.f32.mrb[0].mxu0
      %2129 = vmatprep.mubr.f32.mxu0 0.0
      %2130 = vmatmul.mubr.f32.gmra.mrb[0].mxu0 %v980
      %v2131 = vpop.f32.mrb[0].mxu0
      %v2132 = vadd.f32 %v499, %v2131
      %v2133 = vpop.f32.mrb[0].mxu0
      %2134 = vmatprep.mubr.f32.mxu0 0.0
      %2135 = vmatmul.mubr.f32.gmra.mrb[0].mxu0 %v983
      %v2136 = vpop.f32.mrb[0].mxu0
      %v2137 = vadd.f32 %v499, %v2136
      %v2138 = vpop.f32.mrb[0].mxu0
      %2139 = vmatprep.mubr.f32.mxu0 0.0
      %2140 = vmatmul.mubr.f32.gmra.mrb[0].mxu0 %v986
      %v2141 = vpop.f32.mrb[0].mxu0
      %v2142 = vadd.f32 %v499, %v2141
      %v2143 = vpop.f32.mrb[0].mxu0
      %2144 = vmatprep.mubr.f32.mxu0 0.0
      %2145 = vmatmul.mubr.f32.gmra.mrb[0].mxu0 %v989
      %v2146 = vpop.f32.mrb[0].mxu0
      %v2147 = vadd.f32 %v499, %v2146
      %v2148 = vpop.f32.mrb[0].mxu0
      %2149 = vmatprep.mubr.f32.mxu0 0.0
      %2150 = vmatmul.mubr.f32.gmra.mrb[0].mxu0 %v992
      %v2151 = vpop.f32.mrb[0].mxu0
      %v2152 = vadd.f32 %v499, %v2151
      %v2153 = vpop.f32.mrb[0].mxu0
      %2154 = vmatprep.mubr.f32.mxu0 0.0
      %2155 = vmatmul.mubr.f32.gmra.mrb[0].mxu0 %v995
      %v2156 = vpop.f32.mrb[0].mxu0
      %v2157 = vadd.f32 %v499, %v2156
      %v2158 = vpop.f32.mrb[0].mxu0
      %2159 = vmatprep.mubr.f32.mxu0 0.0
      %2160 = vmatmul.mubr.f32.gmra.mrb[0].mxu0 %v998
      %v2161 = vpop.f32.mrb[0].mxu0
      %v2162 = vadd.f32 %v499, %v2161
      %v2163 = vpop.f32.mrb[0].mxu0
      %2164 = vmatprep.mubr.f32.mxu0 0.0
      %2165 = vmatmul.mubr.f32.gmra.mrb[0].mxu0 %v1001
      %v2166 = vpop.f32.mrb[0].mxu0
      %v2167 = vadd.f32 %v499, %v2166
      %v2168 = vpop.f32.mrb[0].mxu0
      %2169 = vmatprep.mubr.f32.mxu0 0.0
      %2170 = vmatmul.mubr.f32.gmra.mrb[0].mxu0 %v1004
      %v2171 = vpop.f32.mrb[0].mxu0
      %v2172 = vadd.f32 %v499, %v2171
      %v2173 = vpop.f32.mrb[0].mxu0
      %2174 = vmatprep.mubr.f32.mxu0 0.0
      %2175 = vmatmul.mubr.f32.gmra.mrb[0].mxu0 %v1007
      %v2176 = vpop.f32.mrb[0].mxu0
      %v2177 = vadd.f32 %v499, %v2176
      %v2178 = vpop.f32.mrb[0].mxu0
      %2179 = vmatprep.mubr.f32.mxu0 0.0
      %2180 = vmatmul.mubr.f32.gmra.mrb[0].mxu0 %v1010
      %v2181 = vpop.f32.mrb[0].mxu0
      %v2182 = vadd.f32 %v499, %v2181
      %v2183 = vpop.f32.mrb[0].mxu0
      %2184 = vmatprep.mubr.f32.mxu0 0.0
      %2185 = vmatmul.mubr.f32.gmra.mrb[0].mxu0 %v1013
      %v2186 = vpop.f32.mrb[0].mxu0
      %v2187 = vadd.f32 %v499, %v2186
      %v2188 = vpop.f32.mrb[0].mxu0
      %2189 = vmatprep.mubr.f32.mxu0 0.0
      %2190 = vmatmul.mubr.f32.gmra.mrb[0].mxu0 %v1016
      %v2191 = vpop.f32.mrb[0].mxu0
      %v2192 = vadd.f32 %v499, %v2191
      %v2193 = vpop.f32.mrb[0].mxu0
      %2194 = vmatprep.mubr.f32.mxu0 0.0
      %2195 = vmatmul.mubr.f32.gmra.mrb[0].mxu0 %v1019
      %v2196 = vpop.f32.mrb[0].mxu0
      %v2197 = vadd.f32 %v499, %v2196
      %v2198 = vpop.f32.mrb[0].mxu0
      %2199 = vmatprep.mubr.f32.mxu0 0.0
      %2200 = vmatmul.mubr.f32.gmra.mrb[0].mxu0 %v1022
      %v2201 = vpop.f32.mrb[0].mxu0
      %v2202 = vadd.f32 %v499, %v2201
      %v2203 = vpop.f32.mrb[0].mxu0
      %2204 = vmatprep.mubr.f32.mxu0 0.0
      %2205 = vmatmul.mubr.f32.gmra.mrb[0].mxu0 %v1025
      %v2206 = vpop.f32.mrb[0].mxu0
      %v2207 = vadd.f32 %v499, %v2206
      %v2208 = vpop.f32.mrb[0].mxu0
      %2209 = vmatprep.mubr.f32.mxu0 0.0
      %2210 = vmatmul.mubr.f32.gmra.mrb[0].mxu0 %v1028
      %v2211 = vpop.f32.mrb[0].mxu0
      %v2212 = vadd.f32 %v499, %v2211
      %v2213 = vpop.f32.mrb[0].mxu0
      %2214 = vmatprep.mubr.f32.mxu0 0.0
      %2215 = vmatmul.mubr.f32.gmra.mrb[0].mxu0 %v1031
      %v2216 = vpop.f32.mrb[0].mxu0
      %v2217 = vadd.f32 %v499, %v2216
      %v2218 = vpop.f32.mrb[0].mxu0
      %2219 = vmatprep.mubr.f32.mxu0 0.0
      %2220 = vmatmul.mubr.f32.gmra.mrb[0].mxu0 %v1034
      %v2221 = vpop.f32.mrb[0].mxu0
      %v2222 = vadd.f32 %v499, %v2221
      %v2223 = vpop.f32.mrb[0].mxu0
      %2224 = vmatprep.mubr.f32.mxu0 0.0
      %2225 = vmatmul.mubr.f32.gmra.mrb[0].mxu0 %v1037
      %v2226 = vpop.f32.mrb[0].mxu0
      %v2227 = vadd.f32 %v499, %v2226
      %v2228 = vpop.f32.mrb[0].mxu0
      %2229 = vmatprep.mubr.f32.mxu0 0.0
      %2230 = vmatmul.mubr.f32.gmra.mrb[0].mxu0 %v1040
      %v2231 = vpop.f32.mrb[0].mxu0
      %v2232 = vadd.f32 %v499, %v2231
      %v2233 = vpop.f32.mrb[0].mxu0
      %2234 = vmatprep.mubr.f32.mxu0 0.0
      %2235 = vmatmul.mubr.f32.gmra.mrb[0].mxu0 %v1043
      %v2236 = vpop.f32.mrb[0].mxu0
      %v2237 = vadd.f32 %v499, %v2236
      %v2238 = vpop.f32.mrb[0].mxu0
      %2239 = vmatprep.mubr.f32.mxu0 0.0
      %2240 = vmatmul.mubr.f32.gmra.mrb[0].mxu0 %v1046
      %v2241 = vpop.f32.mrb[0].mxu0
      %v2242 = vadd.f32 %v499, %v2241
      %v2243 = vpop.f32.mrb[0].mxu0
      %2244 = vmatprep.mubr.f32.mxu0 0.0
      %2245 = vmatmul.mubr.f32.gmra.mrb[0].mxu0 %v1049
      %v2246 = vpop.f32.mrb[0].mxu0
      %v2247 = vadd.f32 %v499, %v2246
      %v2248 = vpop.f32.mrb[0].mxu0
      %2249 = vmatprep.mubr.f32.mxu0 0.0
      %2250 = vmatmul.mubr.f32.gmra.mrb[0].mxu0 %v1052
      %v2251 = vpop.f32.mrb[0].mxu0
      %v2252 = vadd.f32 %v499, %v2251
      %v2253 = vpop.f32.mrb[0].mxu0
      %2254 = vmatprep.mubr.f32.mxu0 0.0
      %2255 = vmatmul.mubr.f32.gmra.mrb[0].mxu0 %v1055
      %v2256 = vpop.f32.mrb[0].mxu0
      %v2257 = vadd.f32 %v499, %v2256
      %v2258 = vpop.f32.mrb[0].mxu0
      %2259 = vmatprep.mubr.f32.mxu0 0.0
      %2260 = vmatmul.mubr.f32.gmra.mrb[0].mxu0 %v1058
      %v2261 = vpop.f32.mrb[0].mxu0
      %v2262 = vadd.f32 %v499, %v2261
      %v2263 = vpop.f32.mrb[0].mxu0
      %2264 = vmatprep.mubr.f32.mxu0 0.0
      %2265 = vmatmul.mubr.f32.gmra.mrb[0].mxu0 %v1061
      %v2266 = vpop.f32.mrb[0].mxu0
      %v2267 = vadd.f32 %v499, %v2266
      %v2268 = vpop.f32.mrb[0].mxu0
      %2269 = vmatprep.mubr.f32.mxu0 0.0
      %2270 = vmatmul.mubr.f32.gmra.mrb[0].mxu0 %v1064
      %v2271 = vpop.f32.mrb[0].mxu0
      %v2272 = vadd.f32 %v499, %v2271
      %v2273 = vpop.f32.mrb[0].mxu0
      %2274 = vmatprep.mubr.f32.mxu0 0.0
      %2275 = vmatmul.mubr.f32.gmra.mrb[0].mxu0 %v1067
      %v2276 = vpop.f32.mrb[0].mxu0
      %v2277 = vadd.f32 %v499, %v2276
      %v2278 = vpop.f32.mrb[0].mxu0
      %2279 = vmatprep.mubr.f32.mxu0 0.0
      %2280 = vmatmul.mubr.f32.gmra.mrb[0].mxu0 %v1070
      %v2281 = vpop.f32.mrb[0].mxu0
      %v2282 = vadd.f32 %v499, %v2281
      %v2283 = vpop.f32.mrb[0].mxu0
      %2284 = vmatprep.mubr.f32.mxu0 0.0
      %2285 = vmatmul.mubr.f32.gmra.mrb[0].mxu0 %v1073
      %v2286 = vpop.f32.mrb[0].mxu0
      %v2287 = vadd.f32 %v499, %v2286
      %v2288 = vpop.f32.mrb[0].mxu0
      %2289 = vmatprep.mubr.f32.mxu0 0.0
      %2290 = vmatmul.mubr.f32.gmra.mrb[0].mxu0 %v1076
      %v2291 = vpop.f32.mrb[0].mxu0
      %v2292 = vadd.f32 %v499, %v2291
      %v2293 = vpop.f32.mrb[0].mxu0
      %2294 = vmatprep.mubr.f32.mxu0 0.0
      %2295 = vmatmul.mubr.f32.gmra.mrb[0].mxu0 %v1079
      %v2296 = vpop.f32.mrb[0].mxu0
      %v2297 = vadd.f32 %v499, %v2296
      %v2298 = vpop.f32.mrb[0].mxu0
      %2299 = vmatprep.mubr.f32.mxu0 0.0
      %2300 = vmatmul.mubr.f32.gmra.mrb[0].mxu0 %v1082
      %v2301 = vpop.f32.mrb[0].mxu0
      %v2302 = vadd.f32 %v499, %v2301
      %v2303 = vpop.f32.mrb[0].mxu0
      %2304 = vmatprep.mubr.f32.mxu0 0.0
      %2305 = vmatmul.mubr.f32.gmra.mrb[0].mxu0 %v1085
      %v2306 = vpop.f32.mrb[0].mxu0
      %v2307 = vadd.f32 %v499, %v2306
      %v2308 = vpop.f32.mrb[0].mxu0
      %2309 = vmatprep.mubr.f32.mxu0 0.0
      %2310 = vmatmul.mubr.f32.gmra.mrb[0].mxu0 %v1088
      %v2311 = vpop.f32.mrb[0].mxu0
      %v2312 = vadd.f32 %v499, %v2311
      %v2313 = vpop.f32.mrb[0].mxu0
      %2314 = vmatprep.mubr.f32.mxu0 0.0
      %2315 = vmatmul.mubr.f32.gmra.mrb[0].mxu0 %v1091
      %v2316 = vpop.f32.mrb[0].mxu0
      %v2317 = vadd.f32 %v499, %v2316
      %v2318 = vpop.f32.mrb[0].mxu0
      %2319 = vmatprep.mubr.f32.mxu0 0.0
      %2320 = vmatmul.mubr.f32.gmra.mrb[0].mxu0 %v1094
      %v2321 = vpop.f32.mrb[0].mxu0
      %v2322 = vadd.f32 %v499, %v2321
      %v2323 = vpop.f32.mrb[0].mxu0
      %2324 = vmatprep.mubr.f32.mxu0 0.0
      %2325 = vmatmul.mubr.f32.gmra.mrb[0].mxu0 %v1097
      %v2326 = vpop.f32.mrb[0].mxu0
      %v2327 = vadd.f32 %v499, %v2326
      %v2328 = vpop.f32.mrb[0].mxu0
      %2329 = vmatprep.mubr.f32.mxu0 0.0
      %2330 = vmatmul.mubr.f32.gmra.mrb[0].mxu0 %v1100
      %v2331 = vpop.f32.mrb[0].mxu0
      %v2332 = vadd.f32 %v499, %v2331
      %v2333 = vpop.f32.mrb[0].mxu0
      %2334 = vmatprep.mubr.f32.mxu0 0.0
      %2335 = vmatmul.mubr.f32.gmra.mrb[0].mxu0 %v1103
      %v2336 = vpop.f32.mrb[0].mxu0
      %v2337 = vadd.f32 %v499, %v2336
      %v2338 = vpop.f32.mrb[0].mxu0
      %2339 = vmatprep.mubr.f32.mxu0 0.0
      %2340 = vmatmul.mubr.f32.gmra.mrb[0].mxu0 %v1106
      %v2341 = vpop.f32.mrb[0].mxu0
      %v2342 = vadd.f32 %v499, %v2341
      %v2343 = vpop.f32.mrb[0].mxu0
      %2344 = vmatprep.mubr.f32.mxu0 0.0
      %2345 = vmatmul.mubr.f32.gmra.mrb[0].mxu0 %v1109
      %v2346 = vpop.f32.mrb[0].mxu0
      %v2347 = vadd.f32 %v499, %v2346
      %v2348 = vpop.f32.mrb[0].mxu0
      %2349 = vmatprep.mubr.f32.mxu0 0.0
      %2350 = vmatmul.mubr.f32.gmra.mrb[0].mxu0 %v1112
      %v2351 = vpop.f32.mrb[0].mxu0
      %v2352 = vadd.f32 %v499, %v2351
      %v2353 = vpop.f32.mrb[0].mxu0
      %2354 = vmatprep.mubr.f32.mxu0 0.0
      %2355 = vmatmul.mubr.f32.gmra.mrb[0].mxu0 %v1115
      %v2356 = vpop.f32.mrb[0].mxu0
      %v2357 = vadd.f32 %v499, %v2356
      %v2358 = vpop.f32.mrb[0].mxu0
      %2359 = vmatprep.mubr.f32.mxu0 0.0
      %2360 = vmatmul.mubr.f32.gmra.mrb[0].mxu0 %v1118
      %v2361 = vpop.f32.mrb[0].mxu0
      %v2362 = vadd.f32 %v499, %v2361
      %v2363 = vpop.f32.mrb[0].mxu0
      %2364 = vmatprep.mubr.f32.mxu0 0.0
      %2365 = vmatmul.mubr.f32.gmra.mrb[0].mxu0 %v1121
      %v2366 = vpop.f32.mrb[0].mxu0
      %v2367 = vadd.f32 %v499, %v2366
      %v2368 = vpop.f32.mrb[0].mxu0
      %2369 = vmatprep.mubr.f32.mxu0 0.0
      %2370 = vmatmul.mubr.f32.gmra.mrb[0].mxu0 %v1124
      %v2371 = vpop.f32.mrb[0].mxu0
      %v2372 = vadd.f32 %v499, %v2371
      %v2373 = vpop.f32.mrb[0].mxu0
      %2374 = vmatprep.mubr.f32.mxu0 0.0
      %2375 = vmatmul.mubr.f32.gmra.mrb[0].mxu0 %v1127
      %v2376 = vpop.f32.mrb[0].mxu0
      %v2377 = vadd.f32 %v499, %v2376
      %v2378 = vpop.f32.mrb[0].mxu0
      %2379 = vmatprep.mubr.f32.mxu0 0.0
      %2380 = vmatmul.mubr.f32.gmra.mrb[0].mxu0 %v1130
      %v2381 = vpop.f32.mrb[0].mxu0
      %v2382 = vadd.f32 %v499, %v2381
      %v2383 = vpop.f32.mrb[0].mxu0
      %2384 = vmatprep.mubr.f32.mxu0 0.0
      %2385 = vmatmul.mubr.f32.gmra.mrb[0].mxu0 %v1133
      %v2386 = vpop.f32.mrb[0].mxu0
      %v2387 = vadd.f32 %v499, %v2386
      %v2388 = vpop.f32.mrb[0].mxu0
      %2389 = vmatprep.mubr.f32.mxu0 0.0
      %2390 = vmatmul.mubr.f32.gmra.mrb[0].mxu0 %v1136
      %v2391 = vpop.f32.mrb[0].mxu0
      %v2392 = vadd.f32 %v499, %v2391
      %v2393 = vpop.f32.mrb[0].mxu0
      %2394 = vmatprep.mubr.f32.mxu0 0.0
      %2395 = vmatmul.mubr.f32.gmra.mrb[0].mxu0 %v1139
      %v2396 = vpop.f32.mrb[0].mxu0
      %v2397 = vadd.f32 %v499, %v2396
      %v2398 = vpop.f32.mrb[0].mxu0
      %2399 = vmatprep.mubr.f32.mxu0 0.0
      %2400 = vmatmul.mubr.f32.gmra.mrb[0].mxu0 %v1142
      %v2401 = vpop.f32.mrb[0].mxu0
      %v2402 = vadd.f32 %v499, %v2401
      %v2403 = vpop.f32.mrb[0].mxu0
      %2404 = vmatprep.mubr.f32.mxu0 0.0
      %2405 = vmatmul.mubr.f32.gmra.mrb[0].mxu0 %v1145
      %v2406 = vpop.f32.mrb[0].mxu0
      %v2407 = vadd.f32 %v499, %v2406
      %v2408 = vpop.f32.mrb[0].mxu0
      %2409 = vmatprep.mubr.f32.mxu0 0.0
      %2410 = vmatmul.mubr.f32.gmra.mrb[0].mxu0 %v1148
      %v2411 = vpop.f32.mrb[0].mxu0
      %v2412 = vadd.f32 %v499, %v2411
      %v2413 = vpop.f32.mrb[0].mxu0
      %2414 = vmatprep.mubr.f32.mxu0 0.0
      %2415 = vmatmul.mubr.f32.gmra.mrb[0].mxu0 %v1151
      %v2416 = vpop.f32.mrb[0].mxu0
      %v2417 = vadd.f32 %v499, %v2416
      %v2418 = vpop.f32.mrb[0].mxu0
      %2419 = vmatprep.mubr.f32.mxu0 0.0
      %2420 = vmatmul.mubr.f32.gmra.mrb[0].mxu0 %v1154
      %v2421 = vpop.f32.mrb[0].mxu0
      %v2422 = vadd.f32 %v499, %v2421
      %v2423 = vpop.f32.mrb[0].mxu0
      %2424 = vmatprep.mubr.f32.mxu0 0.0
      %2425 = vmatmul.mubr.f32.gmra.mrb[0].mxu0 %v1157
      %v2426 = vpop.f32.mrb[0].mxu0
      %v2427 = vadd.f32 %v499, %v2426
      %v2428 = vpop.f32.mrb[0].mxu0
      %2429 = vmatprep.mubr.f32.mxu0 0.0
      %2430 = vmatmul.mubr.f32.gmra.mrb[0].mxu0 %v1160
      %v2431 = vpop.f32.mrb[0].mxu0
      %v2432 = vadd.f32 %v499, %v2431
      %v2433 = vpop.f32.mrb[0].mxu0
      %2434 = vmatprep.mubr.f32.mxu0 0.0
      %2435 = vmatmul.mubr.f32.gmra.mrb[0].mxu0 %v1163
      %v2436 = vpop.f32.mrb[0].mxu0
      %v2437 = vadd.f32 %v499, %v2436
      %v2438 = vpop.f32.mrb[0].mxu0
      %2439 = vmatprep.mubr.f32.mxu0 0.0
      %2440 = vmatmul.mubr.f32.gmra.mrb[0].mxu0 %v1166
      %v2441 = vpop.f32.mrb[0].mxu0
      %v2442 = vadd.f32 %v499, %v2441
      %v2443 = vpop.f32.mrb[0].mxu0
      %2444 = vmatprep.mubr.f32.mxu0 0.0
      %2445 = vmatmul.mubr.f32.gmra.mrb[0].mxu0 %v1169
      %v2446 = vpop.f32.mrb[0].mxu0
      %v2447 = vadd.f32 %v499, %v2446
      %v2448 = vpop.f32.mrb[0].mxu0
      %2449 = vmatprep.mubr.f32.mxu0 0.0
      %2450 = vmatmul.mubr.f32.gmra.mrb[0].mxu0 %v1172
      %v2451 = vpop.f32.mrb[0].mxu0
      %v2452 = vadd.f32 %v499, %v2451
      %v2453 = vpop.f32.mrb[0].mxu0
      %2454 = vmatprep.mubr.f32.mxu0 0.0
      %2455 = vmatmul.mubr.f32.gmra.mrb[0].mxu0 %v1175
      %v2456 = vpop.f32.mrb[0].mxu0
      %v2457 = vadd.f32 %v499, %v2456
      %v2458 = vpop.f32.mrb[0].mxu0
      %2459 = vmatprep.mubr.f32.mxu0 0.0
      %2460 = vmatmul.mubr.f32.gmra.mrb[0].mxu0 %v1178
      %v2461 = vpop.f32.mrb[0].mxu0
      %v2462 = vadd.f32 %v499, %v2461
      %v2463 = vpop.f32.mrb[0].mxu0
      %2464 = vmatprep.mubr.f32.mxu0 0.0
      %2465 = vmatmul.mubr.f32.gmra.mrb[0].mxu0 %v1181
      %v2466 = vpop.f32.mrb[0].mxu0
      %v2467 = vadd.f32 %v499, %v2466
      %v2468 = vpop.f32.mrb[0].mxu0
      %2469 = vmatprep.mubr.f32.mxu0 0.0
      %2470 = vmatmul.mubr.f32.gmra.mrb[0].mxu0 %v1184
      %v2471 = vpop.f32.mrb[0].mxu0
      %v2472 = vadd.f32 %v499, %v2471
      %v2473 = vpop.f32.mrb[0].mxu0
      %2474 = vmatprep.mubr.f32.mxu0 0.0
      %2475 = vmatmul.mubr.f32.gmra.mrb[0].mxu0 %v1187
      %v2476 = vpop.f32.mrb[0].mxu0
      %v2477 = vadd.f32 %v499, %v2476
      %v2478 = vpop.f32.mrb[0].mxu0
      %2479 = vmatprep.mubr.f32.mxu0 0.0
      %2480 = vmatmul.mubr.f32.gmra.mrb[0].mxu0 %v1190
      %v2481 = vpop.f32.mrb[0].mxu0
      %v2482 = vadd.f32 %v499, %v2481
      %v2483 = vpop.f32.mrb[0].mxu0
      %2484 = vmatprep.mubr.f32.mxu0 0.0
      %2485 = vmatmul.mubr.f32.gmra.mrb[0].mxu0 %v1193
      %v2486 = vpop.f32.mrb[0].mxu0
      %v2487 = vadd.f32 %v499, %v2486
      %v2488 = vpop.f32.mrb[0].mxu0
      %2489 = vmatprep.mubr.f32.mxu0 0.0
      %2490 = vmatmul.mubr.f32.gmra.mrb[0].mxu0 %v1196
      %v2491 = vpop.f32.mrb[0].mxu0
      %v2492 = vadd.f32 %v499, %v2491
      %v2493 = vpop.f32.mrb[0].mxu0
      %2494 = vmatprep.mubr.f32.mxu0 0.0
      %2495 = vmatmul.mubr.f32.gmra.mrb[0].mxu0 %v1199
      %v2496 = vpop.f32.mrb[0].mxu0
      %v2497 = vadd.f32 %v499, %v2496
      %v2498 = vpop.f32.mrb[0].mxu0
      %2499 = vmatprep.mubr.f32.mxu0 0.0
      %2500 = vmatmul.mubr.f32.gmra.mrb[0].mxu0 %v1202
      %v2501 = vpop.f32.mrb[0].mxu0
      %v2502 = vadd.f32 %v499, %v2501
      %v2503 = vpop.f32.mrb[0].mxu0
      %2504 = vmatprep.mubr.f32.mxu0 0.0
      %2505 = vmatmul.mubr.f32.gmra.mrb[0].mxu0 %v1205
      %v2506 = vpop.f32.mrb[0].mxu0
      %v2507 = vadd.f32 %v499, %v2506
      %v2508 = vpop.f32.mrb[0].mxu0
      %2509 = vmatprep.mubr.f32.mxu0 0.0
      %2510 = vmatmul.mubr.f32.gmra.mrb[0].mxu0 %v1208
      %v2511 = vpop.f32.mrb[0].mxu0
      %v2512 = vadd.f32 %v499, %v2511
      %v2513 = vpop.f32.mrb[0].mxu0
      %2514 = vmatprep.mubr.f32.mxu0 0.0
      %2515 = vmatmul.mubr.f32.gmra.mrb[0].mxu0 %v1211
      %v2516 = vpop.f32.mrb[0].mxu0
      %v2517 = vadd.f32 %v499, %v2516
      %v2518 = vpop.f32.mrb[0].mxu0
      %2519 = vmatprep.mubr.f32.mxu0 0.0
      %2520 = vmatmul.mubr.f32.gmra.mrb[0].mxu0 %v1214
      %v2521 = vpop.f32.mrb[0].mxu0
      %v2522 = vadd.f32 %v499, %v2521
      %v2523 = vpop.f32.mrb[0].mxu0
      %2524 = vmatprep.mubr.f32.mxu0 0.0
      %2525 = vmatmul.mubr.f32.gmra.mrb[0].mxu0 %v1217
      %v2526 = vpop.f32.mrb[0].mxu0
      %v2527 = vadd.f32 %v499, %v2526
      %v2528 = vpop.f32.mrb[0].mxu0
      %2529 = vmatprep.mubr.f32.mxu0 0.0
      %2530 = vmatmul.mubr.f32.gmra.mrb[0].mxu0 %v1220
      %v2531 = vpop.f32.mrb[0].mxu0
      %v2532 = vadd.f32 %v499, %v2531
      %v2533 = vpop.f32.mrb[0].mxu0
      %2534 = vmatprep.mubr.f32.mxu0 0.0
      %2535 = vmatmul.mubr.f32.gmra.mrb[0].mxu0 %v1223
      %v2536 = vpop.f32.mrb[0].mxu0
      %v2537 = vadd.f32 %v499, %v2536
      %v2538 = vpop.f32.mrb[0].mxu0
      %2539 = vmatprep.mubr.f32.mxu0 0.0
      %2540 = vmatmul.mubr.f32.gmra.mrb[0].mxu0 %v1226
      %v2541 = vpop.f32.mrb[0].mxu0
      %v2542 = vadd.f32 %v499, %v2541
      %v2543 = vpop.f32.mrb[0].mxu0
      %2544 = vmatprep.mubr.f32.mxu0 0.0
      %2545 = vmatmul.mubr.f32.gmra.mrb[0].mxu0 %v1229
      %v2546 = vpop.f32.mrb[0].mxu0
      %v2547 = vadd.f32 %v499, %v2546
      %v2548 = vpop.f32.mrb[0].mxu0
      %2549 = vmatprep.mubr.f32.mxu0 0.0
      %2550 = vmatmul.mubr.f32.gmra.mrb[0].mxu0 %v1232
      %v2551 = vpop.f32.mrb[0].mxu0
      %v2552 = vadd.f32 %v499, %v2551
      %v2553 = vpop.f32.mrb[0].mxu0
      %2554 = vmatprep.mubr.f32.mxu0 0.0
      %2555 = vmatmul.mubr.f32.gmra.mrb[0].mxu0 %v1235
      %v2556 = vpop.f32.mrb[0].mxu0
      %v2557 = vadd.f32 %v499, %v2556
      %v2558 = vpop.f32.mrb[0].mxu0
      %2559 = vmatprep.mubr.f32.mxu0 0.0
      %2560 = vmatmul.mubr.f32.gmra.mrb[0].mxu0 %v1238
      %v2561 = vpop.f32.mrb[0].mxu0
      %v2562 = vadd.f32 %v499, %v2561
      %v2563 = vpop.f32.mrb[0].mxu0
      %2564 = vmatprep.mubr.f32.mxu0 0.0
      %2565 = vmatmul.mubr.f32.gmra.mrb[0].mxu0 %v1241
      %v2566 = vpop.f32.mrb[0].mxu0
      %v2567 = vadd.f32 %v499, %v2566
      %v2568 = vpop.f32.mrb[0].mxu0
      %2569 = vmatprep.mubr.f32.mxu0 0.0
      %2570 = vmatmul.mubr.f32.gmra.mrb[0].mxu0 %v1244
      %v2571 = vpop.f32.mrb[0].mxu0
      %v2572 = vadd.f32 %v499, %v2571
      %v2573 = vpop.f32.mrb[0].mxu0
      %2574 = vmatprep.mubr.f32.mxu0 0.0
      %2575 = vmatmul.mubr.f32.gmra.mrb[0].mxu0 %v1247
      %v2576 = vpop.f32.mrb[0].mxu0
      %v2577 = vadd.f32 %v499, %v2576
      %v2578 = vpop.f32.mrb[0].mxu0
      %2579 = vmatprep.mubr.f32.mxu0 0.0
      %2580 = vmatmul.mubr.f32.gmra.mrb[0].mxu0 %v1250
      %v2581 = vpop.f32.mrb[0].mxu0
      %v2582 = vadd.f32 %v499, %v2581
      %v2583 = vpop.f32.mrb[0].mxu0
      %2584 = vmatprep.mubr.f32.mxu0 0.0
      %2585 = vmatmul.mubr.f32.gmra.mrb[0].mxu0 %v1253
      %v2586 = vpop.f32.mrb[0].mxu0
      %v2587 = vadd.f32 %v499, %v2586
      %v2588 = vpop.f32.mrb[0].mxu0
      %2589 = vmatprep.mubr.f32.mxu0 0.0
      %2590 = vmatmul.mubr.f32.gmra.mrb[0].mxu0 %v1256
      %v2591 = vpop.f32.mrb[0].mxu0
      %v2592 = vadd.f32 %v499, %v2591
      %v2593 = vpop.f32.mrb[0].mxu0
      %2594 = vmatprep.mubr.f32.mxu0 0.0
      %2595 = vmatmul.mubr.f32.gmra.mrb[0].mxu0 %v1259
      %v2596 = vpop.f32.mrb[0].mxu0
      %v2597 = vadd.f32 %v499, %v2596
      %v2598 = vpop.f32.mrb[0].mxu0
      %2599 = vmatprep.mubr.f32.mxu0 0.0
      %2600 = vmatmul.mubr.f32.gmra.mrb[0].mxu0 %v1262
      %v2601 = vpop.f32.mrb[0].mxu0
      %v2602 = vadd.f32 %v499, %v2601
      %v2603 = vpop.f32.mrb[0].mxu0
      %2604 = vmatprep.mubr.f32.mxu0 0.0
      %2605 = vmatmul.mubr.f32.gmra.mrb[0].mxu0 %v1265
      %v2606 = vpop.f32.mrb[0].mxu0
      %v2607 = vadd.f32 %v499, %v2606
      %v2608 = vpop.f32.mrb[0].mxu0
      %2609 = vmatprep.mubr.f32.mxu0 0.0
      %2610 = vmatmul.mubr.f32.gmra.mrb[0].mxu0 %v1268
      %v2611 = vpop.f32.mrb[0].mxu0
      %v2612 = vadd.f32 %v499, %v2611
      %v2613 = vpop.f32.mrb[0].mxu0
      %2614 = vdwg.mxu0
      %v2615 = vtanh.pop %v1337
      %v2616 = vtanh.pop %v1342
      %v2617 = vtanh.pop %v1347
      %v2618 = vtanh.pop %v1352
      %v2619 = vtanh.pop %v1357
      %v2620 = vtanh.pop %v1362
      %v2621 = vtanh.pop %v1367
      %v2622 = vtanh.pop %v1372
      %v2623 = vtanh.pop %v1377
      %v2624 = vtanh.pop %v1382
      %v2625 = vtanh.pop %v1387
      %v2626 = vtanh.pop %v1392
      %v2627 = vtanh.pop %v1397
      %v2628 = vtanh.pop %v1402
      %v2629 = vtanh.pop %v1407
      %v2630 = vtanh.pop %v1412
      %v2631 = vtanh.pop %v1417
      %v2632 = vtanh.pop %v1422
      %v2633 = vtanh.pop %v1427
      %v2634 = vtanh.pop %v1432
      %v2635 = vtanh.pop %v1437
      %v2636 = vtanh.pop %v1442
      %v2637 = vtanh.pop %v1447
      %v2638 = vtanh.pop %v1452
      %v2639 = vtanh.pop %v1457
      %v2640 = vtanh.pop %v1462
      %v2641 = vtanh.pop %v1467
      %v2642 = vtanh.pop %v1472
      %v2643 = vtanh.pop %v1477
      %v2644 = vtanh.pop %v1482
      %v2645 = vtanh.pop %v1487
      %v2646 = vtanh.pop %v1492
      %v2647 = vtanh.pop %v1497
      %v2648 = vtanh.pop %v1502
      %v2649 = vtanh.pop %v1507
      %v2650 = vtanh.pop %v1512
      %v2651 = vtanh.pop %v1517
      %v2652 = vtanh.pop %v1522
      %v2653 = vtanh.pop %v1527
      %v2654 = vtanh.pop %v1532
      %v2655 = vtanh.pop %v1537
      %v2656 = vtanh.pop %v1542
      %v2657 = vtanh.pop %v1547
      %v2658 = vtanh.pop %v1552
      %v2659 = vtanh.pop %v1557
      %v2660 = vtanh.pop %v1562
      %v2661 = vtanh.pop %v1567
      %v2662 = vtanh.pop %v1572
      %v2663 = vtanh.pop %v1577
      %v2664 = vtanh.pop %v1582
      %v2665 = vtanh.pop %v1587
      %v2666 = vtanh.pop %v1592
      %v2667 = vtanh.pop %v1597
      %v2668 = vtanh.pop %v1602
      %v2669 = vtanh.pop %v1607
      %v2670 = vtanh.pop %v1612
      %v2671 = vtanh.pop %v1617
      %v2672 = vtanh.pop %v1622
      %v2673 = vtanh.pop %v1627
      %v2674 = vtanh.pop %v1632
      %v2675 = vtanh.pop %v1637
      %v2676 = vtanh.pop %v1642
      %v2677 = vtanh.pop %v1647
      %v2678 = vtanh.pop %v1652
      %v2679 = vtanh.pop %v1657
      %v2680 = vtanh.pop %v1662
      %v2681 = vtanh.pop %v1667
      %v2682 = vtanh.pop %v1672
      %v2683 = vtanh.pop %v1677
      %v2684 = vtanh.pop %v1682
      %v2685 = vtanh.pop %v1687
      %v2686 = vtanh.pop %v1692
      %v2687 = vtanh.pop %v1697
      %v2688 = vtanh.pop %v1702
      %v2689 = vtanh.pop %v1707
      %v2690 = vtanh.pop %v1712
      %v2691 = vtanh.pop %v1717
      %v2692 = vtanh.pop %v1722
      %v2693 = vtanh.pop %v1727
      %v2694 = vtanh.pop %v1732
      %v2695 = vtanh.pop %v1737
      %v2696 = vtanh.pop %v1742
      %v2697 = vtanh.pop %v1747
      %v2698 = vtanh.pop %v1752
      %v2699 = vtanh.pop %v1757
      %v2700 = vtanh.pop %v1762
      %v2701 = vtanh.pop %v1767
      %v2702 = vtanh.pop %v1772
      %v2703 = vtanh.pop %v1777
      %v2704 = vtanh.pop %v1782
      %v2705 = vtanh.pop %v1787
      %v2706 = vtanh.pop %v1792
      %v2707 = vtanh.pop %v1797
      %v2708 = vtanh.pop %v1802
      %v2709 = vtanh.pop %v1807
      %v2710 = vtanh.pop %v1812
      %v2711 = vtanh.pop %v1817
      %v2712 = vtanh.pop %v1822
      %v2713 = vtanh.pop %v1827
      %v2714 = vtanh.pop %v1832
      %v2715 = vtanh.pop %v1837
      %v2716 = vtanh.pop %v1842
      %v2717 = vtanh.pop %v1847
      %v2718 = vtanh.pop %v1852
      %v2719 = vtanh.pop %v1857
      %v2720 = vtanh.pop %v1862
      %v2721 = vtanh.pop %v1867
      %v2722 = vtanh.pop %v1872
      %v2723 = vtanh.pop %v1877
      %v2724 = vtanh.pop %v1882
      %v2725 = vtanh.pop %v1887
      %v2726 = vtanh.pop %v1892
      %v2727 = vtanh.pop %v1897
      %v2728 = vtanh.pop %v1902
      %v2729 = vtanh.pop %v1907
      %v2730 = vtanh.pop %v1912
      %v2731 = vtanh.pop %v1917
      %v2732 = vtanh.pop %v1922
      %v2733 = vtanh.pop %v1927
      %v2734 = vtanh.pop %v1932
      %v2735 = vtanh.pop %v1937
      %v2736 = vtanh.pop %v1942
      %v2737 = vtanh.pop %v1947
      %v2738 = vtanh.pop %v1952
      %v2739 = vtanh.pop %v1957
      %v2740 = vtanh.pop %v1962
      %v2741 = vtanh.pop %v1967
      %v2742 = vtanh.pop %v1972
      %v2743 = vtanh.pop %v1977
      %v2744 = vtanh.pop %v1982
      %v2745 = vtanh.pop %v1987
      %v2746 = vtanh.pop %v1992
      %v2747 = vtanh.pop %v1997
      %v2748 = vtanh.pop %v2002
      %v2749 = vtanh.pop %v2007
      %v2750 = vtanh.pop %v2012
      %v2751 = vtanh.pop %v2017
      %v2752 = vtanh.pop %v2022
      %v2753 = vtanh.pop %v2027
      %v2754 = vtanh.pop %v2032
      %v2755 = vtanh.pop %v2037
      %v2756 = vtanh.pop %v2042
      %v2757 = vtanh.pop %v2047
      %v2758 = vtanh.pop %v2052
      %v2759 = vtanh.pop %v2057
      %v2760 = vtanh.pop %v2062
      %v2761 = vtanh.pop %v2067
      %v2762 = vtanh.pop %v2072
      %v2763 = vtanh.pop %v2077
      %v2764 = vtanh.pop %v2082
      %v2765 = vtanh.pop %v2087
      %v2766 = vtanh.pop %v2092
      %v2767 = vtanh.pop %v2097
      %v2768 = vtanh.pop %v2102
      %v2769 = vtanh.pop %v2107
      %v2770 = vtanh.pop %v2112
      %v2771 = vtanh.pop %v2117
      %v2772 = vtanh.pop %v2122
      %v2773 = vtanh.pop %v2127
      %v2774 = vtanh.pop %v2132
      %v2775 = vtanh.pop %v2137
      %v2776 = vtanh.pop %v2142
      %v2777 = vtanh.pop %v2147
      %v2778 = vtanh.pop %v2152
      %v2779 = vtanh.pop %v2157
      %v2780 = vtanh.pop %v2162
      %v2781 = vtanh.pop %v2167
      %v2782 = vtanh.pop %v2172
      %v2783 = vtanh.pop %v2177
      %v2784 = vtanh.pop %v2182
      %v2785 = vtanh.pop %v2187
      %v2786 = vtanh.pop %v2192
      %v2787 = vtanh.pop %v2197
      %v2788 = vtanh.pop %v2202
      %v2789 = vtanh.pop %v2207
      %v2790 = vtanh.pop %v2212
      %v2791 = vtanh.pop %v2217
      %v2792 = vtanh.pop %v2222
      %v2793 = vtanh.pop %v2227
      %v2794 = vtanh.pop %v2232
      %v2795 = vtanh.pop %v2237
      %v2796 = vtanh.pop %v2242
      %v2797 = vtanh.pop %v2247
      %v2798 = vtanh.pop %v2252
      %v2799 = vtanh.pop %v2257
      %v2800 = vtanh.pop %v2262
      %v2801 = vtanh.pop %v2267
      %v2802 = vtanh.pop %v2272
      %v2803 = vtanh.pop %v2277
      %v2804 = vtanh.pop %v2282
      %v2805 = vtanh.pop %v2287
      %v2806 = vtanh.pop %v2292
      %v2807 = vtanh.pop %v2297
      %v2808 = vtanh.pop %v2302
      %v2809 = vtanh.pop %v2307
      %v2810 = vtanh.pop %v2312
      %v2811 = vtanh.pop %v2317
      %v2812 = vtanh.pop %v2322
      %v2813 = vtanh.pop %v2327
      %v2814 = vtanh.pop %v2332
      %v2815 = vtanh.pop %v2337
      %v2816 = vtanh.pop %v2342
      %v2817 = vtanh.pop %v2347
      %v2818 = vtanh.pop %v2352
      %v2819 = vtanh.pop %v2357
      %v2820 = vtanh.pop %v2362
      %v2821 = vtanh.pop %v2367
      %v2822 = vtanh.pop %v2372
      %v2823 = vtanh.pop %v2377
      %v2824 = vtanh.pop %v2382
      %v2825 = vtanh.pop %v2387
      %v2826 = vtanh.pop %v2392
      %v2827 = vtanh.pop %v2397
      %v2828 = vtanh.pop %v2402
      %v2829 = vtanh.pop %v2407
      %v2830 = vtanh.pop %v2412
      %v2831 = vtanh.pop %v2417
      %v2832 = vtanh.pop %v2422
      %v2833 = vtanh.pop %v2427
      %v2834 = vtanh.pop %v2432
      %v2835 = vtanh.pop %v2437
      %v2836 = vtanh.pop %v2442
      %v2837 = vtanh.pop %v2447
      %v2838 = vtanh.pop %v2452
      %v2839 = vtanh.pop %v2457
      %v2840 = vtanh.pop %v2462
      %v2841 = vtanh.pop %v2467
      %v2842 = vtanh.pop %v2472
      %v2843 = vtanh.pop %v2477
      %v2844 = vtanh.pop %v2482
      %v2845 = vtanh.pop %v2487
      %v2846 = vtanh.pop %v2492
      %v2847 = vtanh.pop %v2497
      %v2848 = vtanh.pop %v2502
      %v2849 = vtanh.pop %v2507
      %v2850 = vtanh.pop %v2512
      %v2851 = vtanh.pop %v2517
      %v2852 = vtanh.pop %v2522
      %v2853 = vtanh.pop %v2527
      %v2854 = vtanh.pop %v2532
      %v2855 = vtanh.pop %v2537
      %v2856 = vtanh.pop %v2542
      %v2857 = vtanh.pop %v2547
      %v2858 = vtanh.pop %v2552
      %v2859 = vtanh.pop %v2557
      %v2860 = vtanh.pop %v2562
      %v2861 = vtanh.pop %v2567
      %v2862 = vtanh.pop %v2572
      %v2863 = vtanh.pop %v2577
      %v2864 = vtanh.pop %v2582
      %v2865 = vtanh.pop %v2587
      %v2866 = vtanh.pop %v2592
      %v2867 = vtanh.pop %v2597
      %v2868 = vtanh.pop %v2602
      %v2869 = vtanh.pop %v2607
      %v2870 = vtanh.pop %v2612
      %2871 = vst [vmem:[%s228] sm:$0xff] %v2615
      %2872 = vst [vmem:[%s228 + $0x8] sm:$0xff] %v2616
      %2873 = vst [vmem:[%s228 + $0x10] sm:$0xff] %v2617
      %2874 = vst [vmem:[%s228 + $0x18] sm:$0xff] %v2618
      %2875 = vst [vmem:[%s228 + $0x20] sm:$0xff] %v2619
      %2876 = vst [vmem:[%s228 + $0x28] sm:$0xff] %v2620
      %2877 = vst [vmem:[%s228 + $0x30] sm:$0xff] %v2621
      %2878 = vst [vmem:[%s228 + $0x38] sm:$0xff] %v2622
      %2879 = vst [vmem:[%s228 + $0x40] sm:$0xff] %v2623
      %2880 = vst [vmem:[%s228 + $0x48] sm:$0xff] %v2624
      %2881 = vst [vmem:[%s228 + $0x50] sm:$0xff] %v2625
      %2882 = vst [vmem:[%s228 + $0x58] sm:$0xff] %v2626
      %2883 = vst [vmem:[%s228 + $0x60] sm:$0xff] %v2627
      %2884 = vst [vmem:[%s228 + $0x68] sm:$0xff] %v2628
      %2885 = vst [vmem:[%s228 + $0x70] sm:$0xff] %v2629
      %2886 = vst [vmem:[%s228 + $0x78] sm:$0xff] %v2630
      %2887 = vst [vmem:[%s228 + $0x80] sm:$0xff] %v2631
      %2888 = vst [vmem:[%s228 + $0x88] sm:$0xff] %v2632
      %2889 = vst [vmem:[%s228 + $0x90] sm:$0xff] %v2633
      %2890 = vst [vmem:[%s228 + $0x98] sm:$0xff] %v2634
      %2891 = vst [vmem:[%s228 + $0xa0] sm:$0xff] %v2635
      %2892 = vst [vmem:[%s228 + $0xa8] sm:$0xff] %v2636
      %2893 = vst [vmem:[%s228 + $0xb0] sm:$0xff] %v2637
      %2894 = vst [vmem:[%s228 + $0xb8] sm:$0xff] %v2638
      %2895 = vst [vmem:[%s228 + $0xc0] sm:$0xff] %v2639
      %2896 = vst [vmem:[%s228 + $0xc8] sm:$0xff] %v2640
      %2897 = vst [vmem:[%s228 + $0xd0] sm:$0xff] %v2641
      %2898 = vst [vmem:[%s228 + $0xd8] sm:$0xff] %v2642
      %2899 = vst [vmem:[%s228 + $0xe0] sm:$0xff] %v2643
      %2900 = vst [vmem:[%s228 + $0xe8] sm:$0xff] %v2644
      %2901 = vst [vmem:[%s228 + $0xf0] sm:$0xff] %v2645
      %2902 = vst [vmem:[%s228 + $0xf8] sm:$0xff] %v2646
      %2903 = vst [vmem:[%s228 + $0x100] sm:$0xff] %v2647
      %2904 = vst [vmem:[%s228 + $0x108] sm:$0xff] %v2648
      %2905 = vst [vmem:[%s228 + $0x110] sm:$0xff] %v2649
      %2906 = vst [vmem:[%s228 + $0x118] sm:$0xff] %v2650
      %2907 = vst [vmem:[%s228 + $0x120] sm:$0xff] %v2651
      %2908 = vst [vmem:[%s228 + $0x128] sm:$0xff] %v2652
      %2909 = vst [vmem:[%s228 + $0x130] sm:$0xff] %v2653
      %2910 = vst [vmem:[%s228 + $0x138] sm:$0xff] %v2654
      %2911 = vst [vmem:[%s228 + $0x140] sm:$0xff] %v2655
      %2912 = vst [vmem:[%s228 + $0x148] sm:$0xff] %v2656
      %2913 = vst [vmem:[%s228 + $0x150] sm:$0xff] %v2657
      %2914 = vst [vmem:[%s228 + $0x158] sm:$0xff] %v2658
      %2915 = vst [vmem:[%s228 + $0x160] sm:$0xff] %v2659
      %2916 = vst [vmem:[%s228 + $0x168] sm:$0xff] %v2660
      %2917 = vst [vmem:[%s228 + $0x170] sm:$0xff] %v2661
      %2918 = vst [vmem:[%s228 + $0x178] sm:$0xff] %v2662
      %2919 = vst [vmem:[%s228 + $0x180] sm:$0xff] %v2663
      %2920 = vst [vmem:[%s228 + $0x188] sm:$0xff] %v2664
      %2921 = vst [vmem:[%s228 + $0x190] sm:$0xff] %v2665
      %2922 = vst [vmem:[%s228 + $0x198] sm:$0xff] %v2666
      %2923 = vst [vmem:[%s228 + $0x1a0] sm:$0xff] %v2667
      %2924 = vst [vmem:[%s228 + $0x1a8] sm:$0xff] %v2668
      %2925 = vst [vmem:[%s228 + $0x1b0] sm:$0xff] %v2669
      %2926 = vst [vmem:[%s228 + $0x1b8] sm:$0xff] %v2670
      %2927 = vst [vmem:[%s228 + $0x1c0] sm:$0xff] %v2671
      %2928 = vst [vmem:[%s228 + $0x1c8] sm:$0xff] %v2672
      %2929 = vst [vmem:[%s228 + $0x1d0] sm:$0xff] %v2673
      %2930 = vst [vmem:[%s228 + $0x1d8] sm:$0xff] %v2674
      %2931 = vst [vmem:[%s228 + $0x1e0] sm:$0xff] %v2675
      %2932 = vst [vmem:[%s228 + $0x1e8] sm:$0xff] %v2676
      %2933 = vst [vmem:[%s228 + $0x1f0] sm:$0xff] %v2677
      %2934 = vst [vmem:[%s228 + $0x1f8] sm:$0xff] %v2678
      %2935 = vst [vmem:[%s228 + $0x200] sm:$0xff] %v2679
      %2936 = vst [vmem:[%s228 + $0x208] sm:$0xff] %v2680
      %2937 = vst [vmem:[%s228 + $0x210] sm:$0xff] %v2681
      %2938 = vst [vmem:[%s228 + $0x218] sm:$0xff] %v2682
      %2939 = vst [vmem:[%s228 + $0x220] sm:$0xff] %v2683
      %2940 = vst [vmem:[%s228 + $0x228] sm:$0xff] %v2684
      %2941 = vst [vmem:[%s228 + $0x230] sm:$0xff] %v2685
      %2942 = vst [vmem:[%s228 + $0x238] sm:$0xff] %v2686
      %2943 = vst [vmem:[%s228 + $0x240] sm:$0xff] %v2687
      %2944 = vst [vmem:[%s228 + $0x248] sm:$0xff] %v2688
      %2945 = vst [vmem:[%s228 + $0x250] sm:$0xff] %v2689
      %2946 = vst [vmem:[%s228 + $0x258] sm:$0xff] %v2690
      %2947 = vst [vmem:[%s228 + $0x260] sm:$0xff] %v2691
      %2948 = vst [vmem:[%s228 + $0x268] sm:$0xff] %v2692
      %2949 = vst [vmem:[%s228 + $0x270] sm:$0xff] %v2693
      %2950 = vst [vmem:[%s228 + $0x278] sm:$0xff] %v2694
      %2951 = vst [vmem:[%s228 + $0x280] sm:$0xff] %v2695
      %2952 = vst [vmem:[%s228 + $0x288] sm:$0xff] %v2696
      %2953 = vst [vmem:[%s228 + $0x290] sm:$0xff] %v2697
      %2954 = vst [vmem:[%s228 + $0x298] sm:$0xff] %v2698
      %2955 = vst [vmem:[%s228 + $0x2a0] sm:$0xff] %v2699
      %2956 = vst [vmem:[%s228 + $0x2a8] sm:$0xff] %v2700
      %2957 = vst [vmem:[%s228 + $0x2b0] sm:$0xff] %v2701
      %2958 = vst [vmem:[%s228 + $0x2b8] sm:$0xff] %v2702
      %2959 = vst [vmem:[%s228 + $0x2c0] sm:$0xff] %v2703
      %2960 = vst [vmem:[%s228 + $0x2c8] sm:$0xff] %v2704
      %2961 = vst [vmem:[%s228 + $0x2d0] sm:$0xff] %v2705
      %2962 = vst [vmem:[%s228 + $0x2d8] sm:$0xff] %v2706
      %2963 = vst [vmem:[%s228 + $0x2e0] sm:$0xff] %v2707
      %2964 = vst [vmem:[%s228 + $0x2e8] sm:$0xff] %v2708
      %2965 = vst [vmem:[%s228 + $0x2f0] sm:$0xff] %v2709
      %2966 = vst [vmem:[%s228 + $0x2f8] sm:$0xff] %v2710
      %2967 = vst [vmem:[%s228 + $0x300] sm:$0xff] %v2711
      %2968 = vst [vmem:[%s228 + $0x308] sm:$0xff] %v2712
      %2969 = vst [vmem:[%s228 + $0x310] sm:$0xff] %v2713
      %2970 = vst [vmem:[%s228 + $0x318] sm:$0xff] %v2714
      %2971 = vst [vmem:[%s228 + $0x320] sm:$0xff] %v2715
      %2972 = vst [vmem:[%s228 + $0x328] sm:$0xff] %v2716
      %2973 = vst [vmem:[%s228 + $0x330] sm:$0xff] %v2717
      %2974 = vst [vmem:[%s228 + $0x338] sm:$0xff] %v2718
      %2975 = vst [vmem:[%s228 + $0x340] sm:$0xff] %v2719
      %2976 = vst [vmem:[%s228 + $0x348] sm:$0xff] %v2720
      %2977 = vst [vmem:[%s228 + $0x350] sm:$0xff] %v2721
      %2978 = vst [vmem:[%s228 + $0x358] sm:$0xff] %v2722
      %2979 = vst [vmem:[%s228 + $0x360] sm:$0xff] %v2723
      %2980 = vst [vmem:[%s228 + $0x368] sm:$0xff] %v2724
      %2981 = vst [vmem:[%s228 + $0x370] sm:$0xff] %v2725
      %2982 = vst [vmem:[%s228 + $0x378] sm:$0xff] %v2726
      %2983 = vst [vmem:[%s228 + $0x380] sm:$0xff] %v2727
      %2984 = vst [vmem:[%s228 + $0x388] sm:$0xff] %v2728
      %2985 = vst [vmem:[%s228 + $0x390] sm:$0xff] %v2729
      %2986 = vst [vmem:[%s228 + $0x398] sm:$0xff] %v2730
      %2987 = vst [vmem:[%s228 + $0x3a0] sm:$0xff] %v2731
      %2988 = vst [vmem:[%s228 + $0x3a8] sm:$0xff] %v2732
      %2989 = vst [vmem:[%s228 + $0x3b0] sm:$0xff] %v2733
      %2990 = vst [vmem:[%s228 + $0x3b8] sm:$0xff] %v2734
      %2991 = vst [vmem:[%s228 + $0x3c0] sm:$0xff] %v2735
      %2992 = vst [vmem:[%s228 + $0x3c8] sm:$0xff] %v2736
      %2993 = vst [vmem:[%s228 + $0x3d0] sm:$0xff] %v2737
      %2994 = vst [vmem:[%s228 + $0x3d8] sm:$0xff] %v2738
      %2995 = vst [vmem:[%s228 + $0x3e0] sm:$0xff] %v2739
      %2996 = vst [vmem:[%s228 + $0x3e8] sm:$0xff] %v2740
      %2997 = vst [vmem:[%s228 + $0x3f0] sm:$0xff] %v2741
      %2998 = vst [vmem:[%s228 + $0x3f8] sm:$0xff] %v2742
      %2999 = vst [vmem:[%s228 + $0x400] sm:$0xff] %v2743
      %3000 = vst [vmem:[%s228 + $0x408] sm:$0xff] %v2744
      %3001 = vst [vmem:[%s228 + $0x410] sm:$0xff] %v2745
      %3002 = vst [vmem:[%s228 + $0x418] sm:$0xff] %v2746
      %3003 = vst [vmem:[%s228 + $0x420] sm:$0xff] %v2747
      %3004 = vst [vmem:[%s228 + $0x428] sm:$0xff] %v2748
      %3005 = vst [vmem:[%s228 + $0x430] sm:$0xff] %v2749
      %3006 = vst [vmem:[%s228 + $0x438] sm:$0xff] %v2750
      %3007 = vst [vmem:[%s228 + $0x440] sm:$0xff] %v2751
      %3008 = vst [vmem:[%s228 + $0x448] sm:$0xff] %v2752
      %3009 = vst [vmem:[%s228 + $0x450] sm:$0xff] %v2753
      %3010 = vst [vmem:[%s228 + $0x458] sm:$0xff] %v2754
      %3011 = vst [vmem:[%s228 + $0x460] sm:$0xff] %v2755
      %3012 = vst [vmem:[%s228 + $0x468] sm:$0xff] %v2756
      %3013 = vst [vmem:[%s228 + $0x470] sm:$0xff] %v2757
      %3014 = vst [vmem:[%s228 + $0x478] sm:$0xff] %v2758
      %3015 = vst [vmem:[%s228 + $0x480] sm:$0xff] %v2759
      %3016 = vst [vmem:[%s228 + $0x488] sm:$0xff] %v2760
      %3017 = vst [vmem:[%s228 + $0x490] sm:$0xff] %v2761
      %3018 = vst [vmem:[%s228 + $0x498] sm:$0xff] %v2762
      %3019 = vst [vmem:[%s228 + $0x4a0] sm:$0xff] %v2763
      %3020 = vst [vmem:[%s228 + $0x4a8] sm:$0xff] %v2764
      %3021 = vst [vmem:[%s228 + $0x4b0] sm:$0xff] %v2765
      %3022 = vst [vmem:[%s228 + $0x4b8] sm:$0xff] %v2766
      %3023 = vst [vmem:[%s228 + $0x4c0] sm:$0xff] %v2767
      %3024 = vst [vmem:[%s228 + $0x4c8] sm:$0xff] %v2768
      %3025 = vst [vmem:[%s228 + $0x4d0] sm:$0xff] %v2769
      %3026 = vst [vmem:[%s228 + $0x4d8] sm:$0xff] %v2770
      %3027 = vst [vmem:[%s228 + $0x4e0] sm:$0xff] %v2771
      %3028 = vst [vmem:[%s228 + $0x4e8] sm:$0xff] %v2772
      %3029 = vst [vmem:[%s228 + $0x4f0] sm:$0xff] %v2773
      %3030 = vst [vmem:[%s228 + $0x4f8] sm:$0xff] %v2774
      %3031 = vst [vmem:[%s228 + $0x500] sm:$0xff] %v2775
      %3032 = vst [vmem:[%s228 + $0x508] sm:$0xff] %v2776
      %3033 = vst [vmem:[%s228 + $0x510] sm:$0xff] %v2777
      %3034 = vst [vmem:[%s228 + $0x518] sm:$0xff] %v2778
      %3035 = vst [vmem:[%s228 + $0x520] sm:$0xff] %v2779
      %3036 = vst [vmem:[%s228 + $0x528] sm:$0xff] %v2780
      %3037 = vst [vmem:[%s228 + $0x530] sm:$0xff] %v2781
      %3038 = vst [vmem:[%s228 + $0x538] sm:$0xff] %v2782
      %3039 = vst [vmem:[%s228 + $0x540] sm:$0xff] %v2783
      %3040 = vst [vmem:[%s228 + $0x548] sm:$0xff] %v2784
      %3041 = vst [vmem:[%s228 + $0x550] sm:$0xff] %v2785
      %3042 = vst [vmem:[%s228 + $0x558] sm:$0xff] %v2786
      %3043 = vst [vmem:[%s228 + $0x560] sm:$0xff] %v2787
      %3044 = vst [vmem:[%s228 + $0x568] sm:$0xff] %v2788
      %3045 = vst [vmem:[%s228 + $0x570] sm:$0xff] %v2789
      %3046 = vst [vmem:[%s228 + $0x578] sm:$0xff] %v2790
      %3047 = vst [vmem:[%s228 + $0x580] sm:$0xff] %v2791
      %3048 = vst [vmem:[%s228 + $0x588] sm:$0xff] %v2792
      %3049 = vst [vmem:[%s228 + $0x590] sm:$0xff] %v2793
      %3050 = vst [vmem:[%s228 + $0x598] sm:$0xff] %v2794
      %3051 = vst [vmem:[%s228 + $0x5a0] sm:$0xff] %v2795
      %3052 = vst [vmem:[%s228 + $0x5a8] sm:$0xff] %v2796
      %3053 = vst [vmem:[%s228 + $0x5b0] sm:$0xff] %v2797
      %3054 = vst [vmem:[%s228 + $0x5b8] sm:$0xff] %v2798
      %3055 = vst [vmem:[%s228 + $0x5c0] sm:$0xff] %v2799
      %3056 = vst [vmem:[%s228 + $0x5c8] sm:$0xff] %v2800
      %3057 = vst [vmem:[%s228 + $0x5d0] sm:$0xff] %v2801
      %3058 = vst [vmem:[%s228 + $0x5d8] sm:$0xff] %v2802
      %3059 = vst [vmem:[%s228 + $0x5e0] sm:$0xff] %v2803
      %3060 = vst [vmem:[%s228 + $0x5e8] sm:$0xff] %v2804
      %3061 = vst [vmem:[%s228 + $0x5f0] sm:$0xff] %v2805
      %3062 = vst [vmem:[%s228 + $0x5f8] sm:$0xff] %v2806
      %3063 = vst [vmem:[%s228 + $0x600] sm:$0xff] %v2807
      %3064 = vst [vmem:[%s228 + $0x608] sm:$0xff] %v2808
      %3065 = vst [vmem:[%s228 + $0x610] sm:$0xff] %v2809
      %3066 = vst [vmem:[%s228 + $0x618] sm:$0xff] %v2810
      %3067 = vst [vmem:[%s228 + $0x620] sm:$0xff] %v2811
      %3068 = vst [vmem:[%s228 + $0x628] sm:$0xff] %v2812
      %3069 = vst [vmem:[%s228 + $0x630] sm:$0xff] %v2813
      %3070 = vst [vmem:[%s228 + $0x638] sm:$0xff] %v2814
      %3071 = vst [vmem:[%s228 + $0x640] sm:$0xff] %v2815
      %3072 = vst [vmem:[%s228 + $0x648] sm:$0xff] %v2816
      %3073 = vst [vmem:[%s228 + $0x650] sm:$0xff] %v2817
      %3074 = vst [vmem:[%s228 + $0x658] sm:$0xff] %v2818
      %3075 = vst [vmem:[%s228 + $0x660] sm:$0xff] %v2819
      %3076 = vst [vmem:[%s228 + $0x668] sm:$0xff] %v2820
      %3077 = vst [vmem:[%s228 + $0x670] sm:$0xff] %v2821
      %3078 = vst [vmem:[%s228 + $0x678] sm:$0xff] %v2822
      %3079 = vst [vmem:[%s228 + $0x680] sm:$0xff] %v2823
      %3080 = vst [vmem:[%s228 + $0x688] sm:$0xff] %v2824
      %3081 = vst [vmem:[%s228 + $0x690] sm:$0xff] %v2825
      %3082 = vst [vmem:[%s228 + $0x698] sm:$0xff] %v2826
      %3083 = vst [vmem:[%s228 + $0x6a0] sm:$0xff] %v2827
      %3084 = vst [vmem:[%s228 + $0x6a8] sm:$0xff] %v2828
      %3085 = vst [vmem:[%s228 + $0x6b0] sm:$0xff] %v2829
      %3086 = vst [vmem:[%s228 + $0x6b8] sm:$0xff] %v2830
      %3087 = vst [vmem:[%s228 + $0x6c0] sm:$0xff] %v2831
      %3088 = vst [vmem:[%s228 + $0x6c8] sm:$0xff] %v2832
      %3089 = vst [vmem:[%s228 + $0x6d0] sm:$0xff] %v2833
      %3090 = vst [vmem:[%s228 + $0x6d8] sm:$0xff] %v2834
      %3091 = vst [vmem:[%s228 + $0x6e0] sm:$0xff] %v2835
      %3092 = vst [vmem:[%s228 + $0x6e8] sm:$0xff] %v2836
      %3093 = vst [vmem:[%s228 + $0x6f0] sm:$0xff] %v2837
      %3094 = vst [vmem:[%s228 + $0x6f8] sm:$0xff] %v2838
      %3095 = vst [vmem:[%s228 + $0x700] sm:$0xff] %v2839
      %3096 = vst [vmem:[%s228 + $0x708] sm:$0xff] %v2840
      %3097 = vst [vmem:[%s228 + $0x710] sm:$0xff] %v2841
      %3098 = vst [vmem:[%s228 + $0x718] sm:$0xff] %v2842
      %3099 = vst [vmem:[%s228 + $0x720] sm:$0xff] %v2843
      %3100 = vst [vmem:[%s228 + $0x728] sm:$0xff] %v2844
      %3101 = vst [vmem:[%s228 + $0x730] sm:$0xff] %v2845
      %3102 = vst [vmem:[%s228 + $0x738] sm:$0xff] %v2846
      %3103 = vst [vmem:[%s228 + $0x740] sm:$0xff] %v2847
      %3104 = vst [vmem:[%s228 + $0x748] sm:$0xff] %v2848
      %3105 = vst [vmem:[%s228 + $0x750] sm:$0xff] %v2849
      %3106 = vst [vmem:[%s228 + $0x758] sm:$0xff] %v2850
      %3107 = vst [vmem:[%s228 + $0x760] sm:$0xff] %v2851
      %3108 = vst [vmem:[%s228 + $0x768] sm:$0xff] %v2852
      %3109 = vst [vmem:[%s228 + $0x770] sm:$0xff] %v2853
      %3110 = vst [vmem:[%s228 + $0x778] sm:$0xff] %v2854
      %3111 = vst [vmem:[%s228 + $0x780] sm:$0xff] %v2855
      %3112 = vst [vmem:[%s228 + $0x788] sm:$0xff] %v2856
      %3113 = vst [vmem:[%s228 + $0x790] sm:$0xff] %v2857
      %3114 = vst [vmem:[%s228 + $0x798] sm:$0xff] %v2858
      %3115 = vst [vmem:[%s228 + $0x7a0] sm:$0xff] %v2859
      %3116 = vst [vmem:[%s228 + $0x7a8] sm:$0xff] %v2860
      %3117 = vst [vmem:[%s228 + $0x7b0] sm:$0xff] %v2861
      %3118 = vst [vmem:[%s228 + $0x7b8] sm:$0xff] %v2862
      %3119 = vst [vmem:[%s228 + $0x7c0] sm:$0xff] %v2863
      %3120 = vst [vmem:[%s228 + $0x7c8] sm:$0xff] %v2864
      %3121 = vst [vmem:[%s228 + $0x7d0] sm:$0xff] %v2865
      %3122 = vst [vmem:[%s228 + $0x7d8] sm:$0xff] %v2866
      %3123 = vst [vmem:[%s228 + $0x7e0] sm:$0xff] %v2867
      %3124 = vst [vmem:[%s228 + $0x7e8] sm:$0xff] %v2868
      %3125 = vst [vmem:[%s228 + $0x7f0] sm:$0xff] %v2869
      %3126 = vst [vmem:[%s228 + $0x7f8] sm:$0xff] %v2870
      %s3127 = smul.u32 256, %s19
      %p3128 = scmp.lt.s32.totalorder %s18, 3
      %s3129 = scalar_select %p3128, %s18, 3
      %p3130 = scmp.lt.s32.totalorder %s3127, 255
      %s3131 = scalar_select %p3130, %s3127, 255
      %s3132 = smul.addr %s3129, 256
      %s3133 = sadd.s32 %s3131, %s3132
      %s3134 = smul.addr %s3133, 8
      %s3135 = scalar_lea.vmem %s3, %s3134
      // Predicated region
      $region33: #{forward.9} parent=31 // pred_check
        %p3136 = pneg %p121
      $region34: #{forward.9} parent=31 // pred_check_branch
        %3138 = sbr.rel (%p3136) target = $region36
      $region35: #{forward.9} parent=31 // pred_region
        %s3139 = smul.u32 256, %s19
      $region36: #{forward.9} parent=31 // pred_fallthru
        _
    $region32: #{forward.9} parent=5 // pred_fallthru
      _
    %p3140 = scmp.le.s32.totalorder 2, %s9
    // Predicated region
    $region37: #{forward.9} parent=5 // pred_check
      %p3141 = pneg %p3140
    $region38: #{forward.9} parent=5 // pred_check_branch
      %3143 = sbr.rel (%p3141) target = $region40
    $region39: #{forward.9} parent=5 // pred_region
      %s3144 = ssub.s32 %s9, 2
      // Predicated region
      $region41: #{forward.9} parent=39 // pred_check
        %p3145 = pneg %p127
      $region42: #{forward.9} parent=39 // pred_check_branch
        %3147 = sbr.rel (%p3145) target = $region44
      $region43: #{forward.9} parent=39 // pred_region
        %s3148 = smul.u32 256, %s21
        %p3149 = scmp.lt.s32.totalorder %s20, 3
        %s3150 = scalar_select %p3149, %s20, 3
        %p3151 = scmp.lt.s32.totalorder %s3148, 255
        %s3152 = scalar_select %p3151, %s3148, 255
        %s3153 = smul.addr %s3150, 256
        %s3154 = sadd.s32 %s3152, %s3153
        %s3155 = smul.addr %s3154, 8
        %s3156 = scalar_lea.vmem %s3, %s3155
      $region44: #{forward.9} parent=39 // pred_fallthru
        _
    $region40: #{forward.9} parent=5 // pred_fallthru
      _
  $region6: #{forward.9} parent=0 // loop_footer
    %s13 = sadd.s32 1, %s9
  $region7: #{forward.9} parent=0 // loop_footer_branch
    %8 = sbr.rel target = $region3
  $region8: #{forward.9} parent=0 // loop_exit
    _

</llo_original>
